<compile_context>
chip_gen: v6e
topology: v6e:2x2x1
jax: 0.10.0
libtpu: 0.0.40
codegen_flags: <defaults>
</compile_context>

<pallas_src>
import functools

import jax
import jax.numpy as jnp
from jax import lax
from jax.experimental import pallas as pl
from jax.experimental.pallas import tpu as pltpu

jax.config.update("jax_default_matmul_precision", "highest")

EPS = 1e-5
LANE = 128  # TPU lane width; channel axis zero-padded to this for lane-dense GEMMs/stores.


# --------------------------------------------------------------------------- #
# Stage 1: dwconv3x3 stride-2 folded into pointwise 1x1 (9 MXU GEMMs)
#          -> h1 (lane-padded) + per-tile BN1 partial stats.
# Inputs are the 4 stride-2 phases of the spatially padded input, so every tap
# is a unit-stride static slice.
# --------------------------------------------------------------------------- #
def _stage1_kernel(p00_ref, p01_ref, p10_ref, p11_ref, w1f_ref,
                   h1_ref, st1_ref, *, B_TILE, OH, OW, C):
    R = B_TILE * OH * OW
    phases = ((p00_ref, p01_ref), (p10_ref, p11_ref))
    acc = jnp.zeros((R, LANE), jnp.float32)
    for kh in range(3):
        for kw in range(3):
            pref = phases[kh % 2][kw % 2]
            tap = pref[:, kh // 2:kh // 2 + OH, kw // 2:kw // 2 + OW, :]
            acc = acc + jnp.dot(tap.reshape(R, C), w1f_ref[kh * 3 + kw],
                                preferred_element_type=jnp.float32,
                                precision=lax.Precision.HIGHEST)
    h1_ref[...] = acc.reshape(B_TILE, OH, OW, LANE)
    # Fused one-pass BN1 partial statistics for this tile.
    st1_ref[0, 0:1, :] = jnp.sum(acc, axis=0, keepdims=True)
    st1_ref[0, 1:2, :] = jnp.sum(acc * acc, axis=0, keepdims=True)


# --------------------------------------------------------------------------- #
# Stage 2: BN1(folded)+ReLU -> dwconv3x3 stride-1 folded into pointwise 1x1
#          (9 MXU GEMMs) -> y (lane-padded) + per-tile BN2 partial stats.
# --------------------------------------------------------------------------- #
def _stage2_kernel(h1_ref, sc1_ref, sh1_ref, w2f_ref,
                   y_ref, st2_ref, hp_ref, *, B_TILE, OH, OW):
    # BN1 apply (pre-folded per-channel scale/shift) + ReLU.
    h = jnp.maximum(h1_ref[...] * sc1_ref[...] + sh1_ref[...], 0.0)

    # Zero ONLY the 1-pixel halo of the padded scratch (interior is overwritten
    # below).  Done every step so it is safe even when the parallel grid axis is
    # split across TensorCores (scratch is per-core).
    zrow = jnp.zeros((B_TILE, 1, OW + 2, LANE), jnp.float32)
    zcol = jnp.zeros((B_TILE, OH, 1, LANE), jnp.float32)
    hp_ref[:, 0:1, :, :] = zrow
    hp_ref[:, OH + 1:OH + 2, :, :] = zrow
    hp_ref[:, 1:OH + 1, 0:1, :] = zcol
    hp_ref[:, 1:OH + 1, OW + 1:OW + 2, :] = zcol
    hp_ref[:, 1:OH + 1, 1:OW + 1, :] = h

    # Depthwise+pointwise fused: 9 MXU-accumulated GEMMs (K = 128 each).
    R = B_TILE * OH * OW
    acc = jnp.zeros((R, LANE), jnp.float32)
    for kh in range(3):
        for kw in range(3):
            tap = hp_ref[:, kh:kh + OH, kw:kw + OW, :]
            acc = acc + jnp.dot(tap.reshape(R, LANE), w2f_ref[kh * 3 + kw],
                                preferred_element_type=jnp.float32,
                                precision=lax.Precision.HIGHEST)
    y_ref[...] = acc.reshape(B_TILE, OH, OW, LANE)
    st2_ref[0, 0:1, :] = jnp.sum(acc, axis=0, keepdims=True)
    st2_ref[0, 1:2, :] = jnp.sum(acc * acc, axis=0, keepdims=True)


def _fold_bn(stats, gamma_pad, beta_pad, count):
    """Reduce per-tile (sum, sumsq) -> folded per-channel scale/shift (f32)."""
    s = jnp.sum(stats[:, 0, :], axis=0)
    sq = jnp.sum(stats[:, 1, :], axis=0)
    mu = s / count
    var = jnp.maximum(sq / count - mu * mu, 0.0)
    inv = lax.rsqrt(var + EPS)
    scale = gamma_pad * inv                 # padded lanes: gamma_pad==0 -> scale 0
    shift = beta_pad - mu * scale
    return scale, shift                     # (LANE,) each


def _pick_batch_tile(n, rows_per_image, target_rows=256, min_tiles=2):
    """Images per grid step: aim for >=256 GEMM rows, but keep >=2 parallel tiles."""
    bt = max(1, min(n, target_rows // max(rows_per_image, 1)))
    if n >= min_tiles:
        bt = min(bt, max(1, n // min_tiles))
    while n % bt != 0:
        bt -= 1
    return bt


def sep_conv(x_nchw, params, *, stride=2, padding=1, ksize=3):
    """Forward pass of SepConv.  x_nchw: (N, C_in, H, W) f32 -> (N, C_out, OH, OW)."""
    assert stride == 2 and padding == 1 and ksize == 3
    wdw1, wpw1, g1, b1, wdw2, wpw2, g2, b2 = params
    x = jnp.transpose(x_nchw, (0, 2, 3, 1)).astype(jnp.float32)        # NCHW -> NHWC
    N, H, W, C = x.shape
    CO = wpw2.shape[1]
    OH = (H + 2 * padding - ksize) // stride + 1
    OW = (W + 2 * padding - ksize) // stride + 1
    assert C <= LANE and CO <= LANE   # TODO(synk): channel counts > 128 need K/N GEMM tiling.

    B_TILE = _pick_batch_tile(N, OH * OW)
    G = N // B_TILE
    PH, PW = OH + 1, OW + 1

    # Spatial pad + stride-2 phase split (space-to-depth).  Total HBM bytes of the
    # 4 phases == padded input size (no 9x im2col inflation), and every in-kernel
    # tap becomes a unit-stride slice.
    xp = jnp.pad(x, ((0, 0), (padding, padding), (padding, padding), (0, 0)))

    def _phase(r, c):
        ph = xp[:, r::2, c::2, :][:, :PH, :PW, :]
        return jnp.pad(ph, ((0, 0), (0, PH - ph.shape[1]),
                            (0, PW - ph.shape[2]), (0, 0)))
    p00, p01, p10, p11 = _phase(0, 0), _phase(0, 1), _phase(1, 0), _phase(1, 1)

    # Fold depthwise weights into the pointwise weights: one (C, LANE) GEMM
    # operand per tap, zero-padded so all stores/GEMM outputs are lane-dense.
    wdw1_f = wdw1.reshape(9, C).astype(jnp.float32)
    w1f = wdw1_f[:, :, None] * wpw1.astype(jnp.float32)[None, :, :]     # (9, C, C)
    w1f = jnp.pad(w1f, ((0, 0), (0, 0), (0, LANE - C)))                 # (9, C, LANE)

    wdw2_f = wdw2.reshape(9, C).astype(jnp.float32)
    w2f = wdw2_f[:, :, None] * wpw2.astype(jnp.float32)[None, :, :]     # (9, C, CO)
    w2f = jnp.pad(w2f, ((0, 0), (0, LANE - C), (0, LANE - CO)))         # (9, LANE, LANE)

    # BN affine params zero-padded (padded lanes must stay exactly zero).
    g1_p = jnp.pad(g1.astype(jnp.float32), (0, LANE - C))
    b1_p = jnp.pad(b1.astype(jnp.float32), (0, LANE - C))
    g2_p = jnp.pad(g2.astype(jnp.float32), (0, LANE - CO))
    b2_p = jnp.pad(b2.astype(jnp.float32), (0, LANE - CO))

    cparams = pltpu.CompilerParams(dimension_semantics=("parallel",))

    # ---- stage 1: fused dw3x3(s=2)+1x1 GEMMs, partial BN1 stats per tile ----
    h1, st1 = pl.pallas_call(
        functools.partial(_stage1_kernel, B_TILE=B_TILE, OH=OH, OW=OW, C=C),
        grid=(G,),
        in_specs=[
            pl.BlockSpec((B_TILE, PH, PW, C), lambda n: (n, 0, 0, 0)),
            pl.BlockSpec((B_TILE, PH, PW, C), lambda n: (n, 0, 0, 0)),
            pl.BlockSpec((B_TILE, PH, PW, C), lambda n: (n, 0, 0, 0)),
            pl.BlockSpec((B_TILE, PH, PW, C), lambda n: (n, 0, 0, 0)),
            pl.BlockSpec((9, C, LANE), lambda n: (0, 0, 0)),
        ],
        out_specs=[
            pl.BlockSpec((B_TILE, OH, OW, LANE), lambda n: (n, 0, 0, 0)),
            pl.BlockSpec((1, 2, LANE), lambda n: (n, 0, 0)),
        ],
        out_shape=[
            jax.ShapeDtypeStruct((N, OH, OW, LANE), jnp.float32),
            jax.ShapeDtypeStruct((G, 2, LANE), jnp.float32),
        ],
        compiler_params=cparams,
    )(p00, p01, p10, p11, w1f)

    count = jnp.float32(N * OH * OW)
    sc1, sh1 = _fold_bn(st1, g1_p, b1_p, count)      # tiny (G,2,128) reduce + fold

    # ---- stage 2: BN1+ReLU, fused dw3x3(s=1)+1x1 GEMMs, partial BN2 stats ----
    y, st2 = pl.pallas_call(
        functools.partial(_stage2_kernel, B_TILE=B_TILE, OH=OH, OW=OW),
        grid=(G,),
        in_specs=[
            pl.BlockSpec((B_TILE, OH, OW, LANE), lambda n: (n, 0, 0, 0)),
            pl.BlockSpec((1, LANE), lambda n: (0, 0)),
            pl.BlockSpec((1, LANE), lambda n: (0, 0)),
            pl.BlockSpec((9, LANE, LANE), lambda n: (0, 0, 0)),
        ],
        out_specs=[
            pl.BlockSpec((B_TILE, OH, OW, LANE), lambda n: (n, 0, 0, 0)),
            pl.BlockSpec((1, 2, LANE), lambda n: (n, 0, 0)),
        ],
        out_shape=[
            jax.ShapeDtypeStruct((N, OH, OW, LANE), jnp.float32),
            jax.ShapeDtypeStruct((G, 2, LANE), jnp.float32),
        ],
        scratch_shapes=[pltpu.VMEM((B_TILE, OH + 2, OW + 2, LANE), jnp.float32)],
        compiler_params=cparams,
    )(h1, sc1.reshape(1, LANE), sh1.reshape(1, LANE), w2f)

    sc2, sh2 = _fold_bn(st2, g2_p, b2_p, count)

    # ---- stage 3: BN2 + ReLU + channel slice + NHWC->NCHW, left to XLA so it
    # fuses into a single pass over y (per the perf review). --------------------
    out = jnp.maximum(y * sc2.reshape(1, 1, 1, LANE) + sh2.reshape(1, 1, 1, LANE), 0.0)
    out = out[..., :CO]
    return jnp.transpose(out, (0, 3, 1, 2))


# ------------------------ pure-JAX reference (for checking) -------------------
def _bn_train(x_nchw, gamma, beta):
    mu = jnp.mean(x_nchw, axis=(0, 2, 3), keepdims=True)
    var = jnp.mean((x_nchw - mu) ** 2, axis=(0, 2, 3), keepdims=True)
    return ((x_nchw - mu) * lax.rsqrt(var + EPS)
            * gamma[None, :, None, None] + beta[None, :, None, None])


def sep_conv_ref(x_nchw, params):
    wdw1, wpw1, g1, b1, wdw2, wpw2, g2, b2 = params
    C = wpw1.shape[0]
    dn = ('NCHW', 'OIHW', 'NCHW')
    prec = lax.Precision.HIGHEST
    wdw1_oihw = jnp.transpose(wdw1, (2, 0, 1))[:, None, :, :]       # (C,1,3,3)
    wpw1_oihw = wpw1.T[:, :, None, None]                            # (C,C,1,1)
    wdw2_oihw = jnp.transpose(wdw2, (2, 0, 1))[:, None, :, :]
    wpw2_oihw = wpw2.T[:, :, None, None]                            # (CO,C,1,1)

    h = lax.conv_general_dilated(x_nchw, wdw1_oihw, (2, 2), [(1, 1), (1, 1)],
                                 dimension_numbers=dn, feature_group_count=C,
                                 precision=prec)
    h = lax.conv_general_dilated(h, wpw1_oihw, (1, 1), [(0, 0), (0, 0)],
                                 dimension_numbers=dn, precision=prec)
    h = jnp.maximum(_bn_train(h, g1, b1), 0.0)
    h = lax.conv_general_dilated(h, wdw2_oihw, (1, 1), [(1, 1), (1, 1)],
                                 dimension_numbers=dn, feature_group_count=C,
                                 precision=prec)
    h = lax.conv_general_dilated(h, wpw2_oihw, (1, 1), [(0, 0), (0, 0)],
                                 dimension_numbers=dn, precision=prec)
    return jnp.maximum(_bn_train(h, g2, b2), 0.0)


if __name__ == "__main__":
    N, C_IN, C_OUT, H, W = 2, 4, 8, 16, 16

    key = jax.random.PRNGKey(0)
    kx, k1, k2, k3, k4 = jax.random.split(key, 5)

    x = jax.random.normal(kx, (N, C_IN, H, W), dtype=jnp.float32)

    # Deterministic synthetic parameters (shapes match the nn.Module __init__).
    wdw1 = 0.2 * jax.random.normal(k1, (3, 3, C_IN), dtype=jnp.float32)   # dw conv #1
    wpw1 = 0.2 * jax.random.normal(k2, (C_IN, C_IN), dtype=jnp.float32)   # 1x1 conv #1
    g1 = jnp.ones((C_IN,), jnp.float32)                                   # BN1 affine
    b1 = jnp.zeros((C_IN,), jnp.float32)
    wdw2 = 0.2 * jax.random.normal(k3, (3, 3, C_IN), dtype=jnp.float32)   # dw conv #2
    wpw2 = 0.2 * jax.random.normal(k4, (C_IN, C_OUT), dtype=jnp.float32)  # 1x1 conv #2
    g2 = jnp.ones((C_OUT,), jnp.float32)                                  # BN2 affine
    b2 = jnp.zeros((C_OUT,), jnp.float32)
    params = (wdw1, wpw1, g1, b1, wdw2, wpw2, g2, b2)

    out = jax.block_until_ready(sep_conv(x, params))
    ref = jax.block_until_ready(sep_conv_ref(x, params))

    assert out.shape == (N, C_OUT, H // 2, W // 2), out.shape
    assert jnp.allclose(out, ref, rtol=2e-4, atol=2e-4), \
        f"max abs diff {jnp.max(jnp.abs(out - ref))}"

    # TODO(synk): BatchNorm running-stat (momentum) buffer updates are stateful
    # training bookkeeping and are not part of the functional forward output.
    print("KERNEL_OK")
</pallas_src>

<mosaic_0001>
module attributes {stable_mosaic.version = 11 : i64} {
  func.func @_stage1_kernel(%arg0: i32, %arg1: memref<1x9x9x4xf32, #tpu.memory_space<vmem>>, %arg2: memref<1x9x9x4xf32, #tpu.memory_space<vmem>>, %arg3: memref<1x9x9x4xf32, #tpu.memory_space<vmem>>, %arg4: memref<1x9x9x4xf32, #tpu.memory_space<vmem>>, %arg5: memref<9x4x128xf32, #tpu.memory_space<vmem>>, %arg6: memref<1x8x8x128xf32, #tpu.memory_space<vmem>>, %arg7: memref<1x2x128xf32, #tpu.memory_space<vmem>>) attributes {dimension_semantics = [#tpu.dimension_semantics<parallel>], iteration_bounds = array<i64: 2>, scalar_prefetch = 0 : i64, scratch_operands = 0 : i64, tpu.core_type = #tpu.core_type<tc>, window_params = [{transform_indices = @transform_0, window_bounds = array<i64: 1, 9, 9, 4>}, {transform_indices = @transform_1, window_bounds = array<i64: 1, 9, 9, 4>}, {transform_indices = @transform_2, window_bounds = array<i64: 1, 9, 9, 4>}, {transform_indices = @transform_3, window_bounds = array<i64: 1, 9, 9, 4>}, {pipeline_mode = #tpu.pipeline_mode<synchronous>, transform_indices = @transform_4, window_bounds = array<i64: 9, 4, 128>}, {transform_indices = @transform_5, window_bounds = array<i64: 1, 8, 8, 128>}, {transform_indices = @transform_6, window_bounds = array<i64: 1, 2, 128>}]} {
    %cst = arith.constant 0.000000e+00 : f32
    %0 = vector.broadcast %cst : f32 to vector<64x128xf32>
    %c0 = arith.constant 0 : index
    %c0_0 = arith.constant 0 : index
    %c0_1 = arith.constant 0 : index
    %c0_2 = arith.constant 0 : index
    %1 = vector.load %arg1[%c0, %c0_0, %c0_1, %c0_2] : memref<1x9x9x4xf32, #tpu.memory_space<vmem>>, vector<1x8x8x4xf32>
    %2 = vector.shape_cast %1 : vector<1x8x8x4xf32> to vector<64x4xf32>
    %c0_3 = arith.constant 0 : index
    %c0_4 = arith.constant 0 : index
    %c0_5 = arith.constant 0 : index
    %3 = vector.load %arg5[%c0_3, %c0_4, %c0_5] : memref<9x4x128xf32, #tpu.memory_space<vmem>>, vector<1x4x128xf32>
    %4 = vector.shape_cast %3 : vector<1x4x128xf32> to vector<4x128xf32>
    %cst_6 = arith.constant dense<0.000000e+00> : vector<64x128xf32>
    %5 = tpu.matmul %2, %4, %cst_6 {dimension_numbers = #tpu.dot_dimension_numbers<[1], [0], [0], [1], [0, 0, 1, 1], [], []>, precision = #tpu.contract_precision<fp32>} : vector<64x4xf32>, vector<4x128xf32>, vector<64x128xf32> -> vector<64x128xf32>
    %6 = arith.addf %0, %5 : vector<64x128xf32>
    %c0_7 = arith.constant 0 : index
    %c0_8 = arith.constant 0 : index
    %c0_9 = arith.constant 0 : index
    %c0_10 = arith.constant 0 : index
    %7 = vector.load %arg2[%c0_7, %c0_8, %c0_9, %c0_10] : memref<1x9x9x4xf32, #tpu.memory_space<vmem>>, vector<1x8x8x4xf32>
    %8 = vector.shape_cast %7 : vector<1x8x8x4xf32> to vector<64x4xf32>
    %c1 = arith.constant 1 : index
    %c0_11 = arith.constant 0 : index
    %c0_12 = arith.constant 0 : index
    %9 = vector.load %arg5[%c1, %c0_11, %c0_12] : memref<9x4x128xf32, #tpu.memory_space<vmem>>, vector<1x4x128xf32>
    %10 = vector.shape_cast %9 : vector<1x4x128xf32> to vector<4x128xf32>
    %cst_13 = arith.constant dense<0.000000e+00> : vector<64x128xf32>
    %11 = tpu.matmul %8, %10, %cst_13 {dimension_numbers = #tpu.dot_dimension_numbers<[1], [0], [0], [1], [0, 0, 1, 1], [], []>, precision = #tpu.contract_precision<fp32>} : vector<64x4xf32>, vector<4x128xf32>, vector<64x128xf32> -> vector<64x128xf32>
    %12 = arith.addf %6, %11 : vector<64x128xf32>
    %c0_14 = arith.constant 0 : index
    %c0_15 = arith.constant 0 : index
    %c1_16 = arith.constant 1 : index
    %c0_17 = arith.constant 0 : index
    %13 = vector.load %arg1[%c0_14, %c0_15, %c1_16, %c0_17] : memref<1x9x9x4xf32, #tpu.memory_space<vmem>>, vector<1x8x8x4xf32>
    %14 = vector.shape_cast %13 : vector<1x8x8x4xf32> to vector<64x4xf32>
    %c2 = arith.constant 2 : index
    %c0_18 = arith.constant 0 : index
    %c0_19 = arith.constant 0 : index
    %15 = vector.load %arg5[%c2, %c0_18, %c0_19] : memref<9x4x128xf32, #tpu.memory_space<vmem>>, vector<1x4x128xf32>
    %16 = vector.shape_cast %15 : vector<1x4x128xf32> to vector<4x128xf32>
    %cst_20 = arith.constant dense<0.000000e+00> : vector<64x128xf32>
    %17 = tpu.matmul %14, %16, %cst_20 {dimension_numbers = #tpu.dot_dimension_numbers<[1], [0], [0], [1], [0, 0, 1, 1], [], []>, precision = #tpu.contract_precision<fp32>} : vector<64x4xf32>, vector<4x128xf32>, vector<64x128xf32> -> vector<64x128xf32>
    %18 = arith.addf %12, %17 : vector<64x128xf32>
    %c0_21 = arith.constant 0 : index
    %c0_22 = arith.constant 0 : index
    %c0_23 = arith.constant 0 : index
    %c0_24 = arith.constant 0 : index
    %19 = vector.load %arg3[%c0_21, %c0_22, %c0_23, %c0_24] : memref<1x9x9x4xf32, #tpu.memory_space<vmem>>, vector<1x8x8x4xf32>
    %20 = vector.shape_cast %19 : vector<1x8x8x4xf32> to vector<64x4xf32>
    %c3 = arith.constant 3 : index
    %c0_25 = arith.constant 0 : index
    %c0_26 = arith.constant 0 : index
    %21 = vector.load %arg5[%c3, %c0_25, %c0_26] : memref<9x4x128xf32, #tpu.memory_space<vmem>>, vector<1x4x128xf32>
    %22 = vector.shape_cast %21 : vector<1x4x128xf32> to vector<4x128xf32>
    %cst_27 = arith.constant dense<0.000000e+00> : vector<64x128xf32>
    %23 = tpu.matmul %20, %22, %cst_27 {dimension_numbers = #tpu.dot_dimension_numbers<[1], [0], [0], [1], [0, 0, 1, 1], [], []>, precision = #tpu.contract_precision<fp32>} : vector<64x4xf32>, vector<4x128xf32>, vector<64x128xf32> -> vector<64x128xf32>
    %24 = arith.addf %18, %23 : vector<64x128xf32>
    %c0_28 = arith.constant 0 : index
    %c0_29 = arith.constant 0 : index
    %c0_30 = arith.constant 0 : index
    %c0_31 = arith.constant 0 : index
    %25 = vector.load %arg4[%c0_28, %c0_29, %c0_30, %c0_31] : memref<1x9x9x4xf32, #tpu.memory_space<vmem>>, vector<1x8x8x4xf32>
    %26 = vector.shape_cast %25 : vector<1x8x8x4xf32> to vector<64x4xf32>
    %c4 = arith.constant 4 : index
    %c0_32 = arith.constant 0 : index
    %c0_33 = arith.constant 0 : index
    %27 = vector.load %arg5[%c4, %c0_32, %c0_33] : memref<9x4x128xf32, #tpu.memory_space<vmem>>, vector<1x4x128xf32>
    %28 = vector.shape_cast %27 : vector<1x4x128xf32> to vector<4x128xf32>
    %cst_34 = arith.constant dense<0.000000e+00> : vector<64x128xf32>
    %29 = tpu.matmul %26, %28, %cst_34 {dimension_numbers = #tpu.dot_dimension_numbers<[1], [0], [0], [1], [0, 0, 1, 1], [], []>, precision = #tpu.contract_precision<fp32>} : vector<64x4xf32>, vector<4x128xf32>, vector<64x128xf32> -> vector<64x128xf32>
    %30 = arith.addf %24, %29 : vector<64x128xf32>
    %c0_35 = arith.constant 0 : index
    %c0_36 = arith.constant 0 : index
    %c1_37 = arith.constant 1 : index
    %c0_38 = arith.constant 0 : index
    %31 = vector.load %arg3[%c0_35, %c0_36, %c1_37, %c0_38] : memref<1x9x9x4xf32, #tpu.memory_space<vmem>>, vector<1x8x8x4xf32>
    %32 = vector.shape_cast %31 : vector<1x8x8x4xf32> to vector<64x4xf32>
    %c5 = arith.constant 5 : index
    %c0_39 = arith.constant 0 : index
    %c0_40 = arith.constant 0 : index
    %33 = vector.load %arg5[%c5, %c0_39, %c0_40] : memref<9x4x128xf32, #tpu.memory_space<vmem>>, vector<1x4x128xf32>
    %34 = vector.shape_cast %33 : vector<1x4x128xf32> to vector<4x128xf32>
    %cst_41 = arith.constant dense<0.000000e+00> : vector<64x128xf32>
    %35 = tpu.matmul %32, %34, %cst_41 {dimension_numbers = #tpu.dot_dimension_numbers<[1], [0], [0], [1], [0, 0, 1, 1], [], []>, precision = #tpu.contract_precision<fp32>} : vector<64x4xf32>, vector<4x128xf32>, vector<64x128xf32> -> vector<64x128xf32>
    %36 = arith.addf %30, %35 : vector<64x128xf32>
    %c0_42 = arith.constant 0 : index
    %c1_43 = arith.constant 1 : index
    %c0_44 = arith.constant 0 : index
    %c0_45 = arith.constant 0 : index
    %37 = vector.load %arg1[%c0_42, %c1_43, %c0_44, %c0_45] : memref<1x9x9x4xf32, #tpu.memory_space<vmem>>, vector<1x8x8x4xf32>
    %38 = vector.shape_cast %37 : vector<1x8x8x4xf32> to vector<64x4xf32>
    %c6 = arith.constant 6 : index
    %c0_46 = arith.constant 0 : index
    %c0_47 = arith.constant 0 : index
    %39 = vector.load %arg5[%c6, %c0_46, %c0_47] : memref<9x4x128xf32, #tpu.memory_space<vmem>>, vector<1x4x128xf32>
    %40 = vector.shape_cast %39 : vector<1x4x128xf32> to vector<4x128xf32>
    %cst_48 = arith.constant dense<0.000000e+00> : vector<64x128xf32>
    %41 = tpu.matmul %38, %40, %cst_48 {dimension_numbers = #tpu.dot_dimension_numbers<[1], [0], [0], [1], [0, 0, 1, 1], [], []>, precision = #tpu.contract_precision<fp32>} : vector<64x4xf32>, vector<4x128xf32>, vector<64x128xf32> -> vector<64x128xf32>
    %42 = arith.addf %36, %41 : vector<64x128xf32>
    %c0_49 = arith.constant 0 : index
    %c1_50 = arith.constant 1 : index
    %c0_51 = arith.constant 0 : index
    %c0_52 = arith.constant 0 : index
    %43 = vector.load %arg2[%c0_49, %c1_50, %c0_51, %c0_52] : memref<1x9x9x4xf32, #tpu.memory_space<vmem>>, vector<1x8x8x4xf32>
    %44 = vector.shape_cast %43 : vector<1x8x8x4xf32> to vector<64x4xf32>
    %c7 = arith.constant 7 : index
    %c0_53 = arith.constant 0 : index
    %c0_54 = arith.constant 0 : index
    %45 = vector.load %arg5[%c7, %c0_53, %c0_54] : memref<9x4x128xf32, #tpu.memory_space<vmem>>, vector<1x4x128xf32>
    %46 = vector.shape_cast %45 : vector<1x4x128xf32> to vector<4x128xf32>
    %cst_55 = arith.constant dense<0.000000e+00> : vector<64x128xf32>
    %47 = tpu.matmul %44, %46, %cst_55 {dimension_numbers = #tpu.dot_dimension_numbers<[1], [0], [0], [1], [0, 0, 1, 1], [], []>, precision = #tpu.contract_precision<fp32>} : vector<64x4xf32>, vector<4x128xf32>, vector<64x128xf32> -> vector<64x128xf32>
    %48 = arith.addf %42, %47 : vector<64x128xf32>
    %c0_56 = arith.constant 0 : index
    %c1_57 = arith.constant 1 : index
    %c1_58 = arith.constant 1 : index
    %c0_59 = arith.constant 0 : index
    %49 = vector.load %arg1[%c0_56, %c1_57, %c1_58, %c0_59] : memref<1x9x9x4xf32, #tpu.memory_space<vmem>>, vector<1x8x8x4xf32>
    %50 = vector.shape_cast %49 : vector<1x8x8x4xf32> to vector<64x4xf32>
    %c8 = arith.constant 8 : index
    %c0_60 = arith.constant 0 : index
    %c0_61 = arith.constant 0 : index
    %51 = vector.load %arg5[%c8, %c0_60, %c0_61] : memref<9x4x128xf32, #tpu.memory_space<vmem>>, vector<1x4x128xf32>
    %52 = vector.shape_cast %51 : vector<1x4x128xf32> to vector<4x128xf32>
    %cst_62 = arith.constant dense<0.000000e+00> : vector<64x128xf32>
    %53 = tpu.matmul %50, %52, %cst_62 {dimension_numbers = #tpu.dot_dimension_numbers<[1], [0], [0], [1], [0, 0, 1, 1], [], []>, precision = #tpu.contract_precision<fp32>} : vector<64x4xf32>, vector<4x128xf32>, vector<64x128xf32> -> vector<64x128xf32>
    %54 = arith.addf %48, %53 : vector<64x128xf32>
    %55 = vector.shape_cast %54 : vector<64x128xf32> to vector<1x8x8x128xf32>
    %c0_63 = arith.constant 0 : index
    %c0_64 = arith.constant 0 : index
    %c0_65 = arith.constant 0 : index
    %c0_66 = arith.constant 0 : index
    %56 = vector.load %arg6[%c0_63, %c0_64, %c0_65, %c0_66] : memref<1x8x8x128xf32, #tpu.memory_space<vmem>>, vector<1x8x8x128xf32>
    tpu.vector_store %arg6[%c0_63, %c0_64, %c0_65, %c0_66], %55 {strides = array<i32>} : memref<1x8x8x128xf32, #tpu.memory_space<vmem>>, vector<1x8x8x128xf32>,
    %cst_67 = arith.constant dense<0.000000e+00> : vector<128xf32>
    %57 = vector.multi_reduction <add>, %54, %cst_67 [0] : vector<64x128xf32> to vector<128xf32>
    %58 = vector.shape_cast %57 : vector<128xf32> to vector<1x128xf32>
    %c0_68 = arith.constant 0 : index
    %c0_69 = arith.constant 0 : index
    %c0_70 = arith.constant 0 : index
    %59 = vector.load %arg7[%c0_68, %c0_69, %c0_70] : memref<1x2x128xf32, #tpu.memory_space<vmem>>, vector<1x1x128xf32>
    %60 = vector.shape_cast %59 : vector<1x1x128xf32> to vector<1x128xf32>
    %61 = vector.shape_cast %58 : vector<1x128xf32> to vector<1x1x128xf32>
    tpu.vector_store %arg7[%c0_68, %c0_69, %c0_70], %61 {strides = array<i32>} : memref<1x2x128xf32, #tpu.memory_space<vmem>>, vector<1x1x128xf32>,
    %62 = arith.mulf %54, %54 : vector<64x128xf32>
    %cst_71 = arith.constant dense<0.000000e+00> : vector<128xf32>
    %63 = vector.multi_reduction <add>, %62, %cst_71 [0] : vector<64x128xf32> to vector<128xf32>
    %64 = vector.shape_cast %63 : vector<128xf32> to vector<1x128xf32>
    %c0_72 = arith.constant 0 : index
    %c1_73 = arith.constant 1 : index
    %c0_74 = arith.constant 0 : index
    %65 = vector.load %arg7[%c0_72, %c1_73, %c0_74] : memref<1x2x128xf32, #tpu.memory_space<vmem>>, vector<1x1x128xf32>
    %66 = vector.shape_cast %65 : vector<1x1x128xf32> to vector<1x128xf32>
    %67 = vector.shape_cast %64 : vector<1x128xf32> to vector<1x1x128xf32>
    tpu.vector_store %arg7[%c0_72, %c1_73, %c0_74], %67 {strides = array<i32>} : memref<1x2x128xf32, #tpu.memory_space<vmem>>, vector<1x1x128xf32>,
    return
  }
  func.func @transform_0(%arg0: i32) -> (i32, i32, i32, i32) {
    %c0_i32 = arith.constant 0 : i32
    %c0_i32_0 = arith.constant 0 : i32
    %c0_i32_1 = arith.constant 0 : i32
    %c0_i32_2 = arith.constant 0 : i32
    return %arg0, %c0_i32, %c0_i32_0, %c0_i32_1 : i32, i32, i32, i32
  }
  func.func @transform_1(%arg0: i32) -> (i32, i32, i32, i32) {
    %c0_i32 = arith.constant 0 : i32
    %c0_i32_0 = arith.constant 0 : i32
    %c0_i32_1 = arith.constant 0 : i32
    %c0_i32_2 = arith.constant 0 : i32
    return %arg0, %c0_i32, %c0_i32_0, %c0_i32_1 : i32, i32, i32, i32
  }
  func.func @transform_2(%arg0: i32) -> (i32, i32, i32, i32) {
    %c0_i32 = arith.constant 0 : i32
    %c0_i32_0 = arith.constant 0 : i32
    %c0_i32_1 = arith.constant 0 : i32
    %c0_i32_2 = arith.constant 0 : i32
    return %arg0, %c0_i32, %c0_i32_0, %c0_i32_1 : i32, i32, i32, i32
  }
  func.func @transform_3(%arg0: i32) -> (i32, i32, i32, i32) {
    %c0_i32 = arith.constant 0 : i32
    %c0_i32_0 = arith.constant 0 : i32
    %c0_i32_1 = arith.constant 0 : i32
    %c0_i32_2 = arith.constant 0 : i32
    return %arg0, %c0_i32, %c0_i32_0, %c0_i32_1 : i32, i32, i32, i32
  }
  func.func @transform_4(%arg0: i32) -> (i32, i32, i32) {
    %c0_i32 = arith.constant 0 : i32
    %c0_i32_0 = arith.constant 0 : i32
    %c0_i32_1 = arith.constant 0 : i32
    %c0_i32_2 = arith.constant 0 : i32
    return %c0_i32, %c0_i32_0, %c0_i32_1 : i32, i32, i32
  }
  func.func @transform_5(%arg0: i32) -> (i32, i32, i32, i32) {
    %c0_i32 = arith.constant 0 : i32
    %c0_i32_0 = arith.constant 0 : i32
    %c0_i32_1 = arith.constant 0 : i32
    %c0_i32_2 = arith.constant 0 : i32
    return %arg0, %c0_i32, %c0_i32_0, %c0_i32_1 : i32, i32, i32, i32
  }
  func.func @transform_6(%arg0: i32) -> (i32, i32, i32) {
    %c0_i32 = arith.constant 0 : i32
    %c0_i32_0 = arith.constant 0 : i32
    %c0_i32_1 = arith.constant 0 : i32
    return %arg0, %c0_i32, %c0_i32_0 : i32, i32, i32
  }
}

</mosaic_0001>

<llo_original>
// kernel: tpu_custom_call.1
$region0: #{tpu_custom_call.1}
  #allocation0 [shape = 'u32[]', space=smem, size = 0x4, offset = 0x4, fixed_abs, tag = 'smem constant byte address 0x4 - core index']
  #allocation1 [shape = 'u32[144,128]{1,0:T(1,128)}', space=vmem, size = 0x12000, scoped, tag = 'internal scratch']
  %s0 = inlined_call_operand.vmem [shape: f32[2,9,9,4], index: 0, kind: input, shape index: {}]
  %s1 = inlined_call_operand.vmem [shape: f32[2,9,9,4], index: 1, kind: input, shape index: {}]
  %s2 = inlined_call_operand.vmem [shape: f32[2,9,9,4], index: 2, kind: input, shape index: {}]
  %s3 = inlined_call_operand.vmem [shape: f32[2,9,9,4], index: 3, kind: input, shape index: {}]
  %s4 = inlined_call_operand.vmem [shape: f32[9,4,128], index: 4, kind: input, shape index: {}]
  %s5 = inlined_call_operand.hbm [shape: f32[2,8,8,128], index: 5, kind: output, shape index: {0}]
  %s6 = inlined_call_operand.hbm [shape: f32[2,2,128], index: 6, kind: output, shape index: {1}]
  %7 = xla_tuple %s5, %s6
  %s8 = sld [smem:[#allocation0]]
  $region61: #{tpu_custom_call.1} parent=0
    _
  %s10 = ssub.s32 1, %s8
  %s11 = scalar_select 0, %s10, %s8
  $region1: #{tpu_custom_call.1} parent=0
    #allocation2 [shape = 'u8[65536]{0}', space=vmem, size = 0x10000, scoped, tag = 'output window, operand 0']
    #allocation3 [shape = 's32[2]{0}', space=sflag, size = 0x8, scoped, tag = 'scoped memory for tpu_custom_call.1']
    #allocation4 [shape = 'u8[2048]{0}', space=vmem, size = 0x800, scoped, tag = 'output window, operand 1']
    #allocation5 [shape = 's32[2]{0}', space=sflag, size = 0x8, scoped, tag = 'scoped memory for tpu_custom_call.1']
    %12 = vsyncpa [#allocation3], 0
    %s13 = scalar_lea.sflag [#allocation3], 1
    %14 = vsyncpa %s13, 0
    %15 = vsyncpa [#allocation5], 0
    %s16 = scalar_lea.sflag [#allocation5], 1
    %17 = vsyncpa %s16, 0
    loop: start=0, step=1, limit=4
    $region2: #{tpu_custom_call.1} parent=1 // loop_pre_header
      _
    $region3: #{tpu_custom_call.1} parent=1 // loop_header
      %s19 = sphi 0, %s23
      %p20 = scmp.ge.s32.totalorder %s19, 4
      %s29 = sphi 0, %s31
      %s32 = sphi 0, %s29
      %s33 = sphi 0, %s32
      %s49 = sphi 0, %s33
      %s55 = sphi 0, %s57
      %s58 = sphi 0, %s55
      %s59 = sphi 0, %s58
      %s75 = sphi 0, %s59
      %s81 = sphi 0, %s83
      %s84 = sphi 0, %s81
      %s85 = sphi 0, %s84
      %s101 = sphi 0, %s85
      %s107 = sphi 0, %s109
      %s110 = sphi 0, %s107
      %s111 = sphi 0, %s110
      %s127 = sphi 0, %s111
      %s131 = sphi 0, %s131
      %s133 = sphi 0, %s131
      %s134 = sphi 0, %s133
      %s148 = sphi 0, %s134
      %s154 = sphi 0, %s156
      %s157 = sphi 0, %s154
      %s158 = sphi 0, %s157
      %s174 = sphi 0, %s158
      %s180 = sphi 0, %s182
      %s183 = sphi 0, %s180
      %s184 = sphi 0, %s183
      %s200 = sphi 0, %s184
    $region4: #{tpu_custom_call.1} parent=1 // loop_header_branch
      %22 = sbr.rel (%p20) target = $region8
    $region5: #{tpu_custom_call.1} parent=1 // loop_body
      %s24 = ssub.s32 %s19, 1
      %s25 = ssub.s32 %s19, 2
      %s26 = sadd.s32 %s19, 1
      %s27 = ssub.s32 %s19, %s26
      %p28 = scmp.eq.s32.totalorder %s27, 0
      %s30 = sadd.s32 %s29, 1
      %s31 = scalar_select %p28, %s29, %s30
      %p34 = pneg %p28
      %p35 = scmp.eq.s32.totalorder %s19, 1
      %p36 = por %p34, %p35
      %p37 = scmp.ne.s32.totalorder %s29, %s32
      %p38 = scmp.eq.s32.totalorder %s19, 0
      %p39 = por %p37, %p38
      %p40 = scmp.ne.s32.totalorder %s29, %s32
      %p41 = scmp.eq.s32.totalorder %s24, 1
      %p42 = por %p40, %p41
      %p43 = scmp.ne.s32.totalorder %s32, %s33
      %p44 = scmp.eq.s32.totalorder %s24, 0
      %p45 = por %p43, %p44
      %p46 = scmp.ne.s32.totalorder %s32, %s33
      %p47 = scmp.eq.s32.totalorder %s25, 1
      %p48 = por %p46, %p47
      %p50 = scmp.ne.s32.totalorder %s33, %s49
      %p51 = scmp.eq.s32.totalorder %s25, 0
      %p52 = por %p50, %p51
      %s53 = ssub.s32 %s19, %s26
      %p54 = scmp.eq.s32.totalorder %s53, 0
      %s56 = sadd.s32 %s55, 1
      %s57 = scalar_select %p54, %s55, %s56
      %p60 = pneg %p54
      %p61 = scmp.eq.s32.totalorder %s19, 1
      %p62 = por %p60, %p61
      %p63 = scmp.ne.s32.totalorder %s55, %s58
      %p64 = scmp.eq.s32.totalorder %s19, 0
      %p65 = por %p63, %p64
      %p66 = scmp.ne.s32.totalorder %s55, %s58
      %p67 = scmp.eq.s32.totalorder %s24, 1
      %p68 = por %p66, %p67
      %p69 = scmp.ne.s32.totalorder %s58, %s59
      %p70 = scmp.eq.s32.totalorder %s24, 0
      %p71 = por %p69, %p70
      %p72 = scmp.ne.s32.totalorder %s58, %s59
      %p73 = scmp.eq.s32.totalorder %s25, 1
      %p74 = por %p72, %p73
      %p76 = scmp.ne.s32.totalorder %s59, %s75
      %p77 = scmp.eq.s32.totalorder %s25, 0
      %p78 = por %p76, %p77
      %s79 = ssub.s32 %s19, %s26
      %p80 = scmp.eq.s32.totalorder %s79, 0
      %s82 = sadd.s32 %s81, 1
      %s83 = scalar_select %p80, %s81, %s82
      %p86 = pneg %p80
      %p87 = scmp.eq.s32.totalorder %s19, 1
      %p88 = por %p86, %p87
      %p89 = scmp.ne.s32.totalorder %s81, %s84
      %p90 = scmp.eq.s32.totalorder %s19, 0
      %p91 = por %p89, %p90
      %p92 = scmp.ne.s32.totalorder %s81, %s84
      %p93 = scmp.eq.s32.totalorder %s24, 1
      %p94 = por %p92, %p93
      %p95 = scmp.ne.s32.totalorder %s84, %s85
      %p96 = scmp.eq.s32.totalorder %s24, 0
      %p97 = por %p95, %p96
      %p98 = scmp.ne.s32.totalorder %s84, %s85
      %p99 = scmp.eq.s32.totalorder %s25, 1
      %p100 = por %p98, %p99
      %p102 = scmp.ne.s32.totalorder %s85, %s101
      %p103 = scmp.eq.s32.totalorder %s25, 0
      %p104 = por %p102, %p103
      %s105 = ssub.s32 %s19, %s26
      %p106 = scmp.eq.s32.totalorder %s105, 0
      %s108 = sadd.s32 %s107, 1
      %s109 = scalar_select %p106, %s107, %s108
      %p112 = pneg %p106
      %p113 = scmp.eq.s32.totalorder %s19, 1
      %p114 = por %p112, %p113
      %p115 = scmp.ne.s32.totalorder %s107, %s110
      %p116 = scmp.eq.s32.totalorder %s19, 0
      %p117 = por %p115, %p116
      %p118 = scmp.ne.s32.totalorder %s107, %s110
      %p119 = scmp.eq.s32.totalorder %s24, 1
      %p120 = por %p118, %p119
      %p121 = scmp.ne.s32.totalorder %s110, %s111
      %p122 = scmp.eq.s32.totalorder %s24, 0
      %p123 = por %p121, %p122
      %p124 = scmp.ne.s32.totalorder %s110, %s111
      %p125 = scmp.eq.s32.totalorder %s25, 1
      %p126 = por %p124, %p125
      %p128 = scmp.ne.s32.totalorder %s111, %s127
      %p129 = scmp.eq.s32.totalorder %s25, 0
      %p130 = por %p128, %p129
      %s132 = sadd.s32 %s131, 1
      %p135 = scmp.eq.s32.totalorder %s19, 1
      %p136 = scmp.ne.s32.totalorder %s131, %s133
      %p137 = scmp.eq.s32.totalorder %s19, 0
      %p138 = por %p136, %p137
      %p139 = scmp.ne.s32.totalorder %s131, %s133
      %p140 = scmp.eq.s32.totalorder %s24, 1
      %p141 = por %p139, %p140
      %p142 = scmp.ne.s32.totalorder %s133, %s134
      %p143 = scmp.eq.s32.totalorder %s24, 0
      %p144 = por %p142, %p143
      %p145 = scmp.ne.s32.totalorder %s133, %s134
      %p146 = scmp.eq.s32.totalorder %s25, 1
      %p147 = por %p145, %p146
      %p149 = scmp.ne.s32.totalorder %s134, %s148
      %p150 = scmp.eq.s32.totalorder %s25, 0
      %p151 = por %p149, %p150
      %s152 = ssub.s32 %s19, %s26
      %p153 = scmp.eq.s32.totalorder %s152, 0
      %s155 = sadd.s32 %s154, 1
      %s156 = scalar_select %p153, %s154, %s155
      %p159 = pneg %p153
      %p160 = scmp.eq.s32.totalorder %s19, 1
      %p161 = por %p159, %p160
      %p162 = scmp.ne.s32.totalorder %s154, %s157
      %p163 = scmp.eq.s32.totalorder %s19, 0
      %p164 = por %p162, %p163
      %p165 = scmp.ne.s32.totalorder %s154, %s157
      %p166 = scmp.eq.s32.totalorder %s24, 1
      %p167 = por %p165, %p166
      %p168 = scmp.ne.s32.totalorder %s157, %s158
      %p169 = scmp.eq.s32.totalorder %s24, 0
      %p170 = por %p168, %p169
      %p171 = scmp.ne.s32.totalorder %s157, %s158
      %p172 = scmp.eq.s32.totalorder %s25, 1
      %p173 = por %p171, %p172
      %p175 = scmp.ne.s32.totalorder %s158, %s174
      %p176 = scmp.eq.s32.totalorder %s25, 0
      %p177 = por %p175, %p176
      %s178 = ssub.s32 %s19, %s26
      %p179 = scmp.eq.s32.totalorder %s178, 0
      %s181 = sadd.s32 %s180, 1
      %s182 = scalar_select %p179, %s180, %s181
      %p185 = pneg %p179
      %p186 = scmp.eq.s32.totalorder %s19, 1
      %p187 = por %p185, %p186
      %p188 = scmp.ne.s32.totalorder %s180, %s183
      %p189 = scmp.eq.s32.totalorder %s19, 0
      %p190 = por %p188, %p189
      %p191 = scmp.ne.s32.totalorder %s180, %s183
      %p192 = scmp.eq.s32.totalorder %s24, 1
      %p193 = por %p191, %p192
      %p194 = scmp.ne.s32.totalorder %s183, %s184
      %p195 = scmp.eq.s32.totalorder %s24, 0
      %p196 = por %p194, %p195
      %p197 = scmp.ne.s32.totalorder %s183, %s184
      %p198 = scmp.eq.s32.totalorder %s25, 1
      %p199 = por %p197, %p198
      %p201 = scmp.ne.s32.totalorder %s184, %s200
      %p202 = scmp.eq.s32.totalorder %s25, 0
      %p203 = por %p201, %p202
      %p204 = scmp.le.s32.totalorder 1, %s19
      %p205 = scmp.lt.s32.totalorder %s19, 3
      %p206 = pnand %p204, %p205
      %p207 = pneg %p206
      // Predicated region
      $region9: #{tpu_custom_call.1} parent=5 // pred_check
        _
      $region10: #{tpu_custom_call.1} parent=5 // pred_check_branch
        %209 = sbr.rel (%p206) target = $region12
      $region11: #{tpu_custom_call.1} parent=5 // pred_region
        %s210 = ssub.s32 %s19, 1
        // Predicated region
        $region13: #{tpu_custom_call.1} parent=11 // pred_check
          %p211 = pneg %p144
        $region14: #{tpu_custom_call.1} parent=11 // pred_check_branch
          %213 = sbr.rel (%p211) target = $region16
        $region15: #{tpu_custom_call.1} parent=11 // pred_region
          _
        $region16: #{tpu_custom_call.1} parent=11 // pred_fallthru
          _
      $region12: #{tpu_custom_call.1} parent=5 // pred_fallthru
        _
      %p214 = scmp.lt.s32.totalorder %s19, 2
      // Predicated region
      $region17: #{tpu_custom_call.1} parent=5 // pred_check
        %p215 = pneg %p214
      $region18: #{tpu_custom_call.1} parent=5 // pred_check_branch
        %217 = sbr.rel (%p215) target = $region20
      $region19: #{tpu_custom_call.1} parent=5 // pred_region
        // Predicated region
        $region21: #{tpu_custom_call.1} parent=19 // pred_check
          %p218 = pneg %p39
        $region22: #{tpu_custom_call.1} parent=19 // pred_check_branch
          %220 = sbr.rel (%p218) target = $region24
        $region23: #{tpu_custom_call.1} parent=19 // pred_region
          %p221 = scmp.lt.s32.totalorder %s19, 1
          %s222 = scalar_select %p221, %s19, 1
          %s223 = smul.addr %s222, 18
          %s224 = smul.addr %s223, 8
          %s225 = scalar_lea.vmem %s0, %s224
        $region24: #{tpu_custom_call.1} parent=19 // pred_fallthru
          _
        // Predicated region
        $region25: #{tpu_custom_call.1} parent=19 // pred_check
          %p226 = pneg %p65
        $region26: #{tpu_custom_call.1} parent=19 // pred_check_branch
          %228 = sbr.rel (%p226) target = $region28
        $region27: #{tpu_custom_call.1} parent=19 // pred_region
          %p229 = scmp.lt.s32.totalorder %s19, 1
          %s230 = scalar_select %p229, %s19, 1
          %s231 = smul.addr %s230, 18
          %s232 = smul.addr %s231, 8
          %s233 = scalar_lea.vmem %s1, %s232
        $region28: #{tpu_custom_call.1} parent=19 // pred_fallthru
          _
        // Predicated region
        $region29: #{tpu_custom_call.1} parent=19 // pred_check
          %p234 = pneg %p91
        $region30: #{tpu_custom_call.1} parent=19 // pred_check_branch
          %236 = sbr.rel (%p234) target = $region32
        $region31: #{tpu_custom_call.1} parent=19 // pred_region
          %p237 = scmp.lt.s32.totalorder %s19, 1
          %s238 = scalar_select %p237, %s19, 1
          %s239 = smul.addr %s238, 18
          %s240 = smul.addr %s239, 8
          %s241 = scalar_lea.vmem %s2, %s240
        $region32: #{tpu_custom_call.1} parent=19 // pred_fallthru
          _
        // Predicated region
        $region33: #{tpu_custom_call.1} parent=19 // pred_check
          %p242 = pneg %p117
        $region34: #{tpu_custom_call.1} parent=19 // pred_check_branch
          %244 = sbr.rel (%p242) target = $region36
        $region35: #{tpu_custom_call.1} parent=19 // pred_region
          %p245 = scmp.lt.s32.totalorder %s19, 1
          %s246 = scalar_select %p245, %s19, 1
          %s247 = smul.addr %s246, 18
          %s248 = smul.addr %s247, 8
          %s249 = scalar_lea.vmem %s3, %s248
        $region36: #{tpu_custom_call.1} parent=19 // pred_fallthru
          _
      $region20: #{tpu_custom_call.1} parent=5 // pred_fallthru
        _
      %p250 = scmp.le.s32.totalorder 1, %s19
      %p251 = scmp.lt.s32.totalorder %s19, 3
      %p252 = pnand %p250, %p251
      %p253 = pneg %p252
      // Predicated region
      $region37: #{tpu_custom_call.1} parent=5 // pred_check
        _
      $region38: #{tpu_custom_call.1} parent=5 // pred_check_branch
        %255 = sbr.rel (%p252) target = $region40
      $region39: #{tpu_custom_call.1} parent=5 // pred_region
        %s256 = ssub.s32 %s19, 1
        %p257 = scmp.lt.s32.totalorder %s24, 1
        %s258 = scalar_select %p257, %s24, 1
        %s259 = smul.addr %s258, 18
        %s260 = smul.addr %s259, 8
        %s261 = scalar_lea.vmem %s0, %s260
        %p262 = pneg %p45
        %p263 = pneg %p42
        %p264 = scmp.lt.s32.totalorder %s24, 1
        %s265 = scalar_select %p264, %s24, 1
        %s266 = smul.addr %s265, 18
        %s267 = smul.addr %s266, 8
        %s268 = scalar_lea.vmem %s1, %s267
        %p269 = pneg %p71
        %p270 = pneg %p68
        %p271 = scmp.lt.s32.totalorder %s24, 1
        %s272 = scalar_select %p271, %s24, 1
        %s273 = smul.addr %s272, 18
        %s274 = smul.addr %s273, 8
        %s275 = scalar_lea.vmem %s2, %s274
        %p276 = pneg %p97
        %p277 = pneg %p94
        %p278 = scmp.lt.s32.totalorder %s24, 1
        %s279 = scalar_select %p278, %s24, 1
        %s280 = smul.addr %s279, 18
        %s281 = smul.addr %s280, 8
        %s282 = scalar_lea.vmem %s3, %s281
        %p283 = pneg %p123
        %p284 = pneg %p120
        %p285 = pneg %p144
        %p286 = pneg %p141
        %p287 = pneg %p170
        %p288 = pneg %p167
        %s289 = sand.u32 %s157, 1
        %s290 = scalar_lea.sflag [#allocation3], %s289
        %s291 = sand.u32 %s157, 1
        %s292 = smul.addr %s291, 64
        %s293 = scalar_lea.vmem [#allocation2], %s292
        %p294 = pneg %p196
        %p295 = pneg %p193
        %s296 = sand.u32 %s183, 1
        %s297 = scalar_lea.sflag [#allocation5], %s296
        %s298 = sand.u32 %s183, 1
        %s299 = smul.addr %s298, 2
        %s300 = scalar_lea.vmem [#allocation4], %s299
        %p301 = scmp.lt.s32.totalorder %s24, 1
        %s302 = scalar_select %p301, %s24, 1
        %s303 = smul.addr %s302, 18
        %s304 = smul.addr %s303, 8
        %s305 = scalar_lea.vmem %s0, %s304
        %p306 = scmp.lt.s32.totalorder %s24, 1
        %s307 = scalar_select %p306, %s24, 1
        %s308 = smul.addr %s307, 18
        %s309 = smul.addr %s308, 8
        %s310 = scalar_lea.vmem %s1, %s309
        %p311 = scmp.lt.s32.totalorder %s24, 1
        %s312 = scalar_select %p311, %s24, 1
        %s313 = smul.addr %s312, 18
        %s314 = smul.addr %s313, 8
        %s315 = scalar_lea.vmem %s2, %s314
        %p316 = scmp.lt.s32.totalorder %s24, 1
        %s317 = scalar_select %p316, %s24, 1
        %s318 = smul.addr %s317, 18
        %s319 = smul.addr %s318, 8
        %s320 = scalar_lea.vmem %s3, %s319
        %v321 = vld [vmem:[%s305] sm:$0xff]
        %v322 = vld [vmem:[%s305 + $0x10] sm:$0xff]
        %v323 = vld [vmem:[%s305 + $0x20] sm:$0xff]
        %v324 = vld [vmem:[%s305 + $0x30] sm:$0xff]
        %v325 = vld [vmem:[%s305 + $0x40] sm:$0xff]
        %v326 = vld [vmem:[%s305 + $0x50] sm:$0xff]
        %v327 = vld [vmem:[%s305 + $0x60] sm:$0xff]
        %v328 = vld [vmem:[%s305 + $0x70] sm:$0xff]
        %v329 = vld [vmem:[%s4] sm:$0xf]
        %v330 = vld [vmem:[%s310] sm:$0xff]
        %v331 = vld [vmem:[%s310 + $0x10] sm:$0xff]
        %v332 = vld [vmem:[%s310 + $0x20] sm:$0xff]
        %v333 = vld [vmem:[%s310 + $0x30] sm:$0xff]
        %v334 = vld [vmem:[%s310 + $0x40] sm:$0xff]
        %v335 = vld [vmem:[%s310 + $0x50] sm:$0xff]
        %v336 = vld [vmem:[%s310 + $0x60] sm:$0xff]
        %v337 = vld [vmem:[%s310 + $0x70] sm:$0xff]
        %s338 = scalar_lea.vmem %s4, 4
        %v339 = vld [vmem:[%s338] sm:$0xf]
        %vm340 = vcmask 31744
        %v342 = vsel %vm340, %v330, 0
        %v345 = vsel %vm340, %v331, 0
        %v348 = vsel %vm340, %v332, 0
        %v351 = vsel %vm340, %v333, 0
        %v354 = vsel %vm340, %v334, 0
        %v357 = vsel %vm340, %v335, 0
        %v360 = vsel %vm340, %v336, 0
        %v363 = vsel %vm340, %v337, 0
        %vm365 = vcmask 1043456
        %v367 = vsel %vm365, %v339, 0
        %369 = vmatprep.subr.mxu0 0.0
        %370 = vmatpush1.msra.mxu0 0.0
        %371 = vmatprep.subr.mxu0 0.0
        %372 = vmatpush1.msra.mxu0 0.0
        %373 = vmatprep.subr.mxu0 0.0
        %374 = vmatpush1.msra.mxu0 0.0
        %375 = vmatprep.subr.mxu0 0.0
        %376 = vmatpush1.msra.mxu0 0.0
        %377 = vmatprep.subr.mxu0 0.0
        %378 = vmatpush1.msra.mxu0 0.0
        %379 = vmatprep.subr.mxu0 0.0
        %380 = vmatpush1.msra.mxu0 0.0
        %381 = vmatprep.subr.mxu0 0.0
        %382 = vmatpush1.msra.mxu0 0.0
        %383 = vmatprep.subr.mxu0 0.0
        %384 = vmatpush1.msra.mxu0 0.0
        %385 = vmatprep.subr.mxu0 0.0
        %386 = vmatpush1.msra.mxu0 0.0
        %387 = vmatprep.subr.mxu0 0.0
        %388 = vmatpush1.msra.mxu0 0.0
        %389 = vmatprep.subr.mxu0 0.0
        %390 = vmatpush1.msra.mxu0 0.0
        %391 = vmatprep.subr.mxu0 0.0
        %392 = vmatpush1.msra.mxu0 0.0
        %393 = vmatprep.subr.mxu0 0.0
        %394 = vmatpush1.msra.mxu0 0.0
        %395 = vmatprep.subr.mxu0 0.0
        %396 = vmatpush1.msra.mxu0 0.0
        %397 = vmatprep.subr.mxu0 0.0
        %398 = vmatpush1.msra.mxu0 0.0
        %399 = vmatprep.subr.mxu0 0.0
        %v400 = vand.u32 %v367, 4294901760
        %401 = vmatpush1.msra.mxu0 %v400
        %402 = vmatprep.subr.mxu0 0.0
        %403 = vmatpush2.msra.mxu0 0.0
        %404 = vmatprep.subr.mxu0 0.0
        %405 = vmatpush2.msra.mxu0 0.0
        %406 = vmatprep.subr.mxu0 0.0
        %407 = vmatpush2.msra.mxu0 0.0
        %408 = vmatprep.subr.mxu0 0.0
        %409 = vmatpush2.msra.mxu0 0.0
        %410 = vmatprep.subr.mxu0 0.0
        %411 = vmatpush2.msra.mxu0 0.0
        %412 = vmatprep.subr.mxu0 0.0
        %413 = vmatpush2.msra.mxu0 0.0
        %414 = vmatprep.subr.mxu0 0.0
        %415 = vmatpush2.msra.mxu0 0.0
        %416 = vmatprep.subr.mxu0 0.0
        %417 = vmatpush2.msra.mxu0 0.0
        %418 = vmatprep.subr.mxu0 0.0
        %419 = vmatpush2.msra.mxu0 0.0
        %420 = vmatprep.subr.mxu0 0.0
        %421 = vmatpush2.msra.mxu0 0.0
        %422 = vmatprep.subr.mxu0 0.0
        %423 = vmatpush2.msra.mxu0 0.0
        %424 = vmatprep.subr.mxu0 0.0
        %425 = vmatpush2.msra.mxu0 0.0
        %426 = vmatprep.subr.mxu0 0.0
        %427 = vmatpush2.msra.mxu0 0.0
        %428 = vmatprep.subr.mxu0 0.0
        %429 = vmatpush2.msra.mxu0 0.0
        %430 = vmatprep.subr.mxu0 0.0
        %431 = vmatpush2.msra.mxu0 0.0
        %432 = vmatprep.subr.mxu0 0.0
        %433 = vmatpush2.msra.mxu0 0.0
        %434 = vmatprep.mubr.f32.mxu0 0.0
        %v435 = vand.u32 %v342, 4294901760
        %v436 = vsub.f32 %v342, %v435
        %v437 = vand.u32 %v436, 4294901760
        %v438 = vsub.f32 %v436, %v437
        %v439 = vand.u32 %v438, 4294901760
        %440 = vmatmul.mubr.f32.gmra.mxu0 %v439
        %v441 = vpop.f32.mrf.mxu0
        %v442 = vadd.f32 0.0, %v441
        %v443 = vpop.f32.mrf.mxu0
        %444 = vmatprep.mubr.f32.mxu0 0.0
        %v445 = vand.u32 %v345, 4294901760
        %v446 = vsub.f32 %v345, %v445
        %v447 = vand.u32 %v446, 4294901760
        %v448 = vsub.f32 %v446, %v447
        %v449 = vand.u32 %v448, 4294901760
        %450 = vmatmul.mubr.f32.gmra.mxu0 %v449
        %v451 = vpop.f32.mrf.mxu0
        %v452 = vadd.f32 0.0, %v451
        %v453 = vpop.f32.mrf.mxu0
        %454 = vmatprep.mubr.f32.mxu0 0.0
        %v455 = vand.u32 %v348, 4294901760
        %v456 = vsub.f32 %v348, %v455
        %v457 = vand.u32 %v456, 4294901760
        %v458 = vsub.f32 %v456, %v457
        %v459 = vand.u32 %v458, 4294901760
        %460 = vmatmul.mubr.f32.gmra.mxu0 %v459
        %v461 = vpop.f32.mrf.mxu0
        %v462 = vadd.f32 0.0, %v461
        %v463 = vpop.f32.mrf.mxu0
        %464 = vmatprep.mubr.f32.mxu0 0.0
        %v465 = vand.u32 %v351, 4294901760
        %v466 = vsub.f32 %v351, %v465
        %v467 = vand.u32 %v466, 4294901760
        %v468 = vsub.f32 %v466, %v467
        %v469 = vand.u32 %v468, 4294901760
        %470 = vmatmul.mubr.f32.gmra.mxu0 %v469
        %v471 = vpop.f32.mrf.mxu0
        %v472 = vadd.f32 0.0, %v471
        %v473 = vpop.f32.mrf.mxu0
        %474 = vmatprep.mubr.f32.mxu0 0.0
        %v475 = vand.u32 %v354, 4294901760
        %v476 = vsub.f32 %v354, %v475
        %v477 = vand.u32 %v476, 4294901760
        %v478 = vsub.f32 %v476, %v477
        %v479 = vand.u32 %v478, 4294901760
        %480 = vmatmul.mubr.f32.gmra.mxu0 %v479
        %v481 = vpop.f32.mrf.mxu0
        %v482 = vadd.f32 0.0, %v481
        %v483 = vpop.f32.mrf.mxu0
        %484 = vmatprep.mubr.f32.mxu0 0.0
        %v485 = vand.u32 %v357, 4294901760
        %v486 = vsub.f32 %v357, %v485
        %v487 = vand.u32 %v486, 4294901760
        %v488 = vsub.f32 %v486, %v487
        %v489 = vand.u32 %v488, 4294901760
        %490 = vmatmul.mubr.f32.gmra.mxu0 %v489
        %v491 = vpop.f32.mrf.mxu0
        %v492 = vadd.f32 0.0, %v491
        %v493 = vpop.f32.mrf.mxu0
        %494 = vmatprep.mubr.f32.mxu0 0.0
        %v495 = vand.u32 %v360, 4294901760
        %v496 = vsub.f32 %v360, %v495
        %v497 = vand.u32 %v496, 4294901760
        %v498 = vsub.f32 %v496, %v497
        %v499 = vand.u32 %v498, 4294901760
        %500 = vmatmul.mubr.f32.gmra.mxu0 %v499
        %v501 = vpop.f32.mrf.mxu0
        %v502 = vadd.f32 0.0, %v501
        %v503 = vpop.f32.mrf.mxu0
        %504 = vmatprep.mubr.f32.mxu0 0.0
        %v505 = vand.u32 %v363, 4294901760
        %v506 = vsub.f32 %v363, %v505
        %v507 = vand.u32 %v506, 4294901760
        %v508 = vsub.f32 %v506, %v507
        %v509 = vand.u32 %v508, 4294901760
        %510 = vmatmul.mubr.f32.gmra.mxu0 %v509
        %v511 = vpop.f32.mrf.mxu0
        %v512 = vadd.f32 0.0, %v511
        %v513 = vpop.f32.mrf.mxu0
        %514 = vdwg.mxu0
        %515 = vmatprep.subr.mxu0 0.0
        %516 = vmatpush1.msra.mxu0 0.0
        %517 = vmatprep.subr.mxu0 0.0
        %518 = vmatpush1.msra.mxu0 0.0
        %519 = vmatprep.subr.mxu0 0.0
        %520 = vmatpush1.msra.mxu0 0.0
        %521 = vmatprep.subr.mxu0 0.0
        %522 = vmatpush1.msra.mxu0 0.0
        %523 = vmatprep.subr.mxu0 0.0
        %524 = vmatpush1.msra.mxu0 0.0
        %525 = vmatprep.subr.mxu0 0.0
        %526 = vmatpush1.msra.mxu0 0.0
        %527 = vmatprep.subr.mxu0 0.0
        %528 = vmatpush1.msra.mxu0 0.0
        %529 = vmatprep.subr.mxu0 0.0
        %530 = vmatpush1.msra.mxu0 0.0
        %531 = vmatprep.subr.mxu0 0.0
        %532 = vmatpush1.msra.mxu0 0.0
        %533 = vmatprep.subr.mxu0 0.0
        %534 = vmatpush1.msra.mxu0 0.0
        %535 = vmatprep.subr.mxu0 0.0
        %536 = vmatpush1.msra.mxu0 0.0
        %537 = vmatprep.subr.mxu0 0.0
        %538 = vmatpush1.msra.mxu0 0.0
        %539 = vmatprep.subr.mxu0 0.0
        %540 = vmatpush1.msra.mxu0 0.0
        %541 = vmatprep.subr.mxu0 0.0
        %542 = vmatpush1.msra.mxu0 0.0
        %543 = vmatprep.subr.mxu0 0.0
        %544 = vmatpush1.msra.mxu0 0.0
        %545 = vmatprep.subr.mxu0 0.0
        %v546 = vand.u32 %v367, 4294901760
        %v547 = vsub.f32 %v367, %v546
        %v548 = vand.u32 %v547, 4294901760
        %v549 = vsub.f32 %v547, %v548
        %v550 = vand.u32 %v549, 4294901760
        %551 = vmatpush1.msra.mxu0 %v550
        %552 = vmatprep.subr.mxu0 0.0
        %553 = vmatpush2.msra.mxu0 0.0
        %554 = vmatprep.subr.mxu0 0.0
        %555 = vmatpush2.msra.mxu0 0.0
        %556 = vmatprep.subr.mxu0 0.0
        %557 = vmatpush2.msra.mxu0 0.0
        %558 = vmatprep.subr.mxu0 0.0
        %559 = vmatpush2.msra.mxu0 0.0
        %560 = vmatprep.subr.mxu0 0.0
        %561 = vmatpush2.msra.mxu0 0.0
        %562 = vmatprep.subr.mxu0 0.0
        %563 = vmatpush2.msra.mxu0 0.0
        %564 = vmatprep.subr.mxu0 0.0
        %565 = vmatpush2.msra.mxu0 0.0
        %566 = vmatprep.subr.mxu0 0.0
        %567 = vmatpush2.msra.mxu0 0.0
        %568 = vmatprep.subr.mxu0 0.0
        %569 = vmatpush2.msra.mxu0 0.0
        %570 = vmatprep.subr.mxu0 0.0
        %571 = vmatpush2.msra.mxu0 0.0
        %572 = vmatprep.subr.mxu0 0.0
        %573 = vmatpush2.msra.mxu0 0.0
        %574 = vmatprep.subr.mxu0 0.0
        %575 = vmatpush2.msra.mxu0 0.0
        %576 = vmatprep.subr.mxu0 0.0
        %577 = vmatpush2.msra.mxu0 0.0
        %578 = vmatprep.subr.mxu0 0.0
        %579 = vmatpush2.msra.mxu0 0.0
        %580 = vmatprep.subr.mxu0 0.0
        %581 = vmatpush2.msra.mxu0 0.0
        %582 = vmatprep.subr.mxu0 0.0
        %583 = vmatpush2.msra.mxu0 0.0
        %584 = vmatprep.mubr.f32.mxu0 0.0
        %v585 = vand.u32 %v342, 4294901760
        %586 = vmatmul.mubr.f32.gmra.mxu0 %v585
        %v587 = vpop.f32.mrf.mxu0
        %v588 = vadd.f32 %v442, %v587
        %v589 = vpop.f32.mrf.mxu0
        %590 = vmatprep.mubr.f32.mxu0 0.0
        %v591 = vand.u32 %v345, 4294901760
        %592 = vmatmul.mubr.f32.gmra.mxu0 %v591
        %v593 = vpop.f32.mrf.mxu0
        %v594 = vadd.f32 %v452, %v593
        %v595 = vpop.f32.mrf.mxu0
        %596 = vmatprep.mubr.f32.mxu0 0.0
        %v597 = vand.u32 %v348, 4294901760
        %598 = vmatmul.mubr.f32.gmra.mxu0 %v597
        %v599 = vpop.f32.mrf.mxu0
        %v600 = vadd.f32 %v462, %v599
        %v601 = vpop.f32.mrf.mxu0
        %602 = vmatprep.mubr.f32.mxu0 0.0
        %v603 = vand.u32 %v351, 4294901760
        %604 = vmatmul.mubr.f32.gmra.mxu0 %v603
        %v605 = vpop.f32.mrf.mxu0
        %v606 = vadd.f32 %v472, %v605
        %v607 = vpop.f32.mrf.mxu0
        %608 = vmatprep.mubr.f32.mxu0 0.0
        %v609 = vand.u32 %v354, 4294901760
        %610 = vmatmul.mubr.f32.gmra.mxu0 %v609
        %v611 = vpop.f32.mrf.mxu0
        %v612 = vadd.f32 %v482, %v611
        %v613 = vpop.f32.mrf.mxu0
        %614 = vmatprep.mubr.f32.mxu0 0.0
        %v615 = vand.u32 %v357, 4294901760
        %616 = vmatmul.mubr.f32.gmra.mxu0 %v615
        %v617 = vpop.f32.mrf.mxu0
        %v618 = vadd.f32 %v492, %v617
        %v619 = vpop.f32.mrf.mxu0
        %620 = vmatprep.mubr.f32.mxu0 0.0
        %v621 = vand.u32 %v360, 4294901760
        %622 = vmatmul.mubr.f32.gmra.mxu0 %v621
        %v623 = vpop.f32.mrf.mxu0
        %v624 = vadd.f32 %v502, %v623
        %v625 = vpop.f32.mrf.mxu0
        %626 = vmatprep.mubr.f32.mxu0 0.0
        %v627 = vand.u32 %v363, 4294901760
        %628 = vmatmul.mubr.f32.gmra.mxu0 %v627
        %v629 = vpop.f32.mrf.mxu0
        %v630 = vadd.f32 %v512, %v629
        %v631 = vpop.f32.mrf.mxu0
        %632 = vdwg.mxu0
        %633 = vmatprep.subr.mxu0 0.0
        %634 = vmatpush1.msra.mxu0 0.0
        %635 = vmatprep.subr.mxu0 0.0
        %636 = vmatpush1.msra.mxu0 0.0
        %637 = vmatprep.subr.mxu0 0.0
        %638 = vmatpush1.msra.mxu0 0.0
        %639 = vmatprep.subr.mxu0 0.0
        %640 = vmatpush1.msra.mxu0 0.0
        %641 = vmatprep.subr.mxu0 0.0
        %642 = vmatpush1.msra.mxu0 0.0
        %643 = vmatprep.subr.mxu0 0.0
        %644 = vmatpush1.msra.mxu0 0.0
        %645 = vmatprep.subr.mxu0 0.0
        %646 = vmatpush1.msra.mxu0 0.0
        %647 = vmatprep.subr.mxu0 0.0
        %648 = vmatpush1.msra.mxu0 0.0
        %649 = vmatprep.subr.mxu0 0.0
        %650 = vmatpush1.msra.mxu0 0.0
        %651 = vmatprep.subr.mxu0 0.0
        %652 = vmatpush1.msra.mxu0 0.0
        %653 = vmatprep.subr.mxu0 0.0
        %654 = vmatpush1.msra.mxu0 0.0
        %655 = vmatprep.subr.mxu0 0.0
        %656 = vmatpush1.msra.mxu0 0.0
        %657 = vmatprep.subr.mxu0 0.0
        %658 = vmatpush1.msra.mxu0 0.0
        %659 = vmatprep.subr.mxu0 0.0
        %660 = vmatpush1.msra.mxu0 0.0
        %661 = vmatprep.subr.mxu0 0.0
        %662 = vmatpush1.msra.mxu0 0.0
        %663 = vmatprep.subr.mxu0 0.0
        %v664 = vand.u32 %v367, 4294901760
        %v665 = vsub.f32 %v367, %v664
        %666 = vmatpush1.msra.mxu0 %v665
        %667 = vmatprep.subr.mxu0 0.0
        %668 = vmatpush2.msra.mxu0 0.0
        %669 = vmatprep.subr.mxu0 0.0
        %670 = vmatpush2.msra.mxu0 0.0
        %671 = vmatprep.subr.mxu0 0.0
        %672 = vmatpush2.msra.mxu0 0.0
        %673 = vmatprep.subr.mxu0 0.0
        %674 = vmatpush2.msra.mxu0 0.0
        %675 = vmatprep.subr.mxu0 0.0
        %676 = vmatpush2.msra.mxu0 0.0
        %677 = vmatprep.subr.mxu0 0.0
        %678 = vmatpush2.msra.mxu0 0.0
        %679 = vmatprep.subr.mxu0 0.0
        %680 = vmatpush2.msra.mxu0 0.0
        %681 = vmatprep.subr.mxu0 0.0
        %682 = vmatpush2.msra.mxu0 0.0
        %683 = vmatprep.subr.mxu0 0.0
        %684 = vmatpush2.msra.mxu0 0.0
        %685 = vmatprep.subr.mxu0 0.0
        %686 = vmatpush2.msra.mxu0 0.0
        %687 = vmatprep.subr.mxu0 0.0
        %688 = vmatpush2.msra.mxu0 0.0
        %689 = vmatprep.subr.mxu0 0.0
        %690 = vmatpush2.msra.mxu0 0.0
        %691 = vmatprep.subr.mxu0 0.0
        %692 = vmatpush2.msra.mxu0 0.0
        %693 = vmatprep.subr.mxu0 0.0
        %694 = vmatpush2.msra.mxu0 0.0
        %695 = vmatprep.subr.mxu0 0.0
        %696 = vmatpush2.msra.mxu0 0.0
        %697 = vmatprep.subr.mxu0 0.0
        %698 = vmatpush2.msra.mxu0 0.0
        %699 = vmatprep.mubr.f32.mxu0 0.0
        %v700 = vand.u32 %v342, 4294901760
        %v701 = vsub.f32 %v342, %v700
        %702 = vmatmul.mubr.f32.gmra.mxu0 %v701
        %v703 = vpop.f32.mrf.mxu0
        %v704 = vadd.f32 %v588, %v703
        %v705 = vpop.f32.mrf.mxu0
        %706 = vmatprep.mubr.f32.mxu0 0.0
        %v707 = vand.u32 %v345, 4294901760
        %v708 = vsub.f32 %v345, %v707
        %709 = vmatmul.mubr.f32.gmra.mxu0 %v708
        %v710 = vpop.f32.mrf.mxu0
        %v711 = vadd.f32 %v594, %v710
        %v712 = vpop.f32.mrf.mxu0
        %713 = vmatprep.mubr.f32.mxu0 0.0
        %v714 = vand.u32 %v348, 4294901760
        %v715 = vsub.f32 %v348, %v714
        %716 = vmatmul.mubr.f32.gmra.mxu0 %v715
        %v717 = vpop.f32.mrf.mxu0
        %v718 = vadd.f32 %v600, %v717
        %v719 = vpop.f32.mrf.mxu0
        %720 = vmatprep.mubr.f32.mxu0 0.0
        %v721 = vand.u32 %v351, 4294901760
        %v722 = vsub.f32 %v351, %v721
        %723 = vmatmul.mubr.f32.gmra.mxu0 %v722
        %v724 = vpop.f32.mrf.mxu0
        %v725 = vadd.f32 %v606, %v724
        %v726 = vpop.f32.mrf.mxu0
        %727 = vmatprep.mubr.f32.mxu0 0.0
        %v728 = vand.u32 %v354, 4294901760
        %v729 = vsub.f32 %v354, %v728
        %730 = vmatmul.mubr.f32.gmra.mxu0 %v729
        %v731 = vpop.f32.mrf.mxu0
        %v732 = vadd.f32 %v612, %v731
        %v733 = vpop.f32.mrf.mxu0
        %734 = vmatprep.mubr.f32.mxu0 0.0
        %v735 = vand.u32 %v357, 4294901760
        %v736 = vsub.f32 %v357, %v735
        %737 = vmatmul.mubr.f32.gmra.mxu0 %v736
        %v738 = vpop.f32.mrf.mxu0
        %v739 = vadd.f32 %v618, %v738
        %v740 = vpop.f32.mrf.mxu0
        %741 = vmatprep.mubr.f32.mxu0 0.0
        %v742 = vand.u32 %v360, 4294901760
        %v743 = vsub.f32 %v360, %v742
        %744 = vmatmul.mubr.f32.gmra.mxu0 %v743
        %v745 = vpop.f32.mrf.mxu0
        %v746 = vadd.f32 %v624, %v745
        %v747 = vpop.f32.mrf.mxu0
        %748 = vmatprep.mubr.f32.mxu0 0.0
        %v749 = vand.u32 %v363, 4294901760
        %v750 = vsub.f32 %v363, %v749
        %751 = vmatmul.mubr.f32.gmra.mxu0 %v750
        %v752 = vpop.f32.mrf.mxu0
        %v753 = vadd.f32 %v630, %v752
        %v754 = vpop.f32.mrf.mxu0
        %755 = vdwg.mxu0
        %756 = vmatprep.subr.mxu0 0.0
        %757 = vmatpush1.msra.mxu0 0.0
        %758 = vmatprep.subr.mxu0 0.0
        %759 = vmatpush1.msra.mxu0 0.0
        %760 = vmatprep.subr.mxu0 0.0
        %761 = vmatpush1.msra.mxu0 0.0
        %762 = vmatprep.subr.mxu0 0.0
        %763 = vmatpush1.msra.mxu0 0.0
        %764 = vmatprep.subr.mxu0 0.0
        %765 = vmatpush1.msra.mxu0 0.0
        %766 = vmatprep.subr.mxu0 0.0
        %767 = vmatpush1.msra.mxu0 0.0
        %768 = vmatprep.subr.mxu0 0.0
        %769 = vmatpush1.msra.mxu0 0.0
        %770 = vmatprep.subr.mxu0 0.0
        %771 = vmatpush1.msra.mxu0 0.0
        %772 = vmatprep.subr.mxu0 0.0
        %773 = vmatpush1.msra.mxu0 0.0
        %774 = vmatprep.subr.mxu0 0.0
        %775 = vmatpush1.msra.mxu0 0.0
        %776 = vmatprep.subr.mxu0 0.0
        %777 = vmatpush1.msra.mxu0 0.0
        %778 = vmatprep.subr.mxu0 0.0
        %779 = vmatpush1.msra.mxu0 0.0
        %780 = vmatprep.subr.mxu0 0.0
        %781 = vmatpush1.msra.mxu0 0.0
        %782 = vmatprep.subr.mxu0 0.0
        %783 = vmatpush1.msra.mxu0 0.0
        %784 = vmatprep.subr.mxu0 0.0
        %785 = vmatpush1.msra.mxu0 0.0
        %786 = vmatprep.subr.mxu0 0.0
        %v787 = vand.u32 %v367, 4294901760
        %788 = vmatpush1.msra.mxu0 %v787
        %789 = vmatprep.subr.mxu0 0.0
        %790 = vmatpush2.msra.mxu0 0.0
        %791 = vmatprep.subr.mxu0 0.0
        %792 = vmatpush2.msra.mxu0 0.0
        %793 = vmatprep.subr.mxu0 0.0
        %794 = vmatpush2.msra.mxu0 0.0
        %795 = vmatprep.subr.mxu0 0.0
        %796 = vmatpush2.msra.mxu0 0.0
        %797 = vmatprep.subr.mxu0 0.0
        %798 = vmatpush2.msra.mxu0 0.0
        %799 = vmatprep.subr.mxu0 0.0
        %800 = vmatpush2.msra.mxu0 0.0
        %801 = vmatprep.subr.mxu0 0.0
        %802 = vmatpush2.msra.mxu0 0.0
        %803 = vmatprep.subr.mxu0 0.0
        %804 = vmatpush2.msra.mxu0 0.0
        %805 = vmatprep.subr.mxu0 0.0
        %806 = vmatpush2.msra.mxu0 0.0
        %807 = vmatprep.subr.mxu0 0.0
        %808 = vmatpush2.msra.mxu0 0.0
        %809 = vmatprep.subr.mxu0 0.0
        %810 = vmatpush2.msra.mxu0 0.0
        %811 = vmatprep.subr.mxu0 0.0
        %812 = vmatpush2.msra.mxu0 0.0
        %813 = vmatprep.subr.mxu0 0.0
        %814 = vmatpush2.msra.mxu0 0.0
        %815 = vmatprep.subr.mxu0 0.0
        %816 = vmatpush2.msra.mxu0 0.0
        %817 = vmatprep.subr.mxu0 0.0
        %818 = vmatpush2.msra.mxu0 0.0
        %819 = vmatprep.subr.mxu0 0.0
        %820 = vmatpush2.msra.mxu0 0.0
        %821 = vmatprep.mubr.f32.mxu0 0.0
        %v822 = vand.u32 %v342, 4294901760
        %v823 = vsub.f32 %v342, %v822
        %v824 = vand.u32 %v823, 4294901760
        %825 = vmatmul.mubr.f32.gmra.mxu0 %v824
        %v826 = vpop.f32.mrf.mxu0
        %v827 = vadd.f32 %v704, %v826
        %v828 = vpop.f32.mrf.mxu0
        %829 = vmatprep.mubr.f32.mxu0 0.0
        %v830 = vand.u32 %v345, 4294901760
        %v831 = vsub.f32 %v345, %v830
        %v832 = vand.u32 %v831, 4294901760
        %833 = vmatmul.mubr.f32.gmra.mxu0 %v832
        %v834 = vpop.f32.mrf.mxu0
        %v835 = vadd.f32 %v711, %v834
        %v836 = vpop.f32.mrf.mxu0
        %837 = vmatprep.mubr.f32.mxu0 0.0
        %v838 = vand.u32 %v348, 4294901760
        %v839 = vsub.f32 %v348, %v838
        %v840 = vand.u32 %v839, 4294901760
        %841 = vmatmul.mubr.f32.gmra.mxu0 %v840
        %v842 = vpop.f32.mrf.mxu0
        %v843 = vadd.f32 %v718, %v842
        %v844 = vpop.f32.mrf.mxu0
        %845 = vmatprep.mubr.f32.mxu0 0.0
        %v846 = vand.u32 %v351, 4294901760
        %v847 = vsub.f32 %v351, %v846
        %v848 = vand.u32 %v847, 4294901760
        %849 = vmatmul.mubr.f32.gmra.mxu0 %v848
        %v850 = vpop.f32.mrf.mxu0
        %v851 = vadd.f32 %v725, %v850
        %v852 = vpop.f32.mrf.mxu0
        %853 = vmatprep.mubr.f32.mxu0 0.0
        %v854 = vand.u32 %v354, 4294901760
        %v855 = vsub.f32 %v354, %v854
        %v856 = vand.u32 %v855, 4294901760
        %857 = vmatmul.mubr.f32.gmra.mxu0 %v856
        %v858 = vpop.f32.mrf.mxu0
        %v859 = vadd.f32 %v732, %v858
        %v860 = vpop.f32.mrf.mxu0
        %861 = vmatprep.mubr.f32.mxu0 0.0
        %v862 = vand.u32 %v357, 4294901760
        %v863 = vsub.f32 %v357, %v862
        %v864 = vand.u32 %v863, 4294901760
        %865 = vmatmul.mubr.f32.gmra.mxu0 %v864
        %v866 = vpop.f32.mrf.mxu0
        %v867 = vadd.f32 %v739, %v866
        %v868 = vpop.f32.mrf.mxu0
        %869 = vmatprep.mubr.f32.mxu0 0.0
        %v870 = vand.u32 %v360, 4294901760
        %v871 = vsub.f32 %v360, %v870
        %v872 = vand.u32 %v871, 4294901760
        %873 = vmatmul.mubr.f32.gmra.mxu0 %v872
        %v874 = vpop.f32.mrf.mxu0
        %v875 = vadd.f32 %v746, %v874
        %v876 = vpop.f32.mrf.mxu0
        %877 = vmatprep.mubr.f32.mxu0 0.0
        %v878 = vand.u32 %v363, 4294901760
        %v879 = vsub.f32 %v363, %v878
        %v880 = vand.u32 %v879, 4294901760
        %881 = vmatmul.mubr.f32.gmra.mxu0 %v880
        %v882 = vpop.f32.mrf.mxu0
        %v883 = vadd.f32 %v753, %v882
        %v884 = vpop.f32.mrf.mxu0
        %885 = vdwg.mxu0
        %886 = vmatprep.subr.mxu0 0.0
        %887 = vmatpush1.msra.mxu0 0.0
        %888 = vmatprep.subr.mxu0 0.0
        %889 = vmatpush1.msra.mxu0 0.0
        %890 = vmatprep.subr.mxu0 0.0
        %891 = vmatpush1.msra.mxu0 0.0
        %892 = vmatprep.subr.mxu0 0.0
        %893 = vmatpush1.msra.mxu0 0.0
        %894 = vmatprep.subr.mxu0 0.0
        %895 = vmatpush1.msra.mxu0 0.0
        %896 = vmatprep.subr.mxu0 0.0
        %897 = vmatpush1.msra.mxu0 0.0
        %898 = vmatprep.subr.mxu0 0.0
        %899 = vmatpush1.msra.mxu0 0.0
        %900 = vmatprep.subr.mxu0 0.0
        %901 = vmatpush1.msra.mxu0 0.0
        %902 = vmatprep.subr.mxu0 0.0
        %903 = vmatpush1.msra.mxu0 0.0
        %904 = vmatprep.subr.mxu0 0.0
        %905 = vmatpush1.msra.mxu0 0.0
        %906 = vmatprep.subr.mxu0 0.0
        %907 = vmatpush1.msra.mxu0 0.0
        %908 = vmatprep.subr.mxu0 0.0
        %909 = vmatpush1.msra.mxu0 0.0
        %910 = vmatprep.subr.mxu0 0.0
        %911 = vmatpush1.msra.mxu0 0.0
        %912 = vmatprep.subr.mxu0 0.0
        %913 = vmatpush1.msra.mxu0 0.0
        %914 = vmatprep.subr.mxu0 0.0
        %915 = vmatpush1.msra.mxu0 0.0
        %916 = vmatprep.subr.mxu0 0.0
        %v917 = vand.u32 %v367, 4294901760
        %v918 = vsub.f32 %v367, %v917
        %v919 = vand.u32 %v918, 4294901760
        %920 = vmatpush1.msra.mxu0 %v919
        %921 = vmatprep.subr.mxu0 0.0
        %922 = vmatpush2.msra.mxu0 0.0
        %923 = vmatprep.subr.mxu0 0.0
        %924 = vmatpush2.msra.mxu0 0.0
        %925 = vmatprep.subr.mxu0 0.0
        %926 = vmatpush2.msra.mxu0 0.0
        %927 = vmatprep.subr.mxu0 0.0
        %928 = vmatpush2.msra.mxu0 0.0
        %929 = vmatprep.subr.mxu0 0.0
        %930 = vmatpush2.msra.mxu0 0.0
        %931 = vmatprep.subr.mxu0 0.0
        %932 = vmatpush2.msra.mxu0 0.0
        %933 = vmatprep.subr.mxu0 0.0
        %934 = vmatpush2.msra.mxu0 0.0
        %935 = vmatprep.subr.mxu0 0.0
        %936 = vmatpush2.msra.mxu0 0.0
        %937 = vmatprep.subr.mxu0 0.0
        %938 = vmatpush2.msra.mxu0 0.0
        %939 = vmatprep.subr.mxu0 0.0
        %940 = vmatpush2.msra.mxu0 0.0
        %941 = vmatprep.subr.mxu0 0.0
        %942 = vmatpush2.msra.mxu0 0.0
        %943 = vmatprep.subr.mxu0 0.0
        %944 = vmatpush2.msra.mxu0 0.0
        %945 = vmatprep.subr.mxu0 0.0
        %946 = vmatpush2.msra.mxu0 0.0
        %947 = vmatprep.subr.mxu0 0.0
        %948 = vmatpush2.msra.mxu0 0.0
        %949 = vmatprep.subr.mxu0 0.0
        %950 = vmatpush2.msra.mxu0 0.0
        %951 = vmatprep.subr.mxu0 0.0
        %952 = vmatpush2.msra.mxu0 0.0
        %953 = vmatprep.mubr.f32.mxu0 0.0
        %v954 = vand.u32 %v342, 4294901760
        %955 = vmatmul.mubr.f32.gmra.mxu0 %v954
        %v956 = vpop.f32.mrf.mxu0
        %v957 = vadd.f32 %v827, %v956
        %v958 = vpop.f32.mrf.mxu0
        %959 = vmatprep.mubr.f32.mxu0 0.0
        %v960 = vand.u32 %v345, 4294901760
        %961 = vmatmul.mubr.f32.gmra.mxu0 %v960
        %v962 = vpop.f32.mrf.mxu0
        %v963 = vadd.f32 %v835, %v962
        %v964 = vpop.f32.mrf.mxu0
        %965 = vmatprep.mubr.f32.mxu0 0.0
        %v966 = vand.u32 %v348, 4294901760
        %967 = vmatmul.mubr.f32.gmra.mxu0 %v966
        %v968 = vpop.f32.mrf.mxu0
        %v969 = vadd.f32 %v843, %v968
        %v970 = vpop.f32.mrf.mxu0
        %971 = vmatprep.mubr.f32.mxu0 0.0
        %v972 = vand.u32 %v351, 4294901760
        %973 = vmatmul.mubr.f32.gmra.mxu0 %v972
        %v974 = vpop.f32.mrf.mxu0
        %v975 = vadd.f32 %v851, %v974
        %v976 = vpop.f32.mrf.mxu0
        %977 = vmatprep.mubr.f32.mxu0 0.0
        %v978 = vand.u32 %v354, 4294901760
        %979 = vmatmul.mubr.f32.gmra.mxu0 %v978
        %v980 = vpop.f32.mrf.mxu0
        %v981 = vadd.f32 %v859, %v980
        %v982 = vpop.f32.mrf.mxu0
        %983 = vmatprep.mubr.f32.mxu0 0.0
        %v984 = vand.u32 %v357, 4294901760
        %985 = vmatmul.mubr.f32.gmra.mxu0 %v984
        %v986 = vpop.f32.mrf.mxu0
        %v987 = vadd.f32 %v867, %v986
        %v988 = vpop.f32.mrf.mxu0
        %989 = vmatprep.mubr.f32.mxu0 0.0
        %v990 = vand.u32 %v360, 4294901760
        %991 = vmatmul.mubr.f32.gmra.mxu0 %v990
        %v992 = vpop.f32.mrf.mxu0
        %v993 = vadd.f32 %v875, %v992
        %v994 = vpop.f32.mrf.mxu0
        %995 = vmatprep.mubr.f32.mxu0 0.0
        %v996 = vand.u32 %v363, 4294901760
        %997 = vmatmul.mubr.f32.gmra.mxu0 %v996
        %v998 = vpop.f32.mrf.mxu0
        %v999 = vadd.f32 %v883, %v998
        %v1000 = vpop.f32.mrf.mxu0
        %1001 = vdwg.mxu0
        %1002 = vmatprep.subr.mxu0 0.0
        %1003 = vmatpush1.msra.mxu0 0.0
        %1004 = vmatprep.subr.mxu0 0.0
        %1005 = vmatpush1.msra.mxu0 0.0
        %1006 = vmatprep.subr.mxu0 0.0
        %1007 = vmatpush1.msra.mxu0 0.0
        %1008 = vmatprep.subr.mxu0 0.0
        %1009 = vmatpush1.msra.mxu0 0.0
        %1010 = vmatprep.subr.mxu0 0.0
        %1011 = vmatpush1.msra.mxu0 0.0
        %1012 = vmatprep.subr.mxu0 0.0
        %1013 = vmatpush1.msra.mxu0 0.0
        %1014 = vmatprep.subr.mxu0 0.0
        %1015 = vmatpush1.msra.mxu0 0.0
        %1016 = vmatprep.subr.mxu0 0.0
        %1017 = vmatpush1.msra.mxu0 0.0
        %1018 = vmatprep.subr.mxu0 0.0
        %1019 = vmatpush1.msra.mxu0 0.0
        %1020 = vmatprep.subr.mxu0 0.0
        %1021 = vmatpush1.msra.mxu0 0.0
        %1022 = vmatprep.subr.mxu0 0.0
        %1023 = vmatpush1.msra.mxu0 0.0
        %1024 = vmatprep.subr.mxu0 0.0
        %1025 = vmatpush1.msra.mxu0 0.0
        %1026 = vmatprep.subr.mxu0 0.0
        %1027 = vmatpush1.msra.mxu0 0.0
        %1028 = vmatprep.subr.mxu0 0.0
        %1029 = vmatpush1.msra.mxu0 0.0
        %1030 = vmatprep.subr.mxu0 0.0
        %1031 = vmatpush1.msra.mxu0 0.0
        %1032 = vmatprep.subr.mxu0 0.0
        %v1033 = vand.u32 %v367, 4294901760
        %1034 = vmatpush1.msra.mxu0 %v1033
        %1035 = vmatprep.subr.mxu0 0.0
        %1036 = vmatpush2.msra.mxu0 0.0
        %1037 = vmatprep.subr.mxu0 0.0
        %1038 = vmatpush2.msra.mxu0 0.0
        %1039 = vmatprep.subr.mxu0 0.0
        %1040 = vmatpush2.msra.mxu0 0.0
        %1041 = vmatprep.subr.mxu0 0.0
        %1042 = vmatpush2.msra.mxu0 0.0
        %1043 = vmatprep.subr.mxu0 0.0
        %1044 = vmatpush2.msra.mxu0 0.0
        %1045 = vmatprep.subr.mxu0 0.0
        %1046 = vmatpush2.msra.mxu0 0.0
        %1047 = vmatprep.subr.mxu0 0.0
        %1048 = vmatpush2.msra.mxu0 0.0
        %1049 = vmatprep.subr.mxu0 0.0
        %1050 = vmatpush2.msra.mxu0 0.0
        %1051 = vmatprep.subr.mxu0 0.0
        %1052 = vmatpush2.msra.mxu0 0.0
        %1053 = vmatprep.subr.mxu0 0.0
        %1054 = vmatpush2.msra.mxu0 0.0
        %1055 = vmatprep.subr.mxu0 0.0
        %1056 = vmatpush2.msra.mxu0 0.0
        %1057 = vmatprep.subr.mxu0 0.0
        %1058 = vmatpush2.msra.mxu0 0.0
        %1059 = vmatprep.subr.mxu0 0.0
        %1060 = vmatpush2.msra.mxu0 0.0
        %1061 = vmatprep.subr.mxu0 0.0
        %1062 = vmatpush2.msra.mxu0 0.0
        %1063 = vmatprep.subr.mxu0 0.0
        %1064 = vmatpush2.msra.mxu0 0.0
        %1065 = vmatprep.subr.mxu0 0.0
        %1066 = vmatpush2.msra.mxu0 0.0
        %1067 = vmatprep.mubr.f32.mxu0 0.0
        %v1068 = vand.u32 %v342, 4294901760
        %1069 = vmatmul.mubr.f32.gmra.mxu0 %v1068
        %v1070 = vpop.f32.mrf.mxu0
        %v1071 = vadd.f32 %v957, %v1070
        %v1072 = vpop.f32.mrf.mxu0
        %1073 = vmatprep.mubr.f32.mxu0 0.0
        %v1074 = vand.u32 %v345, 4294901760
        %1075 = vmatmul.mubr.f32.gmra.mxu0 %v1074
        %v1076 = vpop.f32.mrf.mxu0
        %v1077 = vadd.f32 %v963, %v1076
        %v1078 = vpop.f32.mrf.mxu0
        %1079 = vmatprep.mubr.f32.mxu0 0.0
        %v1080 = vand.u32 %v348, 4294901760
        %1081 = vmatmul.mubr.f32.gmra.mxu0 %v1080
        %v1082 = vpop.f32.mrf.mxu0
        %v1083 = vadd.f32 %v969, %v1082
        %v1084 = vpop.f32.mrf.mxu0
        %1085 = vmatprep.mubr.f32.mxu0 0.0
        %v1086 = vand.u32 %v351, 4294901760
        %1087 = vmatmul.mubr.f32.gmra.mxu0 %v1086
        %v1088 = vpop.f32.mrf.mxu0
        %v1089 = vadd.f32 %v975, %v1088
        %v1090 = vpop.f32.mrf.mxu0
        %1091 = vmatprep.mubr.f32.mxu0 0.0
        %v1092 = vand.u32 %v354, 4294901760
        %1093 = vmatmul.mubr.f32.gmra.mxu0 %v1092
        %v1094 = vpop.f32.mrf.mxu0
        %v1095 = vadd.f32 %v981, %v1094
        %v1096 = vpop.f32.mrf.mxu0
        %1097 = vmatprep.mubr.f32.mxu0 0.0
        %v1098 = vand.u32 %v357, 4294901760
        %1099 = vmatmul.mubr.f32.gmra.mxu0 %v1098
        %v1100 = vpop.f32.mrf.mxu0
        %v1101 = vadd.f32 %v987, %v1100
        %v1102 = vpop.f32.mrf.mxu0
        %1103 = vmatprep.mubr.f32.mxu0 0.0
        %v1104 = vand.u32 %v360, 4294901760
        %1105 = vmatmul.mubr.f32.gmra.mxu0 %v1104
        %v1106 = vpop.f32.mrf.mxu0
        %v1107 = vadd.f32 %v993, %v1106
        %v1108 = vpop.f32.mrf.mxu0
        %1109 = vmatprep.mubr.f32.mxu0 0.0
        %v1110 = vand.u32 %v363, 4294901760
        %1111 = vmatmul.mubr.f32.gmra.mxu0 %v1110
        %v1112 = vpop.f32.mrf.mxu0
        %v1113 = vadd.f32 %v999, %v1112
        %v1114 = vpop.f32.mrf.mxu0
        %1115 = vdwg.mxu0
        %v1117 = vsel %vm340, %v321, 0
        %v1120 = vsel %vm340, %v322, 0
        %v1123 = vsel %vm340, %v323, 0
        %v1126 = vsel %vm340, %v324, 0
        %v1129 = vsel %vm340, %v325, 0
        %v1132 = vsel %vm340, %v326, 0
        %v1135 = vsel %vm340, %v327, 0
        %v1138 = vsel %vm340, %v328, 0
        %v1141 = vsel %vm365, %v329, 0
        %1143 = vmatprep.subr.mxu0 0.0
        %1144 = vmatpush1.msra.mxu0 0.0
        %1145 = vmatprep.subr.mxu0 0.0
        %1146 = vmatpush1.msra.mxu0 0.0
        %1147 = vmatprep.subr.mxu0 0.0
        %1148 = vmatpush1.msra.mxu0 0.0
        %1149 = vmatprep.subr.mxu0 0.0
        %1150 = vmatpush1.msra.mxu0 0.0
        %1151 = vmatprep.subr.mxu0 0.0
        %1152 = vmatpush1.msra.mxu0 0.0
        %1153 = vmatprep.subr.mxu0 0.0
        %1154 = vmatpush1.msra.mxu0 0.0
        %1155 = vmatprep.subr.mxu0 0.0
        %1156 = vmatpush1.msra.mxu0 0.0
        %1157 = vmatprep.subr.mxu0 0.0
        %1158 = vmatpush1.msra.mxu0 0.0
        %1159 = vmatprep.subr.mxu0 0.0
        %1160 = vmatpush1.msra.mxu0 0.0
        %1161 = vmatprep.subr.mxu0 0.0
        %1162 = vmatpush1.msra.mxu0 0.0
        %1163 = vmatprep.subr.mxu0 0.0
        %1164 = vmatpush1.msra.mxu0 0.0
        %1165 = vmatprep.subr.mxu0 0.0
        %1166 = vmatpush1.msra.mxu0 0.0
        %1167 = vmatprep.subr.mxu0 0.0
        %1168 = vmatpush1.msra.mxu0 0.0
        %1169 = vmatprep.subr.mxu0 0.0
        %1170 = vmatpush1.msra.mxu0 0.0
        %1171 = vmatprep.subr.mxu0 0.0
        %1172 = vmatpush1.msra.mxu0 0.0
        %1173 = vmatprep.subr.mxu0 0.0
        %v1174 = vand.u32 %v1141, 4294901760
        %1175 = vmatpush1.msra.mxu0 %v1174
        %1176 = vmatprep.subr.mxu0 0.0
        %1177 = vmatpush2.msra.mxu0 0.0
        %1178 = vmatprep.subr.mxu0 0.0
        %1179 = vmatpush2.msra.mxu0 0.0
        %1180 = vmatprep.subr.mxu0 0.0
        %1181 = vmatpush2.msra.mxu0 0.0
        %1182 = vmatprep.subr.mxu0 0.0
        %1183 = vmatpush2.msra.mxu0 0.0
        %1184 = vmatprep.subr.mxu0 0.0
        %1185 = vmatpush2.msra.mxu0 0.0
        %1186 = vmatprep.subr.mxu0 0.0
        %1187 = vmatpush2.msra.mxu0 0.0
        %1188 = vmatprep.subr.mxu0 0.0
        %1189 = vmatpush2.msra.mxu0 0.0
        %1190 = vmatprep.subr.mxu0 0.0
        %1191 = vmatpush2.msra.mxu0 0.0
        %1192 = vmatprep.subr.mxu0 0.0
        %1193 = vmatpush2.msra.mxu0 0.0
        %1194 = vmatprep.subr.mxu0 0.0
        %1195 = vmatpush2.msra.mxu0 0.0
        %1196 = vmatprep.subr.mxu0 0.0
        %1197 = vmatpush2.msra.mxu0 0.0
        %1198 = vmatprep.subr.mxu0 0.0
        %1199 = vmatpush2.msra.mxu0 0.0
        %1200 = vmatprep.subr.mxu0 0.0
        %1201 = vmatpush2.msra.mxu0 0.0
        %1202 = vmatprep.subr.mxu0 0.0
        %1203 = vmatpush2.msra.mxu0 0.0
        %1204 = vmatprep.subr.mxu0 0.0
        %1205 = vmatpush2.msra.mxu0 0.0
        %1206 = vmatprep.subr.mxu0 0.0
        %1207 = vmatpush2.msra.mxu0 0.0
        %1208 = vmatprep.mubr.f32.mxu0 0.0
        %v1209 = vand.u32 %v1117, 4294901760
        %v1210 = vsub.f32 %v1117, %v1209
        %v1211 = vand.u32 %v1210, 4294901760
        %v1212 = vsub.f32 %v1210, %v1211
        %v1213 = vand.u32 %v1212, 4294901760
        %1214 = vmatmul.mubr.f32.gmra.mxu0 %v1213
        %v1215 = vpop.f32.mrf.mxu0
        %v1216 = vadd.f32 %v1071, %v1215
        %v1217 = vpop.f32.mrf.mxu0
        %1218 = vmatprep.mubr.f32.mxu0 0.0
        %v1219 = vand.u32 %v1120, 4294901760
        %v1220 = vsub.f32 %v1120, %v1219
        %v1221 = vand.u32 %v1220, 4294901760
        %v1222 = vsub.f32 %v1220, %v1221
        %v1223 = vand.u32 %v1222, 4294901760
        %1224 = vmatmul.mubr.f32.gmra.mxu0 %v1223
        %v1225 = vpop.f32.mrf.mxu0
        %v1226 = vadd.f32 %v1077, %v1225
        %v1227 = vpop.f32.mrf.mxu0
        %1228 = vmatprep.mubr.f32.mxu0 0.0
        %v1229 = vand.u32 %v1123, 4294901760
        %v1230 = vsub.f32 %v1123, %v1229
        %v1231 = vand.u32 %v1230, 4294901760
        %v1232 = vsub.f32 %v1230, %v1231
        %v1233 = vand.u32 %v1232, 4294901760
        %1234 = vmatmul.mubr.f32.gmra.mxu0 %v1233
        %v1235 = vpop.f32.mrf.mxu0
        %v1236 = vadd.f32 %v1083, %v1235
        %v1237 = vpop.f32.mrf.mxu0
        %1238 = vmatprep.mubr.f32.mxu0 0.0
        %v1239 = vand.u32 %v1126, 4294901760
        %v1240 = vsub.f32 %v1126, %v1239
        %v1241 = vand.u32 %v1240, 4294901760
        %v1242 = vsub.f32 %v1240, %v1241
        %v1243 = vand.u32 %v1242, 4294901760
        %1244 = vmatmul.mubr.f32.gmra.mxu0 %v1243
        %v1245 = vpop.f32.mrf.mxu0
        %v1246 = vadd.f32 %v1089, %v1245
        %v1247 = vpop.f32.mrf.mxu0
        %1248 = vmatprep.mubr.f32.mxu0 0.0
        %v1249 = vand.u32 %v1129, 4294901760
        %v1250 = vsub.f32 %v1129, %v1249
        %v1251 = vand.u32 %v1250, 4294901760
        %v1252 = vsub.f32 %v1250, %v1251
        %v1253 = vand.u32 %v1252, 4294901760
        %1254 = vmatmul.mubr.f32.gmra.mxu0 %v1253
        %v1255 = vpop.f32.mrf.mxu0
        %v1256 = vadd.f32 %v1095, %v1255
        %v1257 = vpop.f32.mrf.mxu0
        %1258 = vmatprep.mubr.f32.mxu0 0.0
        %v1259 = vand.u32 %v1132, 4294901760
        %v1260 = vsub.f32 %v1132, %v1259
        %v1261 = vand.u32 %v1260, 4294901760
        %v1262 = vsub.f32 %v1260, %v1261
        %v1263 = vand.u32 %v1262, 4294901760
        %1264 = vmatmul.mubr.f32.gmra.mxu0 %v1263
        %v1265 = vpop.f32.mrf.mxu0
        %v1266 = vadd.f32 %v1101, %v1265
        %v1267 = vpop.f32.mrf.mxu0
        %1268 = vmatprep.mubr.f32.mxu0 0.0
        %v1269 = vand.u32 %v1135, 4294901760
        %v1270 = vsub.f32 %v1135, %v1269
        %v1271 = vand.u32 %v1270, 4294901760
        %v1272 = vsub.f32 %v1270, %v1271
        %v1273 = vand.u32 %v1272, 4294901760
        %1274 = vmatmul.mubr.f32.gmra.mxu0 %v1273
        %v1275 = vpop.f32.mrf.mxu0
        %v1276 = vadd.f32 %v1107, %v1275
        %v1277 = vpop.f32.mrf.mxu0
        %1278 = vmatprep.mubr.f32.mxu0 0.0
        %v1279 = vand.u32 %v1138, 4294901760
        %v1280 = vsub.f32 %v1138, %v1279
        %v1281 = vand.u32 %v1280, 4294901760
        %v1282 = vsub.f32 %v1280, %v1281
        %v1283 = vand.u32 %v1282, 4294901760
        %1284 = vmatmul.mubr.f32.gmra.mxu0 %v1283
        %v1285 = vpop.f32.mrf.mxu0
        %v1286 = vadd.f32 %v1113, %v1285
        %v1287 = vpop.f32.mrf.mxu0
        %1288 = vdwg.mxu0
        %1289 = vmatprep.subr.mxu0 0.0
        %1290 = vmatpush1.msra.mxu0 0.0
        %1291 = vmatprep.subr.mxu0 0.0
        %1292 = vmatpush1.msra.mxu0 0.0
        %1293 = vmatprep.subr.mxu0 0.0
        %1294 = vmatpush1.msra.mxu0 0.0
        %1295 = vmatprep.subr.mxu0 0.0
        %1296 = vmatpush1.msra.mxu0 0.0
        %1297 = vmatprep.subr.mxu0 0.0
        %1298 = vmatpush1.msra.mxu0 0.0
        %1299 = vmatprep.subr.mxu0 0.0
        %1300 = vmatpush1.msra.mxu0 0.0
        %1301 = vmatprep.subr.mxu0 0.0
        %1302 = vmatpush1.msra.mxu0 0.0
        %1303 = vmatprep.subr.mxu0 0.0
        %1304 = vmatpush1.msra.mxu0 0.0
        %1305 = vmatprep.subr.mxu0 0.0
        %1306 = vmatpush1.msra.mxu0 0.0
        %1307 = vmatprep.subr.mxu0 0.0
        %1308 = vmatpush1.msra.mxu0 0.0
        %1309 = vmatprep.subr.mxu0 0.0
        %1310 = vmatpush1.msra.mxu0 0.0
        %1311 = vmatprep.subr.mxu0 0.0
        %1312 = vmatpush1.msra.mxu0 0.0
        %1313 = vmatprep.subr.mxu0 0.0
        %1314 = vmatpush1.msra.mxu0 0.0
        %1315 = vmatprep.subr.mxu0 0.0
        %1316 = vmatpush1.msra.mxu0 0.0
        %1317 = vmatprep.subr.mxu0 0.0
        %1318 = vmatpush1.msra.mxu0 0.0
        %1319 = vmatprep.subr.mxu0 0.0
        %v1320 = vand.u32 %v1141, 4294901760
        %v1321 = vsub.f32 %v1141, %v1320
        %v1322 = vand.u32 %v1321, 4294901760
        %v1323 = vsub.f32 %v1321, %v1322
        %v1324 = vand.u32 %v1323, 4294901760
        %1325 = vmatpush1.msra.mxu0 %v1324
        %1326 = vmatprep.subr.mxu0 0.0
        %1327 = vmatpush2.msra.mxu0 0.0
        %1328 = vmatprep.subr.mxu0 0.0
        %1329 = vmatpush2.msra.mxu0 0.0
        %1330 = vmatprep.subr.mxu0 0.0
        %1331 = vmatpush2.msra.mxu0 0.0
        %1332 = vmatprep.subr.mxu0 0.0
        %1333 = vmatpush2.msra.mxu0 0.0
        %1334 = vmatprep.subr.mxu0 0.0
        %1335 = vmatpush2.msra.mxu0 0.0
        %1336 = vmatprep.subr.mxu0 0.0
        %1337 = vmatpush2.msra.mxu0 0.0
        %1338 = vmatprep.subr.mxu0 0.0
        %1339 = vmatpush2.msra.mxu0 0.0
        %1340 = vmatprep.subr.mxu0 0.0
        %1341 = vmatpush2.msra.mxu0 0.0
        %1342 = vmatprep.subr.mxu0 0.0
        %1343 = vmatpush2.msra.mxu0 0.0
        %1344 = vmatprep.subr.mxu0 0.0
        %1345 = vmatpush2.msra.mxu0 0.0
        %1346 = vmatprep.subr.mxu0 0.0
        %1347 = vmatpush2.msra.mxu0 0.0
        %1348 = vmatprep.subr.mxu0 0.0
        %1349 = vmatpush2.msra.mxu0 0.0
        %1350 = vmatprep.subr.mxu0 0.0
        %1351 = vmatpush2.msra.mxu0 0.0
        %1352 = vmatprep.subr.mxu0 0.0
        %1353 = vmatpush2.msra.mxu0 0.0
        %1354 = vmatprep.subr.mxu0 0.0
        %1355 = vmatpush2.msra.mxu0 0.0
        %1356 = vmatprep.subr.mxu0 0.0
        %1357 = vmatpush2.msra.mxu0 0.0
        %1358 = vmatprep.mubr.f32.mxu0 0.0
        %v1359 = vand.u32 %v1117, 4294901760
        %1360 = vmatmul.mubr.f32.gmra.mxu0 %v1359
        %v1361 = vpop.f32.mrf.mxu0
        %v1362 = vadd.f32 %v1216, %v1361
        %v1363 = vpop.f32.mrf.mxu0
        %1364 = vmatprep.mubr.f32.mxu0 0.0
        %v1365 = vand.u32 %v1120, 4294901760
        %1366 = vmatmul.mubr.f32.gmra.mxu0 %v1365
        %v1367 = vpop.f32.mrf.mxu0
        %v1368 = vadd.f32 %v1226, %v1367
        %v1369 = vpop.f32.mrf.mxu0
        %1370 = vmatprep.mubr.f32.mxu0 0.0
        %v1371 = vand.u32 %v1123, 4294901760
        %1372 = vmatmul.mubr.f32.gmra.mxu0 %v1371
        %v1373 = vpop.f32.mrf.mxu0
        %v1374 = vadd.f32 %v1236, %v1373
        %v1375 = vpop.f32.mrf.mxu0
        %1376 = vmatprep.mubr.f32.mxu0 0.0
        %v1377 = vand.u32 %v1126, 4294901760
        %1378 = vmatmul.mubr.f32.gmra.mxu0 %v1377
        %v1379 = vpop.f32.mrf.mxu0
        %v1380 = vadd.f32 %v1246, %v1379
        %v1381 = vpop.f32.mrf.mxu0
        %1382 = vmatprep.mubr.f32.mxu0 0.0
        %v1383 = vand.u32 %v1129, 4294901760
        %1384 = vmatmul.mubr.f32.gmra.mxu0 %v1383
        %v1385 = vpop.f32.mrf.mxu0
        %v1386 = vadd.f32 %v1256, %v1385
        %v1387 = vpop.f32.mrf.mxu0
        %1388 = vmatprep.mubr.f32.mxu0 0.0
        %v1389 = vand.u32 %v1132, 4294901760
        %1390 = vmatmul.mubr.f32.gmra.mxu0 %v1389
        %v1391 = vpop.f32.mrf.mxu0
        %v1392 = vadd.f32 %v1266, %v1391
        %v1393 = vpop.f32.mrf.mxu0
        %1394 = vmatprep.mubr.f32.mxu0 0.0
        %v1395 = vand.u32 %v1135, 4294901760
        %1396 = vmatmul.mubr.f32.gmra.mxu0 %v1395
        %v1397 = vpop.f32.mrf.mxu0
        %v1398 = vadd.f32 %v1276, %v1397
        %v1399 = vpop.f32.mrf.mxu0
        %1400 = vmatprep.mubr.f32.mxu0 0.0
        %v1401 = vand.u32 %v1138, 4294901760
        %1402 = vmatmul.mubr.f32.gmra.mxu0 %v1401
        %v1403 = vpop.f32.mrf.mxu0
        %v1404 = vadd.f32 %v1286, %v1403
        %v1405 = vpop.f32.mrf.mxu0
        %1406 = vdwg.mxu0
        %1407 = vmatprep.subr.mxu0 0.0
        %1408 = vmatpush1.msra.mxu0 0.0
        %1409 = vmatprep.subr.mxu0 0.0
        %1410 = vmatpush1.msra.mxu0 0.0
        %1411 = vmatprep.subr.mxu0 0.0
        %1412 = vmatpush1.msra.mxu0 0.0
        %1413 = vmatprep.subr.mxu0 0.0
        %1414 = vmatpush1.msra.mxu0 0.0
        %1415 = vmatprep.subr.mxu0 0.0
        %1416 = vmatpush1.msra.mxu0 0.0
        %1417 = vmatprep.subr.mxu0 0.0
        %1418 = vmatpush1.msra.mxu0 0.0
        %1419 = vmatprep.subr.mxu0 0.0
        %1420 = vmatpush1.msra.mxu0 0.0
        %1421 = vmatprep.subr.mxu0 0.0
        %1422 = vmatpush1.msra.mxu0 0.0
        %1423 = vmatprep.subr.mxu0 0.0
        %1424 = vmatpush1.msra.mxu0 0.0
        %1425 = vmatprep.subr.mxu0 0.0
        %1426 = vmatpush1.msra.mxu0 0.0
        %1427 = vmatprep.subr.mxu0 0.0
        %1428 = vmatpush1.msra.mxu0 0.0
        %1429 = vmatprep.subr.mxu0 0.0
        %1430 = vmatpush1.msra.mxu0 0.0
        %1431 = vmatprep.subr.mxu0 0.0
        %1432 = vmatpush1.msra.mxu0 0.0
        %1433 = vmatprep.subr.mxu0 0.0
        %1434 = vmatpush1.msra.mxu0 0.0
        %1435 = vmatprep.subr.mxu0 0.0
        %1436 = vmatpush1.msra.mxu0 0.0
        %1437 = vmatprep.subr.mxu0 0.0
        %v1438 = vand.u32 %v1141, 4294901760
        %v1439 = vsub.f32 %v1141, %v1438
        %1440 = vmatpush1.msra.mxu0 %v1439
        %1441 = vmatprep.subr.mxu0 0.0
        %1442 = vmatpush2.msra.mxu0 0.0
        %1443 = vmatprep.subr.mxu0 0.0
        %1444 = vmatpush2.msra.mxu0 0.0
        %1445 = vmatprep.subr.mxu0 0.0
        %1446 = vmatpush2.msra.mxu0 0.0
        %1447 = vmatprep.subr.mxu0 0.0
        %1448 = vmatpush2.msra.mxu0 0.0
        %1449 = vmatprep.subr.mxu0 0.0
        %1450 = vmatpush2.msra.mxu0 0.0
        %1451 = vmatprep.subr.mxu0 0.0
        %1452 = vmatpush2.msra.mxu0 0.0
        %1453 = vmatprep.subr.mxu0 0.0
        %1454 = vmatpush2.msra.mxu0 0.0
        %1455 = vmatprep.subr.mxu0 0.0
        %1456 = vmatpush2.msra.mxu0 0.0
        %1457 = vmatprep.subr.mxu0 0.0
        %1458 = vmatpush2.msra.mxu0 0.0
        %1459 = vmatprep.subr.mxu0 0.0
        %1460 = vmatpush2.msra.mxu0 0.0
        %1461 = vmatprep.subr.mxu0 0.0
        %1462 = vmatpush2.msra.mxu0 0.0
        %1463 = vmatprep.subr.mxu0 0.0
        %1464 = vmatpush2.msra.mxu0 0.0
        %1465 = vmatprep.subr.mxu0 0.0
        %1466 = vmatpush2.msra.mxu0 0.0
        %1467 = vmatprep.subr.mxu0 0.0
        %1468 = vmatpush2.msra.mxu0 0.0
        %1469 = vmatprep.subr.mxu0 0.0
        %1470 = vmatpush2.msra.mxu0 0.0
        %1471 = vmatprep.subr.mxu0 0.0
        %1472 = vmatpush2.msra.mxu0 0.0
        %1473 = vmatprep.mubr.f32.mxu0 0.0
        %v1474 = vand.u32 %v1117, 4294901760
        %v1475 = vsub.f32 %v1117, %v1474
        %1476 = vmatmul.mubr.f32.gmra.mxu0 %v1475
        %v1477 = vpop.f32.mrf.mxu0
        %v1478 = vadd.f32 %v1362, %v1477
        %v1479 = vpop.f32.mrf.mxu0
        %1480 = vmatprep.mubr.f32.mxu0 0.0
        %v1481 = vand.u32 %v1120, 4294901760
        %v1482 = vsub.f32 %v1120, %v1481
        %1483 = vmatmul.mubr.f32.gmra.mxu0 %v1482
        %v1484 = vpop.f32.mrf.mxu0
        %v1485 = vadd.f32 %v1368, %v1484
        %v1486 = vpop.f32.mrf.mxu0
        %1487 = vmatprep.mubr.f32.mxu0 0.0
        %v1488 = vand.u32 %v1123, 4294901760
        %v1489 = vsub.f32 %v1123, %v1488
        %1490 = vmatmul.mubr.f32.gmra.mxu0 %v1489
        %v1491 = vpop.f32.mrf.mxu0
        %v1492 = vadd.f32 %v1374, %v1491
        %v1493 = vpop.f32.mrf.mxu0
        %1494 = vmatprep.mubr.f32.mxu0 0.0
        %v1495 = vand.u32 %v1126, 4294901760
        %v1496 = vsub.f32 %v1126, %v1495
        %1497 = vmatmul.mubr.f32.gmra.mxu0 %v1496
        %v1498 = vpop.f32.mrf.mxu0
        %v1499 = vadd.f32 %v1380, %v1498
        %v1500 = vpop.f32.mrf.mxu0
        %1501 = vmatprep.mubr.f32.mxu0 0.0
        %v1502 = vand.u32 %v1129, 4294901760
        %v1503 = vsub.f32 %v1129, %v1502
        %1504 = vmatmul.mubr.f32.gmra.mxu0 %v1503
        %v1505 = vpop.f32.mrf.mxu0
        %v1506 = vadd.f32 %v1386, %v1505
        %v1507 = vpop.f32.mrf.mxu0
        %1508 = vmatprep.mubr.f32.mxu0 0.0
        %v1509 = vand.u32 %v1132, 4294901760
        %v1510 = vsub.f32 %v1132, %v1509
        %1511 = vmatmul.mubr.f32.gmra.mxu0 %v1510
        %v1512 = vpop.f32.mrf.mxu0
        %v1513 = vadd.f32 %v1392, %v1512
        %v1514 = vpop.f32.mrf.mxu0
        %1515 = vmatprep.mubr.f32.mxu0 0.0
        %v1516 = vand.u32 %v1135, 4294901760
        %v1517 = vsub.f32 %v1135, %v1516
        %1518 = vmatmul.mubr.f32.gmra.mxu0 %v1517
        %v1519 = vpop.f32.mrf.mxu0
        %v1520 = vadd.f32 %v1398, %v1519
        %v1521 = vpop.f32.mrf.mxu0
        %1522 = vmatprep.mubr.f32.mxu0 0.0
        %v1523 = vand.u32 %v1138, 4294901760
        %v1524 = vsub.f32 %v1138, %v1523
        %1525 = vmatmul.mubr.f32.gmra.mxu0 %v1524
        %v1526 = vpop.f32.mrf.mxu0
        %v1527 = vadd.f32 %v1404, %v1526
        %v1528 = vpop.f32.mrf.mxu0
        %1529 = vdwg.mxu0
        %1530 = vmatprep.subr.mxu0 0.0
        %1531 = vmatpush1.msra.mxu0 0.0
        %1532 = vmatprep.subr.mxu0 0.0
        %1533 = vmatpush1.msra.mxu0 0.0
        %1534 = vmatprep.subr.mxu0 0.0
        %1535 = vmatpush1.msra.mxu0 0.0
        %1536 = vmatprep.subr.mxu0 0.0
        %1537 = vmatpush1.msra.mxu0 0.0
        %1538 = vmatprep.subr.mxu0 0.0
        %1539 = vmatpush1.msra.mxu0 0.0
        %1540 = vmatprep.subr.mxu0 0.0
        %1541 = vmatpush1.msra.mxu0 0.0
        %1542 = vmatprep.subr.mxu0 0.0
        %1543 = vmatpush1.msra.mxu0 0.0
        %1544 = vmatprep.subr.mxu0 0.0
        %1545 = vmatpush1.msra.mxu0 0.0
        %1546 = vmatprep.subr.mxu0 0.0
        %1547 = vmatpush1.msra.mxu0 0.0
        %1548 = vmatprep.subr.mxu0 0.0
        %1549 = vmatpush1.msra.mxu0 0.0
        %1550 = vmatprep.subr.mxu0 0.0
        %1551 = vmatpush1.msra.mxu0 0.0
        %1552 = vmatprep.subr.mxu0 0.0
        %1553 = vmatpush1.msra.mxu0 0.0
        %1554 = vmatprep.subr.mxu0 0.0
        %1555 = vmatpush1.msra.mxu0 0.0
        %1556 = vmatprep.subr.mxu0 0.0
        %1557 = vmatpush1.msra.mxu0 0.0
        %1558 = vmatprep.subr.mxu0 0.0
        %1559 = vmatpush1.msra.mxu0 0.0
        %1560 = vmatprep.subr.mxu0 0.0
        %v1561 = vand.u32 %v1141, 4294901760
        %1562 = vmatpush1.msra.mxu0 %v1561
        %1563 = vmatprep.subr.mxu0 0.0
        %1564 = vmatpush2.msra.mxu0 0.0
        %1565 = vmatprep.subr.mxu0 0.0
        %1566 = vmatpush2.msra.mxu0 0.0
        %1567 = vmatprep.subr.mxu0 0.0
        %1568 = vmatpush2.msra.mxu0 0.0
        %1569 = vmatprep.subr.mxu0 0.0
        %1570 = vmatpush2.msra.mxu0 0.0
        %1571 = vmatprep.subr.mxu0 0.0
        %1572 = vmatpush2.msra.mxu0 0.0
        %1573 = vmatprep.subr.mxu0 0.0
        %1574 = vmatpush2.msra.mxu0 0.0
        %1575 = vmatprep.subr.mxu0 0.0
        %1576 = vmatpush2.msra.mxu0 0.0
        %1577 = vmatprep.subr.mxu0 0.0
        %1578 = vmatpush2.msra.mxu0 0.0
        %1579 = vmatprep.subr.mxu0 0.0
        %1580 = vmatpush2.msra.mxu0 0.0
        %1581 = vmatprep.subr.mxu0 0.0
        %1582 = vmatpush2.msra.mxu0 0.0
        %1583 = vmatprep.subr.mxu0 0.0
        %1584 = vmatpush2.msra.mxu0 0.0
        %1585 = vmatprep.subr.mxu0 0.0
        %1586 = vmatpush2.msra.mxu0 0.0
        %1587 = vmatprep.subr.mxu0 0.0
        %1588 = vmatpush2.msra.mxu0 0.0
        %1589 = vmatprep.subr.mxu0 0.0
        %1590 = vmatpush2.msra.mxu0 0.0
        %1591 = vmatprep.subr.mxu0 0.0
        %1592 = vmatpush2.msra.mxu0 0.0
        %1593 = vmatprep.subr.mxu0 0.0
        %1594 = vmatpush2.msra.mxu0 0.0
        %1595 = vmatprep.mubr.f32.mxu0 0.0
        %v1596 = vand.u32 %v1117, 4294901760
        %v1597 = vsub.f32 %v1117, %v1596
        %v1598 = vand.u32 %v1597, 4294901760
        %1599 = vmatmul.mubr.f32.gmra.mxu0 %v1598
        %v1600 = vpop.f32.mrf.mxu0
        %v1601 = vadd.f32 %v1478, %v1600
        %v1602 = vpop.f32.mrf.mxu0
        %1603 = vmatprep.mubr.f32.mxu0 0.0
        %v1604 = vand.u32 %v1120, 4294901760
        %v1605 = vsub.f32 %v1120, %v1604
        %v1606 = vand.u32 %v1605, 4294901760
        %1607 = vmatmul.mubr.f32.gmra.mxu0 %v1606
        %v1608 = vpop.f32.mrf.mxu0
        %v1609 = vadd.f32 %v1485, %v1608
        %v1610 = vpop.f32.mrf.mxu0
        %1611 = vmatprep.mubr.f32.mxu0 0.0
        %v1612 = vand.u32 %v1123, 4294901760
        %v1613 = vsub.f32 %v1123, %v1612
        %v1614 = vand.u32 %v1613, 4294901760
        %1615 = vmatmul.mubr.f32.gmra.mxu0 %v1614
        %v1616 = vpop.f32.mrf.mxu0
        %v1617 = vadd.f32 %v1492, %v1616
        %v1618 = vpop.f32.mrf.mxu0
        %1619 = vmatprep.mubr.f32.mxu0 0.0
        %v1620 = vand.u32 %v1126, 4294901760
        %v1621 = vsub.f32 %v1126, %v1620
        %v1622 = vand.u32 %v1621, 4294901760
        %1623 = vmatmul.mubr.f32.gmra.mxu0 %v1622
        %v1624 = vpop.f32.mrf.mxu0
        %v1625 = vadd.f32 %v1499, %v1624
        %v1626 = vpop.f32.mrf.mxu0
        %1627 = vmatprep.mubr.f32.mxu0 0.0
        %v1628 = vand.u32 %v1129, 4294901760
        %v1629 = vsub.f32 %v1129, %v1628
        %v1630 = vand.u32 %v1629, 4294901760
        %1631 = vmatmul.mubr.f32.gmra.mxu0 %v1630
        %v1632 = vpop.f32.mrf.mxu0
        %v1633 = vadd.f32 %v1506, %v1632
        %v1634 = vpop.f32.mrf.mxu0
        %1635 = vmatprep.mubr.f32.mxu0 0.0
        %v1636 = vand.u32 %v1132, 4294901760
        %v1637 = vsub.f32 %v1132, %v1636
        %v1638 = vand.u32 %v1637, 4294901760
        %1639 = vmatmul.mubr.f32.gmra.mxu0 %v1638
        %v1640 = vpop.f32.mrf.mxu0
        %v1641 = vadd.f32 %v1513, %v1640
        %v1642 = vpop.f32.mrf.mxu0
        %1643 = vmatprep.mubr.f32.mxu0 0.0
        %v1644 = vand.u32 %v1135, 4294901760
        %v1645 = vsub.f32 %v1135, %v1644
        %v1646 = vand.u32 %v1645, 4294901760
        %1647 = vmatmul.mubr.f32.gmra.mxu0 %v1646
        %v1648 = vpop.f32.mrf.mxu0
        %v1649 = vadd.f32 %v1520, %v1648
        %v1650 = vpop.f32.mrf.mxu0
        %1651 = vmatprep.mubr.f32.mxu0 0.0
        %v1652 = vand.u32 %v1138, 4294901760
        %v1653 = vsub.f32 %v1138, %v1652
        %v1654 = vand.u32 %v1653, 4294901760
        %1655 = vmatmul.mubr.f32.gmra.mxu0 %v1654
        %v1656 = vpop.f32.mrf.mxu0
        %v1657 = vadd.f32 %v1527, %v1656
        %v1658 = vpop.f32.mrf.mxu0
        %1659 = vdwg.mxu0
        %1660 = vmatprep.subr.mxu0 0.0
        %1661 = vmatpush1.msra.mxu0 0.0
        %1662 = vmatprep.subr.mxu0 0.0
        %1663 = vmatpush1.msra.mxu0 0.0
        %1664 = vmatprep.subr.mxu0 0.0
        %1665 = vmatpush1.msra.mxu0 0.0
        %1666 = vmatprep.subr.mxu0 0.0
        %1667 = vmatpush1.msra.mxu0 0.0
        %1668 = vmatprep.subr.mxu0 0.0
        %1669 = vmatpush1.msra.mxu0 0.0
        %1670 = vmatprep.subr.mxu0 0.0
        %1671 = vmatpush1.msra.mxu0 0.0
        %1672 = vmatprep.subr.mxu0 0.0
        %1673 = vmatpush1.msra.mxu0 0.0
        %1674 = vmatprep.subr.mxu0 0.0
        %1675 = vmatpush1.msra.mxu0 0.0
        %1676 = vmatprep.subr.mxu0 0.0
        %1677 = vmatpush1.msra.mxu0 0.0
        %1678 = vmatprep.subr.mxu0 0.0
        %1679 = vmatpush1.msra.mxu0 0.0
        %1680 = vmatprep.subr.mxu0 0.0
        %1681 = vmatpush1.msra.mxu0 0.0
        %1682 = vmatprep.subr.mxu0 0.0
        %1683 = vmatpush1.msra.mxu0 0.0
        %1684 = vmatprep.subr.mxu0 0.0
        %1685 = vmatpush1.msra.mxu0 0.0
        %1686 = vmatprep.subr.mxu0 0.0
        %1687 = vmatpush1.msra.mxu0 0.0
        %1688 = vmatprep.subr.mxu0 0.0
        %1689 = vmatpush1.msra.mxu0 0.0
        %1690 = vmatprep.subr.mxu0 0.0
        %v1691 = vand.u32 %v1141, 4294901760
        %v1692 = vsub.f32 %v1141, %v1691
        %v1693 = vand.u32 %v1692, 4294901760
        %1694 = vmatpush1.msra.mxu0 %v1693
        %1695 = vmatprep.subr.mxu0 0.0
        %1696 = vmatpush2.msra.mxu0 0.0
        %1697 = vmatprep.subr.mxu0 0.0
        %1698 = vmatpush2.msra.mxu0 0.0
        %1699 = vmatprep.subr.mxu0 0.0
        %1700 = vmatpush2.msra.mxu0 0.0
        %1701 = vmatprep.subr.mxu0 0.0
        %1702 = vmatpush2.msra.mxu0 0.0
        %1703 = vmatprep.subr.mxu0 0.0
        %1704 = vmatpush2.msra.mxu0 0.0
        %1705 = vmatprep.subr.mxu0 0.0
        %1706 = vmatpush2.msra.mxu0 0.0
        %1707 = vmatprep.subr.mxu0 0.0
        %1708 = vmatpush2.msra.mxu0 0.0
        %1709 = vmatprep.subr.mxu0 0.0
        %1710 = vmatpush2.msra.mxu0 0.0
        %1711 = vmatprep.subr.mxu0 0.0
        %1712 = vmatpush2.msra.mxu0 0.0
        %1713 = vmatprep.subr.mxu0 0.0
        %1714 = vmatpush2.msra.mxu0 0.0
        %1715 = vmatprep.subr.mxu0 0.0
        %1716 = vmatpush2.msra.mxu0 0.0
        %1717 = vmatprep.subr.mxu0 0.0
        %1718 = vmatpush2.msra.mxu0 0.0
        %1719 = vmatprep.subr.mxu0 0.0
        %1720 = vmatpush2.msra.mxu0 0.0
        %1721 = vmatprep.subr.mxu0 0.0
        %1722 = vmatpush2.msra.mxu0 0.0
        %1723 = vmatprep.subr.mxu0 0.0
        %1724 = vmatpush2.msra.mxu0 0.0
        %1725 = vmatprep.subr.mxu0 0.0
        %1726 = vmatpush2.msra.mxu0 0.0
        %1727 = vmatprep.mubr.f32.mxu0 0.0
        %v1728 = vand.u32 %v1117, 4294901760
        %1729 = vmatmul.mubr.f32.gmra.mxu0 %v1728
        %v1730 = vpop.f32.mrf.mxu0
        %v1731 = vadd.f32 %v1601, %v1730
        %v1732 = vpop.f32.mrf.mxu0
        %1733 = vmatprep.mubr.f32.mxu0 0.0
        %v1734 = vand.u32 %v1120, 4294901760
        %1735 = vmatmul.mubr.f32.gmra.mxu0 %v1734
        %v1736 = vpop.f32.mrf.mxu0
        %v1737 = vadd.f32 %v1609, %v1736
        %v1738 = vpop.f32.mrf.mxu0
        %1739 = vmatprep.mubr.f32.mxu0 0.0
        %v1740 = vand.u32 %v1123, 4294901760
        %1741 = vmatmul.mubr.f32.gmra.mxu0 %v1740
        %v1742 = vpop.f32.mrf.mxu0
        %v1743 = vadd.f32 %v1617, %v1742
        %v1744 = vpop.f32.mrf.mxu0
        %1745 = vmatprep.mubr.f32.mxu0 0.0
        %v1746 = vand.u32 %v1126, 4294901760
        %1747 = vmatmul.mubr.f32.gmra.mxu0 %v1746
        %v1748 = vpop.f32.mrf.mxu0
        %v1749 = vadd.f32 %v1625, %v1748
        %v1750 = vpop.f32.mrf.mxu0
        %1751 = vmatprep.mubr.f32.mxu0 0.0
        %v1752 = vand.u32 %v1129, 4294901760
        %1753 = vmatmul.mubr.f32.gmra.mxu0 %v1752
        %v1754 = vpop.f32.mrf.mxu0
        %v1755 = vadd.f32 %v1633, %v1754
        %v1756 = vpop.f32.mrf.mxu0
        %1757 = vmatprep.mubr.f32.mxu0 0.0
        %v1758 = vand.u32 %v1132, 4294901760
        %1759 = vmatmul.mubr.f32.gmra.mxu0 %v1758
        %v1760 = vpop.f32.mrf.mxu0
        %v1761 = vadd.f32 %v1641, %v1760
        %v1762 = vpop.f32.mrf.mxu0
        %1763 = vmatprep.mubr.f32.mxu0 0.0
        %v1764 = vand.u32 %v1135, 4294901760
        %1765 = vmatmul.mubr.f32.gmra.mxu0 %v1764
        %v1766 = vpop.f32.mrf.mxu0
        %v1767 = vadd.f32 %v1649, %v1766
        %v1768 = vpop.f32.mrf.mxu0
        %1769 = vmatprep.mubr.f32.mxu0 0.0
        %v1770 = vand.u32 %v1138, 4294901760
        %1771 = vmatmul.mubr.f32.gmra.mxu0 %v1770
        %v1772 = vpop.f32.mrf.mxu0
        %v1773 = vadd.f32 %v1657, %v1772
        %v1774 = vpop.f32.mrf.mxu0
        %1775 = vdwg.mxu0
        %1776 = vmatprep.subr.mxu0 0.0
        %1777 = vmatpush1.msra.mxu0 0.0
        %1778 = vmatprep.subr.mxu0 0.0
        %1779 = vmatpush1.msra.mxu0 0.0
        %1780 = vmatprep.subr.mxu0 0.0
        %1781 = vmatpush1.msra.mxu0 0.0
        %1782 = vmatprep.subr.mxu0 0.0
        %1783 = vmatpush1.msra.mxu0 0.0
        %1784 = vmatprep.subr.mxu0 0.0
        %1785 = vmatpush1.msra.mxu0 0.0
        %1786 = vmatprep.subr.mxu0 0.0
        %1787 = vmatpush1.msra.mxu0 0.0
        %1788 = vmatprep.subr.mxu0 0.0
        %1789 = vmatpush1.msra.mxu0 0.0
        %1790 = vmatprep.subr.mxu0 0.0
        %1791 = vmatpush1.msra.mxu0 0.0
        %1792 = vmatprep.subr.mxu0 0.0
        %1793 = vmatpush1.msra.mxu0 0.0
        %1794 = vmatprep.subr.mxu0 0.0
        %1795 = vmatpush1.msra.mxu0 0.0
        %1796 = vmatprep.subr.mxu0 0.0
        %1797 = vmatpush1.msra.mxu0 0.0
        %1798 = vmatprep.subr.mxu0 0.0
        %1799 = vmatpush1.msra.mxu0 0.0
        %1800 = vmatprep.subr.mxu0 0.0
        %1801 = vmatpush1.msra.mxu0 0.0
        %1802 = vmatprep.subr.mxu0 0.0
        %1803 = vmatpush1.msra.mxu0 0.0
        %1804 = vmatprep.subr.mxu0 0.0
        %1805 = vmatpush1.msra.mxu0 0.0
        %1806 = vmatprep.subr.mxu0 0.0
        %v1807 = vand.u32 %v1141, 4294901760
        %1808 = vmatpush1.msra.mxu0 %v1807
        %1809 = vmatprep.subr.mxu0 0.0
        %1810 = vmatpush2.msra.mxu0 0.0
        %1811 = vmatprep.subr.mxu0 0.0
        %1812 = vmatpush2.msra.mxu0 0.0
        %1813 = vmatprep.subr.mxu0 0.0
        %1814 = vmatpush2.msra.mxu0 0.0
        %1815 = vmatprep.subr.mxu0 0.0
        %1816 = vmatpush2.msra.mxu0 0.0
        %1817 = vmatprep.subr.mxu0 0.0
        %1818 = vmatpush2.msra.mxu0 0.0
        %1819 = vmatprep.subr.mxu0 0.0
        %1820 = vmatpush2.msra.mxu0 0.0
        %1821 = vmatprep.subr.mxu0 0.0
        %1822 = vmatpush2.msra.mxu0 0.0
        %1823 = vmatprep.subr.mxu0 0.0
        %1824 = vmatpush2.msra.mxu0 0.0
        %1825 = vmatprep.subr.mxu0 0.0
        %1826 = vmatpush2.msra.mxu0 0.0
        %1827 = vmatprep.subr.mxu0 0.0
        %1828 = vmatpush2.msra.mxu0 0.0
        %1829 = vmatprep.subr.mxu0 0.0
        %1830 = vmatpush2.msra.mxu0 0.0
        %1831 = vmatprep.subr.mxu0 0.0
        %1832 = vmatpush2.msra.mxu0 0.0
        %1833 = vmatprep.subr.mxu0 0.0
        %1834 = vmatpush2.msra.mxu0 0.0
        %1835 = vmatprep.subr.mxu0 0.0
        %1836 = vmatpush2.msra.mxu0 0.0
        %1837 = vmatprep.subr.mxu0 0.0
        %1838 = vmatpush2.msra.mxu0 0.0
        %1839 = vmatprep.subr.mxu0 0.0
        %1840 = vmatpush2.msra.mxu0 0.0
        %1841 = vmatprep.mubr.f32.mxu0 0.0
        %v1842 = vand.u32 %v1117, 4294901760
        %1843 = vmatmul.mubr.f32.gmra.mxu0 %v1842
        %v1844 = vpop.f32.mrf.mxu0
        %v1845 = vadd.f32 %v1731, %v1844
        %v1846 = vpop.f32.mrf.mxu0
        %1847 = vmatprep.mubr.f32.mxu0 0.0
        %v1848 = vand.u32 %v1120, 4294901760
        %1849 = vmatmul.mubr.f32.gmra.mxu0 %v1848
        %v1850 = vpop.f32.mrf.mxu0
        %v1851 = vadd.f32 %v1737, %v1850
        %v1852 = vpop.f32.mrf.mxu0
        %1853 = vmatprep.mubr.f32.mxu0 0.0
        %v1854 = vand.u32 %v1123, 4294901760
        %1855 = vmatmul.mubr.f32.gmra.mxu0 %v1854
        %v1856 = vpop.f32.mrf.mxu0
        %v1857 = vadd.f32 %v1743, %v1856
        %v1858 = vpop.f32.mrf.mxu0
        %1859 = vmatprep.mubr.f32.mxu0 0.0
        %v1860 = vand.u32 %v1126, 4294901760
        %1861 = vmatmul.mubr.f32.gmra.mxu0 %v1860
        %v1862 = vpop.f32.mrf.mxu0
        %v1863 = vadd.f32 %v1749, %v1862
        %v1864 = vpop.f32.mrf.mxu0
        %1865 = vmatprep.mubr.f32.mxu0 0.0
        %v1866 = vand.u32 %v1129, 4294901760
        %1867 = vmatmul.mubr.f32.gmra.mxu0 %v1866
        %v1868 = vpop.f32.mrf.mxu0
        %v1869 = vadd.f32 %v1755, %v1868
        %v1870 = vpop.f32.mrf.mxu0
        %1871 = vmatprep.mubr.f32.mxu0 0.0
        %v1872 = vand.u32 %v1132, 4294901760
        %1873 = vmatmul.mubr.f32.gmra.mxu0 %v1872
        %v1874 = vpop.f32.mrf.mxu0
        %v1875 = vadd.f32 %v1761, %v1874
        %v1876 = vpop.f32.mrf.mxu0
        %1877 = vmatprep.mubr.f32.mxu0 0.0
        %v1878 = vand.u32 %v1135, 4294901760
        %1879 = vmatmul.mubr.f32.gmra.mxu0 %v1878
        %v1880 = vpop.f32.mrf.mxu0
        %v1881 = vadd.f32 %v1767, %v1880
        %v1882 = vpop.f32.mrf.mxu0
        %1883 = vmatprep.mubr.f32.mxu0 0.0
        %v1884 = vand.u32 %v1138, 4294901760
        %1885 = vmatmul.mubr.f32.gmra.mxu0 %v1884
        %v1886 = vpop.f32.mrf.mxu0
        %v1887 = vadd.f32 %v1773, %v1886
        %v1888 = vpop.f32.mrf.mxu0
        %1889 = vdwg.mxu0
        %v1890 = vld [vmem:[%s305 + $0x1] sm:$0xff]
        %v1891 = vld [vmem:[%s305 + $0x11] sm:$0xff]
        %v1892 = vld [vmem:[%s305 + $0x21] sm:$0xff]
        %v1893 = vld [vmem:[%s305 + $0x31] sm:$0xff]
        %v1894 = vld [vmem:[%s305 + $0x41] sm:$0xff]
        %v1895 = vld [vmem:[%s305 + $0x51] sm:$0xff]
        %v1896 = vld [vmem:[%s305 + $0x61] sm:$0xff]
        %v1897 = vld [vmem:[%s305 + $0x71] sm:$0xff]
        %s1898 = scalar_lea.vmem %s4, 8
        %v1899 = vld [vmem:[%s1898] sm:$0xf]
        %v1901 = vsel %vm340, %v1890, 0
        %v1904 = vsel %vm340, %v1891, 0
        %v1907 = vsel %vm340, %v1892, 0
        %v1910 = vsel %vm340, %v1893, 0
        %v1913 = vsel %vm340, %v1894, 0
        %v1916 = vsel %vm340, %v1895, 0
        %v1919 = vsel %vm340, %v1896, 0
        %v1922 = vsel %vm340, %v1897, 0
        %v1925 = vsel %vm365, %v1899, 0
        %1927 = vmatprep.subr.mxu0 0.0
        %1928 = vmatpush1.msra.mxu0 0.0
        %1929 = vmatprep.subr.mxu0 0.0
        %1930 = vmatpush1.msra.mxu0 0.0
        %1931 = vmatprep.subr.mxu0 0.0
        %1932 = vmatpush1.msra.mxu0 0.0
        %1933 = vmatprep.subr.mxu0 0.0
        %1934 = vmatpush1.msra.mxu0 0.0
        %1935 = vmatprep.subr.mxu0 0.0
        %1936 = vmatpush1.msra.mxu0 0.0
        %1937 = vmatprep.subr.mxu0 0.0
        %1938 = vmatpush1.msra.mxu0 0.0
        %1939 = vmatprep.subr.mxu0 0.0
        %1940 = vmatpush1.msra.mxu0 0.0
        %1941 = vmatprep.subr.mxu0 0.0
        %1942 = vmatpush1.msra.mxu0 0.0
        %1943 = vmatprep.subr.mxu0 0.0
        %1944 = vmatpush1.msra.mxu0 0.0
        %1945 = vmatprep.subr.mxu0 0.0
        %1946 = vmatpush1.msra.mxu0 0.0
        %1947 = vmatprep.subr.mxu0 0.0
        %1948 = vmatpush1.msra.mxu0 0.0
        %1949 = vmatprep.subr.mxu0 0.0
        %1950 = vmatpush1.msra.mxu0 0.0
        %1951 = vmatprep.subr.mxu0 0.0
        %1952 = vmatpush1.msra.mxu0 0.0
        %1953 = vmatprep.subr.mxu0 0.0
        %1954 = vmatpush1.msra.mxu0 0.0
        %1955 = vmatprep.subr.mxu0 0.0
        %1956 = vmatpush1.msra.mxu0 0.0
        %1957 = vmatprep.subr.mxu0 0.0
        %v1958 = vand.u32 %v1925, 4294901760
        %1959 = vmatpush1.msra.mxu0 %v1958
        %1960 = vmatprep.subr.mxu0 0.0
        %1961 = vmatpush2.msra.mxu0 0.0
        %1962 = vmatprep.subr.mxu0 0.0
        %1963 = vmatpush2.msra.mxu0 0.0
        %1964 = vmatprep.subr.mxu0 0.0
        %1965 = vmatpush2.msra.mxu0 0.0
        %1966 = vmatprep.subr.mxu0 0.0
        %1967 = vmatpush2.msra.mxu0 0.0
        %1968 = vmatprep.subr.mxu0 0.0
        %1969 = vmatpush2.msra.mxu0 0.0
        %1970 = vmatprep.subr.mxu0 0.0
        %1971 = vmatpush2.msra.mxu0 0.0
        %1972 = vmatprep.subr.mxu0 0.0
        %1973 = vmatpush2.msra.mxu0 0.0
        %1974 = vmatprep.subr.mxu0 0.0
        %1975 = vmatpush2.msra.mxu0 0.0
        %1976 = vmatprep.subr.mxu0 0.0
        %1977 = vmatpush2.msra.mxu0 0.0
        %1978 = vmatprep.subr.mxu0 0.0
        %1979 = vmatpush2.msra.mxu0 0.0
        %1980 = vmatprep.subr.mxu0 0.0
        %1981 = vmatpush2.msra.mxu0 0.0
        %1982 = vmatprep.subr.mxu0 0.0
        %1983 = vmatpush2.msra.mxu0 0.0
        %1984 = vmatprep.subr.mxu0 0.0
        %1985 = vmatpush2.msra.mxu0 0.0
        %1986 = vmatprep.subr.mxu0 0.0
        %1987 = vmatpush2.msra.mxu0 0.0
        %1988 = vmatprep.subr.mxu0 0.0
        %1989 = vmatpush2.msra.mxu0 0.0
        %1990 = vmatprep.subr.mxu0 0.0
        %1991 = vmatpush2.msra.mxu0 0.0
        %1992 = vmatprep.mubr.f32.mxu0 0.0
        %v1993 = vand.u32 %v1901, 4294901760
        %v1994 = vsub.f32 %v1901, %v1993
        %v1995 = vand.u32 %v1994, 4294901760
        %v1996 = vsub.f32 %v1994, %v1995
        %v1997 = vand.u32 %v1996, 4294901760
        %1998 = vmatmul.mubr.f32.gmra.mxu0 %v1997
        %v1999 = vpop.f32.mrf.mxu0
        %v2000 = vadd.f32 0.0, %v1999
        %v2001 = vpop.f32.mrf.mxu0
        %2002 = vmatprep.mubr.f32.mxu0 0.0
        %v2003 = vand.u32 %v1904, 4294901760
        %v2004 = vsub.f32 %v1904, %v2003
        %v2005 = vand.u32 %v2004, 4294901760
        %v2006 = vsub.f32 %v2004, %v2005
        %v2007 = vand.u32 %v2006, 4294901760
        %2008 = vmatmul.mubr.f32.gmra.mxu0 %v2007
        %v2009 = vpop.f32.mrf.mxu0
        %v2010 = vadd.f32 0.0, %v2009
        %v2011 = vpop.f32.mrf.mxu0
        %2012 = vmatprep.mubr.f32.mxu0 0.0
        %v2013 = vand.u32 %v1907, 4294901760
        %v2014 = vsub.f32 %v1907, %v2013
        %v2015 = vand.u32 %v2014, 4294901760
        %v2016 = vsub.f32 %v2014, %v2015
        %v2017 = vand.u32 %v2016, 4294901760
        %2018 = vmatmul.mubr.f32.gmra.mxu0 %v2017
        %v2019 = vpop.f32.mrf.mxu0
        %v2020 = vadd.f32 0.0, %v2019
        %v2021 = vpop.f32.mrf.mxu0
        %2022 = vmatprep.mubr.f32.mxu0 0.0
        %v2023 = vand.u32 %v1910, 4294901760
        %v2024 = vsub.f32 %v1910, %v2023
        %v2025 = vand.u32 %v2024, 4294901760
        %v2026 = vsub.f32 %v2024, %v2025
        %v2027 = vand.u32 %v2026, 4294901760
        %2028 = vmatmul.mubr.f32.gmra.mxu0 %v2027
        %v2029 = vpop.f32.mrf.mxu0
        %v2030 = vadd.f32 0.0, %v2029
        %v2031 = vpop.f32.mrf.mxu0
        %2032 = vmatprep.mubr.f32.mxu0 0.0
        %v2033 = vand.u32 %v1913, 4294901760
        %v2034 = vsub.f32 %v1913, %v2033
        %v2035 = vand.u32 %v2034, 4294901760
        %v2036 = vsub.f32 %v2034, %v2035
        %v2037 = vand.u32 %v2036, 4294901760
        %2038 = vmatmul.mubr.f32.gmra.mxu0 %v2037
        %v2039 = vpop.f32.mrf.mxu0
        %v2040 = vadd.f32 0.0, %v2039
        %v2041 = vpop.f32.mrf.mxu0
        %2042 = vmatprep.mubr.f32.mxu0 0.0
        %v2043 = vand.u32 %v1916, 4294901760
        %v2044 = vsub.f32 %v1916, %v2043
        %v2045 = vand.u32 %v2044, 4294901760
        %v2046 = vsub.f32 %v2044, %v2045
        %v2047 = vand.u32 %v2046, 4294901760
        %2048 = vmatmul.mubr.f32.gmra.mxu0 %v2047
        %v2049 = vpop.f32.mrf.mxu0
        %v2050 = vadd.f32 0.0, %v2049
        %v2051 = vpop.f32.mrf.mxu0
        %2052 = vmatprep.mubr.f32.mxu0 0.0
        %v2053 = vand.u32 %v1919, 4294901760
        %v2054 = vsub.f32 %v1919, %v2053
        %v2055 = vand.u32 %v2054, 4294901760
        %v2056 = vsub.f32 %v2054, %v2055
        %v2057 = vand.u32 %v2056, 4294901760
        %2058 = vmatmul.mubr.f32.gmra.mxu0 %v2057
        %v2059 = vpop.f32.mrf.mxu0
        %v2060 = vadd.f32 0.0, %v2059
        %v2061 = vpop.f32.mrf.mxu0
        %2062 = vmatprep.mubr.f32.mxu0 0.0
        %v2063 = vand.u32 %v1922, 4294901760
        %v2064 = vsub.f32 %v1922, %v2063
        %v2065 = vand.u32 %v2064, 4294901760
        %v2066 = vsub.f32 %v2064, %v2065
        %v2067 = vand.u32 %v2066, 4294901760
        %2068 = vmatmul.mubr.f32.gmra.mxu0 %v2067
        %v2069 = vpop.f32.mrf.mxu0
        %v2070 = vadd.f32 0.0, %v2069
        %v2071 = vpop.f32.mrf.mxu0
        %2072 = vdwg.mxu0
        %2073 = vmatprep.subr.mxu0 0.0
        %2074 = vmatpush1.msra.mxu0 0.0
        %2075 = vmatprep.subr.mxu0 0.0
        %2076 = vmatpush1.msra.mxu0 0.0
        %2077 = vmatprep.subr.mxu0 0.0
        %2078 = vmatpush1.msra.mxu0 0.0
        %2079 = vmatprep.subr.mxu0 0.0
        %2080 = vmatpush1.msra.mxu0 0.0
        %2081 = vmatprep.subr.mxu0 0.0
        %2082 = vmatpush1.msra.mxu0 0.0
        %2083 = vmatprep.subr.mxu0 0.0
        %2084 = vmatpush1.msra.mxu0 0.0
        %2085 = vmatprep.subr.mxu0 0.0
        %2086 = vmatpush1.msra.mxu0 0.0
        %2087 = vmatprep.subr.mxu0 0.0
        %2088 = vmatpush1.msra.mxu0 0.0
        %2089 = vmatprep.subr.mxu0 0.0
        %2090 = vmatpush1.msra.mxu0 0.0
        %2091 = vmatprep.subr.mxu0 0.0
        %2092 = vmatpush1.msra.mxu0 0.0
        %2093 = vmatprep.subr.mxu0 0.0
        %2094 = vmatpush1.msra.mxu0 0.0
        %2095 = vmatprep.subr.mxu0 0.0
        %2096 = vmatpush1.msra.mxu0 0.0
        %2097 = vmatprep.subr.mxu0 0.0
        %2098 = vmatpush1.msra.mxu0 0.0
        %2099 = vmatprep.subr.mxu0 0.0
        %2100 = vmatpush1.msra.mxu0 0.0
        %2101 = vmatprep.subr.mxu0 0.0
        %2102 = vmatpush1.msra.mxu0 0.0
        %2103 = vmatprep.subr.mxu0 0.0
        %v2104 = vand.u32 %v1925, 4294901760
        %v2105 = vsub.f32 %v1925, %v2104
        %v2106 = vand.u32 %v2105, 4294901760
        %v2107 = vsub.f32 %v2105, %v2106
        %v2108 = vand.u32 %v2107, 4294901760
        %2109 = vmatpush1.msra.mxu0 %v2108
        %2110 = vmatprep.subr.mxu0 0.0
        %2111 = vmatpush2.msra.mxu0 0.0
        %2112 = vmatprep.subr.mxu0 0.0
        %2113 = vmatpush2.msra.mxu0 0.0
        %2114 = vmatprep.subr.mxu0 0.0
        %2115 = vmatpush2.msra.mxu0 0.0
        %2116 = vmatprep.subr.mxu0 0.0
        %2117 = vmatpush2.msra.mxu0 0.0
        %2118 = vmatprep.subr.mxu0 0.0
        %2119 = vmatpush2.msra.mxu0 0.0
        %2120 = vmatprep.subr.mxu0 0.0
        %2121 = vmatpush2.msra.mxu0 0.0
        %2122 = vmatprep.subr.mxu0 0.0
        %2123 = vmatpush2.msra.mxu0 0.0
        %2124 = vmatprep.subr.mxu0 0.0
        %2125 = vmatpush2.msra.mxu0 0.0
        %2126 = vmatprep.subr.mxu0 0.0
        %2127 = vmatpush2.msra.mxu0 0.0
        %2128 = vmatprep.subr.mxu0 0.0
        %2129 = vmatpush2.msra.mxu0 0.0
        %2130 = vmatprep.subr.mxu0 0.0
        %2131 = vmatpush2.msra.mxu0 0.0
        %2132 = vmatprep.subr.mxu0 0.0
        %2133 = vmatpush2.msra.mxu0 0.0
        %2134 = vmatprep.subr.mxu0 0.0
        %2135 = vmatpush2.msra.mxu0 0.0
        %2136 = vmatprep.subr.mxu0 0.0
        %2137 = vmatpush2.msra.mxu0 0.0
        %2138 = vmatprep.subr.mxu0 0.0
        %2139 = vmatpush2.msra.mxu0 0.0
        %2140 = vmatprep.subr.mxu0 0.0
        %2141 = vmatpush2.msra.mxu0 0.0
        %2142 = vmatprep.mubr.f32.mxu0 0.0
        %v2143 = vand.u32 %v1901, 4294901760
        %2144 = vmatmul.mubr.f32.gmra.mxu0 %v2143
        %v2145 = vpop.f32.mrf.mxu0
        %v2146 = vadd.f32 %v2000, %v2145
        %v2147 = vpop.f32.mrf.mxu0
        %2148 = vmatprep.mubr.f32.mxu0 0.0
        %v2149 = vand.u32 %v1904, 4294901760
        %2150 = vmatmul.mubr.f32.gmra.mxu0 %v2149
        %v2151 = vpop.f32.mrf.mxu0
        %v2152 = vadd.f32 %v2010, %v2151
        %v2153 = vpop.f32.mrf.mxu0
        %2154 = vmatprep.mubr.f32.mxu0 0.0
        %v2155 = vand.u32 %v1907, 4294901760
        %2156 = vmatmul.mubr.f32.gmra.mxu0 %v2155
        %v2157 = vpop.f32.mrf.mxu0
        %v2158 = vadd.f32 %v2020, %v2157
        %v2159 = vpop.f32.mrf.mxu0
        %2160 = vmatprep.mubr.f32.mxu0 0.0
        %v2161 = vand.u32 %v1910, 4294901760
        %2162 = vmatmul.mubr.f32.gmra.mxu0 %v2161
        %v2163 = vpop.f32.mrf.mxu0
        %v2164 = vadd.f32 %v2030, %v2163
        %v2165 = vpop.f32.mrf.mxu0
        %2166 = vmatprep.mubr.f32.mxu0 0.0
        %v2167 = vand.u32 %v1913, 4294901760
        %2168 = vmatmul.mubr.f32.gmra.mxu0 %v2167
        %v2169 = vpop.f32.mrf.mxu0
        %v2170 = vadd.f32 %v2040, %v2169
        %v2171 = vpop.f32.mrf.mxu0
        %2172 = vmatprep.mubr.f32.mxu0 0.0
        %v2173 = vand.u32 %v1916, 4294901760
        %2174 = vmatmul.mubr.f32.gmra.mxu0 %v2173
        %v2175 = vpop.f32.mrf.mxu0
        %v2176 = vadd.f32 %v2050, %v2175
        %v2177 = vpop.f32.mrf.mxu0
        %2178 = vmatprep.mubr.f32.mxu0 0.0
        %v2179 = vand.u32 %v1919, 4294901760
        %2180 = vmatmul.mubr.f32.gmra.mxu0 %v2179
        %v2181 = vpop.f32.mrf.mxu0
        %v2182 = vadd.f32 %v2060, %v2181
        %v2183 = vpop.f32.mrf.mxu0
        %2184 = vmatprep.mubr.f32.mxu0 0.0
        %v2185 = vand.u32 %v1922, 4294901760
        %2186 = vmatmul.mubr.f32.gmra.mxu0 %v2185
        %v2187 = vpop.f32.mrf.mxu0
        %v2188 = vadd.f32 %v2070, %v2187
        %v2189 = vpop.f32.mrf.mxu0
        %2190 = vdwg.mxu0
        %2191 = vmatprep.subr.mxu0 0.0
        %2192 = vmatpush1.msra.mxu0 0.0
        %2193 = vmatprep.subr.mxu0 0.0
        %2194 = vmatpush1.msra.mxu0 0.0
        %2195 = vmatprep.subr.mxu0 0.0
        %2196 = vmatpush1.msra.mxu0 0.0
        %2197 = vmatprep.subr.mxu0 0.0
        %2198 = vmatpush1.msra.mxu0 0.0
        %2199 = vmatprep.subr.mxu0 0.0
        %2200 = vmatpush1.msra.mxu0 0.0
        %2201 = vmatprep.subr.mxu0 0.0
        %2202 = vmatpush1.msra.mxu0 0.0
        %2203 = vmatprep.subr.mxu0 0.0
        %2204 = vmatpush1.msra.mxu0 0.0
        %2205 = vmatprep.subr.mxu0 0.0
        %2206 = vmatpush1.msra.mxu0 0.0
        %2207 = vmatprep.subr.mxu0 0.0
        %2208 = vmatpush1.msra.mxu0 0.0
        %2209 = vmatprep.subr.mxu0 0.0
        %2210 = vmatpush1.msra.mxu0 0.0
        %2211 = vmatprep.subr.mxu0 0.0
        %2212 = vmatpush1.msra.mxu0 0.0
        %2213 = vmatprep.subr.mxu0 0.0
        %2214 = vmatpush1.msra.mxu0 0.0
        %2215 = vmatprep.subr.mxu0 0.0
        %2216 = vmatpush1.msra.mxu0 0.0
        %2217 = vmatprep.subr.mxu0 0.0
        %2218 = vmatpush1.msra.mxu0 0.0
        %2219 = vmatprep.subr.mxu0 0.0
        %2220 = vmatpush1.msra.mxu0 0.0
        %2221 = vmatprep.subr.mxu0 0.0
        %v2222 = vand.u32 %v1925, 4294901760
        %v2223 = vsub.f32 %v1925, %v2222
        %2224 = vmatpush1.msra.mxu0 %v2223
        %2225 = vmatprep.subr.mxu0 0.0
        %2226 = vmatpush2.msra.mxu0 0.0
        %2227 = vmatprep.subr.mxu0 0.0
        %2228 = vmatpush2.msra.mxu0 0.0
        %2229 = vmatprep.subr.mxu0 0.0
        %2230 = vmatpush2.msra.mxu0 0.0
        %2231 = vmatprep.subr.mxu0 0.0
        %2232 = vmatpush2.msra.mxu0 0.0
        %2233 = vmatprep.subr.mxu0 0.0
        %2234 = vmatpush2.msra.mxu0 0.0
        %2235 = vmatprep.subr.mxu0 0.0
        %2236 = vmatpush2.msra.mxu0 0.0
        %2237 = vmatprep.subr.mxu0 0.0
        %2238 = vmatpush2.msra.mxu0 0.0
        %2239 = vmatprep.subr.mxu0 0.0
        %2240 = vmatpush2.msra.mxu0 0.0
        %2241 = vmatprep.subr.mxu0 0.0
        %2242 = vmatpush2.msra.mxu0 0.0
        %2243 = vmatprep.subr.mxu0 0.0
        %2244 = vmatpush2.msra.mxu0 0.0
        %2245 = vmatprep.subr.mxu0 0.0
        %2246 = vmatpush2.msra.mxu0 0.0
        %2247 = vmatprep.subr.mxu0 0.0
        %2248 = vmatpush2.msra.mxu0 0.0
        %2249 = vmatprep.subr.mxu0 0.0
        %2250 = vmatpush2.msra.mxu0 0.0
        %2251 = vmatprep.subr.mxu0 0.0
        %2252 = vmatpush2.msra.mxu0 0.0
        %2253 = vmatprep.subr.mxu0 0.0
        %2254 = vmatpush2.msra.mxu0 0.0
        %2255 = vmatprep.subr.mxu0 0.0
        %2256 = vmatpush2.msra.mxu0 0.0
        %2257 = vmatprep.mubr.f32.mxu0 0.0
        %v2258 = vand.u32 %v1901, 4294901760
        %v2259 = vsub.f32 %v1901, %v2258
        %2260 = vmatmul.mubr.f32.gmra.mxu0 %v2259
        %v2261 = vpop.f32.mrf.mxu0
        %v2262 = vadd.f32 %v2146, %v2261
        %v2263 = vpop.f32.mrf.mxu0
        %2264 = vmatprep.mubr.f32.mxu0 0.0
        %v2265 = vand.u32 %v1904, 4294901760
        %v2266 = vsub.f32 %v1904, %v2265
        %2267 = vmatmul.mubr.f32.gmra.mxu0 %v2266
        %v2268 = vpop.f32.mrf.mxu0
        %v2269 = vadd.f32 %v2152, %v2268
        %v2270 = vpop.f32.mrf.mxu0
        %2271 = vmatprep.mubr.f32.mxu0 0.0
        %v2272 = vand.u32 %v1907, 4294901760
        %v2273 = vsub.f32 %v1907, %v2272
        %2274 = vmatmul.mubr.f32.gmra.mxu0 %v2273
        %v2275 = vpop.f32.mrf.mxu0
        %v2276 = vadd.f32 %v2158, %v2275
        %v2277 = vpop.f32.mrf.mxu0
        %2278 = vmatprep.mubr.f32.mxu0 0.0
        %v2279 = vand.u32 %v1910, 4294901760
        %v2280 = vsub.f32 %v1910, %v2279
        %2281 = vmatmul.mubr.f32.gmra.mxu0 %v2280
        %v2282 = vpop.f32.mrf.mxu0
        %v2283 = vadd.f32 %v2164, %v2282
        %v2284 = vpop.f32.mrf.mxu0
        %2285 = vmatprep.mubr.f32.mxu0 0.0
        %v2286 = vand.u32 %v1913, 4294901760
        %v2287 = vsub.f32 %v1913, %v2286
        %2288 = vmatmul.mubr.f32.gmra.mxu0 %v2287
        %v2289 = vpop.f32.mrf.mxu0
        %v2290 = vadd.f32 %v2170, %v2289
        %v2291 = vpop.f32.mrf.mxu0
        %2292 = vmatprep.mubr.f32.mxu0 0.0
        %v2293 = vand.u32 %v1916, 4294901760
        %v2294 = vsub.f32 %v1916, %v2293
        %2295 = vmatmul.mubr.f32.gmra.mxu0 %v2294
        %v2296 = vpop.f32.mrf.mxu0
        %v2297 = vadd.f32 %v2176, %v2296
        %v2298 = vpop.f32.mrf.mxu0
        %2299 = vmatprep.mubr.f32.mxu0 0.0
        %v2300 = vand.u32 %v1919, 4294901760
        %v2301 = vsub.f32 %v1919, %v2300
        %2302 = vmatmul.mubr.f32.gmra.mxu0 %v2301
        %v2303 = vpop.f32.mrf.mxu0
        %v2304 = vadd.f32 %v2182, %v2303
        %v2305 = vpop.f32.mrf.mxu0
        %2306 = vmatprep.mubr.f32.mxu0 0.0
        %v2307 = vand.u32 %v1922, 4294901760
        %v2308 = vsub.f32 %v1922, %v2307
        %2309 = vmatmul.mubr.f32.gmra.mxu0 %v2308
        %v2310 = vpop.f32.mrf.mxu0
        %v2311 = vadd.f32 %v2188, %v2310
        %v2312 = vpop.f32.mrf.mxu0
        %2313 = vdwg.mxu0
        %2314 = vmatprep.subr.mxu0 0.0
        %2315 = vmatpush1.msra.mxu0 0.0
        %2316 = vmatprep.subr.mxu0 0.0
        %2317 = vmatpush1.msra.mxu0 0.0
        %2318 = vmatprep.subr.mxu0 0.0
        %2319 = vmatpush1.msra.mxu0 0.0
        %2320 = vmatprep.subr.mxu0 0.0
        %2321 = vmatpush1.msra.mxu0 0.0
        %2322 = vmatprep.subr.mxu0 0.0
        %2323 = vmatpush1.msra.mxu0 0.0
        %2324 = vmatprep.subr.mxu0 0.0
        %2325 = vmatpush1.msra.mxu0 0.0
        %2326 = vmatprep.subr.mxu0 0.0
        %2327 = vmatpush1.msra.mxu0 0.0
        %2328 = vmatprep.subr.mxu0 0.0
        %2329 = vmatpush1.msra.mxu0 0.0
        %2330 = vmatprep.subr.mxu0 0.0
        %2331 = vmatpush1.msra.mxu0 0.0
        %2332 = vmatprep.subr.mxu0 0.0
        %2333 = vmatpush1.msra.mxu0 0.0
        %2334 = vmatprep.subr.mxu0 0.0
        %2335 = vmatpush1.msra.mxu0 0.0
        %2336 = vmatprep.subr.mxu0 0.0
        %2337 = vmatpush1.msra.mxu0 0.0
        %2338 = vmatprep.subr.mxu0 0.0
        %2339 = vmatpush1.msra.mxu0 0.0
        %2340 = vmatprep.subr.mxu0 0.0
        %2341 = vmatpush1.msra.mxu0 0.0
        %2342 = vmatprep.subr.mxu0 0.0
        %2343 = vmatpush1.msra.mxu0 0.0
        %2344 = vmatprep.subr.mxu0 0.0
        %v2345 = vand.u32 %v1925, 4294901760
        %2346 = vmatpush1.msra.mxu0 %v2345
        %2347 = vmatprep.subr.mxu0 0.0
        %2348 = vmatpush2.msra.mxu0 0.0
        %2349 = vmatprep.subr.mxu0 0.0
        %2350 = vmatpush2.msra.mxu0 0.0
        %2351 = vmatprep.subr.mxu0 0.0
        %2352 = vmatpush2.msra.mxu0 0.0
        %2353 = vmatprep.subr.mxu0 0.0
        %2354 = vmatpush2.msra.mxu0 0.0
        %2355 = vmatprep.subr.mxu0 0.0
        %2356 = vmatpush2.msra.mxu0 0.0
        %2357 = vmatprep.subr.mxu0 0.0
        %2358 = vmatpush2.msra.mxu0 0.0
        %2359 = vmatprep.subr.mxu0 0.0
        %2360 = vmatpush2.msra.mxu0 0.0
        %2361 = vmatprep.subr.mxu0 0.0
        %2362 = vmatpush2.msra.mxu0 0.0
        %2363 = vmatprep.subr.mxu0 0.0
        %2364 = vmatpush2.msra.mxu0 0.0
        %2365 = vmatprep.subr.mxu0 0.0
        %2366 = vmatpush2.msra.mxu0 0.0
        %2367 = vmatprep.subr.mxu0 0.0
        %2368 = vmatpush2.msra.mxu0 0.0
        %2369 = vmatprep.subr.mxu0 0.0
        %2370 = vmatpush2.msra.mxu0 0.0
        %2371 = vmatprep.subr.mxu0 0.0
        %2372 = vmatpush2.msra.mxu0 0.0
        %2373 = vmatprep.subr.mxu0 0.0
        %2374 = vmatpush2.msra.mxu0 0.0
        %2375 = vmatprep.subr.mxu0 0.0
        %2376 = vmatpush2.msra.mxu0 0.0
        %2377 = vmatprep.subr.mxu0 0.0
        %2378 = vmatpush2.msra.mxu0 0.0
        %2379 = vmatprep.mubr.f32.mxu0 0.0
        %v2380 = vand.u32 %v1901, 4294901760
        %v2381 = vsub.f32 %v1901, %v2380
        %v2382 = vand.u32 %v2381, 4294901760
        %2383 = vmatmul.mubr.f32.gmra.mxu0 %v2382
        %v2384 = vpop.f32.mrf.mxu0
        %v2385 = vadd.f32 %v2262, %v2384
        %v2386 = vpop.f32.mrf.mxu0
        %2387 = vmatprep.mubr.f32.mxu0 0.0
        %v2388 = vand.u32 %v1904, 4294901760
        %v2389 = vsub.f32 %v1904, %v2388
        %v2390 = vand.u32 %v2389, 4294901760
        %2391 = vmatmul.mubr.f32.gmra.mxu0 %v2390
        %v2392 = vpop.f32.mrf.mxu0
        %v2393 = vadd.f32 %v2269, %v2392
        %v2394 = vpop.f32.mrf.mxu0
        %2395 = vmatprep.mubr.f32.mxu0 0.0
        %v2396 = vand.u32 %v1907, 4294901760
        %v2397 = vsub.f32 %v1907, %v2396
        %v2398 = vand.u32 %v2397, 4294901760
        %2399 = vmatmul.mubr.f32.gmra.mxu0 %v2398
        %v2400 = vpop.f32.mrf.mxu0
        %v2401 = vadd.f32 %v2276, %v2400
        %v2402 = vpop.f32.mrf.mxu0
        %2403 = vmatprep.mubr.f32.mxu0 0.0
        %v2404 = vand.u32 %v1910, 4294901760
        %v2405 = vsub.f32 %v1910, %v2404
        %v2406 = vand.u32 %v2405, 4294901760
        %2407 = vmatmul.mubr.f32.gmra.mxu0 %v2406
        %v2408 = vpop.f32.mrf.mxu0
        %v2409 = vadd.f32 %v2283, %v2408
        %v2410 = vpop.f32.mrf.mxu0
        %2411 = vmatprep.mubr.f32.mxu0 0.0
        %v2412 = vand.u32 %v1913, 4294901760
        %v2413 = vsub.f32 %v1913, %v2412
        %v2414 = vand.u32 %v2413, 4294901760
        %2415 = vmatmul.mubr.f32.gmra.mxu0 %v2414
        %v2416 = vpop.f32.mrf.mxu0
        %v2417 = vadd.f32 %v2290, %v2416
        %v2418 = vpop.f32.mrf.mxu0
        %2419 = vmatprep.mubr.f32.mxu0 0.0
        %v2420 = vand.u32 %v1916, 4294901760
        %v2421 = vsub.f32 %v1916, %v2420
        %v2422 = vand.u32 %v2421, 4294901760
        %2423 = vmatmul.mubr.f32.gmra.mxu0 %v2422
        %v2424 = vpop.f32.mrf.mxu0
        %v2425 = vadd.f32 %v2297, %v2424
        %v2426 = vpop.f32.mrf.mxu0
        %2427 = vmatprep.mubr.f32.mxu0 0.0
        %v2428 = vand.u32 %v1919, 4294901760
        %v2429 = vsub.f32 %v1919, %v2428
        %v2430 = vand.u32 %v2429, 4294901760
        %2431 = vmatmul.mubr.f32.gmra.mxu0 %v2430
        %v2432 = vpop.f32.mrf.mxu0
        %v2433 = vadd.f32 %v2304, %v2432
        %v2434 = vpop.f32.mrf.mxu0
        %2435 = vmatprep.mubr.f32.mxu0 0.0
        %v2436 = vand.u32 %v1922, 4294901760
        %v2437 = vsub.f32 %v1922, %v2436
        %v2438 = vand.u32 %v2437, 4294901760
        %2439 = vmatmul.mubr.f32.gmra.mxu0 %v2438
        %v2440 = vpop.f32.mrf.mxu0
        %v2441 = vadd.f32 %v2311, %v2440
        %v2442 = vpop.f32.mrf.mxu0
        %2443 = vdwg.mxu0
        %2444 = vmatprep.subr.mxu0 0.0
        %2445 = vmatpush1.msra.mxu0 0.0
        %2446 = vmatprep.subr.mxu0 0.0
        %2447 = vmatpush1.msra.mxu0 0.0
        %2448 = vmatprep.subr.mxu0 0.0
        %2449 = vmatpush1.msra.mxu0 0.0
        %2450 = vmatprep.subr.mxu0 0.0
        %2451 = vmatpush1.msra.mxu0 0.0
        %2452 = vmatprep.subr.mxu0 0.0
        %2453 = vmatpush1.msra.mxu0 0.0
        %2454 = vmatprep.subr.mxu0 0.0
        %2455 = vmatpush1.msra.mxu0 0.0
        %2456 = vmatprep.subr.mxu0 0.0
        %2457 = vmatpush1.msra.mxu0 0.0
        %2458 = vmatprep.subr.mxu0 0.0
        %2459 = vmatpush1.msra.mxu0 0.0
        %2460 = vmatprep.subr.mxu0 0.0
        %2461 = vmatpush1.msra.mxu0 0.0
        %2462 = vmatprep.subr.mxu0 0.0
        %2463 = vmatpush1.msra.mxu0 0.0
        %2464 = vmatprep.subr.mxu0 0.0
        %2465 = vmatpush1.msra.mxu0 0.0
        %2466 = vmatprep.subr.mxu0 0.0
        %2467 = vmatpush1.msra.mxu0 0.0
        %2468 = vmatprep.subr.mxu0 0.0
        %2469 = vmatpush1.msra.mxu0 0.0
        %2470 = vmatprep.subr.mxu0 0.0
        %2471 = vmatpush1.msra.mxu0 0.0
        %2472 = vmatprep.subr.mxu0 0.0
        %2473 = vmatpush1.msra.mxu0 0.0
        %2474 = vmatprep.subr.mxu0 0.0
        %v2475 = vand.u32 %v1925, 4294901760
        %v2476 = vsub.f32 %v1925, %v2475
        %v2477 = vand.u32 %v2476, 4294901760
        %2478 = vmatpush1.msra.mxu0 %v2477
        %2479 = vmatprep.subr.mxu0 0.0
        %2480 = vmatpush2.msra.mxu0 0.0
        %2481 = vmatprep.subr.mxu0 0.0
        %2482 = vmatpush2.msra.mxu0 0.0
        %2483 = vmatprep.subr.mxu0 0.0
        %2484 = vmatpush2.msra.mxu0 0.0
        %2485 = vmatprep.subr.mxu0 0.0
        %2486 = vmatpush2.msra.mxu0 0.0
        %2487 = vmatprep.subr.mxu0 0.0
        %2488 = vmatpush2.msra.mxu0 0.0
        %2489 = vmatprep.subr.mxu0 0.0
        %2490 = vmatpush2.msra.mxu0 0.0
        %2491 = vmatprep.subr.mxu0 0.0
        %2492 = vmatpush2.msra.mxu0 0.0
        %2493 = vmatprep.subr.mxu0 0.0
        %2494 = vmatpush2.msra.mxu0 0.0
        %2495 = vmatprep.subr.mxu0 0.0
        %2496 = vmatpush2.msra.mxu0 0.0
        %2497 = vmatprep.subr.mxu0 0.0
        %2498 = vmatpush2.msra.mxu0 0.0
        %2499 = vmatprep.subr.mxu0 0.0
        %2500 = vmatpush2.msra.mxu0 0.0
        %2501 = vmatprep.subr.mxu0 0.0
        %2502 = vmatpush2.msra.mxu0 0.0
        %2503 = vmatprep.subr.mxu0 0.0
        %2504 = vmatpush2.msra.mxu0 0.0
        %2505 = vmatprep.subr.mxu0 0.0
        %2506 = vmatpush2.msra.mxu0 0.0
        %2507 = vmatprep.subr.mxu0 0.0
        %2508 = vmatpush2.msra.mxu0 0.0
        %2509 = vmatprep.subr.mxu0 0.0
        %2510 = vmatpush2.msra.mxu0 0.0
        %2511 = vmatprep.mubr.f32.mxu0 0.0
        %v2512 = vand.u32 %v1901, 4294901760
        %2513 = vmatmul.mubr.f32.gmra.mxu0 %v2512
        %v2514 = vpop.f32.mrf.mxu0
        %v2515 = vadd.f32 %v2385, %v2514
        %v2516 = vpop.f32.mrf.mxu0
        %2517 = vmatprep.mubr.f32.mxu0 0.0
        %v2518 = vand.u32 %v1904, 4294901760
        %2519 = vmatmul.mubr.f32.gmra.mxu0 %v2518
        %v2520 = vpop.f32.mrf.mxu0
        %v2521 = vadd.f32 %v2393, %v2520
        %v2522 = vpop.f32.mrf.mxu0
        %2523 = vmatprep.mubr.f32.mxu0 0.0
        %v2524 = vand.u32 %v1907, 4294901760
        %2525 = vmatmul.mubr.f32.gmra.mxu0 %v2524
        %v2526 = vpop.f32.mrf.mxu0
        %v2527 = vadd.f32 %v2401, %v2526
        %v2528 = vpop.f32.mrf.mxu0
        %2529 = vmatprep.mubr.f32.mxu0 0.0
        %v2530 = vand.u32 %v1910, 4294901760
        %2531 = vmatmul.mubr.f32.gmra.mxu0 %v2530
        %v2532 = vpop.f32.mrf.mxu0
        %v2533 = vadd.f32 %v2409, %v2532
        %v2534 = vpop.f32.mrf.mxu0
        %2535 = vmatprep.mubr.f32.mxu0 0.0
        %v2536 = vand.u32 %v1913, 4294901760
        %2537 = vmatmul.mubr.f32.gmra.mxu0 %v2536
        %v2538 = vpop.f32.mrf.mxu0
        %v2539 = vadd.f32 %v2417, %v2538
        %v2540 = vpop.f32.mrf.mxu0
        %2541 = vmatprep.mubr.f32.mxu0 0.0
        %v2542 = vand.u32 %v1916, 4294901760
        %2543 = vmatmul.mubr.f32.gmra.mxu0 %v2542
        %v2544 = vpop.f32.mrf.mxu0
        %v2545 = vadd.f32 %v2425, %v2544
        %v2546 = vpop.f32.mrf.mxu0
        %2547 = vmatprep.mubr.f32.mxu0 0.0
        %v2548 = vand.u32 %v1919, 4294901760
        %2549 = vmatmul.mubr.f32.gmra.mxu0 %v2548
        %v2550 = vpop.f32.mrf.mxu0
        %v2551 = vadd.f32 %v2433, %v2550
        %v2552 = vpop.f32.mrf.mxu0
        %2553 = vmatprep.mubr.f32.mxu0 0.0
        %v2554 = vand.u32 %v1922, 4294901760
        %2555 = vmatmul.mubr.f32.gmra.mxu0 %v2554
        %v2556 = vpop.f32.mrf.mxu0
        %v2557 = vadd.f32 %v2441, %v2556
        %v2558 = vpop.f32.mrf.mxu0
        %2559 = vdwg.mxu0
        %2560 = vmatprep.subr.mxu0 0.0
        %2561 = vmatpush1.msra.mxu0 0.0
        %2562 = vmatprep.subr.mxu0 0.0
        %2563 = vmatpush1.msra.mxu0 0.0
        %2564 = vmatprep.subr.mxu0 0.0
        %2565 = vmatpush1.msra.mxu0 0.0
        %2566 = vmatprep.subr.mxu0 0.0
        %2567 = vmatpush1.msra.mxu0 0.0
        %2568 = vmatprep.subr.mxu0 0.0
        %2569 = vmatpush1.msra.mxu0 0.0
        %2570 = vmatprep.subr.mxu0 0.0
        %2571 = vmatpush1.msra.mxu0 0.0
        %2572 = vmatprep.subr.mxu0 0.0
        %2573 = vmatpush1.msra.mxu0 0.0
        %2574 = vmatprep.subr.mxu0 0.0
        %2575 = vmatpush1.msra.mxu0 0.0
        %2576 = vmatprep.subr.mxu0 0.0
        %2577 = vmatpush1.msra.mxu0 0.0
        %2578 = vmatprep.subr.mxu0 0.0
        %2579 = vmatpush1.msra.mxu0 0.0
        %2580 = vmatprep.subr.mxu0 0.0
        %2581 = vmatpush1.msra.mxu0 0.0
        %2582 = vmatprep.subr.mxu0 0.0
        %2583 = vmatpush1.msra.mxu0 0.0
        %2584 = vmatprep.subr.mxu0 0.0
        %2585 = vmatpush1.msra.mxu0 0.0
        %2586 = vmatprep.subr.mxu0 0.0
        %2587 = vmatpush1.msra.mxu0 0.0
        %2588 = vmatprep.subr.mxu0 0.0
        %2589 = vmatpush1.msra.mxu0 0.0
        %2590 = vmatprep.subr.mxu0 0.0
        %v2591 = vand.u32 %v1925, 4294901760
        %2592 = vmatpush1.msra.mxu0 %v2591
        %2593 = vmatprep.subr.mxu0 0.0
        %2594 = vmatpush2.msra.mxu0 0.0
        %2595 = vmatprep.subr.mxu0 0.0
        %2596 = vmatpush2.msra.mxu0 0.0
        %2597 = vmatprep.subr.mxu0 0.0
        %2598 = vmatpush2.msra.mxu0 0.0
        %2599 = vmatprep.subr.mxu0 0.0
        %2600 = vmatpush2.msra.mxu0 0.0
        %2601 = vmatprep.subr.mxu0 0.0
        %2602 = vmatpush2.msra.mxu0 0.0
        %2603 = vmatprep.subr.mxu0 0.0
        %2604 = vmatpush2.msra.mxu0 0.0
        %2605 = vmatprep.subr.mxu0 0.0
        %2606 = vmatpush2.msra.mxu0 0.0
        %2607 = vmatprep.subr.mxu0 0.0
        %2608 = vmatpush2.msra.mxu0 0.0
        %2609 = vmatprep.subr.mxu0 0.0
        %2610 = vmatpush2.msra.mxu0 0.0
        %2611 = vmatprep.subr.mxu0 0.0
        %2612 = vmatpush2.msra.mxu0 0.0
        %2613 = vmatprep.subr.mxu0 0.0
        %2614 = vmatpush2.msra.mxu0 0.0
        %2615 = vmatprep.subr.mxu0 0.0
        %2616 = vmatpush2.msra.mxu0 0.0
        %2617 = vmatprep.subr.mxu0 0.0
        %2618 = vmatpush2.msra.mxu0 0.0
        %2619 = vmatprep.subr.mxu0 0.0
        %2620 = vmatpush2.msra.mxu0 0.0
        %2621 = vmatprep.subr.mxu0 0.0
        %2622 = vmatpush2.msra.mxu0 0.0
        %2623 = vmatprep.subr.mxu0 0.0
        %2624 = vmatpush2.msra.mxu0 0.0
        %2625 = vmatprep.mubr.f32.mxu0 0.0
        %v2626 = vand.u32 %v1901, 4294901760
        %2627 = vmatmul.mubr.f32.gmra.mxu0 %v2626
        %v2628 = vpop.f32.mrf.mxu0
        %v2629 = vadd.f32 %v2515, %v2628
        %v2630 = vpop.f32.mrf.mxu0
        %2631 = vmatprep.mubr.f32.mxu0 0.0
        %v2632 = vand.u32 %v1904, 4294901760
        %2633 = vmatmul.mubr.f32.gmra.mxu0 %v2632
        %v2634 = vpop.f32.mrf.mxu0
        %v2635 = vadd.f32 %v2521, %v2634
        %v2636 = vpop.f32.mrf.mxu0
        %2637 = vmatprep.mubr.f32.mxu0 0.0
        %v2638 = vand.u32 %v1907, 4294901760
        %2639 = vmatmul.mubr.f32.gmra.mxu0 %v2638
        %v2640 = vpop.f32.mrf.mxu0
        %v2641 = vadd.f32 %v2527, %v2640
        %v2642 = vpop.f32.mrf.mxu0
        %2643 = vmatprep.mubr.f32.mxu0 0.0
        %v2644 = vand.u32 %v1910, 4294901760
        %2645 = vmatmul.mubr.f32.gmra.mxu0 %v2644
        %v2646 = vpop.f32.mrf.mxu0
        %v2647 = vadd.f32 %v2533, %v2646
        %v2648 = vpop.f32.mrf.mxu0
        %2649 = vmatprep.mubr.f32.mxu0 0.0
        %v2650 = vand.u32 %v1913, 4294901760
        %2651 = vmatmul.mubr.f32.gmra.mxu0 %v2650
        %v2652 = vpop.f32.mrf.mxu0
        %v2653 = vadd.f32 %v2539, %v2652
        %v2654 = vpop.f32.mrf.mxu0
        %2655 = vmatprep.mubr.f32.mxu0 0.0
        %v2656 = vand.u32 %v1916, 4294901760
        %2657 = vmatmul.mubr.f32.gmra.mxu0 %v2656
        %v2658 = vpop.f32.mrf.mxu0
        %v2659 = vadd.f32 %v2545, %v2658
        %v2660 = vpop.f32.mrf.mxu0
        %2661 = vmatprep.mubr.f32.mxu0 0.0
        %v2662 = vand.u32 %v1919, 4294901760
        %2663 = vmatmul.mubr.f32.gmra.mxu0 %v2662
        %v2664 = vpop.f32.mrf.mxu0
        %v2665 = vadd.f32 %v2551, %v2664
        %v2666 = vpop.f32.mrf.mxu0
        %2667 = vmatprep.mubr.f32.mxu0 0.0
        %v2668 = vand.u32 %v1922, 4294901760
        %2669 = vmatmul.mubr.f32.gmra.mxu0 %v2668
        %v2670 = vpop.f32.mrf.mxu0
        %v2671 = vadd.f32 %v2557, %v2670
        %v2672 = vpop.f32.mrf.mxu0
        %2673 = vdwg.mxu0
        %v2674 = vadd.f32 %v1845, %v2629
        %v2675 = vadd.f32 %v1851, %v2635
        %v2676 = vadd.f32 %v1857, %v2641
        %v2677 = vadd.f32 %v1863, %v2647
        %v2678 = vadd.f32 %v1869, %v2653
        %v2679 = vadd.f32 %v1875, %v2659
        %v2680 = vadd.f32 %v1881, %v2665
        %v2681 = vadd.f32 %v1887, %v2671
        %v2682 = vld [vmem:[%s315] sm:$0xff]
        %v2683 = vld [vmem:[%s315 + $0x10] sm:$0xff]
        %v2684 = vld [vmem:[%s315 + $0x20] sm:$0xff]
        %v2685 = vld [vmem:[%s315 + $0x30] sm:$0xff]
        %v2686 = vld [vmem:[%s315 + $0x40] sm:$0xff]
        %v2687 = vld [vmem:[%s315 + $0x50] sm:$0xff]
        %v2688 = vld [vmem:[%s315 + $0x60] sm:$0xff]
        %v2689 = vld [vmem:[%s315 + $0x70] sm:$0xff]
        %s2690 = scalar_lea.vmem %s4, 12
        %v2691 = vld [vmem:[%s2690] sm:$0xf]
        %v2693 = vsel %vm340, %v2682, 0
        %v2696 = vsel %vm340, %v2683, 0
        %v2699 = vsel %vm340, %v2684, 0
        %v2702 = vsel %vm340, %v2685, 0
        %v2705 = vsel %vm340, %v2686, 0
        %v2708 = vsel %vm340, %v2687, 0
        %v2711 = vsel %vm340, %v2688, 0
        %v2714 = vsel %vm340, %v2689, 0
        %v2717 = vsel %vm365, %v2691, 0
        %2719 = vmatprep.subr.mxu0 0.0
        %2720 = vmatpush1.msra.mxu0 0.0
        %2721 = vmatprep.subr.mxu0 0.0
        %2722 = vmatpush1.msra.mxu0 0.0
        %2723 = vmatprep.subr.mxu0 0.0
        %2724 = vmatpush1.msra.mxu0 0.0
        %2725 = vmatprep.subr.mxu0 0.0
        %2726 = vmatpush1.msra.mxu0 0.0
        %2727 = vmatprep.subr.mxu0 0.0
        %2728 = vmatpush1.msra.mxu0 0.0
        %2729 = vmatprep.subr.mxu0 0.0
        %2730 = vmatpush1.msra.mxu0 0.0
        %2731 = vmatprep.subr.mxu0 0.0
        %2732 = vmatpush1.msra.mxu0 0.0
        %2733 = vmatprep.subr.mxu0 0.0
        %2734 = vmatpush1.msra.mxu0 0.0
        %2735 = vmatprep.subr.mxu0 0.0
        %2736 = vmatpush1.msra.mxu0 0.0
        %2737 = vmatprep.subr.mxu0 0.0
        %2738 = vmatpush1.msra.mxu0 0.0
        %2739 = vmatprep.subr.mxu0 0.0
        %2740 = vmatpush1.msra.mxu0 0.0
        %2741 = vmatprep.subr.mxu0 0.0
        %2742 = vmatpush1.msra.mxu0 0.0
        %2743 = vmatprep.subr.mxu0 0.0
        %2744 = vmatpush1.msra.mxu0 0.0
        %2745 = vmatprep.subr.mxu0 0.0
        %2746 = vmatpush1.msra.mxu0 0.0
        %2747 = vmatprep.subr.mxu0 0.0
        %2748 = vmatpush1.msra.mxu0 0.0
        %2749 = vmatprep.subr.mxu0 0.0
        %v2750 = vand.u32 %v2717, 4294901760
        %2751 = vmatpush1.msra.mxu0 %v2750
        %2752 = vmatprep.subr.mxu0 0.0
        %2753 = vmatpush2.msra.mxu0 0.0
        %2754 = vmatprep.subr.mxu0 0.0
        %2755 = vmatpush2.msra.mxu0 0.0
        %2756 = vmatprep.subr.mxu0 0.0
        %2757 = vmatpush2.msra.mxu0 0.0
        %2758 = vmatprep.subr.mxu0 0.0
        %2759 = vmatpush2.msra.mxu0 0.0
        %2760 = vmatprep.subr.mxu0 0.0
        %2761 = vmatpush2.msra.mxu0 0.0
        %2762 = vmatprep.subr.mxu0 0.0
        %2763 = vmatpush2.msra.mxu0 0.0
        %2764 = vmatprep.subr.mxu0 0.0
        %2765 = vmatpush2.msra.mxu0 0.0
        %2766 = vmatprep.subr.mxu0 0.0
        %2767 = vmatpush2.msra.mxu0 0.0
        %2768 = vmatprep.subr.mxu0 0.0
        %2769 = vmatpush2.msra.mxu0 0.0
        %2770 = vmatprep.subr.mxu0 0.0
        %2771 = vmatpush2.msra.mxu0 0.0
        %2772 = vmatprep.subr.mxu0 0.0
        %2773 = vmatpush2.msra.mxu0 0.0
        %2774 = vmatprep.subr.mxu0 0.0
        %2775 = vmatpush2.msra.mxu0 0.0
        %2776 = vmatprep.subr.mxu0 0.0
        %2777 = vmatpush2.msra.mxu0 0.0
        %2778 = vmatprep.subr.mxu0 0.0
        %2779 = vmatpush2.msra.mxu0 0.0
        %2780 = vmatprep.subr.mxu0 0.0
        %2781 = vmatpush2.msra.mxu0 0.0
        %2782 = vmatprep.subr.mxu0 0.0
        %2783 = vmatpush2.msra.mxu0 0.0
        %2784 = vmatprep.mubr.f32.mxu0 0.0
        %v2785 = vand.u32 %v2693, 4294901760
        %v2786 = vsub.f32 %v2693, %v2785
        %v2787 = vand.u32 %v2786, 4294901760
        %v2788 = vsub.f32 %v2786, %v2787
        %v2789 = vand.u32 %v2788, 4294901760
        %2790 = vmatmul.mubr.f32.gmra.mxu0 %v2789
        %v2791 = vpop.f32.mrf.mxu0
        %v2792 = vadd.f32 0.0, %v2791
        %v2793 = vpop.f32.mrf.mxu0
        %2794 = vmatprep.mubr.f32.mxu0 0.0
        %v2795 = vand.u32 %v2696, 4294901760
        %v2796 = vsub.f32 %v2696, %v2795
        %v2797 = vand.u32 %v2796, 4294901760
        %v2798 = vsub.f32 %v2796, %v2797
        %v2799 = vand.u32 %v2798, 4294901760
        %2800 = vmatmul.mubr.f32.gmra.mxu0 %v2799
        %v2801 = vpop.f32.mrf.mxu0
        %v2802 = vadd.f32 0.0, %v2801
        %v2803 = vpop.f32.mrf.mxu0
        %2804 = vmatprep.mubr.f32.mxu0 0.0
        %v2805 = vand.u32 %v2699, 4294901760
        %v2806 = vsub.f32 %v2699, %v2805
        %v2807 = vand.u32 %v2806, 4294901760
        %v2808 = vsub.f32 %v2806, %v2807
        %v2809 = vand.u32 %v2808, 4294901760
        %2810 = vmatmul.mubr.f32.gmra.mxu0 %v2809
        %v2811 = vpop.f32.mrf.mxu0
        %v2812 = vadd.f32 0.0, %v2811
        %v2813 = vpop.f32.mrf.mxu0
        %2814 = vmatprep.mubr.f32.mxu0 0.0
        %v2815 = vand.u32 %v2702, 4294901760
        %v2816 = vsub.f32 %v2702, %v2815
        %v2817 = vand.u32 %v2816, 4294901760
        %v2818 = vsub.f32 %v2816, %v2817
        %v2819 = vand.u32 %v2818, 4294901760
        %2820 = vmatmul.mubr.f32.gmra.mxu0 %v2819
        %v2821 = vpop.f32.mrf.mxu0
        %v2822 = vadd.f32 0.0, %v2821
        %v2823 = vpop.f32.mrf.mxu0
        %2824 = vmatprep.mubr.f32.mxu0 0.0
        %v2825 = vand.u32 %v2705, 4294901760
        %v2826 = vsub.f32 %v2705, %v2825
        %v2827 = vand.u32 %v2826, 4294901760
        %v2828 = vsub.f32 %v2826, %v2827
        %v2829 = vand.u32 %v2828, 4294901760
        %2830 = vmatmul.mubr.f32.gmra.mxu0 %v2829
        %v2831 = vpop.f32.mrf.mxu0
        %v2832 = vadd.f32 0.0, %v2831
        %v2833 = vpop.f32.mrf.mxu0
        %2834 = vmatprep.mubr.f32.mxu0 0.0
        %v2835 = vand.u32 %v2708, 4294901760
        %v2836 = vsub.f32 %v2708, %v2835
        %v2837 = vand.u32 %v2836, 4294901760
        %v2838 = vsub.f32 %v2836, %v2837
        %v2839 = vand.u32 %v2838, 4294901760
        %2840 = vmatmul.mubr.f32.gmra.mxu0 %v2839
        %v2841 = vpop.f32.mrf.mxu0
        %v2842 = vadd.f32 0.0, %v2841
        %v2843 = vpop.f32.mrf.mxu0
        %2844 = vmatprep.mubr.f32.mxu0 0.0
        %v2845 = vand.u32 %v2711, 4294901760
        %v2846 = vsub.f32 %v2711, %v2845
        %v2847 = vand.u32 %v2846, 4294901760
        %v2848 = vsub.f32 %v2846, %v2847
        %v2849 = vand.u32 %v2848, 4294901760
        %2850 = vmatmul.mubr.f32.gmra.mxu0 %v2849
        %v2851 = vpop.f32.mrf.mxu0
        %v2852 = vadd.f32 0.0, %v2851
        %v2853 = vpop.f32.mrf.mxu0
        %2854 = vmatprep.mubr.f32.mxu0 0.0
        %v2855 = vand.u32 %v2714, 4294901760
        %v2856 = vsub.f32 %v2714, %v2855
        %v2857 = vand.u32 %v2856, 4294901760
        %v2858 = vsub.f32 %v2856, %v2857
        %v2859 = vand.u32 %v2858, 4294901760
        %2860 = vmatmul.mubr.f32.gmra.mxu0 %v2859
        %v2861 = vpop.f32.mrf.mxu0
        %v2862 = vadd.f32 0.0, %v2861
        %v2863 = vpop.f32.mrf.mxu0
        %2864 = vdwg.mxu0
        %2865 = vmatprep.subr.mxu0 0.0
        %2866 = vmatpush1.msra.mxu0 0.0
        %2867 = vmatprep.subr.mxu0 0.0
        %2868 = vmatpush1.msra.mxu0 0.0
        %2869 = vmatprep.subr.mxu0 0.0
        %2870 = vmatpush1.msra.mxu0 0.0
        %2871 = vmatprep.subr.mxu0 0.0
        %2872 = vmatpush1.msra.mxu0 0.0
        %2873 = vmatprep.subr.mxu0 0.0
        %2874 = vmatpush1.msra.mxu0 0.0
        %2875 = vmatprep.subr.mxu0 0.0
        %2876 = vmatpush1.msra.mxu0 0.0
        %2877 = vmatprep.subr.mxu0 0.0
        %2878 = vmatpush1.msra.mxu0 0.0
        %2879 = vmatprep.subr.mxu0 0.0
        %2880 = vmatpush1.msra.mxu0 0.0
        %2881 = vmatprep.subr.mxu0 0.0
        %2882 = vmatpush1.msra.mxu0 0.0
        %2883 = vmatprep.subr.mxu0 0.0
        %2884 = vmatpush1.msra.mxu0 0.0
        %2885 = vmatprep.subr.mxu0 0.0
        %2886 = vmatpush1.msra.mxu0 0.0
        %2887 = vmatprep.subr.mxu0 0.0
        %2888 = vmatpush1.msra.mxu0 0.0
        %2889 = vmatprep.subr.mxu0 0.0
        %2890 = vmatpush1.msra.mxu0 0.0
        %2891 = vmatprep.subr.mxu0 0.0
        %2892 = vmatpush1.msra.mxu0 0.0
        %2893 = vmatprep.subr.mxu0 0.0
        %2894 = vmatpush1.msra.mxu0 0.0
        %2895 = vmatprep.subr.mxu0 0.0
        %v2896 = vand.u32 %v2717, 4294901760
        %v2897 = vsub.f32 %v2717, %v2896
        %v2898 = vand.u32 %v2897, 4294901760
        %v2899 = vsub.f32 %v2897, %v2898
        %v2900 = vand.u32 %v2899, 4294901760
        %2901 = vmatpush1.msra.mxu0 %v2900
        %2902 = vmatprep.subr.mxu0 0.0
        %2903 = vmatpush2.msra.mxu0 0.0
        %2904 = vmatprep.subr.mxu0 0.0
        %2905 = vmatpush2.msra.mxu0 0.0
        %2906 = vmatprep.subr.mxu0 0.0
        %2907 = vmatpush2.msra.mxu0 0.0
        %2908 = vmatprep.subr.mxu0 0.0
        %2909 = vmatpush2.msra.mxu0 0.0
        %2910 = vmatprep.subr.mxu0 0.0
        %2911 = vmatpush2.msra.mxu0 0.0
        %2912 = vmatprep.subr.mxu0 0.0
        %2913 = vmatpush2.msra.mxu0 0.0
        %2914 = vmatprep.subr.mxu0 0.0
        %2915 = vmatpush2.msra.mxu0 0.0
        %2916 = vmatprep.subr.mxu0 0.0
        %2917 = vmatpush2.msra.mxu0 0.0
        %2918 = vmatprep.subr.mxu0 0.0
        %2919 = vmatpush2.msra.mxu0 0.0
        %2920 = vmatprep.subr.mxu0 0.0
        %2921 = vmatpush2.msra.mxu0 0.0
        %2922 = vmatprep.subr.mxu0 0.0
        %2923 = vmatpush2.msra.mxu0 0.0
        %2924 = vmatprep.subr.mxu0 0.0
        %2925 = vmatpush2.msra.mxu0 0.0
        %2926 = vmatprep.subr.mxu0 0.0
        %2927 = vmatpush2.msra.mxu0 0.0
        %2928 = vmatprep.subr.mxu0 0.0
        %2929 = vmatpush2.msra.mxu0 0.0
        %2930 = vmatprep.subr.mxu0 0.0
        %2931 = vmatpush2.msra.mxu0 0.0
        %2932 = vmatprep.subr.mxu0 0.0
        %2933 = vmatpush2.msra.mxu0 0.0
        %2934 = vmatprep.mubr.f32.mxu0 0.0
        %v2935 = vand.u32 %v2693, 4294901760
        %2936 = vmatmul.mubr.f32.gmra.mxu0 %v2935
        %v2937 = vpop.f32.mrf.mxu0
        %v2938 = vadd.f32 %v2792, %v2937
        %v2939 = vpop.f32.mrf.mxu0
        %2940 = vmatprep.mubr.f32.mxu0 0.0
        %v2941 = vand.u32 %v2696, 4294901760
        %2942 = vmatmul.mubr.f32.gmra.mxu0 %v2941
        %v2943 = vpop.f32.mrf.mxu0
        %v2944 = vadd.f32 %v2802, %v2943
        %v2945 = vpop.f32.mrf.mxu0
        %2946 = vmatprep.mubr.f32.mxu0 0.0
        %v2947 = vand.u32 %v2699, 4294901760
        %2948 = vmatmul.mubr.f32.gmra.mxu0 %v2947
        %v2949 = vpop.f32.mrf.mxu0
        %v2950 = vadd.f32 %v2812, %v2949
        %v2951 = vpop.f32.mrf.mxu0
        %2952 = vmatprep.mubr.f32.mxu0 0.0
        %v2953 = vand.u32 %v2702, 4294901760
        %2954 = vmatmul.mubr.f32.gmra.mxu0 %v2953
        %v2955 = vpop.f32.mrf.mxu0
        %v2956 = vadd.f32 %v2822, %v2955
        %v2957 = vpop.f32.mrf.mxu0
        %2958 = vmatprep.mubr.f32.mxu0 0.0
        %v2959 = vand.u32 %v2705, 4294901760
        %2960 = vmatmul.mubr.f32.gmra.mxu0 %v2959
        %v2961 = vpop.f32.mrf.mxu0
        %v2962 = vadd.f32 %v2832, %v2961
        %v2963 = vpop.f32.mrf.mxu0
        %2964 = vmatprep.mubr.f32.mxu0 0.0
        %v2965 = vand.u32 %v2708, 4294901760
        %2966 = vmatmul.mubr.f32.gmra.mxu0 %v2965
        %v2967 = vpop.f32.mrf.mxu0
        %v2968 = vadd.f32 %v2842, %v2967
        %v2969 = vpop.f32.mrf.mxu0
        %2970 = vmatprep.mubr.f32.mxu0 0.0
        %v2971 = vand.u32 %v2711, 4294901760
        %2972 = vmatmul.mubr.f32.gmra.mxu0 %v2971
        %v2973 = vpop.f32.mrf.mxu0
        %v2974 = vadd.f32 %v2852, %v2973
        %v2975 = vpop.f32.mrf.mxu0
        %2976 = vmatprep.mubr.f32.mxu0 0.0
        %v2977 = vand.u32 %v2714, 4294901760
        %2978 = vmatmul.mubr.f32.gmra.mxu0 %v2977
        %v2979 = vpop.f32.mrf.mxu0
        %v2980 = vadd.f32 %v2862, %v2979
        %v2981 = vpop.f32.mrf.mxu0
        %2982 = vdwg.mxu0
        %2983 = vmatprep.subr.mxu0 0.0
        %2984 = vmatpush1.msra.mxu0 0.0
        %2985 = vmatprep.subr.mxu0 0.0
        %2986 = vmatpush1.msra.mxu0 0.0
        %2987 = vmatprep.subr.mxu0 0.0
        %2988 = vmatpush1.msra.mxu0 0.0
        %2989 = vmatprep.subr.mxu0 0.0
        %2990 = vmatpush1.msra.mxu0 0.0
        %2991 = vmatprep.subr.mxu0 0.0
        %2992 = vmatpush1.msra.mxu0 0.0
        %2993 = vmatprep.subr.mxu0 0.0
        %2994 = vmatpush1.msra.mxu0 0.0
        %2995 = vmatprep.subr.mxu0 0.0
        %2996 = vmatpush1.msra.mxu0 0.0
        %2997 = vmatprep.subr.mxu0 0.0
        %2998 = vmatpush1.msra.mxu0 0.0
        %2999 = vmatprep.subr.mxu0 0.0
        %3000 = vmatpush1.msra.mxu0 0.0
        %3001 = vmatprep.subr.mxu0 0.0
        %3002 = vmatpush1.msra.mxu0 0.0
        %3003 = vmatprep.subr.mxu0 0.0
        %3004 = vmatpush1.msra.mxu0 0.0
        %3005 = vmatprep.subr.mxu0 0.0
        %3006 = vmatpush1.msra.mxu0 0.0
        %3007 = vmatprep.subr.mxu0 0.0
        %3008 = vmatpush1.msra.mxu0 0.0
        %3009 = vmatprep.subr.mxu0 0.0
        %3010 = vmatpush1.msra.mxu0 0.0
        %3011 = vmatprep.subr.mxu0 0.0
        %3012 = vmatpush1.msra.mxu0 0.0
        %3013 = vmatprep.subr.mxu0 0.0
        %v3014 = vand.u32 %v2717, 4294901760
        %v3015 = vsub.f32 %v2717, %v3014
        %3016 = vmatpush1.msra.mxu0 %v3015
        %3017 = vmatprep.subr.mxu0 0.0
        %3018 = vmatpush2.msra.mxu0 0.0
        %3019 = vmatprep.subr.mxu0 0.0
        %3020 = vmatpush2.msra.mxu0 0.0
        %3021 = vmatprep.subr.mxu0 0.0
        %3022 = vmatpush2.msra.mxu0 0.0
        %3023 = vmatprep.subr.mxu0 0.0
        %3024 = vmatpush2.msra.mxu0 0.0
        %3025 = vmatprep.subr.mxu0 0.0
        %3026 = vmatpush2.msra.mxu0 0.0
        %3027 = vmatprep.subr.mxu0 0.0
        %3028 = vmatpush2.msra.mxu0 0.0
        %3029 = vmatprep.subr.mxu0 0.0
        %3030 = vmatpush2.msra.mxu0 0.0
        %3031 = vmatprep.subr.mxu0 0.0
        %3032 = vmatpush2.msra.mxu0 0.0
        %3033 = vmatprep.subr.mxu0 0.0
        %3034 = vmatpush2.msra.mxu0 0.0
        %3035 = vmatprep.subr.mxu0 0.0
        %3036 = vmatpush2.msra.mxu0 0.0
        %3037 = vmatprep.subr.mxu0 0.0
        %3038 = vmatpush2.msra.mxu0 0.0
        %3039 = vmatprep.subr.mxu0 0.0
        %3040 = vmatpush2.msra.mxu0 0.0
        %3041 = vmatprep.subr.mxu0 0.0
        %3042 = vmatpush2.msra.mxu0 0.0
        %3043 = vmatprep.subr.mxu0 0.0
        %3044 = vmatpush2.msra.mxu0 0.0
        %3045 = vmatprep.subr.mxu0 0.0
        %3046 = vmatpush2.msra.mxu0 0.0
        %3047 = vmatprep.subr.mxu0 0.0
        %3048 = vmatpush2.msra.mxu0 0.0
        %3049 = vmatprep.mubr.f32.mxu0 0.0
        %v3050 = vand.u32 %v2693, 4294901760
        %v3051 = vsub.f32 %v2693, %v3050
        %3052 = vmatmul.mubr.f32.gmra.mxu0 %v3051
        %v3053 = vpop.f32.mrf.mxu0
        %v3054 = vadd.f32 %v2938, %v3053
        %v3055 = vpop.f32.mrf.mxu0
        %3056 = vmatprep.mubr.f32.mxu0 0.0
        %v3057 = vand.u32 %v2696, 4294901760
        %v3058 = vsub.f32 %v2696, %v3057
        %3059 = vmatmul.mubr.f32.gmra.mxu0 %v3058
        %v3060 = vpop.f32.mrf.mxu0
        %v3061 = vadd.f32 %v2944, %v3060
        %v3062 = vpop.f32.mrf.mxu0
        %3063 = vmatprep.mubr.f32.mxu0 0.0
        %v3064 = vand.u32 %v2699, 4294901760
        %v3065 = vsub.f32 %v2699, %v3064
        %3066 = vmatmul.mubr.f32.gmra.mxu0 %v3065
        %v3067 = vpop.f32.mrf.mxu0
        %v3068 = vadd.f32 %v2950, %v3067
        %v3069 = vpop.f32.mrf.mxu0
        %3070 = vmatprep.mubr.f32.mxu0 0.0
        %v3071 = vand.u32 %v2702, 4294901760
        %v3072 = vsub.f32 %v2702, %v3071
        %3073 = vmatmul.mubr.f32.gmra.mxu0 %v3072
        %v3074 = vpop.f32.mrf.mxu0
        %v3075 = vadd.f32 %v2956, %v3074
        %v3076 = vpop.f32.mrf.mxu0
        %3077 = vmatprep.mubr.f32.mxu0 0.0
        %v3078 = vand.u32 %v2705, 4294901760
        %v3079 = vsub.f32 %v2705, %v3078
        %3080 = vmatmul.mubr.f32.gmra.mxu0 %v3079
        %v3081 = vpop.f32.mrf.mxu0
        %v3082 = vadd.f32 %v2962, %v3081
        %v3083 = vpop.f32.mrf.mxu0
        %3084 = vmatprep.mubr.f32.mxu0 0.0
        %v3085 = vand.u32 %v2708, 4294901760
        %v3086 = vsub.f32 %v2708, %v3085
        %3087 = vmatmul.mubr.f32.gmra.mxu0 %v3086
        %v3088 = vpop.f32.mrf.mxu0
        %v3089 = vadd.f32 %v2968, %v3088
        %v3090 = vpop.f32.mrf.mxu0
        %3091 = vmatprep.mubr.f32.mxu0 0.0
        %v3092 = vand.u32 %v2711, 4294901760
        %v3093 = vsub.f32 %v2711, %v3092
        %3094 = vmatmul.mubr.f32.gmra.mxu0 %v3093
        %v3095 = vpop.f32.mrf.mxu0
        %v3096 = vadd.f32 %v2974, %v3095
        %v3097 = vpop.f32.mrf.mxu0
        %3098 = vmatprep.mubr.f32.mxu0 0.0
        %v3099 = vand.u32 %v2714, 4294901760
        %v3100 = vsub.f32 %v2714, %v3099
        %3101 = vmatmul.mubr.f32.gmra.mxu0 %v3100
        %v3102 = vpop.f32.mrf.mxu0
        %v3103 = vadd.f32 %v2980, %v3102
        %v3104 = vpop.f32.mrf.mxu0
        %3105 = vdwg.mxu0
        %3106 = vmatprep.subr.mxu0 0.0
        %3107 = vmatpush1.msra.mxu0 0.0
        %3108 = vmatprep.subr.mxu0 0.0
        %3109 = vmatpush1.msra.mxu0 0.0
        %3110 = vmatprep.subr.mxu0 0.0
        %3111 = vmatpush1.msra.mxu0 0.0
        %3112 = vmatprep.subr.mxu0 0.0
        %3113 = vmatpush1.msra.mxu0 0.0
        %3114 = vmatprep.subr.mxu0 0.0
        %3115 = vmatpush1.msra.mxu0 0.0
        %3116 = vmatprep.subr.mxu0 0.0
        %3117 = vmatpush1.msra.mxu0 0.0
        %3118 = vmatprep.subr.mxu0 0.0
        %3119 = vmatpush1.msra.mxu0 0.0
        %3120 = vmatprep.subr.mxu0 0.0
        %3121 = vmatpush1.msra.mxu0 0.0
        %3122 = vmatprep.subr.mxu0 0.0
        %3123 = vmatpush1.msra.mxu0 0.0
        %3124 = vmatprep.subr.mxu0 0.0
        %3125 = vmatpush1.msra.mxu0 0.0
        %3126 = vmatprep.subr.mxu0 0.0
        %3127 = vmatpush1.msra.mxu0 0.0
        %3128 = vmatprep.subr.mxu0 0.0
        %3129 = vmatpush1.msra.mxu0 0.0
        %3130 = vmatprep.subr.mxu0 0.0
        %3131 = vmatpush1.msra.mxu0 0.0
        %3132 = vmatprep.subr.mxu0 0.0
        %3133 = vmatpush1.msra.mxu0 0.0
        %3134 = vmatprep.subr.mxu0 0.0
        %3135 = vmatpush1.msra.mxu0 0.0
        %3136 = vmatprep.subr.mxu0 0.0
        %v3137 = vand.u32 %v2717, 4294901760
        %3138 = vmatpush1.msra.mxu0 %v3137
        %3139 = vmatprep.subr.mxu0 0.0
        %3140 = vmatpush2.msra.mxu0 0.0
        %3141 = vmatprep.subr.mxu0 0.0
        %3142 = vmatpush2.msra.mxu0 0.0
        %3143 = vmatprep.subr.mxu0 0.0
        %3144 = vmatpush2.msra.mxu0 0.0
        %3145 = vmatprep.subr.mxu0 0.0
        %3146 = vmatpush2.msra.mxu0 0.0
        %3147 = vmatprep.subr.mxu0 0.0
        %3148 = vmatpush2.msra.mxu0 0.0
        %3149 = vmatprep.subr.mxu0 0.0
        %3150 = vmatpush2.msra.mxu0 0.0
        %3151 = vmatprep.subr.mxu0 0.0
        %3152 = vmatpush2.msra.mxu0 0.0
        %3153 = vmatprep.subr.mxu0 0.0
        %3154 = vmatpush2.msra.mxu0 0.0
        %3155 = vmatprep.subr.mxu0 0.0
        %3156 = vmatpush2.msra.mxu0 0.0
        %3157 = vmatprep.subr.mxu0 0.0
        %3158 = vmatpush2.msra.mxu0 0.0
        %3159 = vmatprep.subr.mxu0 0.0
        %3160 = vmatpush2.msra.mxu0 0.0
        %3161 = vmatprep.subr.mxu0 0.0
        %3162 = vmatpush2.msra.mxu0 0.0
        %3163 = vmatprep.subr.mxu0 0.0
        %3164 = vmatpush2.msra.mxu0 0.0
        %3165 = vmatprep.subr.mxu0 0.0
        %3166 = vmatpush2.msra.mxu0 0.0
        %3167 = vmatprep.subr.mxu0 0.0
        %3168 = vmatpush2.msra.mxu0 0.0
        %3169 = vmatprep.subr.mxu0 0.0
        %3170 = vmatpush2.msra.mxu0 0.0
        %3171 = vmatprep.mubr.f32.mxu0 0.0
        %v3172 = vand.u32 %v2693, 4294901760
        %v3173 = vsub.f32 %v2693, %v3172
        %v3174 = vand.u32 %v3173, 4294901760
        %3175 = vmatmul.mubr.f32.gmra.mxu0 %v3174
        %v3176 = vpop.f32.mrf.mxu0
        %v3177 = vadd.f32 %v3054, %v3176
        %v3178 = vpop.f32.mrf.mxu0
        %3179 = vmatprep.mubr.f32.mxu0 0.0
        %v3180 = vand.u32 %v2696, 4294901760
        %v3181 = vsub.f32 %v2696, %v3180
        %v3182 = vand.u32 %v3181, 4294901760
        %3183 = vmatmul.mubr.f32.gmra.mxu0 %v3182
        %v3184 = vpop.f32.mrf.mxu0
        %v3185 = vadd.f32 %v3061, %v3184
        %v3186 = vpop.f32.mrf.mxu0
        %3187 = vmatprep.mubr.f32.mxu0 0.0
        %v3188 = vand.u32 %v2699, 4294901760
        %v3189 = vsub.f32 %v2699, %v3188
        %v3190 = vand.u32 %v3189, 4294901760
        %3191 = vmatmul.mubr.f32.gmra.mxu0 %v3190
        %v3192 = vpop.f32.mrf.mxu0
        %v3193 = vadd.f32 %v3068, %v3192
        %v3194 = vpop.f32.mrf.mxu0
        %3195 = vmatprep.mubr.f32.mxu0 0.0
        %v3196 = vand.u32 %v2702, 4294901760
        %v3197 = vsub.f32 %v2702, %v3196
        %v3198 = vand.u32 %v3197, 4294901760
        %3199 = vmatmul.mubr.f32.gmra.mxu0 %v3198
        %v3200 = vpop.f32.mrf.mxu0
        %v3201 = vadd.f32 %v3075, %v3200
        %v3202 = vpop.f32.mrf.mxu0
        %3203 = vmatprep.mubr.f32.mxu0 0.0
        %v3204 = vand.u32 %v2705, 4294901760
        %v3205 = vsub.f32 %v2705, %v3204
        %v3206 = vand.u32 %v3205, 4294901760
        %3207 = vmatmul.mubr.f32.gmra.mxu0 %v3206
        %v3208 = vpop.f32.mrf.mxu0
        %v3209 = vadd.f32 %v3082, %v3208
        %v3210 = vpop.f32.mrf.mxu0
        %3211 = vmatprep.mubr.f32.mxu0 0.0
        %v3212 = vand.u32 %v2708, 4294901760
        %v3213 = vsub.f32 %v2708, %v3212
        %v3214 = vand.u32 %v3213, 4294901760
        %3215 = vmatmul.mubr.f32.gmra.mxu0 %v3214
        %v3216 = vpop.f32.mrf.mxu0
        %v3217 = vadd.f32 %v3089, %v3216
        %v3218 = vpop.f32.mrf.mxu0
        %3219 = vmatprep.mubr.f32.mxu0 0.0
        %v3220 = vand.u32 %v2711, 4294901760
        %v3221 = vsub.f32 %v2711, %v3220
        %v3222 = vand.u32 %v3221, 4294901760
        %3223 = vmatmul.mubr.f32.gmra.mxu0 %v3222
        %v3224 = vpop.f32.mrf.mxu0
        %v3225 = vadd.f32 %v3096, %v3224
        %v3226 = vpop.f32.mrf.mxu0
        %3227 = vmatprep.mubr.f32.mxu0 0.0
        %v3228 = vand.u32 %v2714, 4294901760
        %v3229 = vsub.f32 %v2714, %v3228
        %v3230 = vand.u32 %v3229, 4294901760
        %3231 = vmatmul.mubr.f32.gmra.mxu0 %v3230
        %v3232 = vpop.f32.mrf.mxu0
        %v3233 = vadd.f32 %v3103, %v3232
        %v3234 = vpop.f32.mrf.mxu0
        %3235 = vdwg.mxu0
        %3236 = vmatprep.subr.mxu0 0.0
        %3237 = vmatpush1.msra.mxu0 0.0
        %3238 = vmatprep.subr.mxu0 0.0
        %3239 = vmatpush1.msra.mxu0 0.0
        %3240 = vmatprep.subr.mxu0 0.0
        %3241 = vmatpush1.msra.mxu0 0.0
        %3242 = vmatprep.subr.mxu0 0.0
        %3243 = vmatpush1.msra.mxu0 0.0
        %3244 = vmatprep.subr.mxu0 0.0
        %3245 = vmatpush1.msra.mxu0 0.0
        %3246 = vmatprep.subr.mxu0 0.0
        %3247 = vmatpush1.msra.mxu0 0.0
        %3248 = vmatprep.subr.mxu0 0.0
        %3249 = vmatpush1.msra.mxu0 0.0
        %3250 = vmatprep.subr.mxu0 0.0
        %3251 = vmatpush1.msra.mxu0 0.0
        %3252 = vmatprep.subr.mxu0 0.0
        %3253 = vmatpush1.msra.mxu0 0.0
        %3254 = vmatprep.subr.mxu0 0.0
        %3255 = vmatpush1.msra.mxu0 0.0
        %3256 = vmatprep.subr.mxu0 0.0
        %3257 = vmatpush1.msra.mxu0 0.0
        %3258 = vmatprep.subr.mxu0 0.0
        %3259 = vmatpush1.msra.mxu0 0.0
        %3260 = vmatprep.subr.mxu0 0.0
        %3261 = vmatpush1.msra.mxu0 0.0
        %3262 = vmatprep.subr.mxu0 0.0
        %3263 = vmatpush1.msra.mxu0 0.0
        %3264 = vmatprep.subr.mxu0 0.0
        %3265 = vmatpush1.msra.mxu0 0.0
        %3266 = vmatprep.subr.mxu0 0.0
        %v3267 = vand.u32 %v2717, 4294901760
        %v3268 = vsub.f32 %v2717, %v3267
        %v3269 = vand.u32 %v3268, 4294901760
        %3270 = vmatpush1.msra.mxu0 %v3269
        %3271 = vmatprep.subr.mxu0 0.0
        %3272 = vmatpush2.msra.mxu0 0.0
        %3273 = vmatprep.subr.mxu0 0.0
        %3274 = vmatpush2.msra.mxu0 0.0
        %3275 = vmatprep.subr.mxu0 0.0
        %3276 = vmatpush2.msra.mxu0 0.0
        %3277 = vmatprep.subr.mxu0 0.0
        %3278 = vmatpush2.msra.mxu0 0.0
        %3279 = vmatprep.subr.mxu0 0.0
        %3280 = vmatpush2.msra.mxu0 0.0
        %3281 = vmatprep.subr.mxu0 0.0
        %3282 = vmatpush2.msra.mxu0 0.0
        %3283 = vmatprep.subr.mxu0 0.0
        %3284 = vmatpush2.msra.mxu0 0.0
        %3285 = vmatprep.subr.mxu0 0.0
        %3286 = vmatpush2.msra.mxu0 0.0
        %3287 = vmatprep.subr.mxu0 0.0
        %3288 = vmatpush2.msra.mxu0 0.0
        %3289 = vmatprep.subr.mxu0 0.0
        %3290 = vmatpush2.msra.mxu0 0.0
        %3291 = vmatprep.subr.mxu0 0.0
        %3292 = vmatpush2.msra.mxu0 0.0
        %3293 = vmatprep.subr.mxu0 0.0
        %3294 = vmatpush2.msra.mxu0 0.0
        %3295 = vmatprep.subr.mxu0 0.0
        %3296 = vmatpush2.msra.mxu0 0.0
        %3297 = vmatprep.subr.mxu0 0.0
        %3298 = vmatpush2.msra.mxu0 0.0
        %3299 = vmatprep.subr.mxu0 0.0
        %3300 = vmatpush2.msra.mxu0 0.0
        %3301 = vmatprep.subr.mxu0 0.0
        %3302 = vmatpush2.msra.mxu0 0.0
        %3303 = vmatprep.mubr.f32.mxu0 0.0
        %v3304 = vand.u32 %v2693, 4294901760
        %3305 = vmatmul.mubr.f32.gmra.mxu0 %v3304
        %v3306 = vpop.f32.mrf.mxu0
        %v3307 = vadd.f32 %v3177, %v3306
        %v3308 = vpop.f32.mrf.mxu0
        %3309 = vmatprep.mubr.f32.mxu0 0.0
        %v3310 = vand.u32 %v2696, 4294901760
        %3311 = vmatmul.mubr.f32.gmra.mxu0 %v3310
        %v3312 = vpop.f32.mrf.mxu0
        %v3313 = vadd.f32 %v3185, %v3312
        %v3314 = vpop.f32.mrf.mxu0
        %3315 = vmatprep.mubr.f32.mxu0 0.0
        %v3316 = vand.u32 %v2699, 4294901760
        %3317 = vmatmul.mubr.f32.gmra.mxu0 %v3316
        %v3318 = vpop.f32.mrf.mxu0
        %v3319 = vadd.f32 %v3193, %v3318
        %v3320 = vpop.f32.mrf.mxu0
        %3321 = vmatprep.mubr.f32.mxu0 0.0
        %v3322 = vand.u32 %v2702, 4294901760
        %3323 = vmatmul.mubr.f32.gmra.mxu0 %v3322
        %v3324 = vpop.f32.mrf.mxu0
        %v3325 = vadd.f32 %v3201, %v3324
        %v3326 = vpop.f32.mrf.mxu0
        %3327 = vmatprep.mubr.f32.mxu0 0.0
        %v3328 = vand.u32 %v2705, 4294901760
        %3329 = vmatmul.mubr.f32.gmra.mxu0 %v3328
        %v3330 = vpop.f32.mrf.mxu0
        %v3331 = vadd.f32 %v3209, %v3330
        %v3332 = vpop.f32.mrf.mxu0
        %3333 = vmatprep.mubr.f32.mxu0 0.0
        %v3334 = vand.u32 %v2708, 4294901760
        %3335 = vmatmul.mubr.f32.gmra.mxu0 %v3334
        %v3336 = vpop.f32.mrf.mxu0
        %v3337 = vadd.f32 %v3217, %v3336
        %v3338 = vpop.f32.mrf.mxu0
        %3339 = vmatprep.mubr.f32.mxu0 0.0
        %v3340 = vand.u32 %v2711, 4294901760
        %3341 = vmatmul.mubr.f32.gmra.mxu0 %v3340
        %v3342 = vpop.f32.mrf.mxu0
        %v3343 = vadd.f32 %v3225, %v3342
        %v3344 = vpop.f32.mrf.mxu0
        %3345 = vmatprep.mubr.f32.mxu0 0.0
        %v3346 = vand.u32 %v2714, 4294901760
        %3347 = vmatmul.mubr.f32.gmra.mxu0 %v3346
        %v3348 = vpop.f32.mrf.mxu0
        %v3349 = vadd.f32 %v3233, %v3348
        %v3350 = vpop.f32.mrf.mxu0
        %3351 = vdwg.mxu0
        %3352 = vmatprep.subr.mxu0 0.0
        %3353 = vmatpush1.msra.mxu0 0.0
        %3354 = vmatprep.subr.mxu0 0.0
        %3355 = vmatpush1.msra.mxu0 0.0
        %3356 = vmatprep.subr.mxu0 0.0
        %3357 = vmatpush1.msra.mxu0 0.0
        %3358 = vmatprep.subr.mxu0 0.0
        %3359 = vmatpush1.msra.mxu0 0.0
        %3360 = vmatprep.subr.mxu0 0.0
        %3361 = vmatpush1.msra.mxu0 0.0
        %3362 = vmatprep.subr.mxu0 0.0
        %3363 = vmatpush1.msra.mxu0 0.0
        %3364 = vmatprep.subr.mxu0 0.0
        %3365 = vmatpush1.msra.mxu0 0.0
        %3366 = vmatprep.subr.mxu0 0.0
        %3367 = vmatpush1.msra.mxu0 0.0
        %3368 = vmatprep.subr.mxu0 0.0
        %3369 = vmatpush1.msra.mxu0 0.0
        %3370 = vmatprep.subr.mxu0 0.0
        %3371 = vmatpush1.msra.mxu0 0.0
        %3372 = vmatprep.subr.mxu0 0.0
        %3373 = vmatpush1.msra.mxu0 0.0
        %3374 = vmatprep.subr.mxu0 0.0
        %3375 = vmatpush1.msra.mxu0 0.0
        %3376 = vmatprep.subr.mxu0 0.0
        %3377 = vmatpush1.msra.mxu0 0.0
        %3378 = vmatprep.subr.mxu0 0.0
        %3379 = vmatpush1.msra.mxu0 0.0
        %3380 = vmatprep.subr.mxu0 0.0
        %3381 = vmatpush1.msra.mxu0 0.0
        %3382 = vmatprep.subr.mxu0 0.0
        %v3383 = vand.u32 %v2717, 4294901760
        %3384 = vmatpush1.msra.mxu0 %v3383
        %3385 = vmatprep.subr.mxu0 0.0
        %3386 = vmatpush2.msra.mxu0 0.0
        %3387 = vmatprep.subr.mxu0 0.0
        %3388 = vmatpush2.msra.mxu0 0.0
        %3389 = vmatprep.subr.mxu0 0.0
        %3390 = vmatpush2.msra.mxu0 0.0
        %3391 = vmatprep.subr.mxu0 0.0
        %3392 = vmatpush2.msra.mxu0 0.0
        %3393 = vmatprep.subr.mxu0 0.0
        %3394 = vmatpush2.msra.mxu0 0.0
        %3395 = vmatprep.subr.mxu0 0.0
        %3396 = vmatpush2.msra.mxu0 0.0
        %3397 = vmatprep.subr.mxu0 0.0
        %3398 = vmatpush2.msra.mxu0 0.0
        %3399 = vmatprep.subr.mxu0 0.0
        %3400 = vmatpush2.msra.mxu0 0.0
        %3401 = vmatprep.subr.mxu0 0.0
        %3402 = vmatpush2.msra.mxu0 0.0
        %3403 = vmatprep.subr.mxu0 0.0
        %3404 = vmatpush2.msra.mxu0 0.0
        %3405 = vmatprep.subr.mxu0 0.0
        %3406 = vmatpush2.msra.mxu0 0.0
        %3407 = vmatprep.subr.mxu0 0.0
        %3408 = vmatpush2.msra.mxu0 0.0
        %3409 = vmatprep.subr.mxu0 0.0
        %3410 = vmatpush2.msra.mxu0 0.0
        %3411 = vmatprep.subr.mxu0 0.0
        %3412 = vmatpush2.msra.mxu0 0.0
        %3413 = vmatprep.subr.mxu0 0.0
        %3414 = vmatpush2.msra.mxu0 0.0
        %3415 = vmatprep.subr.mxu0 0.0
        %3416 = vmatpush2.msra.mxu0 0.0
        %3417 = vmatprep.mubr.f32.mxu0 0.0
        %v3418 = vand.u32 %v2693, 4294901760
        %3419 = vmatmul.mubr.f32.gmra.mxu0 %v3418
        %v3420 = vpop.f32.mrf.mxu0
        %v3421 = vadd.f32 %v3307, %v3420
        %v3422 = vpop.f32.mrf.mxu0
        %3423 = vmatprep.mubr.f32.mxu0 0.0
        %v3424 = vand.u32 %v2696, 4294901760
        %3425 = vmatmul.mubr.f32.gmra.mxu0 %v3424
        %v3426 = vpop.f32.mrf.mxu0
        %v3427 = vadd.f32 %v3313, %v3426
        %v3428 = vpop.f32.mrf.mxu0
        %3429 = vmatprep.mubr.f32.mxu0 0.0
        %v3430 = vand.u32 %v2699, 4294901760
        %3431 = vmatmul.mubr.f32.gmra.mxu0 %v3430
        %v3432 = vpop.f32.mrf.mxu0
        %v3433 = vadd.f32 %v3319, %v3432
        %v3434 = vpop.f32.mrf.mxu0
        %3435 = vmatprep.mubr.f32.mxu0 0.0
        %v3436 = vand.u32 %v2702, 4294901760
        %3437 = vmatmul.mubr.f32.gmra.mxu0 %v3436
        %v3438 = vpop.f32.mrf.mxu0
        %v3439 = vadd.f32 %v3325, %v3438
        %v3440 = vpop.f32.mrf.mxu0
        %3441 = vmatprep.mubr.f32.mxu0 0.0
        %v3442 = vand.u32 %v2705, 4294901760
        %3443 = vmatmul.mubr.f32.gmra.mxu0 %v3442
        %v3444 = vpop.f32.mrf.mxu0
        %v3445 = vadd.f32 %v3331, %v3444
        %v3446 = vpop.f32.mrf.mxu0
        %3447 = vmatprep.mubr.f32.mxu0 0.0
        %v3448 = vand.u32 %v2708, 4294901760
        %3449 = vmatmul.mubr.f32.gmra.mxu0 %v3448
        %v3450 = vpop.f32.mrf.mxu0
        %v3451 = vadd.f32 %v3337, %v3450
        %v3452 = vpop.f32.mrf.mxu0
        %3453 = vmatprep.mubr.f32.mxu0 0.0
        %v3454 = vand.u32 %v2711, 4294901760
        %3455 = vmatmul.mubr.f32.gmra.mxu0 %v3454
        %v3456 = vpop.f32.mrf.mxu0
        %v3457 = vadd.f32 %v3343, %v3456
        %v3458 = vpop.f32.mrf.mxu0
        %3459 = vmatprep.mubr.f32.mxu0 0.0
        %v3460 = vand.u32 %v2714, 4294901760
        %3461 = vmatmul.mubr.f32.gmra.mxu0 %v3460
        %v3462 = vpop.f32.mrf.mxu0
        %v3463 = vadd.f32 %v3349, %v3462
        %v3464 = vpop.f32.mrf.mxu0
        %3465 = vdwg.mxu0
        %v3466 = vadd.f32 %v2674, %v3421
        %v3467 = vadd.f32 %v2675, %v3427
        %v3468 = vadd.f32 %v2676, %v3433
        %v3469 = vadd.f32 %v2677, %v3439
        %v3470 = vadd.f32 %v2678, %v3445
        %v3471 = vadd.f32 %v2679, %v3451
        %v3472 = vadd.f32 %v2680, %v3457
        %v3473 = vadd.f32 %v2681, %v3463
        %v3474 = vld [vmem:[%s320] sm:$0xff]
        %v3475 = vld [vmem:[%s320 + $0x10] sm:$0xff]
        %v3476 = vld [vmem:[%s320 + $0x20] sm:$0xff]
        %v3477 = vld [vmem:[%s320 + $0x30] sm:$0xff]
        %v3478 = vld [vmem:[%s320 + $0x40] sm:$0xff]
        %v3479 = vld [vmem:[%s320 + $0x50] sm:$0xff]
        %v3480 = vld [vmem:[%s320 + $0x60] sm:$0xff]
        %v3481 = vld [vmem:[%s320 + $0x70] sm:$0xff]
        %s3482 = scalar_lea.vmem %s4, 16
        %v3483 = vld [vmem:[%s3482] sm:$0xf]
        %v3485 = vsel %vm340, %v3474, 0
        %v3488 = vsel %vm340, %v3475, 0
        %v3491 = vsel %vm340, %v3476, 0
        %v3494 = vsel %vm340, %v3477, 0
        %v3497 = vsel %vm340, %v3478, 0
        %v3500 = vsel %vm340, %v3479, 0
        %v3503 = vsel %vm340, %v3480, 0
        %v3506 = vsel %vm340, %v3481, 0
        %v3509 = vsel %vm365, %v3483, 0
        %3511 = vmatprep.subr.mxu0 0.0
        %3512 = vmatpush1.msra.mxu0 0.0
        %3513 = vmatprep.subr.mxu0 0.0
        %3514 = vmatpush1.msra.mxu0 0.0
        %3515 = vmatprep.subr.mxu0 0.0
        %3516 = vmatpush1.msra.mxu0 0.0
        %3517 = vmatprep.subr.mxu0 0.0
        %3518 = vmatpush1.msra.mxu0 0.0
        %3519 = vmatprep.subr.mxu0 0.0
        %3520 = vmatpush1.msra.mxu0 0.0
        %3521 = vmatprep.subr.mxu0 0.0
        %3522 = vmatpush1.msra.mxu0 0.0
        %3523 = vmatprep.subr.mxu0 0.0
        %3524 = vmatpush1.msra.mxu0 0.0
        %3525 = vmatprep.subr.mxu0 0.0
        %3526 = vmatpush1.msra.mxu0 0.0
        %3527 = vmatprep.subr.mxu0 0.0
        %3528 = vmatpush1.msra.mxu0 0.0
        %3529 = vmatprep.subr.mxu0 0.0
        %3530 = vmatpush1.msra.mxu0 0.0
        %3531 = vmatprep.subr.mxu0 0.0
        %3532 = vmatpush1.msra.mxu0 0.0
        %3533 = vmatprep.subr.mxu0 0.0
        %3534 = vmatpush1.msra.mxu0 0.0
        %3535 = vmatprep.subr.mxu0 0.0
        %3536 = vmatpush1.msra.mxu0 0.0
        %3537 = vmatprep.subr.mxu0 0.0
        %3538 = vmatpush1.msra.mxu0 0.0
        %3539 = vmatprep.subr.mxu0 0.0
        %3540 = vmatpush1.msra.mxu0 0.0
        %3541 = vmatprep.subr.mxu0 0.0
        %v3542 = vand.u32 %v3509, 4294901760
        %3543 = vmatpush1.msra.mxu0 %v3542
        %3544 = vmatprep.subr.mxu0 0.0
        %3545 = vmatpush2.msra.mxu0 0.0
        %3546 = vmatprep.subr.mxu0 0.0
        %3547 = vmatpush2.msra.mxu0 0.0
        %3548 = vmatprep.subr.mxu0 0.0
        %3549 = vmatpush2.msra.mxu0 0.0
        %3550 = vmatprep.subr.mxu0 0.0
        %3551 = vmatpush2.msra.mxu0 0.0
        %3552 = vmatprep.subr.mxu0 0.0
        %3553 = vmatpush2.msra.mxu0 0.0
        %3554 = vmatprep.subr.mxu0 0.0
        %3555 = vmatpush2.msra.mxu0 0.0
        %3556 = vmatprep.subr.mxu0 0.0
        %3557 = vmatpush2.msra.mxu0 0.0
        %3558 = vmatprep.subr.mxu0 0.0
        %3559 = vmatpush2.msra.mxu0 0.0
        %3560 = vmatprep.subr.mxu0 0.0
        %3561 = vmatpush2.msra.mxu0 0.0
        %3562 = vmatprep.subr.mxu0 0.0
        %3563 = vmatpush2.msra.mxu0 0.0
        %3564 = vmatprep.subr.mxu0 0.0
        %3565 = vmatpush2.msra.mxu0 0.0
        %3566 = vmatprep.subr.mxu0 0.0
        %3567 = vmatpush2.msra.mxu0 0.0
        %3568 = vmatprep.subr.mxu0 0.0
        %3569 = vmatpush2.msra.mxu0 0.0
        %3570 = vmatprep.subr.mxu0 0.0
        %3571 = vmatpush2.msra.mxu0 0.0
        %3572 = vmatprep.subr.mxu0 0.0
        %3573 = vmatpush2.msra.mxu0 0.0
        %3574 = vmatprep.subr.mxu0 0.0
        %3575 = vmatpush2.msra.mxu0 0.0
        %3576 = vmatprep.mubr.f32.mxu0 0.0
        %v3577 = vand.u32 %v3485, 4294901760
        %v3578 = vsub.f32 %v3485, %v3577
        %v3579 = vand.u32 %v3578, 4294901760
        %v3580 = vsub.f32 %v3578, %v3579
        %v3581 = vand.u32 %v3580, 4294901760
        %3582 = vmatmul.mubr.f32.gmra.mxu0 %v3581
        %v3583 = vpop.f32.mrf.mxu0
        %v3584 = vadd.f32 0.0, %v3583
        %v3585 = vpop.f32.mrf.mxu0
        %3586 = vmatprep.mubr.f32.mxu0 0.0
        %v3587 = vand.u32 %v3488, 4294901760
        %v3588 = vsub.f32 %v3488, %v3587
        %v3589 = vand.u32 %v3588, 4294901760
        %v3590 = vsub.f32 %v3588, %v3589
        %v3591 = vand.u32 %v3590, 4294901760
        %3592 = vmatmul.mubr.f32.gmra.mxu0 %v3591
        %v3593 = vpop.f32.mrf.mxu0
        %v3594 = vadd.f32 0.0, %v3593
        %v3595 = vpop.f32.mrf.mxu0
        %3596 = vmatprep.mubr.f32.mxu0 0.0
        %v3597 = vand.u32 %v3491, 4294901760
        %v3598 = vsub.f32 %v3491, %v3597
        %v3599 = vand.u32 %v3598, 4294901760
        %v3600 = vsub.f32 %v3598, %v3599
        %v3601 = vand.u32 %v3600, 4294901760
        %3602 = vmatmul.mubr.f32.gmra.mxu0 %v3601
        %v3603 = vpop.f32.mrf.mxu0
        %v3604 = vadd.f32 0.0, %v3603
        %v3605 = vpop.f32.mrf.mxu0
        %3606 = vmatprep.mubr.f32.mxu0 0.0
        %v3607 = vand.u32 %v3494, 4294901760
        %v3608 = vsub.f32 %v3494, %v3607
        %v3609 = vand.u32 %v3608, 4294901760
        %v3610 = vsub.f32 %v3608, %v3609
        %v3611 = vand.u32 %v3610, 4294901760
        %3612 = vmatmul.mubr.f32.gmra.mxu0 %v3611
        %v3613 = vpop.f32.mrf.mxu0
        %v3614 = vadd.f32 0.0, %v3613
        %v3615 = vpop.f32.mrf.mxu0
        %3616 = vmatprep.mubr.f32.mxu0 0.0
        %v3617 = vand.u32 %v3497, 4294901760
        %v3618 = vsub.f32 %v3497, %v3617
        %v3619 = vand.u32 %v3618, 4294901760
        %v3620 = vsub.f32 %v3618, %v3619
        %v3621 = vand.u32 %v3620, 4294901760
        %3622 = vmatmul.mubr.f32.gmra.mxu0 %v3621
        %v3623 = vpop.f32.mrf.mxu0
        %v3624 = vadd.f32 0.0, %v3623
        %v3625 = vpop.f32.mrf.mxu0
        %3626 = vmatprep.mubr.f32.mxu0 0.0
        %v3627 = vand.u32 %v3500, 4294901760
        %v3628 = vsub.f32 %v3500, %v3627
        %v3629 = vand.u32 %v3628, 4294901760
        %v3630 = vsub.f32 %v3628, %v3629
        %v3631 = vand.u32 %v3630, 4294901760
        %3632 = vmatmul.mubr.f32.gmra.mxu0 %v3631
        %v3633 = vpop.f32.mrf.mxu0
        %v3634 = vadd.f32 0.0, %v3633
        %v3635 = vpop.f32.mrf.mxu0
        %3636 = vmatprep.mubr.f32.mxu0 0.0
        %v3637 = vand.u32 %v3503, 4294901760
        %v3638 = vsub.f32 %v3503, %v3637
        %v3639 = vand.u32 %v3638, 4294901760
        %v3640 = vsub.f32 %v3638, %v3639
        %v3641 = vand.u32 %v3640, 4294901760
        %3642 = vmatmul.mubr.f32.gmra.mxu0 %v3641
        %v3643 = vpop.f32.mrf.mxu0
        %v3644 = vadd.f32 0.0, %v3643
        %v3645 = vpop.f32.mrf.mxu0
        %3646 = vmatprep.mubr.f32.mxu0 0.0
        %v3647 = vand.u32 %v3506, 4294901760
        %v3648 = vsub.f32 %v3506, %v3647
        %v3649 = vand.u32 %v3648, 4294901760
        %v3650 = vsub.f32 %v3648, %v3649
        %v3651 = vand.u32 %v3650, 4294901760
        %3652 = vmatmul.mubr.f32.gmra.mxu0 %v3651
        %v3653 = vpop.f32.mrf.mxu0
        %v3654 = vadd.f32 0.0, %v3653
        %v3655 = vpop.f32.mrf.mxu0
        %3656 = vdwg.mxu0
        %3657 = vmatprep.subr.mxu0 0.0
        %3658 = vmatpush1.msra.mxu0 0.0
        %3659 = vmatprep.subr.mxu0 0.0
        %3660 = vmatpush1.msra.mxu0 0.0
        %3661 = vmatprep.subr.mxu0 0.0
        %3662 = vmatpush1.msra.mxu0 0.0
        %3663 = vmatprep.subr.mxu0 0.0
        %3664 = vmatpush1.msra.mxu0 0.0
        %3665 = vmatprep.subr.mxu0 0.0
        %3666 = vmatpush1.msra.mxu0 0.0
        %3667 = vmatprep.subr.mxu0 0.0
        %3668 = vmatpush1.msra.mxu0 0.0
        %3669 = vmatprep.subr.mxu0 0.0
        %3670 = vmatpush1.msra.mxu0 0.0
        %3671 = vmatprep.subr.mxu0 0.0
        %3672 = vmatpush1.msra.mxu0 0.0
        %3673 = vmatprep.subr.mxu0 0.0
        %3674 = vmatpush1.msra.mxu0 0.0
        %3675 = vmatprep.subr.mxu0 0.0
        %3676 = vmatpush1.msra.mxu0 0.0
        %3677 = vmatprep.subr.mxu0 0.0
        %3678 = vmatpush1.msra.mxu0 0.0
        %3679 = vmatprep.subr.mxu0 0.0
        %3680 = vmatpush1.msra.mxu0 0.0
        %3681 = vmatprep.subr.mxu0 0.0
        %3682 = vmatpush1.msra.mxu0 0.0
        %3683 = vmatprep.subr.mxu0 0.0
        %3684 = vmatpush1.msra.mxu0 0.0
        %3685 = vmatprep.subr.mxu0 0.0
        %3686 = vmatpush1.msra.mxu0 0.0
        %3687 = vmatprep.subr.mxu0 0.0
        %v3688 = vand.u32 %v3509, 4294901760
        %v3689 = vsub.f32 %v3509, %v3688
        %v3690 = vand.u32 %v3689, 4294901760
        %v3691 = vsub.f32 %v3689, %v3690
        %v3692 = vand.u32 %v3691, 4294901760
        %3693 = vmatpush1.msra.mxu0 %v3692
        %3694 = vmatprep.subr.mxu0 0.0
        %3695 = vmatpush2.msra.mxu0 0.0
        %3696 = vmatprep.subr.mxu0 0.0
        %3697 = vmatpush2.msra.mxu0 0.0
        %3698 = vmatprep.subr.mxu0 0.0
        %3699 = vmatpush2.msra.mxu0 0.0
        %3700 = vmatprep.subr.mxu0 0.0
        %3701 = vmatpush2.msra.mxu0 0.0
        %3702 = vmatprep.subr.mxu0 0.0
        %3703 = vmatpush2.msra.mxu0 0.0
        %3704 = vmatprep.subr.mxu0 0.0
        %3705 = vmatpush2.msra.mxu0 0.0
        %3706 = vmatprep.subr.mxu0 0.0
        %3707 = vmatpush2.msra.mxu0 0.0
        %3708 = vmatprep.subr.mxu0 0.0
        %3709 = vmatpush2.msra.mxu0 0.0
        %3710 = vmatprep.subr.mxu0 0.0
        %3711 = vmatpush2.msra.mxu0 0.0
        %3712 = vmatprep.subr.mxu0 0.0
        %3713 = vmatpush2.msra.mxu0 0.0
        %3714 = vmatprep.subr.mxu0 0.0
        %3715 = vmatpush2.msra.mxu0 0.0
        %3716 = vmatprep.subr.mxu0 0.0
        %3717 = vmatpush2.msra.mxu0 0.0
        %3718 = vmatprep.subr.mxu0 0.0
        %3719 = vmatpush2.msra.mxu0 0.0
        %3720 = vmatprep.subr.mxu0 0.0
        %3721 = vmatpush2.msra.mxu0 0.0
        %3722 = vmatprep.subr.mxu0 0.0
        %3723 = vmatpush2.msra.mxu0 0.0
        %3724 = vmatprep.subr.mxu0 0.0
        %3725 = vmatpush2.msra.mxu0 0.0
        %3726 = vmatprep.mubr.f32.mxu0 0.0
        %v3727 = vand.u32 %v3485, 4294901760
        %3728 = vmatmul.mubr.f32.gmra.mxu0 %v3727
        %v3729 = vpop.f32.mrf.mxu0
        %v3730 = vadd.f32 %v3584, %v3729
        %v3731 = vpop.f32.mrf.mxu0
        %3732 = vmatprep.mubr.f32.mxu0 0.0
        %v3733 = vand.u32 %v3488, 4294901760
        %3734 = vmatmul.mubr.f32.gmra.mxu0 %v3733
        %v3735 = vpop.f32.mrf.mxu0
        %v3736 = vadd.f32 %v3594, %v3735
        %v3737 = vpop.f32.mrf.mxu0
        %3738 = vmatprep.mubr.f32.mxu0 0.0
        %v3739 = vand.u32 %v3491, 4294901760
        %3740 = vmatmul.mubr.f32.gmra.mxu0 %v3739
        %v3741 = vpop.f32.mrf.mxu0
        %v3742 = vadd.f32 %v3604, %v3741
        %v3743 = vpop.f32.mrf.mxu0
        %3744 = vmatprep.mubr.f32.mxu0 0.0
        %v3745 = vand.u32 %v3494, 4294901760
        %3746 = vmatmul.mubr.f32.gmra.mxu0 %v3745
        %v3747 = vpop.f32.mrf.mxu0
        %v3748 = vadd.f32 %v3614, %v3747
        %v3749 = vpop.f32.mrf.mxu0
        %3750 = vmatprep.mubr.f32.mxu0 0.0
        %v3751 = vand.u32 %v3497, 4294901760
        %3752 = vmatmul.mubr.f32.gmra.mxu0 %v3751
        %v3753 = vpop.f32.mrf.mxu0
        %v3754 = vadd.f32 %v3624, %v3753
        %v3755 = vpop.f32.mrf.mxu0
        %3756 = vmatprep.mubr.f32.mxu0 0.0
        %v3757 = vand.u32 %v3500, 4294901760
        %3758 = vmatmul.mubr.f32.gmra.mxu0 %v3757
        %v3759 = vpop.f32.mrf.mxu0
        %v3760 = vadd.f32 %v3634, %v3759
        %v3761 = vpop.f32.mrf.mxu0
        %3762 = vmatprep.mubr.f32.mxu0 0.0
        %v3763 = vand.u32 %v3503, 4294901760
        %3764 = vmatmul.mubr.f32.gmra.mxu0 %v3763
        %v3765 = vpop.f32.mrf.mxu0
        %v3766 = vadd.f32 %v3644, %v3765
        %v3767 = vpop.f32.mrf.mxu0
        %3768 = vmatprep.mubr.f32.mxu0 0.0
        %v3769 = vand.u32 %v3506, 4294901760
        %3770 = vmatmul.mubr.f32.gmra.mxu0 %v3769
        %v3771 = vpop.f32.mrf.mxu0
        %v3772 = vadd.f32 %v3654, %v3771
        %v3773 = vpop.f32.mrf.mxu0
        %3774 = vdwg.mxu0
        %3775 = vmatprep.subr.mxu0 0.0
        %3776 = vmatpush1.msra.mxu0 0.0
        %3777 = vmatprep.subr.mxu0 0.0
        %3778 = vmatpush1.msra.mxu0 0.0
        %3779 = vmatprep.subr.mxu0 0.0
        %3780 = vmatpush1.msra.mxu0 0.0
        %3781 = vmatprep.subr.mxu0 0.0
        %3782 = vmatpush1.msra.mxu0 0.0
        %3783 = vmatprep.subr.mxu0 0.0
        %3784 = vmatpush1.msra.mxu0 0.0
        %3785 = vmatprep.subr.mxu0 0.0
        %3786 = vmatpush1.msra.mxu0 0.0
        %3787 = vmatprep.subr.mxu0 0.0
        %3788 = vmatpush1.msra.mxu0 0.0
        %3789 = vmatprep.subr.mxu0 0.0
        %3790 = vmatpush1.msra.mxu0 0.0
        %3791 = vmatprep.subr.mxu0 0.0
        %3792 = vmatpush1.msra.mxu0 0.0
        %3793 = vmatprep.subr.mxu0 0.0
        %3794 = vmatpush1.msra.mxu0 0.0
        %3795 = vmatprep.subr.mxu0 0.0
        %3796 = vmatpush1.msra.mxu0 0.0
        %3797 = vmatprep.subr.mxu0 0.0
        %3798 = vmatpush1.msra.mxu0 0.0
        %3799 = vmatprep.subr.mxu0 0.0
        %3800 = vmatpush1.msra.mxu0 0.0
        %3801 = vmatprep.subr.mxu0 0.0
        %3802 = vmatpush1.msra.mxu0 0.0
        %3803 = vmatprep.subr.mxu0 0.0
        %3804 = vmatpush1.msra.mxu0 0.0
        %3805 = vmatprep.subr.mxu0 0.0
        %v3806 = vand.u32 %v3509, 4294901760
        %v3807 = vsub.f32 %v3509, %v3806
        %3808 = vmatpush1.msra.mxu0 %v3807
        %3809 = vmatprep.subr.mxu0 0.0
        %3810 = vmatpush2.msra.mxu0 0.0
        %3811 = vmatprep.subr.mxu0 0.0
        %3812 = vmatpush2.msra.mxu0 0.0
        %3813 = vmatprep.subr.mxu0 0.0
        %3814 = vmatpush2.msra.mxu0 0.0
        %3815 = vmatprep.subr.mxu0 0.0
        %3816 = vmatpush2.msra.mxu0 0.0
        %3817 = vmatprep.subr.mxu0 0.0
        %3818 = vmatpush2.msra.mxu0 0.0
        %3819 = vmatprep.subr.mxu0 0.0
        %3820 = vmatpush2.msra.mxu0 0.0
        %3821 = vmatprep.subr.mxu0 0.0
        %3822 = vmatpush2.msra.mxu0 0.0
        %3823 = vmatprep.subr.mxu0 0.0
        %3824 = vmatpush2.msra.mxu0 0.0
        %3825 = vmatprep.subr.mxu0 0.0
        %3826 = vmatpush2.msra.mxu0 0.0
        %3827 = vmatprep.subr.mxu0 0.0
        %3828 = vmatpush2.msra.mxu0 0.0
        %3829 = vmatprep.subr.mxu0 0.0
        %3830 = vmatpush2.msra.mxu0 0.0
        %3831 = vmatprep.subr.mxu0 0.0
        %3832 = vmatpush2.msra.mxu0 0.0
        %3833 = vmatprep.subr.mxu0 0.0
        %3834 = vmatpush2.msra.mxu0 0.0
        %3835 = vmatprep.subr.mxu0 0.0
        %3836 = vmatpush2.msra.mxu0 0.0
        %3837 = vmatprep.subr.mxu0 0.0
        %3838 = vmatpush2.msra.mxu0 0.0
        %3839 = vmatprep.subr.mxu0 0.0
        %3840 = vmatpush2.msra.mxu0 0.0
        %3841 = vmatprep.mubr.f32.mxu0 0.0
        %v3842 = vand.u32 %v3485, 4294901760
        %v3843 = vsub.f32 %v3485, %v3842
        %3844 = vmatmul.mubr.f32.gmra.mxu0 %v3843
        %v3845 = vpop.f32.mrf.mxu0
        %v3846 = vadd.f32 %v3730, %v3845
        %v3847 = vpop.f32.mrf.mxu0
        %3848 = vmatprep.mubr.f32.mxu0 0.0
        %v3849 = vand.u32 %v3488, 4294901760
        %v3850 = vsub.f32 %v3488, %v3849
        %3851 = vmatmul.mubr.f32.gmra.mxu0 %v3850
        %v3852 = vpop.f32.mrf.mxu0
        %v3853 = vadd.f32 %v3736, %v3852
        %v3854 = vpop.f32.mrf.mxu0
        %3855 = vmatprep.mubr.f32.mxu0 0.0
        %v3856 = vand.u32 %v3491, 4294901760
        %v3857 = vsub.f32 %v3491, %v3856
        %3858 = vmatmul.mubr.f32.gmra.mxu0 %v3857
        %v3859 = vpop.f32.mrf.mxu0
        %v3860 = vadd.f32 %v3742, %v3859
        %v3861 = vpop.f32.mrf.mxu0
        %3862 = vmatprep.mubr.f32.mxu0 0.0
        %v3863 = vand.u32 %v3494, 4294901760
        %v3864 = vsub.f32 %v3494, %v3863
        %3865 = vmatmul.mubr.f32.gmra.mxu0 %v3864
        %v3866 = vpop.f32.mrf.mxu0
        %v3867 = vadd.f32 %v3748, %v3866
        %v3868 = vpop.f32.mrf.mxu0
        %3869 = vmatprep.mubr.f32.mxu0 0.0
        %v3870 = vand.u32 %v3497, 4294901760
        %v3871 = vsub.f32 %v3497, %v3870
        %3872 = vmatmul.mubr.f32.gmra.mxu0 %v3871
        %v3873 = vpop.f32.mrf.mxu0
        %v3874 = vadd.f32 %v3754, %v3873
        %v3875 = vpop.f32.mrf.mxu0
        %3876 = vmatprep.mubr.f32.mxu0 0.0
        %v3877 = vand.u32 %v3500, 4294901760
        %v3878 = vsub.f32 %v3500, %v3877
        %3879 = vmatmul.mubr.f32.gmra.mxu0 %v3878
        %v3880 = vpop.f32.mrf.mxu0
        %v3881 = vadd.f32 %v3760, %v3880
        %v3882 = vpop.f32.mrf.mxu0
        %3883 = vmatprep.mubr.f32.mxu0 0.0
        %v3884 = vand.u32 %v3503, 4294901760
        %v3885 = vsub.f32 %v3503, %v3884
        %3886 = vmatmul.mubr.f32.gmra.mxu0 %v3885
        %v3887 = vpop.f32.mrf.mxu0
        %v3888 = vadd.f32 %v3766, %v3887
        %v3889 = vpop.f32.mrf.mxu0
        %3890 = vmatprep.mubr.f32.mxu0 0.0
        %v3891 = vand.u32 %v3506, 4294901760
        %v3892 = vsub.f32 %v3506, %v3891
        %3893 = vmatmul.mubr.f32.gmra.mxu0 %v3892
        %v3894 = vpop.f32.mrf.mxu0
        %v3895 = vadd.f32 %v3772, %v3894
        %v3896 = vpop.f32.mrf.mxu0
        %3897 = vdwg.mxu0
        %3898 = vmatprep.subr.mxu0 0.0
        %3899 = vmatpush1.msra.mxu0 0.0
        %3900 = vmatprep.subr.mxu0 0.0
        %3901 = vmatpush1.msra.mxu0 0.0
        %3902 = vmatprep.subr.mxu0 0.0
        %3903 = vmatpush1.msra.mxu0 0.0
        %3904 = vmatprep.subr.mxu0 0.0
        %3905 = vmatpush1.msra.mxu0 0.0
        %3906 = vmatprep.subr.mxu0 0.0
        %3907 = vmatpush1.msra.mxu0 0.0
        %3908 = vmatprep.subr.mxu0 0.0
        %3909 = vmatpush1.msra.mxu0 0.0
        %3910 = vmatprep.subr.mxu0 0.0
        %3911 = vmatpush1.msra.mxu0 0.0
        %3912 = vmatprep.subr.mxu0 0.0
        %3913 = vmatpush1.msra.mxu0 0.0
        %3914 = vmatprep.subr.mxu0 0.0
        %3915 = vmatpush1.msra.mxu0 0.0
        %3916 = vmatprep.subr.mxu0 0.0
        %3917 = vmatpush1.msra.mxu0 0.0
        %3918 = vmatprep.subr.mxu0 0.0
        %3919 = vmatpush1.msra.mxu0 0.0
        %3920 = vmatprep.subr.mxu0 0.0
        %3921 = vmatpush1.msra.mxu0 0.0
        %3922 = vmatprep.subr.mxu0 0.0
        %3923 = vmatpush1.msra.mxu0 0.0
        %3924 = vmatprep.subr.mxu0 0.0
        %3925 = vmatpush1.msra.mxu0 0.0
        %3926 = vmatprep.subr.mxu0 0.0
        %3927 = vmatpush1.msra.mxu0 0.0
        %3928 = vmatprep.subr.mxu0 0.0
        %v3929 = vand.u32 %v3509, 4294901760
        %3930 = vmatpush1.msra.mxu0 %v3929
        %3931 = vmatprep.subr.mxu0 0.0
        %3932 = vmatpush2.msra.mxu0 0.0
        %3933 = vmatprep.subr.mxu0 0.0
        %3934 = vmatpush2.msra.mxu0 0.0
        %3935 = vmatprep.subr.mxu0 0.0
        %3936 = vmatpush2.msra.mxu0 0.0
        %3937 = vmatprep.subr.mxu0 0.0
        %3938 = vmatpush2.msra.mxu0 0.0
        %3939 = vmatprep.subr.mxu0 0.0
        %3940 = vmatpush2.msra.mxu0 0.0
        %3941 = vmatprep.subr.mxu0 0.0
        %3942 = vmatpush2.msra.mxu0 0.0
        %3943 = vmatprep.subr.mxu0 0.0
        %3944 = vmatpush2.msra.mxu0 0.0
        %3945 = vmatprep.subr.mxu0 0.0
        %3946 = vmatpush2.msra.mxu0 0.0
        %3947 = vmatprep.subr.mxu0 0.0
        %3948 = vmatpush2.msra.mxu0 0.0
        %3949 = vmatprep.subr.mxu0 0.0
        %3950 = vmatpush2.msra.mxu0 0.0
        %3951 = vmatprep.subr.mxu0 0.0
        %3952 = vmatpush2.msra.mxu0 0.0
        %3953 = vmatprep.subr.mxu0 0.0
        %3954 = vmatpush2.msra.mxu0 0.0
        %3955 = vmatprep.subr.mxu0 0.0
        %3956 = vmatpush2.msra.mxu0 0.0
        %3957 = vmatprep.subr.mxu0 0.0
        %3958 = vmatpush2.msra.mxu0 0.0
        %3959 = vmatprep.subr.mxu0 0.0
        %3960 = vmatpush2.msra.mxu0 0.0
        %3961 = vmatprep.subr.mxu0 0.0
        %3962 = vmatpush2.msra.mxu0 0.0
        %3963 = vmatprep.mubr.f32.mxu0 0.0
        %v3964 = vand.u32 %v3485, 4294901760
        %v3965 = vsub.f32 %v3485, %v3964
        %v3966 = vand.u32 %v3965, 4294901760
        %3967 = vmatmul.mubr.f32.gmra.mxu0 %v3966
        %v3968 = vpop.f32.mrf.mxu0
        %v3969 = vadd.f32 %v3846, %v3968
        %v3970 = vpop.f32.mrf.mxu0
        %3971 = vmatprep.mubr.f32.mxu0 0.0
        %v3972 = vand.u32 %v3488, 4294901760
        %v3973 = vsub.f32 %v3488, %v3972
        %v3974 = vand.u32 %v3973, 4294901760
        %3975 = vmatmul.mubr.f32.gmra.mxu0 %v3974
        %v3976 = vpop.f32.mrf.mxu0
        %v3977 = vadd.f32 %v3853, %v3976
        %v3978 = vpop.f32.mrf.mxu0
        %3979 = vmatprep.mubr.f32.mxu0 0.0
        %v3980 = vand.u32 %v3491, 4294901760
        %v3981 = vsub.f32 %v3491, %v3980
        %v3982 = vand.u32 %v3981, 4294901760
        %3983 = vmatmul.mubr.f32.gmra.mxu0 %v3982
        %v3984 = vpop.f32.mrf.mxu0
        %v3985 = vadd.f32 %v3860, %v3984
        %v3986 = vpop.f32.mrf.mxu0
        %3987 = vmatprep.mubr.f32.mxu0 0.0
        %v3988 = vand.u32 %v3494, 4294901760
        %v3989 = vsub.f32 %v3494, %v3988
        %v3990 = vand.u32 %v3989, 4294901760
        %3991 = vmatmul.mubr.f32.gmra.mxu0 %v3990
        %v3992 = vpop.f32.mrf.mxu0
        %v3993 = vadd.f32 %v3867, %v3992
        %v3994 = vpop.f32.mrf.mxu0
        %3995 = vmatprep.mubr.f32.mxu0 0.0
        %v3996 = vand.u32 %v3497, 4294901760
        %v3997 = vsub.f32 %v3497, %v3996
        %v3998 = vand.u32 %v3997, 4294901760
        %3999 = vmatmul.mubr.f32.gmra.mxu0 %v3998
        %v4000 = vpop.f32.mrf.mxu0
        %v4001 = vadd.f32 %v3874, %v4000
        %v4002 = vpop.f32.mrf.mxu0
        %4003 = vmatprep.mubr.f32.mxu0 0.0
        %v4004 = vand.u32 %v3500, 4294901760
        %v4005 = vsub.f32 %v3500, %v4004
        %v4006 = vand.u32 %v4005, 4294901760
        %4007 = vmatmul.mubr.f32.gmra.mxu0 %v4006
        %v4008 = vpop.f32.mrf.mxu0
        %v4009 = vadd.f32 %v3881, %v4008
        %v4010 = vpop.f32.mrf.mxu0
        %4011 = vmatprep.mubr.f32.mxu0 0.0
        %v4012 = vand.u32 %v3503, 4294901760
        %v4013 = vsub.f32 %v3503, %v4012
        %v4014 = vand.u32 %v4013, 4294901760
        %4015 = vmatmul.mubr.f32.gmra.mxu0 %v4014
        %v4016 = vpop.f32.mrf.mxu0
        %v4017 = vadd.f32 %v3888, %v4016
        %v4018 = vpop.f32.mrf.mxu0
        %4019 = vmatprep.mubr.f32.mxu0 0.0
        %v4020 = vand.u32 %v3506, 4294901760
        %v4021 = vsub.f32 %v3506, %v4020
        %v4022 = vand.u32 %v4021, 4294901760
        %4023 = vmatmul.mubr.f32.gmra.mxu0 %v4022
        %v4024 = vpop.f32.mrf.mxu0
        %v4025 = vadd.f32 %v3895, %v4024
        %v4026 = vpop.f32.mrf.mxu0
        %4027 = vdwg.mxu0
        %4028 = vmatprep.subr.mxu0 0.0
        %4029 = vmatpush1.msra.mxu0 0.0
        %4030 = vmatprep.subr.mxu0 0.0
        %4031 = vmatpush1.msra.mxu0 0.0
        %4032 = vmatprep.subr.mxu0 0.0
        %4033 = vmatpush1.msra.mxu0 0.0
        %4034 = vmatprep.subr.mxu0 0.0
        %4035 = vmatpush1.msra.mxu0 0.0
        %4036 = vmatprep.subr.mxu0 0.0
        %4037 = vmatpush1.msra.mxu0 0.0
        %4038 = vmatprep.subr.mxu0 0.0
        %4039 = vmatpush1.msra.mxu0 0.0
        %4040 = vmatprep.subr.mxu0 0.0
        %4041 = vmatpush1.msra.mxu0 0.0
        %4042 = vmatprep.subr.mxu0 0.0
        %4043 = vmatpush1.msra.mxu0 0.0
        %4044 = vmatprep.subr.mxu0 0.0
        %4045 = vmatpush1.msra.mxu0 0.0
        %4046 = vmatprep.subr.mxu0 0.0
        %4047 = vmatpush1.msra.mxu0 0.0
        %4048 = vmatprep.subr.mxu0 0.0
        %4049 = vmatpush1.msra.mxu0 0.0
        %4050 = vmatprep.subr.mxu0 0.0
        %4051 = vmatpush1.msra.mxu0 0.0
        %4052 = vmatprep.subr.mxu0 0.0
        %4053 = vmatpush1.msra.mxu0 0.0
        %4054 = vmatprep.subr.mxu0 0.0
        %4055 = vmatpush1.msra.mxu0 0.0
        %4056 = vmatprep.subr.mxu0 0.0
        %4057 = vmatpush1.msra.mxu0 0.0
        %4058 = vmatprep.subr.mxu0 0.0
        %v4059 = vand.u32 %v3509, 4294901760
        %v4060 = vsub.f32 %v3509, %v4059
        %v4061 = vand.u32 %v4060, 4294901760
        %4062 = vmatpush1.msra.mxu0 %v4061
        %4063 = vmatprep.subr.mxu0 0.0
        %4064 = vmatpush2.msra.mxu0 0.0
        %4065 = vmatprep.subr.mxu0 0.0
        %4066 = vmatpush2.msra.mxu0 0.0
        %4067 = vmatprep.subr.mxu0 0.0
        %4068 = vmatpush2.msra.mxu0 0.0
        %4069 = vmatprep.subr.mxu0 0.0
        %4070 = vmatpush2.msra.mxu0 0.0
        %4071 = vmatprep.subr.mxu0 0.0
        %4072 = vmatpush2.msra.mxu0 0.0
        %4073 = vmatprep.subr.mxu0 0.0
        %4074 = vmatpush2.msra.mxu0 0.0
        %4075 = vmatprep.subr.mxu0 0.0
        %4076 = vmatpush2.msra.mxu0 0.0
        %4077 = vmatprep.subr.mxu0 0.0
        %4078 = vmatpush2.msra.mxu0 0.0
        %4079 = vmatprep.subr.mxu0 0.0
        %4080 = vmatpush2.msra.mxu0 0.0
        %4081 = vmatprep.subr.mxu0 0.0
        %4082 = vmatpush2.msra.mxu0 0.0
        %4083 = vmatprep.subr.mxu0 0.0
        %4084 = vmatpush2.msra.mxu0 0.0
        %4085 = vmatprep.subr.mxu0 0.0
        %4086 = vmatpush2.msra.mxu0 0.0
        %4087 = vmatprep.subr.mxu0 0.0
        %4088 = vmatpush2.msra.mxu0 0.0
        %4089 = vmatprep.subr.mxu0 0.0
        %4090 = vmatpush2.msra.mxu0 0.0
        %4091 = vmatprep.subr.mxu0 0.0
        %4092 = vmatpush2.msra.mxu0 0.0
        %4093 = vmatprep.subr.mxu0 0.0
        %4094 = vmatpush2.msra.mxu0 0.0
        %4095 = vmatprep.mubr.f32.mxu0 0.0
        %v4096 = vand.u32 %v3485, 4294901760
        %4097 = vmatmul.mubr.f32.gmra.mxu0 %v4096
        %v4098 = vpop.f32.mrf.mxu0
        %v4099 = vadd.f32 %v3969, %v4098
        %v4100 = vpop.f32.mrf.mxu0
        %4101 = vmatprep.mubr.f32.mxu0 0.0
        %v4102 = vand.u32 %v3488, 4294901760
        %4103 = vmatmul.mubr.f32.gmra.mxu0 %v4102
        %v4104 = vpop.f32.mrf.mxu0
        %v4105 = vadd.f32 %v3977, %v4104
        %v4106 = vpop.f32.mrf.mxu0
        %4107 = vmatprep.mubr.f32.mxu0 0.0
        %v4108 = vand.u32 %v3491, 4294901760
        %4109 = vmatmul.mubr.f32.gmra.mxu0 %v4108
        %v4110 = vpop.f32.mrf.mxu0
        %v4111 = vadd.f32 %v3985, %v4110
        %v4112 = vpop.f32.mrf.mxu0
        %4113 = vmatprep.mubr.f32.mxu0 0.0
        %v4114 = vand.u32 %v3494, 4294901760
        %4115 = vmatmul.mubr.f32.gmra.mxu0 %v4114
        %v4116 = vpop.f32.mrf.mxu0
        %v4117 = vadd.f32 %v3993, %v4116
        %v4118 = vpop.f32.mrf.mxu0
        %4119 = vmatprep.mubr.f32.mxu0 0.0
        %v4120 = vand.u32 %v3497, 4294901760
        %4121 = vmatmul.mubr.f32.gmra.mxu0 %v4120
        %v4122 = vpop.f32.mrf.mxu0
        %v4123 = vadd.f32 %v4001, %v4122
        %v4124 = vpop.f32.mrf.mxu0
        %4125 = vmatprep.mubr.f32.mxu0 0.0
        %v4126 = vand.u32 %v3500, 4294901760
        %4127 = vmatmul.mubr.f32.gmra.mxu0 %v4126
        %v4128 = vpop.f32.mrf.mxu0
        %v4129 = vadd.f32 %v4009, %v4128
        %v4130 = vpop.f32.mrf.mxu0
        %4131 = vmatprep.mubr.f32.mxu0 0.0
        %v4132 = vand.u32 %v3503, 4294901760
        %4133 = vmatmul.mubr.f32.gmra.mxu0 %v4132
        %v4134 = vpop.f32.mrf.mxu0
        %v4135 = vadd.f32 %v4017, %v4134
        %v4136 = vpop.f32.mrf.mxu0
        %4137 = vmatprep.mubr.f32.mxu0 0.0
        %v4138 = vand.u32 %v3506, 4294901760
        %4139 = vmatmul.mubr.f32.gmra.mxu0 %v4138
        %v4140 = vpop.f32.mrf.mxu0
        %v4141 = vadd.f32 %v4025, %v4140
        %v4142 = vpop.f32.mrf.mxu0
        %4143 = vdwg.mxu0
        %4144 = vmatprep.subr.mxu0 0.0
        %4145 = vmatpush1.msra.mxu0 0.0
        %4146 = vmatprep.subr.mxu0 0.0
        %4147 = vmatpush1.msra.mxu0 0.0
        %4148 = vmatprep.subr.mxu0 0.0
        %4149 = vmatpush1.msra.mxu0 0.0
        %4150 = vmatprep.subr.mxu0 0.0
        %4151 = vmatpush1.msra.mxu0 0.0
        %4152 = vmatprep.subr.mxu0 0.0
        %4153 = vmatpush1.msra.mxu0 0.0
        %4154 = vmatprep.subr.mxu0 0.0
        %4155 = vmatpush1.msra.mxu0 0.0
        %4156 = vmatprep.subr.mxu0 0.0
        %4157 = vmatpush1.msra.mxu0 0.0
        %4158 = vmatprep.subr.mxu0 0.0
        %4159 = vmatpush1.msra.mxu0 0.0
        %4160 = vmatprep.subr.mxu0 0.0
        %4161 = vmatpush1.msra.mxu0 0.0
        %4162 = vmatprep.subr.mxu0 0.0
        %4163 = vmatpush1.msra.mxu0 0.0
        %4164 = vmatprep.subr.mxu0 0.0
        %4165 = vmatpush1.msra.mxu0 0.0
        %4166 = vmatprep.subr.mxu0 0.0
        %4167 = vmatpush1.msra.mxu0 0.0
        %4168 = vmatprep.subr.mxu0 0.0
        %4169 = vmatpush1.msra.mxu0 0.0
        %4170 = vmatprep.subr.mxu0 0.0
        %4171 = vmatpush1.msra.mxu0 0.0
        %4172 = vmatprep.subr.mxu0 0.0
        %4173 = vmatpush1.msra.mxu0 0.0
        %4174 = vmatprep.subr.mxu0 0.0
        %v4175 = vand.u32 %v3509, 4294901760
        %4176 = vmatpush1.msra.mxu0 %v4175
        %4177 = vmatprep.subr.mxu0 0.0
        %4178 = vmatpush2.msra.mxu0 0.0
        %4179 = vmatprep.subr.mxu0 0.0
        %4180 = vmatpush2.msra.mxu0 0.0
        %4181 = vmatprep.subr.mxu0 0.0
        %4182 = vmatpush2.msra.mxu0 0.0
        %4183 = vmatprep.subr.mxu0 0.0
        %4184 = vmatpush2.msra.mxu0 0.0
        %4185 = vmatprep.subr.mxu0 0.0
        %4186 = vmatpush2.msra.mxu0 0.0
        %4187 = vmatprep.subr.mxu0 0.0
        %4188 = vmatpush2.msra.mxu0 0.0
        %4189 = vmatprep.subr.mxu0 0.0
        %4190 = vmatpush2.msra.mxu0 0.0
        %4191 = vmatprep.subr.mxu0 0.0
        %4192 = vmatpush2.msra.mxu0 0.0
        %4193 = vmatprep.subr.mxu0 0.0
        %4194 = vmatpush2.msra.mxu0 0.0
        %4195 = vmatprep.subr.mxu0 0.0
        %4196 = vmatpush2.msra.mxu0 0.0
        %4197 = vmatprep.subr.mxu0 0.0
        %4198 = vmatpush2.msra.mxu0 0.0
        %4199 = vmatprep.subr.mxu0 0.0
        %4200 = vmatpush2.msra.mxu0 0.0
        %4201 = vmatprep.subr.mxu0 0.0
        %4202 = vmatpush2.msra.mxu0 0.0
        %4203 = vmatprep.subr.mxu0 0.0
        %4204 = vmatpush2.msra.mxu0 0.0
        %4205 = vmatprep.subr.mxu0 0.0
        %4206 = vmatpush2.msra.mxu0 0.0
        %4207 = vmatprep.subr.mxu0 0.0
        %4208 = vmatpush2.msra.mxu0 0.0
        %4209 = vmatprep.mubr.f32.mxu0 0.0
        %v4210 = vand.u32 %v3485, 4294901760
        %4211 = vmatmul.mubr.f32.gmra.mxu0 %v4210
        %v4212 = vpop.f32.mrf.mxu0
        %v4213 = vadd.f32 %v4099, %v4212
        %v4214 = vpop.f32.mrf.mxu0
        %4215 = vmatprep.mubr.f32.mxu0 0.0
        %v4216 = vand.u32 %v3488, 4294901760
        %4217 = vmatmul.mubr.f32.gmra.mxu0 %v4216
        %v4218 = vpop.f32.mrf.mxu0
        %v4219 = vadd.f32 %v4105, %v4218
        %v4220 = vpop.f32.mrf.mxu0
        %4221 = vmatprep.mubr.f32.mxu0 0.0
        %v4222 = vand.u32 %v3491, 4294901760
        %4223 = vmatmul.mubr.f32.gmra.mxu0 %v4222
        %v4224 = vpop.f32.mrf.mxu0
        %v4225 = vadd.f32 %v4111, %v4224
        %v4226 = vpop.f32.mrf.mxu0
        %4227 = vmatprep.mubr.f32.mxu0 0.0
        %v4228 = vand.u32 %v3494, 4294901760
        %4229 = vmatmul.mubr.f32.gmra.mxu0 %v4228
        %v4230 = vpop.f32.mrf.mxu0
        %v4231 = vadd.f32 %v4117, %v4230
        %v4232 = vpop.f32.mrf.mxu0
        %4233 = vmatprep.mubr.f32.mxu0 0.0
        %v4234 = vand.u32 %v3497, 4294901760
        %4235 = vmatmul.mubr.f32.gmra.mxu0 %v4234
        %v4236 = vpop.f32.mrf.mxu0
        %v4237 = vadd.f32 %v4123, %v4236
        %v4238 = vpop.f32.mrf.mxu0
        %4239 = vmatprep.mubr.f32.mxu0 0.0
        %v4240 = vand.u32 %v3500, 4294901760
        %4241 = vmatmul.mubr.f32.gmra.mxu0 %v4240
        %v4242 = vpop.f32.mrf.mxu0
        %v4243 = vadd.f32 %v4129, %v4242
        %v4244 = vpop.f32.mrf.mxu0
        %4245 = vmatprep.mubr.f32.mxu0 0.0
        %v4246 = vand.u32 %v3503, 4294901760
        %4247 = vmatmul.mubr.f32.gmra.mxu0 %v4246
        %v4248 = vpop.f32.mrf.mxu0
        %v4249 = vadd.f32 %v4135, %v4248
        %v4250 = vpop.f32.mrf.mxu0
        %4251 = vmatprep.mubr.f32.mxu0 0.0
        %v4252 = vand.u32 %v3506, 4294901760
        %4253 = vmatmul.mubr.f32.gmra.mxu0 %v4252
        %v4254 = vpop.f32.mrf.mxu0
        %v4255 = vadd.f32 %v4141, %v4254
        %v4256 = vpop.f32.mrf.mxu0
        %4257 = vdwg.mxu0
        %v4258 = vadd.f32 %v3466, %v4213
        %v4259 = vadd.f32 %v3467, %v4219
        %v4260 = vadd.f32 %v3468, %v4225
        %v4261 = vadd.f32 %v3469, %v4231
        %v4262 = vadd.f32 %v3470, %v4237
        %v4263 = vadd.f32 %v3471, %v4243
        %v4264 = vadd.f32 %v3472, %v4249
        %v4265 = vadd.f32 %v3473, %v4255
        %v4266 = vld [vmem:[%s315 + $0x1] sm:$0xff]
        %v4267 = vld [vmem:[%s315 + $0x11] sm:$0xff]
        %v4268 = vld [vmem:[%s315 + $0x21] sm:$0xff]
        %v4269 = vld [vmem:[%s315 + $0x31] sm:$0xff]
        %v4270 = vld [vmem:[%s315 + $0x41] sm:$0xff]
        %v4271 = vld [vmem:[%s315 + $0x51] sm:$0xff]
        %v4272 = vld [vmem:[%s315 + $0x61] sm:$0xff]
        %v4273 = vld [vmem:[%s315 + $0x71] sm:$0xff]
        %s4274 = scalar_lea.vmem %s4, 20
        %v4275 = vld [vmem:[%s4274] sm:$0xf]
        %v4277 = vsel %vm340, %v4266, 0
        %v4280 = vsel %vm340, %v4267, 0
        %v4283 = vsel %vm340, %v4268, 0
        %v4286 = vsel %vm340, %v4269, 0
        %v4289 = vsel %vm340, %v4270, 0
        %v4292 = vsel %vm340, %v4271, 0
        %v4295 = vsel %vm340, %v4272, 0
        %v4298 = vsel %vm340, %v4273, 0
        %v4301 = vsel %vm365, %v4275, 0
        %4303 = vmatprep.subr.mxu0 0.0
        %4304 = vmatpush1.msra.mxu0 0.0
        %4305 = vmatprep.subr.mxu0 0.0
        %4306 = vmatpush1.msra.mxu0 0.0
        %4307 = vmatprep.subr.mxu0 0.0
        %4308 = vmatpush1.msra.mxu0 0.0
        %4309 = vmatprep.subr.mxu0 0.0
        %4310 = vmatpush1.msra.mxu0 0.0
        %4311 = vmatprep.subr.mxu0 0.0
        %4312 = vmatpush1.msra.mxu0 0.0
        %4313 = vmatprep.subr.mxu0 0.0
        %4314 = vmatpush1.msra.mxu0 0.0
        %4315 = vmatprep.subr.mxu0 0.0
        %4316 = vmatpush1.msra.mxu0 0.0
        %4317 = vmatprep.subr.mxu0 0.0
        %4318 = vmatpush1.msra.mxu0 0.0
        %4319 = vmatprep.subr.mxu0 0.0
        %4320 = vmatpush1.msra.mxu0 0.0
        %4321 = vmatprep.subr.mxu0 0.0
        %4322 = vmatpush1.msra.mxu0 0.0
        %4323 = vmatprep.subr.mxu0 0.0
        %4324 = vmatpush1.msra.mxu0 0.0
        %4325 = vmatprep.subr.mxu0 0.0
        %4326 = vmatpush1.msra.mxu0 0.0
        %4327 = vmatprep.subr.mxu0 0.0
        %4328 = vmatpush1.msra.mxu0 0.0
        %4329 = vmatprep.subr.mxu0 0.0
        %4330 = vmatpush1.msra.mxu0 0.0
        %4331 = vmatprep.subr.mxu0 0.0
        %4332 = vmatpush1.msra.mxu0 0.0
        %4333 = vmatprep.subr.mxu0 0.0
        %v4334 = vand.u32 %v4301, 4294901760
        %4335 = vmatpush1.msra.mxu0 %v4334
        %4336 = vmatprep.subr.mxu0 0.0
        %4337 = vmatpush2.msra.mxu0 0.0
        %4338 = vmatprep.subr.mxu0 0.0
        %4339 = vmatpush2.msra.mxu0 0.0
        %4340 = vmatprep.subr.mxu0 0.0
        %4341 = vmatpush2.msra.mxu0 0.0
        %4342 = vmatprep.subr.mxu0 0.0
        %4343 = vmatpush2.msra.mxu0 0.0
        %4344 = vmatprep.subr.mxu0 0.0
        %4345 = vmatpush2.msra.mxu0 0.0
        %4346 = vmatprep.subr.mxu0 0.0
        %4347 = vmatpush2.msra.mxu0 0.0
        %4348 = vmatprep.subr.mxu0 0.0
        %4349 = vmatpush2.msra.mxu0 0.0
        %4350 = vmatprep.subr.mxu0 0.0
        %4351 = vmatpush2.msra.mxu0 0.0
        %4352 = vmatprep.subr.mxu0 0.0
        %4353 = vmatpush2.msra.mxu0 0.0
        %4354 = vmatprep.subr.mxu0 0.0
        %4355 = vmatpush2.msra.mxu0 0.0
        %4356 = vmatprep.subr.mxu0 0.0
        %4357 = vmatpush2.msra.mxu0 0.0
        %4358 = vmatprep.subr.mxu0 0.0
        %4359 = vmatpush2.msra.mxu0 0.0
        %4360 = vmatprep.subr.mxu0 0.0
        %4361 = vmatpush2.msra.mxu0 0.0
        %4362 = vmatprep.subr.mxu0 0.0
        %4363 = vmatpush2.msra.mxu0 0.0
        %4364 = vmatprep.subr.mxu0 0.0
        %4365 = vmatpush2.msra.mxu0 0.0
        %4366 = vmatprep.subr.mxu0 0.0
        %4367 = vmatpush2.msra.mxu0 0.0
        %4368 = vmatprep.mubr.f32.mxu0 0.0
        %v4369 = vand.u32 %v4277, 4294901760
        %v4370 = vsub.f32 %v4277, %v4369
        %v4371 = vand.u32 %v4370, 4294901760
        %v4372 = vsub.f32 %v4370, %v4371
        %v4373 = vand.u32 %v4372, 4294901760
        %4374 = vmatmul.mubr.f32.gmra.mxu0 %v4373
        %v4375 = vpop.f32.mrf.mxu0
        %v4376 = vadd.f32 0.0, %v4375
        %v4377 = vpop.f32.mrf.mxu0
        %4378 = vmatprep.mubr.f32.mxu0 0.0
        %v4379 = vand.u32 %v4280, 4294901760
        %v4380 = vsub.f32 %v4280, %v4379
        %v4381 = vand.u32 %v4380, 4294901760
        %v4382 = vsub.f32 %v4380, %v4381
        %v4383 = vand.u32 %v4382, 4294901760
        %4384 = vmatmul.mubr.f32.gmra.mxu0 %v4383
        %v4385 = vpop.f32.mrf.mxu0
        %v4386 = vadd.f32 0.0, %v4385
        %v4387 = vpop.f32.mrf.mxu0
        %4388 = vmatprep.mubr.f32.mxu0 0.0
        %v4389 = vand.u32 %v4283, 4294901760
        %v4390 = vsub.f32 %v4283, %v4389
        %v4391 = vand.u32 %v4390, 4294901760
        %v4392 = vsub.f32 %v4390, %v4391
        %v4393 = vand.u32 %v4392, 4294901760
        %4394 = vmatmul.mubr.f32.gmra.mxu0 %v4393
        %v4395 = vpop.f32.mrf.mxu0
        %v4396 = vadd.f32 0.0, %v4395
        %v4397 = vpop.f32.mrf.mxu0
        %4398 = vmatprep.mubr.f32.mxu0 0.0
        %v4399 = vand.u32 %v4286, 4294901760
        %v4400 = vsub.f32 %v4286, %v4399
        %v4401 = vand.u32 %v4400, 4294901760
        %v4402 = vsub.f32 %v4400, %v4401
        %v4403 = vand.u32 %v4402, 4294901760
        %4404 = vmatmul.mubr.f32.gmra.mxu0 %v4403
        %v4405 = vpop.f32.mrf.mxu0
        %v4406 = vadd.f32 0.0, %v4405
        %v4407 = vpop.f32.mrf.mxu0
        %4408 = vmatprep.mubr.f32.mxu0 0.0
        %v4409 = vand.u32 %v4289, 4294901760
        %v4410 = vsub.f32 %v4289, %v4409
        %v4411 = vand.u32 %v4410, 4294901760
        %v4412 = vsub.f32 %v4410, %v4411
        %v4413 = vand.u32 %v4412, 4294901760
        %4414 = vmatmul.mubr.f32.gmra.mxu0 %v4413
        %v4415 = vpop.f32.mrf.mxu0
        %v4416 = vadd.f32 0.0, %v4415
        %v4417 = vpop.f32.mrf.mxu0
        %4418 = vmatprep.mubr.f32.mxu0 0.0
        %v4419 = vand.u32 %v4292, 4294901760
        %v4420 = vsub.f32 %v4292, %v4419
        %v4421 = vand.u32 %v4420, 4294901760
        %v4422 = vsub.f32 %v4420, %v4421
        %v4423 = vand.u32 %v4422, 4294901760
        %4424 = vmatmul.mubr.f32.gmra.mxu0 %v4423
        %v4425 = vpop.f32.mrf.mxu0
        %v4426 = vadd.f32 0.0, %v4425
        %v4427 = vpop.f32.mrf.mxu0
        %4428 = vmatprep.mubr.f32.mxu0 0.0
        %v4429 = vand.u32 %v4295, 4294901760
        %v4430 = vsub.f32 %v4295, %v4429
        %v4431 = vand.u32 %v4430, 4294901760
        %v4432 = vsub.f32 %v4430, %v4431
        %v4433 = vand.u32 %v4432, 4294901760
        %4434 = vmatmul.mubr.f32.gmra.mxu0 %v4433
        %v4435 = vpop.f32.mrf.mxu0
        %v4436 = vadd.f32 0.0, %v4435
        %v4437 = vpop.f32.mrf.mxu0
        %4438 = vmatprep.mubr.f32.mxu0 0.0
        %v4439 = vand.u32 %v4298, 4294901760
        %v4440 = vsub.f32 %v4298, %v4439
        %v4441 = vand.u32 %v4440, 4294901760
        %v4442 = vsub.f32 %v4440, %v4441
        %v4443 = vand.u32 %v4442, 4294901760
        %4444 = vmatmul.mubr.f32.gmra.mxu0 %v4443
        %v4445 = vpop.f32.mrf.mxu0
        %v4446 = vadd.f32 0.0, %v4445
        %v4447 = vpop.f32.mrf.mxu0
        %4448 = vdwg.mxu0
        %4449 = vmatprep.subr.mxu0 0.0
        %4450 = vmatpush1.msra.mxu0 0.0
        %4451 = vmatprep.subr.mxu0 0.0
        %4452 = vmatpush1.msra.mxu0 0.0
        %4453 = vmatprep.subr.mxu0 0.0
        %4454 = vmatpush1.msra.mxu0 0.0
        %4455 = vmatprep.subr.mxu0 0.0
        %4456 = vmatpush1.msra.mxu0 0.0
        %4457 = vmatprep.subr.mxu0 0.0
        %4458 = vmatpush1.msra.mxu0 0.0
        %4459 = vmatprep.subr.mxu0 0.0
        %4460 = vmatpush1.msra.mxu0 0.0
        %4461 = vmatprep.subr.mxu0 0.0
        %4462 = vmatpush1.msra.mxu0 0.0
        %4463 = vmatprep.subr.mxu0 0.0
        %4464 = vmatpush1.msra.mxu0 0.0
        %4465 = vmatprep.subr.mxu0 0.0
        %4466 = vmatpush1.msra.mxu0 0.0
        %4467 = vmatprep.subr.mxu0 0.0
        %4468 = vmatpush1.msra.mxu0 0.0
        %4469 = vmatprep.subr.mxu0 0.0
        %4470 = vmatpush1.msra.mxu0 0.0
        %4471 = vmatprep.subr.mxu0 0.0
        %4472 = vmatpush1.msra.mxu0 0.0
        %4473 = vmatprep.subr.mxu0 0.0
        %4474 = vmatpush1.msra.mxu0 0.0
        %4475 = vmatprep.subr.mxu0 0.0
        %4476 = vmatpush1.msra.mxu0 0.0
        %4477 = vmatprep.subr.mxu0 0.0
        %4478 = vmatpush1.msra.mxu0 0.0
        %4479 = vmatprep.subr.mxu0 0.0
        %v4480 = vand.u32 %v4301, 4294901760
        %v4481 = vsub.f32 %v4301, %v4480
        %v4482 = vand.u32 %v4481, 4294901760
        %v4483 = vsub.f32 %v4481, %v4482
        %v4484 = vand.u32 %v4483, 4294901760
        %4485 = vmatpush1.msra.mxu0 %v4484
        %4486 = vmatprep.subr.mxu0 0.0
        %4487 = vmatpush2.msra.mxu0 0.0
        %4488 = vmatprep.subr.mxu0 0.0
        %4489 = vmatpush2.msra.mxu0 0.0
        %4490 = vmatprep.subr.mxu0 0.0
        %4491 = vmatpush2.msra.mxu0 0.0
        %4492 = vmatprep.subr.mxu0 0.0
        %4493 = vmatpush2.msra.mxu0 0.0
        %4494 = vmatprep.subr.mxu0 0.0
        %4495 = vmatpush2.msra.mxu0 0.0
        %4496 = vmatprep.subr.mxu0 0.0
        %4497 = vmatpush2.msra.mxu0 0.0
        %4498 = vmatprep.subr.mxu0 0.0
        %4499 = vmatpush2.msra.mxu0 0.0
        %4500 = vmatprep.subr.mxu0 0.0
        %4501 = vmatpush2.msra.mxu0 0.0
        %4502 = vmatprep.subr.mxu0 0.0
        %4503 = vmatpush2.msra.mxu0 0.0
        %4504 = vmatprep.subr.mxu0 0.0
        %4505 = vmatpush2.msra.mxu0 0.0
        %4506 = vmatprep.subr.mxu0 0.0
        %4507 = vmatpush2.msra.mxu0 0.0
        %4508 = vmatprep.subr.mxu0 0.0
        %4509 = vmatpush2.msra.mxu0 0.0
        %4510 = vmatprep.subr.mxu0 0.0
        %4511 = vmatpush2.msra.mxu0 0.0
        %4512 = vmatprep.subr.mxu0 0.0
        %4513 = vmatpush2.msra.mxu0 0.0
        %4514 = vmatprep.subr.mxu0 0.0
        %4515 = vmatpush2.msra.mxu0 0.0
        %4516 = vmatprep.subr.mxu0 0.0
        %4517 = vmatpush2.msra.mxu0 0.0
        %4518 = vmatprep.mubr.f32.mxu0 0.0
        %v4519 = vand.u32 %v4277, 4294901760
        %4520 = vmatmul.mubr.f32.gmra.mxu0 %v4519
        %v4521 = vpop.f32.mrf.mxu0
        %v4522 = vadd.f32 %v4376, %v4521
        %v4523 = vpop.f32.mrf.mxu0
        %4524 = vmatprep.mubr.f32.mxu0 0.0
        %v4525 = vand.u32 %v4280, 4294901760
        %4526 = vmatmul.mubr.f32.gmra.mxu0 %v4525
        %v4527 = vpop.f32.mrf.mxu0
        %v4528 = vadd.f32 %v4386, %v4527
        %v4529 = vpop.f32.mrf.mxu0
        %4530 = vmatprep.mubr.f32.mxu0 0.0
        %v4531 = vand.u32 %v4283, 4294901760
        %4532 = vmatmul.mubr.f32.gmra.mxu0 %v4531
        %v4533 = vpop.f32.mrf.mxu0
        %v4534 = vadd.f32 %v4396, %v4533
        %v4535 = vpop.f32.mrf.mxu0
        %4536 = vmatprep.mubr.f32.mxu0 0.0
        %v4537 = vand.u32 %v4286, 4294901760
        %4538 = vmatmul.mubr.f32.gmra.mxu0 %v4537
        %v4539 = vpop.f32.mrf.mxu0
        %v4540 = vadd.f32 %v4406, %v4539
        %v4541 = vpop.f32.mrf.mxu0
        %4542 = vmatprep.mubr.f32.mxu0 0.0
        %v4543 = vand.u32 %v4289, 4294901760
        %4544 = vmatmul.mubr.f32.gmra.mxu0 %v4543
        %v4545 = vpop.f32.mrf.mxu0
        %v4546 = vadd.f32 %v4416, %v4545
        %v4547 = vpop.f32.mrf.mxu0
        %4548 = vmatprep.mubr.f32.mxu0 0.0
        %v4549 = vand.u32 %v4292, 4294901760
        %4550 = vmatmul.mubr.f32.gmra.mxu0 %v4549
        %v4551 = vpop.f32.mrf.mxu0
        %v4552 = vadd.f32 %v4426, %v4551
        %v4553 = vpop.f32.mrf.mxu0
        %4554 = vmatprep.mubr.f32.mxu0 0.0
        %v4555 = vand.u32 %v4295, 4294901760
        %4556 = vmatmul.mubr.f32.gmra.mxu0 %v4555
        %v4557 = vpop.f32.mrf.mxu0
        %v4558 = vadd.f32 %v4436, %v4557
        %v4559 = vpop.f32.mrf.mxu0
        %4560 = vmatprep.mubr.f32.mxu0 0.0
        %v4561 = vand.u32 %v4298, 4294901760
        %4562 = vmatmul.mubr.f32.gmra.mxu0 %v4561
        %v4563 = vpop.f32.mrf.mxu0
        %v4564 = vadd.f32 %v4446, %v4563
        %v4565 = vpop.f32.mrf.mxu0
        %4566 = vdwg.mxu0
        %4567 = vmatprep.subr.mxu0 0.0
        %4568 = vmatpush1.msra.mxu0 0.0
        %4569 = vmatprep.subr.mxu0 0.0
        %4570 = vmatpush1.msra.mxu0 0.0
        %4571 = vmatprep.subr.mxu0 0.0
        %4572 = vmatpush1.msra.mxu0 0.0
        %4573 = vmatprep.subr.mxu0 0.0
        %4574 = vmatpush1.msra.mxu0 0.0
        %4575 = vmatprep.subr.mxu0 0.0
        %4576 = vmatpush1.msra.mxu0 0.0
        %4577 = vmatprep.subr.mxu0 0.0
        %4578 = vmatpush1.msra.mxu0 0.0
        %4579 = vmatprep.subr.mxu0 0.0
        %4580 = vmatpush1.msra.mxu0 0.0
        %4581 = vmatprep.subr.mxu0 0.0
        %4582 = vmatpush1.msra.mxu0 0.0
        %4583 = vmatprep.subr.mxu0 0.0
        %4584 = vmatpush1.msra.mxu0 0.0
        %4585 = vmatprep.subr.mxu0 0.0
        %4586 = vmatpush1.msra.mxu0 0.0
        %4587 = vmatprep.subr.mxu0 0.0
        %4588 = vmatpush1.msra.mxu0 0.0
        %4589 = vmatprep.subr.mxu0 0.0
        %4590 = vmatpush1.msra.mxu0 0.0
        %4591 = vmatprep.subr.mxu0 0.0
        %4592 = vmatpush1.msra.mxu0 0.0
        %4593 = vmatprep.subr.mxu0 0.0
        %4594 = vmatpush1.msra.mxu0 0.0
        %4595 = vmatprep.subr.mxu0 0.0
        %4596 = vmatpush1.msra.mxu0 0.0
        %4597 = vmatprep.subr.mxu0 0.0
        %v4598 = vand.u32 %v4301, 4294901760
        %v4599 = vsub.f32 %v4301, %v4598
        %4600 = vmatpush1.msra.mxu0 %v4599
        %4601 = vmatprep.subr.mxu0 0.0
        %4602 = vmatpush2.msra.mxu0 0.0
        %4603 = vmatprep.subr.mxu0 0.0
        %4604 = vmatpush2.msra.mxu0 0.0
        %4605 = vmatprep.subr.mxu0 0.0
        %4606 = vmatpush2.msra.mxu0 0.0
        %4607 = vmatprep.subr.mxu0 0.0
        %4608 = vmatpush2.msra.mxu0 0.0
        %4609 = vmatprep.subr.mxu0 0.0
        %4610 = vmatpush2.msra.mxu0 0.0
        %4611 = vmatprep.subr.mxu0 0.0
        %4612 = vmatpush2.msra.mxu0 0.0
        %4613 = vmatprep.subr.mxu0 0.0
        %4614 = vmatpush2.msra.mxu0 0.0
        %4615 = vmatprep.subr.mxu0 0.0
        %4616 = vmatpush2.msra.mxu0 0.0
        %4617 = vmatprep.subr.mxu0 0.0
        %4618 = vmatpush2.msra.mxu0 0.0
        %4619 = vmatprep.subr.mxu0 0.0
        %4620 = vmatpush2.msra.mxu0 0.0
        %4621 = vmatprep.subr.mxu0 0.0
        %4622 = vmatpush2.msra.mxu0 0.0
        %4623 = vmatprep.subr.mxu0 0.0
        %4624 = vmatpush2.msra.mxu0 0.0
        %4625 = vmatprep.subr.mxu0 0.0
        %4626 = vmatpush2.msra.mxu0 0.0
        %4627 = vmatprep.subr.mxu0 0.0
        %4628 = vmatpush2.msra.mxu0 0.0
        %4629 = vmatprep.subr.mxu0 0.0
        %4630 = vmatpush2.msra.mxu0 0.0
        %4631 = vmatprep.subr.mxu0 0.0
        %4632 = vmatpush2.msra.mxu0 0.0
        %4633 = vmatprep.mubr.f32.mxu0 0.0
        %v4634 = vand.u32 %v4277, 4294901760
        %v4635 = vsub.f32 %v4277, %v4634
        %4636 = vmatmul.mubr.f32.gmra.mxu0 %v4635
        %v4637 = vpop.f32.mrf.mxu0
        %v4638 = vadd.f32 %v4522, %v4637
        %v4639 = vpop.f32.mrf.mxu0
        %4640 = vmatprep.mubr.f32.mxu0 0.0
        %v4641 = vand.u32 %v4280, 4294901760
        %v4642 = vsub.f32 %v4280, %v4641
        %4643 = vmatmul.mubr.f32.gmra.mxu0 %v4642
        %v4644 = vpop.f32.mrf.mxu0
        %v4645 = vadd.f32 %v4528, %v4644
        %v4646 = vpop.f32.mrf.mxu0
        %4647 = vmatprep.mubr.f32.mxu0 0.0
        %v4648 = vand.u32 %v4283, 4294901760
        %v4649 = vsub.f32 %v4283, %v4648
        %4650 = vmatmul.mubr.f32.gmra.mxu0 %v4649
        %v4651 = vpop.f32.mrf.mxu0
        %v4652 = vadd.f32 %v4534, %v4651
        %v4653 = vpop.f32.mrf.mxu0
        %4654 = vmatprep.mubr.f32.mxu0 0.0
        %v4655 = vand.u32 %v4286, 4294901760
        %v4656 = vsub.f32 %v4286, %v4655
        %4657 = vmatmul.mubr.f32.gmra.mxu0 %v4656
        %v4658 = vpop.f32.mrf.mxu0
        %v4659 = vadd.f32 %v4540, %v4658
        %v4660 = vpop.f32.mrf.mxu0
        %4661 = vmatprep.mubr.f32.mxu0 0.0
        %v4662 = vand.u32 %v4289, 4294901760
        %v4663 = vsub.f32 %v4289, %v4662
        %4664 = vmatmul.mubr.f32.gmra.mxu0 %v4663
        %v4665 = vpop.f32.mrf.mxu0
        %v4666 = vadd.f32 %v4546, %v4665
        %v4667 = vpop.f32.mrf.mxu0
        %4668 = vmatprep.mubr.f32.mxu0 0.0
        %v4669 = vand.u32 %v4292, 4294901760
        %v4670 = vsub.f32 %v4292, %v4669
        %4671 = vmatmul.mubr.f32.gmra.mxu0 %v4670
        %v4672 = vpop.f32.mrf.mxu0
        %v4673 = vadd.f32 %v4552, %v4672
        %v4674 = vpop.f32.mrf.mxu0
        %4675 = vmatprep.mubr.f32.mxu0 0.0
        %v4676 = vand.u32 %v4295, 4294901760
        %v4677 = vsub.f32 %v4295, %v4676
        %4678 = vmatmul.mubr.f32.gmra.mxu0 %v4677
        %v4679 = vpop.f32.mrf.mxu0
        %v4680 = vadd.f32 %v4558, %v4679
        %v4681 = vpop.f32.mrf.mxu0
        %4682 = vmatprep.mubr.f32.mxu0 0.0
        %v4683 = vand.u32 %v4298, 4294901760
        %v4684 = vsub.f32 %v4298, %v4683
        %4685 = vmatmul.mubr.f32.gmra.mxu0 %v4684
        %v4686 = vpop.f32.mrf.mxu0
        %v4687 = vadd.f32 %v4564, %v4686
        %v4688 = vpop.f32.mrf.mxu0
        %4689 = vdwg.mxu0
        %4690 = vmatprep.subr.mxu0 0.0
        %4691 = vmatpush1.msra.mxu0 0.0
        %4692 = vmatprep.subr.mxu0 0.0
        %4693 = vmatpush1.msra.mxu0 0.0
        %4694 = vmatprep.subr.mxu0 0.0
        %4695 = vmatpush1.msra.mxu0 0.0
        %4696 = vmatprep.subr.mxu0 0.0
        %4697 = vmatpush1.msra.mxu0 0.0
        %4698 = vmatprep.subr.mxu0 0.0
        %4699 = vmatpush1.msra.mxu0 0.0
        %4700 = vmatprep.subr.mxu0 0.0
        %4701 = vmatpush1.msra.mxu0 0.0
        %4702 = vmatprep.subr.mxu0 0.0
        %4703 = vmatpush1.msra.mxu0 0.0
        %4704 = vmatprep.subr.mxu0 0.0
        %4705 = vmatpush1.msra.mxu0 0.0
        %4706 = vmatprep.subr.mxu0 0.0
        %4707 = vmatpush1.msra.mxu0 0.0
        %4708 = vmatprep.subr.mxu0 0.0
        %4709 = vmatpush1.msra.mxu0 0.0
        %4710 = vmatprep.subr.mxu0 0.0
        %4711 = vmatpush1.msra.mxu0 0.0
        %4712 = vmatprep.subr.mxu0 0.0
        %4713 = vmatpush1.msra.mxu0 0.0
        %4714 = vmatprep.subr.mxu0 0.0
        %4715 = vmatpush1.msra.mxu0 0.0
        %4716 = vmatprep.subr.mxu0 0.0
        %4717 = vmatpush1.msra.mxu0 0.0
        %4718 = vmatprep.subr.mxu0 0.0
        %4719 = vmatpush1.msra.mxu0 0.0
        %4720 = vmatprep.subr.mxu0 0.0
        %v4721 = vand.u32 %v4301, 4294901760
        %4722 = vmatpush1.msra.mxu0 %v4721
        %4723 = vmatprep.subr.mxu0 0.0
        %4724 = vmatpush2.msra.mxu0 0.0
        %4725 = vmatprep.subr.mxu0 0.0
        %4726 = vmatpush2.msra.mxu0 0.0
        %4727 = vmatprep.subr.mxu0 0.0
        %4728 = vmatpush2.msra.mxu0 0.0
        %4729 = vmatprep.subr.mxu0 0.0
        %4730 = vmatpush2.msra.mxu0 0.0
        %4731 = vmatprep.subr.mxu0 0.0
        %4732 = vmatpush2.msra.mxu0 0.0
        %4733 = vmatprep.subr.mxu0 0.0
        %4734 = vmatpush2.msra.mxu0 0.0
        %4735 = vmatprep.subr.mxu0 0.0
        %4736 = vmatpush2.msra.mxu0 0.0
        %4737 = vmatprep.subr.mxu0 0.0
        %4738 = vmatpush2.msra.mxu0 0.0
        %4739 = vmatprep.subr.mxu0 0.0
        %4740 = vmatpush2.msra.mxu0 0.0
        %4741 = vmatprep.subr.mxu0 0.0
        %4742 = vmatpush2.msra.mxu0 0.0
        %4743 = vmatprep.subr.mxu0 0.0
        %4744 = vmatpush2.msra.mxu0 0.0
        %4745 = vmatprep.subr.mxu0 0.0
        %4746 = vmatpush2.msra.mxu0 0.0
        %4747 = vmatprep.subr.mxu0 0.0
        %4748 = vmatpush2.msra.mxu0 0.0
        %4749 = vmatprep.subr.mxu0 0.0
        %4750 = vmatpush2.msra.mxu0 0.0
        %4751 = vmatprep.subr.mxu0 0.0
        %4752 = vmatpush2.msra.mxu0 0.0
        %4753 = vmatprep.subr.mxu0 0.0
        %4754 = vmatpush2.msra.mxu0 0.0
        %4755 = vmatprep.mubr.f32.mxu0 0.0
        %v4756 = vand.u32 %v4277, 4294901760
        %v4757 = vsub.f32 %v4277, %v4756
        %v4758 = vand.u32 %v4757, 4294901760
        %4759 = vmatmul.mubr.f32.gmra.mxu0 %v4758
        %v4760 = vpop.f32.mrf.mxu0
        %v4761 = vadd.f32 %v4638, %v4760
        %v4762 = vpop.f32.mrf.mxu0
        %4763 = vmatprep.mubr.f32.mxu0 0.0
        %v4764 = vand.u32 %v4280, 4294901760
        %v4765 = vsub.f32 %v4280, %v4764
        %v4766 = vand.u32 %v4765, 4294901760
        %4767 = vmatmul.mubr.f32.gmra.mxu0 %v4766
        %v4768 = vpop.f32.mrf.mxu0
        %v4769 = vadd.f32 %v4645, %v4768
        %v4770 = vpop.f32.mrf.mxu0
        %4771 = vmatprep.mubr.f32.mxu0 0.0
        %v4772 = vand.u32 %v4283, 4294901760
        %v4773 = vsub.f32 %v4283, %v4772
        %v4774 = vand.u32 %v4773, 4294901760
        %4775 = vmatmul.mubr.f32.gmra.mxu0 %v4774
        %v4776 = vpop.f32.mrf.mxu0
        %v4777 = vadd.f32 %v4652, %v4776
        %v4778 = vpop.f32.mrf.mxu0
        %4779 = vmatprep.mubr.f32.mxu0 0.0
        %v4780 = vand.u32 %v4286, 4294901760
        %v4781 = vsub.f32 %v4286, %v4780
        %v4782 = vand.u32 %v4781, 4294901760
        %4783 = vmatmul.mubr.f32.gmra.mxu0 %v4782
        %v4784 = vpop.f32.mrf.mxu0
        %v4785 = vadd.f32 %v4659, %v4784
        %v4786 = vpop.f32.mrf.mxu0
        %4787 = vmatprep.mubr.f32.mxu0 0.0
        %v4788 = vand.u32 %v4289, 4294901760
        %v4789 = vsub.f32 %v4289, %v4788
        %v4790 = vand.u32 %v4789, 4294901760
        %4791 = vmatmul.mubr.f32.gmra.mxu0 %v4790
        %v4792 = vpop.f32.mrf.mxu0
        %v4793 = vadd.f32 %v4666, %v4792
        %v4794 = vpop.f32.mrf.mxu0
        %4795 = vmatprep.mubr.f32.mxu0 0.0
        %v4796 = vand.u32 %v4292, 4294901760
        %v4797 = vsub.f32 %v4292, %v4796
        %v4798 = vand.u32 %v4797, 4294901760
        %4799 = vmatmul.mubr.f32.gmra.mxu0 %v4798
        %v4800 = vpop.f32.mrf.mxu0
        %v4801 = vadd.f32 %v4673, %v4800
        %v4802 = vpop.f32.mrf.mxu0
        %4803 = vmatprep.mubr.f32.mxu0 0.0
        %v4804 = vand.u32 %v4295, 4294901760
        %v4805 = vsub.f32 %v4295, %v4804
        %v4806 = vand.u32 %v4805, 4294901760
        %4807 = vmatmul.mubr.f32.gmra.mxu0 %v4806
        %v4808 = vpop.f32.mrf.mxu0
        %v4809 = vadd.f32 %v4680, %v4808
        %v4810 = vpop.f32.mrf.mxu0
        %4811 = vmatprep.mubr.f32.mxu0 0.0
        %v4812 = vand.u32 %v4298, 4294901760
        %v4813 = vsub.f32 %v4298, %v4812
        %v4814 = vand.u32 %v4813, 4294901760
        %4815 = vmatmul.mubr.f32.gmra.mxu0 %v4814
        %v4816 = vpop.f32.mrf.mxu0
        %v4817 = vadd.f32 %v4687, %v4816
        %v4818 = vpop.f32.mrf.mxu0
        %4819 = vdwg.mxu0
        %4820 = vmatprep.subr.mxu0 0.0
        %4821 = vmatpush1.msra.mxu0 0.0
        %4822 = vmatprep.subr.mxu0 0.0
        %4823 = vmatpush1.msra.mxu0 0.0
        %4824 = vmatprep.subr.mxu0 0.0
        %4825 = vmatpush1.msra.mxu0 0.0
        %4826 = vmatprep.subr.mxu0 0.0
        %4827 = vmatpush1.msra.mxu0 0.0
        %4828 = vmatprep.subr.mxu0 0.0
        %4829 = vmatpush1.msra.mxu0 0.0
        %4830 = vmatprep.subr.mxu0 0.0
        %4831 = vmatpush1.msra.mxu0 0.0
        %4832 = vmatprep.subr.mxu0 0.0
        %4833 = vmatpush1.msra.mxu0 0.0
        %4834 = vmatprep.subr.mxu0 0.0
        %4835 = vmatpush1.msra.mxu0 0.0
        %4836 = vmatprep.subr.mxu0 0.0
        %4837 = vmatpush1.msra.mxu0 0.0
        %4838 = vmatprep.subr.mxu0 0.0
        %4839 = vmatpush1.msra.mxu0 0.0
        %4840 = vmatprep.subr.mxu0 0.0
        %4841 = vmatpush1.msra.mxu0 0.0
        %4842 = vmatprep.subr.mxu0 0.0
        %4843 = vmatpush1.msra.mxu0 0.0
        %4844 = vmatprep.subr.mxu0 0.0
        %4845 = vmatpush1.msra.mxu0 0.0
        %4846 = vmatprep.subr.mxu0 0.0
        %4847 = vmatpush1.msra.mxu0 0.0
        %4848 = vmatprep.subr.mxu0 0.0
        %4849 = vmatpush1.msra.mxu0 0.0
        %4850 = vmatprep.subr.mxu0 0.0
        %v4851 = vand.u32 %v4301, 4294901760
        %v4852 = vsub.f32 %v4301, %v4851
        %v4853 = vand.u32 %v4852, 4294901760
        %4854 = vmatpush1.msra.mxu0 %v4853
        %4855 = vmatprep.subr.mxu0 0.0
        %4856 = vmatpush2.msra.mxu0 0.0
        %4857 = vmatprep.subr.mxu0 0.0
        %4858 = vmatpush2.msra.mxu0 0.0
        %4859 = vmatprep.subr.mxu0 0.0
        %4860 = vmatpush2.msra.mxu0 0.0
        %4861 = vmatprep.subr.mxu0 0.0
        %4862 = vmatpush2.msra.mxu0 0.0
        %4863 = vmatprep.subr.mxu0 0.0
        %4864 = vmatpush2.msra.mxu0 0.0
        %4865 = vmatprep.subr.mxu0 0.0
        %4866 = vmatpush2.msra.mxu0 0.0
        %4867 = vmatprep.subr.mxu0 0.0
        %4868 = vmatpush2.msra.mxu0 0.0
        %4869 = vmatprep.subr.mxu0 0.0
        %4870 = vmatpush2.msra.mxu0 0.0
        %4871 = vmatprep.subr.mxu0 0.0
        %4872 = vmatpush2.msra.mxu0 0.0
        %4873 = vmatprep.subr.mxu0 0.0
        %4874 = vmatpush2.msra.mxu0 0.0
        %4875 = vmatprep.subr.mxu0 0.0
        %4876 = vmatpush2.msra.mxu0 0.0
        %4877 = vmatprep.subr.mxu0 0.0
        %4878 = vmatpush2.msra.mxu0 0.0
        %4879 = vmatprep.subr.mxu0 0.0
        %4880 = vmatpush2.msra.mxu0 0.0
        %4881 = vmatprep.subr.mxu0 0.0
        %4882 = vmatpush2.msra.mxu0 0.0
        %4883 = vmatprep.subr.mxu0 0.0
        %4884 = vmatpush2.msra.mxu0 0.0
        %4885 = vmatprep.subr.mxu0 0.0
        %4886 = vmatpush2.msra.mxu0 0.0
        %4887 = vmatprep.mubr.f32.mxu0 0.0
        %v4888 = vand.u32 %v4277, 4294901760
        %4889 = vmatmul.mubr.f32.gmra.mxu0 %v4888
        %v4890 = vpop.f32.mrf.mxu0
        %v4891 = vadd.f32 %v4761, %v4890
        %v4892 = vpop.f32.mrf.mxu0
        %4893 = vmatprep.mubr.f32.mxu0 0.0
        %v4894 = vand.u32 %v4280, 4294901760
        %4895 = vmatmul.mubr.f32.gmra.mxu0 %v4894
        %v4896 = vpop.f32.mrf.mxu0
        %v4897 = vadd.f32 %v4769, %v4896
        %v4898 = vpop.f32.mrf.mxu0
        %4899 = vmatprep.mubr.f32.mxu0 0.0
        %v4900 = vand.u32 %v4283, 4294901760
        %4901 = vmatmul.mubr.f32.gmra.mxu0 %v4900
        %v4902 = vpop.f32.mrf.mxu0
        %v4903 = vadd.f32 %v4777, %v4902
        %v4904 = vpop.f32.mrf.mxu0
        %4905 = vmatprep.mubr.f32.mxu0 0.0
        %v4906 = vand.u32 %v4286, 4294901760
        %4907 = vmatmul.mubr.f32.gmra.mxu0 %v4906
        %v4908 = vpop.f32.mrf.mxu0
        %v4909 = vadd.f32 %v4785, %v4908
        %v4910 = vpop.f32.mrf.mxu0
        %4911 = vmatprep.mubr.f32.mxu0 0.0
        %v4912 = vand.u32 %v4289, 4294901760
        %4913 = vmatmul.mubr.f32.gmra.mxu0 %v4912
        %v4914 = vpop.f32.mrf.mxu0
        %v4915 = vadd.f32 %v4793, %v4914
        %v4916 = vpop.f32.mrf.mxu0
        %4917 = vmatprep.mubr.f32.mxu0 0.0
        %v4918 = vand.u32 %v4292, 4294901760
        %4919 = vmatmul.mubr.f32.gmra.mxu0 %v4918
        %v4920 = vpop.f32.mrf.mxu0
        %v4921 = vadd.f32 %v4801, %v4920
        %v4922 = vpop.f32.mrf.mxu0
        %4923 = vmatprep.mubr.f32.mxu0 0.0
        %v4924 = vand.u32 %v4295, 4294901760
        %4925 = vmatmul.mubr.f32.gmra.mxu0 %v4924
        %v4926 = vpop.f32.mrf.mxu0
        %v4927 = vadd.f32 %v4809, %v4926
        %v4928 = vpop.f32.mrf.mxu0
        %4929 = vmatprep.mubr.f32.mxu0 0.0
        %v4930 = vand.u32 %v4298, 4294901760
        %4931 = vmatmul.mubr.f32.gmra.mxu0 %v4930
        %v4932 = vpop.f32.mrf.mxu0
        %v4933 = vadd.f32 %v4817, %v4932
        %v4934 = vpop.f32.mrf.mxu0
        %4935 = vdwg.mxu0
        %4936 = vmatprep.subr.mxu0 0.0
        %4937 = vmatpush1.msra.mxu0 0.0
        %4938 = vmatprep.subr.mxu0 0.0
        %4939 = vmatpush1.msra.mxu0 0.0
        %4940 = vmatprep.subr.mxu0 0.0
        %4941 = vmatpush1.msra.mxu0 0.0
        %4942 = vmatprep.subr.mxu0 0.0
        %4943 = vmatpush1.msra.mxu0 0.0
        %4944 = vmatprep.subr.mxu0 0.0
        %4945 = vmatpush1.msra.mxu0 0.0
        %4946 = vmatprep.subr.mxu0 0.0
        %4947 = vmatpush1.msra.mxu0 0.0
        %4948 = vmatprep.subr.mxu0 0.0
        %4949 = vmatpush1.msra.mxu0 0.0
        %4950 = vmatprep.subr.mxu0 0.0
        %4951 = vmatpush1.msra.mxu0 0.0
        %4952 = vmatprep.subr.mxu0 0.0
        %4953 = vmatpush1.msra.mxu0 0.0
        %4954 = vmatprep.subr.mxu0 0.0
        %4955 = vmatpush1.msra.mxu0 0.0
        %4956 = vmatprep.subr.mxu0 0.0
        %4957 = vmatpush1.msra.mxu0 0.0
        %4958 = vmatprep.subr.mxu0 0.0
        %4959 = vmatpush1.msra.mxu0 0.0
        %4960 = vmatprep.subr.mxu0 0.0
        %4961 = vmatpush1.msra.mxu0 0.0
        %4962 = vmatprep.subr.mxu0 0.0
        %4963 = vmatpush1.msra.mxu0 0.0
        %4964 = vmatprep.subr.mxu0 0.0
        %4965 = vmatpush1.msra.mxu0 0.0
        %4966 = vmatprep.subr.mxu0 0.0
        %v4967 = vand.u32 %v4301, 4294901760
        %4968 = vmatpush1.msra.mxu0 %v4967
        %4969 = vmatprep.subr.mxu0 0.0
        %4970 = vmatpush2.msra.mxu0 0.0
        %4971 = vmatprep.subr.mxu0 0.0
        %4972 = vmatpush2.msra.mxu0 0.0
        %4973 = vmatprep.subr.mxu0 0.0
        %4974 = vmatpush2.msra.mxu0 0.0
        %4975 = vmatprep.subr.mxu0 0.0
        %4976 = vmatpush2.msra.mxu0 0.0
        %4977 = vmatprep.subr.mxu0 0.0
        %4978 = vmatpush2.msra.mxu0 0.0
        %4979 = vmatprep.subr.mxu0 0.0
        %4980 = vmatpush2.msra.mxu0 0.0
        %4981 = vmatprep.subr.mxu0 0.0
        %4982 = vmatpush2.msra.mxu0 0.0
        %4983 = vmatprep.subr.mxu0 0.0
        %4984 = vmatpush2.msra.mxu0 0.0
        %4985 = vmatprep.subr.mxu0 0.0
        %4986 = vmatpush2.msra.mxu0 0.0
        %4987 = vmatprep.subr.mxu0 0.0
        %4988 = vmatpush2.msra.mxu0 0.0
        %4989 = vmatprep.subr.mxu0 0.0
        %4990 = vmatpush2.msra.mxu0 0.0
        %4991 = vmatprep.subr.mxu0 0.0
        %4992 = vmatpush2.msra.mxu0 0.0
        %4993 = vmatprep.subr.mxu0 0.0
        %4994 = vmatpush2.msra.mxu0 0.0
        %4995 = vmatprep.subr.mxu0 0.0
        %4996 = vmatpush2.msra.mxu0 0.0
        %4997 = vmatprep.subr.mxu0 0.0
        %4998 = vmatpush2.msra.mxu0 0.0
        %4999 = vmatprep.subr.mxu0 0.0
        %5000 = vmatpush2.msra.mxu0 0.0
        %5001 = vmatprep.mubr.f32.mxu0 0.0
        %v5002 = vand.u32 %v4277, 4294901760
        %5003 = vmatmul.mubr.f32.gmra.mxu0 %v5002
        %v5004 = vpop.f32.mrf.mxu0
        %v5005 = vadd.f32 %v4891, %v5004
        %v5006 = vpop.f32.mrf.mxu0
        %5007 = vmatprep.mubr.f32.mxu0 0.0
        %v5008 = vand.u32 %v4280, 4294901760
        %5009 = vmatmul.mubr.f32.gmra.mxu0 %v5008
        %v5010 = vpop.f32.mrf.mxu0
        %v5011 = vadd.f32 %v4897, %v5010
        %v5012 = vpop.f32.mrf.mxu0
        %5013 = vmatprep.mubr.f32.mxu0 0.0
        %v5014 = vand.u32 %v4283, 4294901760
        %5015 = vmatmul.mubr.f32.gmra.mxu0 %v5014
        %v5016 = vpop.f32.mrf.mxu0
        %v5017 = vadd.f32 %v4903, %v5016
        %v5018 = vpop.f32.mrf.mxu0
        %5019 = vmatprep.mubr.f32.mxu0 0.0
        %v5020 = vand.u32 %v4286, 4294901760
        %5021 = vmatmul.mubr.f32.gmra.mxu0 %v5020
        %v5022 = vpop.f32.mrf.mxu0
        %v5023 = vadd.f32 %v4909, %v5022
        %v5024 = vpop.f32.mrf.mxu0
        %5025 = vmatprep.mubr.f32.mxu0 0.0
        %v5026 = vand.u32 %v4289, 4294901760
        %5027 = vmatmul.mubr.f32.gmra.mxu0 %v5026
        %v5028 = vpop.f32.mrf.mxu0
        %v5029 = vadd.f32 %v4915, %v5028
        %v5030 = vpop.f32.mrf.mxu0
        %5031 = vmatprep.mubr.f32.mxu0 0.0
        %v5032 = vand.u32 %v4292, 4294901760
        %5033 = vmatmul.mubr.f32.gmra.mxu0 %v5032
        %v5034 = vpop.f32.mrf.mxu0
        %v5035 = vadd.f32 %v4921, %v5034
        %v5036 = vpop.f32.mrf.mxu0
        %5037 = vmatprep.mubr.f32.mxu0 0.0
        %v5038 = vand.u32 %v4295, 4294901760
        %5039 = vmatmul.mubr.f32.gmra.mxu0 %v5038
        %v5040 = vpop.f32.mrf.mxu0
        %v5041 = vadd.f32 %v4927, %v5040
        %v5042 = vpop.f32.mrf.mxu0
        %5043 = vmatprep.mubr.f32.mxu0 0.0
        %v5044 = vand.u32 %v4298, 4294901760
        %5045 = vmatmul.mubr.f32.gmra.mxu0 %v5044
        %v5046 = vpop.f32.mrf.mxu0
        %v5047 = vadd.f32 %v4933, %v5046
        %v5048 = vpop.f32.mrf.mxu0
        %5049 = vdwg.mxu0
        %v5050 = vadd.f32 %v4258, %v5005
        %v5051 = vadd.f32 %v4259, %v5011
        %v5052 = vadd.f32 %v4260, %v5017
        %v5053 = vadd.f32 %v4261, %v5023
        %v5054 = vadd.f32 %v4262, %v5029
        %v5055 = vadd.f32 %v4263, %v5035
        %v5056 = vadd.f32 %v4264, %v5041
        %v5057 = vadd.f32 %v4265, %v5047
        %s5058 = scalar_lea.vmem %s305, 16
        %v5059 = vld [vmem:[%s5058] sm:$0xff]
        %v5060 = vld [vmem:[%s5058 + $0x10] sm:$0xff]
        %v5061 = vld [vmem:[%s5058 + $0x20] sm:$0xff]
        %v5062 = vld [vmem:[%s5058 + $0x30] sm:$0xff]
        %v5063 = vld [vmem:[%s5058 + $0x40] sm:$0xff]
        %v5064 = vld [vmem:[%s5058 + $0x50] sm:$0xff]
        %v5065 = vld [vmem:[%s5058 + $0x60] sm:$0xff]
        %v5066 = vld [vmem:[%s5058 + $0x70] sm:$0xff]
        %s5067 = scalar_lea.vmem %s4, 24
        %v5068 = vld [vmem:[%s5067] sm:$0xf]
        %v5070 = vsel %vm340, %v5059, 0
        %v5073 = vsel %vm340, %v5060, 0
        %v5076 = vsel %vm340, %v5061, 0
        %v5079 = vsel %vm340, %v5062, 0
        %v5082 = vsel %vm340, %v5063, 0
        %v5085 = vsel %vm340, %v5064, 0
        %v5088 = vsel %vm340, %v5065, 0
        %v5091 = vsel %vm340, %v5066, 0
        %v5094 = vsel %vm365, %v5068, 0
        %5096 = vmatprep.subr.mxu0 0.0
        %5097 = vmatpush1.msra.mxu0 0.0
        %5098 = vmatprep.subr.mxu0 0.0
        %5099 = vmatpush1.msra.mxu0 0.0
        %5100 = vmatprep.subr.mxu0 0.0
        %5101 = vmatpush1.msra.mxu0 0.0
        %5102 = vmatprep.subr.mxu0 0.0
        %5103 = vmatpush1.msra.mxu0 0.0
        %5104 = vmatprep.subr.mxu0 0.0
        %5105 = vmatpush1.msra.mxu0 0.0
        %5106 = vmatprep.subr.mxu0 0.0
        %5107 = vmatpush1.msra.mxu0 0.0
        %5108 = vmatprep.subr.mxu0 0.0
        %5109 = vmatpush1.msra.mxu0 0.0
        %5110 = vmatprep.subr.mxu0 0.0
        %5111 = vmatpush1.msra.mxu0 0.0
        %5112 = vmatprep.subr.mxu0 0.0
        %5113 = vmatpush1.msra.mxu0 0.0
        %5114 = vmatprep.subr.mxu0 0.0
        %5115 = vmatpush1.msra.mxu0 0.0
        %5116 = vmatprep.subr.mxu0 0.0
        %5117 = vmatpush1.msra.mxu0 0.0
        %5118 = vmatprep.subr.mxu0 0.0
        %5119 = vmatpush1.msra.mxu0 0.0
        %5120 = vmatprep.subr.mxu0 0.0
        %5121 = vmatpush1.msra.mxu0 0.0
        %5122 = vmatprep.subr.mxu0 0.0
        %5123 = vmatpush1.msra.mxu0 0.0
        %5124 = vmatprep.subr.mxu0 0.0
        %5125 = vmatpush1.msra.mxu0 0.0
        %5126 = vmatprep.subr.mxu0 0.0
        %v5127 = vand.u32 %v5094, 4294901760
        %5128 = vmatpush1.msra.mxu0 %v5127
        %5129 = vmatprep.subr.mxu0 0.0
        %5130 = vmatpush2.msra.mxu0 0.0
        %5131 = vmatprep.subr.mxu0 0.0
        %5132 = vmatpush2.msra.mxu0 0.0
        %5133 = vmatprep.subr.mxu0 0.0
        %5134 = vmatpush2.msra.mxu0 0.0
        %5135 = vmatprep.subr.mxu0 0.0
        %5136 = vmatpush2.msra.mxu0 0.0
        %5137 = vmatprep.subr.mxu0 0.0
        %5138 = vmatpush2.msra.mxu0 0.0
        %5139 = vmatprep.subr.mxu0 0.0
        %5140 = vmatpush2.msra.mxu0 0.0
        %5141 = vmatprep.subr.mxu0 0.0
        %5142 = vmatpush2.msra.mxu0 0.0
        %5143 = vmatprep.subr.mxu0 0.0
        %5144 = vmatpush2.msra.mxu0 0.0
        %5145 = vmatprep.subr.mxu0 0.0
        %5146 = vmatpush2.msra.mxu0 0.0
        %5147 = vmatprep.subr.mxu0 0.0
        %5148 = vmatpush2.msra.mxu0 0.0
        %5149 = vmatprep.subr.mxu0 0.0
        %5150 = vmatpush2.msra.mxu0 0.0
        %5151 = vmatprep.subr.mxu0 0.0
        %5152 = vmatpush2.msra.mxu0 0.0
        %5153 = vmatprep.subr.mxu0 0.0
        %5154 = vmatpush2.msra.mxu0 0.0
        %5155 = vmatprep.subr.mxu0 0.0
        %5156 = vmatpush2.msra.mxu0 0.0
        %5157 = vmatprep.subr.mxu0 0.0
        %5158 = vmatpush2.msra.mxu0 0.0
        %5159 = vmatprep.subr.mxu0 0.0
        %5160 = vmatpush2.msra.mxu0 0.0
        %5161 = vmatprep.mubr.f32.mxu0 0.0
        %v5162 = vand.u32 %v5070, 4294901760
        %v5163 = vsub.f32 %v5070, %v5162
        %v5164 = vand.u32 %v5163, 4294901760
        %v5165 = vsub.f32 %v5163, %v5164
        %v5166 = vand.u32 %v5165, 4294901760
        %5167 = vmatmul.mubr.f32.gmra.mxu0 %v5166
        %v5168 = vpop.f32.mrf.mxu0
        %v5169 = vadd.f32 0.0, %v5168
        %v5170 = vpop.f32.mrf.mxu0
        %5171 = vmatprep.mubr.f32.mxu0 0.0
        %v5172 = vand.u32 %v5073, 4294901760
        %v5173 = vsub.f32 %v5073, %v5172
        %v5174 = vand.u32 %v5173, 4294901760
        %v5175 = vsub.f32 %v5173, %v5174
        %v5176 = vand.u32 %v5175, 4294901760
        %5177 = vmatmul.mubr.f32.gmra.mxu0 %v5176
        %v5178 = vpop.f32.mrf.mxu0
        %v5179 = vadd.f32 0.0, %v5178
        %v5180 = vpop.f32.mrf.mxu0
        %5181 = vmatprep.mubr.f32.mxu0 0.0
        %v5182 = vand.u32 %v5076, 4294901760
        %v5183 = vsub.f32 %v5076, %v5182
        %v5184 = vand.u32 %v5183, 4294901760
        %v5185 = vsub.f32 %v5183, %v5184
        %v5186 = vand.u32 %v5185, 4294901760
        %5187 = vmatmul.mubr.f32.gmra.mxu0 %v5186
        %v5188 = vpop.f32.mrf.mxu0
        %v5189 = vadd.f32 0.0, %v5188
        %v5190 = vpop.f32.mrf.mxu0
        %5191 = vmatprep.mubr.f32.mxu0 0.0
        %v5192 = vand.u32 %v5079, 4294901760
        %v5193 = vsub.f32 %v5079, %v5192
        %v5194 = vand.u32 %v5193, 4294901760
        %v5195 = vsub.f32 %v5193, %v5194
        %v5196 = vand.u32 %v5195, 4294901760
        %5197 = vmatmul.mubr.f32.gmra.mxu0 %v5196
        %v5198 = vpop.f32.mrf.mxu0
        %v5199 = vadd.f32 0.0, %v5198
        %v5200 = vpop.f32.mrf.mxu0
        %5201 = vmatprep.mubr.f32.mxu0 0.0
        %v5202 = vand.u32 %v5082, 4294901760
        %v5203 = vsub.f32 %v5082, %v5202
        %v5204 = vand.u32 %v5203, 4294901760
        %v5205 = vsub.f32 %v5203, %v5204
        %v5206 = vand.u32 %v5205, 4294901760
        %5207 = vmatmul.mubr.f32.gmra.mxu0 %v5206
        %v5208 = vpop.f32.mrf.mxu0
        %v5209 = vadd.f32 0.0, %v5208
        %v5210 = vpop.f32.mrf.mxu0
        %5211 = vmatprep.mubr.f32.mxu0 0.0
        %v5212 = vand.u32 %v5085, 4294901760
        %v5213 = vsub.f32 %v5085, %v5212
        %v5214 = vand.u32 %v5213, 4294901760
        %v5215 = vsub.f32 %v5213, %v5214
        %v5216 = vand.u32 %v5215, 4294901760
        %5217 = vmatmul.mubr.f32.gmra.mxu0 %v5216
        %v5218 = vpop.f32.mrf.mxu0
        %v5219 = vadd.f32 0.0, %v5218
        %v5220 = vpop.f32.mrf.mxu0
        %5221 = vmatprep.mubr.f32.mxu0 0.0
        %v5222 = vand.u32 %v5088, 4294901760
        %v5223 = vsub.f32 %v5088, %v5222
        %v5224 = vand.u32 %v5223, 4294901760
        %v5225 = vsub.f32 %v5223, %v5224
        %v5226 = vand.u32 %v5225, 4294901760
        %5227 = vmatmul.mubr.f32.gmra.mxu0 %v5226
        %v5228 = vpop.f32.mrf.mxu0
        %v5229 = vadd.f32 0.0, %v5228
        %v5230 = vpop.f32.mrf.mxu0
        %5231 = vmatprep.mubr.f32.mxu0 0.0
        %v5232 = vand.u32 %v5091, 4294901760
        %v5233 = vsub.f32 %v5091, %v5232
        %v5234 = vand.u32 %v5233, 4294901760
        %v5235 = vsub.f32 %v5233, %v5234
        %v5236 = vand.u32 %v5235, 4294901760
        %5237 = vmatmul.mubr.f32.gmra.mxu0 %v5236
        %v5238 = vpop.f32.mrf.mxu0
        %v5239 = vadd.f32 0.0, %v5238
        %v5240 = vpop.f32.mrf.mxu0
        %5241 = vdwg.mxu0
        %5242 = vmatprep.subr.mxu0 0.0
        %5243 = vmatpush1.msra.mxu0 0.0
        %5244 = vmatprep.subr.mxu0 0.0
        %5245 = vmatpush1.msra.mxu0 0.0
        %5246 = vmatprep.subr.mxu0 0.0
        %5247 = vmatpush1.msra.mxu0 0.0
        %5248 = vmatprep.subr.mxu0 0.0
        %5249 = vmatpush1.msra.mxu0 0.0
        %5250 = vmatprep.subr.mxu0 0.0
        %5251 = vmatpush1.msra.mxu0 0.0
        %5252 = vmatprep.subr.mxu0 0.0
        %5253 = vmatpush1.msra.mxu0 0.0
        %5254 = vmatprep.subr.mxu0 0.0
        %5255 = vmatpush1.msra.mxu0 0.0
        %5256 = vmatprep.subr.mxu0 0.0
        %5257 = vmatpush1.msra.mxu0 0.0
        %5258 = vmatprep.subr.mxu0 0.0
        %5259 = vmatpush1.msra.mxu0 0.0
        %5260 = vmatprep.subr.mxu0 0.0
        %5261 = vmatpush1.msra.mxu0 0.0
        %5262 = vmatprep.subr.mxu0 0.0
        %5263 = vmatpush1.msra.mxu0 0.0
        %5264 = vmatprep.subr.mxu0 0.0
        %5265 = vmatpush1.msra.mxu0 0.0
        %5266 = vmatprep.subr.mxu0 0.0
        %5267 = vmatpush1.msra.mxu0 0.0
        %5268 = vmatprep.subr.mxu0 0.0
        %5269 = vmatpush1.msra.mxu0 0.0
        %5270 = vmatprep.subr.mxu0 0.0
        %5271 = vmatpush1.msra.mxu0 0.0
        %5272 = vmatprep.subr.mxu0 0.0
        %v5273 = vand.u32 %v5094, 4294901760
        %v5274 = vsub.f32 %v5094, %v5273
        %v5275 = vand.u32 %v5274, 4294901760
        %v5276 = vsub.f32 %v5274, %v5275
        %v5277 = vand.u32 %v5276, 4294901760
        %5278 = vmatpush1.msra.mxu0 %v5277
        %5279 = vmatprep.subr.mxu0 0.0
        %5280 = vmatpush2.msra.mxu0 0.0
        %5281 = vmatprep.subr.mxu0 0.0
        %5282 = vmatpush2.msra.mxu0 0.0
        %5283 = vmatprep.subr.mxu0 0.0
        %5284 = vmatpush2.msra.mxu0 0.0
        %5285 = vmatprep.subr.mxu0 0.0
        %5286 = vmatpush2.msra.mxu0 0.0
        %5287 = vmatprep.subr.mxu0 0.0
        %5288 = vmatpush2.msra.mxu0 0.0
        %5289 = vmatprep.subr.mxu0 0.0
        %5290 = vmatpush2.msra.mxu0 0.0
        %5291 = vmatprep.subr.mxu0 0.0
        %5292 = vmatpush2.msra.mxu0 0.0
        %5293 = vmatprep.subr.mxu0 0.0
        %5294 = vmatpush2.msra.mxu0 0.0
        %5295 = vmatprep.subr.mxu0 0.0
        %5296 = vmatpush2.msra.mxu0 0.0
        %5297 = vmatprep.subr.mxu0 0.0
        %5298 = vmatpush2.msra.mxu0 0.0
        %5299 = vmatprep.subr.mxu0 0.0
        %5300 = vmatpush2.msra.mxu0 0.0
        %5301 = vmatprep.subr.mxu0 0.0
        %5302 = vmatpush2.msra.mxu0 0.0
        %5303 = vmatprep.subr.mxu0 0.0
        %5304 = vmatpush2.msra.mxu0 0.0
        %5305 = vmatprep.subr.mxu0 0.0
        %5306 = vmatpush2.msra.mxu0 0.0
        %5307 = vmatprep.subr.mxu0 0.0
        %5308 = vmatpush2.msra.mxu0 0.0
        %5309 = vmatprep.subr.mxu0 0.0
        %5310 = vmatpush2.msra.mxu0 0.0
        %5311 = vmatprep.mubr.f32.mxu0 0.0
        %v5312 = vand.u32 %v5070, 4294901760
        %5313 = vmatmul.mubr.f32.gmra.mxu0 %v5312
        %v5314 = vpop.f32.mrf.mxu0
        %v5315 = vadd.f32 %v5169, %v5314
        %v5316 = vpop.f32.mrf.mxu0
        %5317 = vmatprep.mubr.f32.mxu0 0.0
        %v5318 = vand.u32 %v5073, 4294901760
        %5319 = vmatmul.mubr.f32.gmra.mxu0 %v5318
        %v5320 = vpop.f32.mrf.mxu0
        %v5321 = vadd.f32 %v5179, %v5320
        %v5322 = vpop.f32.mrf.mxu0
        %5323 = vmatprep.mubr.f32.mxu0 0.0
        %v5324 = vand.u32 %v5076, 4294901760
        %5325 = vmatmul.mubr.f32.gmra.mxu0 %v5324
        %v5326 = vpop.f32.mrf.mxu0
        %v5327 = vadd.f32 %v5189, %v5326
        %v5328 = vpop.f32.mrf.mxu0
        %5329 = vmatprep.mubr.f32.mxu0 0.0
        %v5330 = vand.u32 %v5079, 4294901760
        %5331 = vmatmul.mubr.f32.gmra.mxu0 %v5330
        %v5332 = vpop.f32.mrf.mxu0
        %v5333 = vadd.f32 %v5199, %v5332
        %v5334 = vpop.f32.mrf.mxu0
        %5335 = vmatprep.mubr.f32.mxu0 0.0
        %v5336 = vand.u32 %v5082, 4294901760
        %5337 = vmatmul.mubr.f32.gmra.mxu0 %v5336
        %v5338 = vpop.f32.mrf.mxu0
        %v5339 = vadd.f32 %v5209, %v5338
        %v5340 = vpop.f32.mrf.mxu0
        %5341 = vmatprep.mubr.f32.mxu0 0.0
        %v5342 = vand.u32 %v5085, 4294901760
        %5343 = vmatmul.mubr.f32.gmra.mxu0 %v5342
        %v5344 = vpop.f32.mrf.mxu0
        %v5345 = vadd.f32 %v5219, %v5344
        %v5346 = vpop.f32.mrf.mxu0
        %5347 = vmatprep.mubr.f32.mxu0 0.0
        %v5348 = vand.u32 %v5088, 4294901760
        %5349 = vmatmul.mubr.f32.gmra.mxu0 %v5348
        %v5350 = vpop.f32.mrf.mxu0
        %v5351 = vadd.f32 %v5229, %v5350
        %v5352 = vpop.f32.mrf.mxu0
        %5353 = vmatprep.mubr.f32.mxu0 0.0
        %v5354 = vand.u32 %v5091, 4294901760
        %5355 = vmatmul.mubr.f32.gmra.mxu0 %v5354
        %v5356 = vpop.f32.mrf.mxu0
        %v5357 = vadd.f32 %v5239, %v5356
        %v5358 = vpop.f32.mrf.mxu0
        %5359 = vdwg.mxu0
        %5360 = vmatprep.subr.mxu0 0.0
        %5361 = vmatpush1.msra.mxu0 0.0
        %5362 = vmatprep.subr.mxu0 0.0
        %5363 = vmatpush1.msra.mxu0 0.0
        %5364 = vmatprep.subr.mxu0 0.0
        %5365 = vmatpush1.msra.mxu0 0.0
        %5366 = vmatprep.subr.mxu0 0.0
        %5367 = vmatpush1.msra.mxu0 0.0
        %5368 = vmatprep.subr.mxu0 0.0
        %5369 = vmatpush1.msra.mxu0 0.0
        %5370 = vmatprep.subr.mxu0 0.0
        %5371 = vmatpush1.msra.mxu0 0.0
        %5372 = vmatprep.subr.mxu0 0.0
        %5373 = vmatpush1.msra.mxu0 0.0
        %5374 = vmatprep.subr.mxu0 0.0
        %5375 = vmatpush1.msra.mxu0 0.0
        %5376 = vmatprep.subr.mxu0 0.0
        %5377 = vmatpush1.msra.mxu0 0.0
        %5378 = vmatprep.subr.mxu0 0.0
        %5379 = vmatpush1.msra.mxu0 0.0
        %5380 = vmatprep.subr.mxu0 0.0
        %5381 = vmatpush1.msra.mxu0 0.0
        %5382 = vmatprep.subr.mxu0 0.0
        %5383 = vmatpush1.msra.mxu0 0.0
        %5384 = vmatprep.subr.mxu0 0.0
        %5385 = vmatpush1.msra.mxu0 0.0
        %5386 = vmatprep.subr.mxu0 0.0
        %5387 = vmatpush1.msra.mxu0 0.0
        %5388 = vmatprep.subr.mxu0 0.0
        %5389 = vmatpush1.msra.mxu0 0.0
        %5390 = vmatprep.subr.mxu0 0.0
        %v5391 = vand.u32 %v5094, 4294901760
        %v5392 = vsub.f32 %v5094, %v5391
        %5393 = vmatpush1.msra.mxu0 %v5392
        %5394 = vmatprep.subr.mxu0 0.0
        %5395 = vmatpush2.msra.mxu0 0.0
        %5396 = vmatprep.subr.mxu0 0.0
        %5397 = vmatpush2.msra.mxu0 0.0
        %5398 = vmatprep.subr.mxu0 0.0
        %5399 = vmatpush2.msra.mxu0 0.0
        %5400 = vmatprep.subr.mxu0 0.0
        %5401 = vmatpush2.msra.mxu0 0.0
        %5402 = vmatprep.subr.mxu0 0.0
        %5403 = vmatpush2.msra.mxu0 0.0
        %5404 = vmatprep.subr.mxu0 0.0
        %5405 = vmatpush2.msra.mxu0 0.0
        %5406 = vmatprep.subr.mxu0 0.0
        %5407 = vmatpush2.msra.mxu0 0.0
        %5408 = vmatprep.subr.mxu0 0.0
        %5409 = vmatpush2.msra.mxu0 0.0
        %5410 = vmatprep.subr.mxu0 0.0
        %5411 = vmatpush2.msra.mxu0 0.0
        %5412 = vmatprep.subr.mxu0 0.0
        %5413 = vmatpush2.msra.mxu0 0.0
        %5414 = vmatprep.subr.mxu0 0.0
        %5415 = vmatpush2.msra.mxu0 0.0
        %5416 = vmatprep.subr.mxu0 0.0
        %5417 = vmatpush2.msra.mxu0 0.0
        %5418 = vmatprep.subr.mxu0 0.0
        %5419 = vmatpush2.msra.mxu0 0.0
        %5420 = vmatprep.subr.mxu0 0.0
        %5421 = vmatpush2.msra.mxu0 0.0
        %5422 = vmatprep.subr.mxu0 0.0
        %5423 = vmatpush2.msra.mxu0 0.0
        %5424 = vmatprep.subr.mxu0 0.0
        %5425 = vmatpush2.msra.mxu0 0.0
        %5426 = vmatprep.mubr.f32.mxu0 0.0
        %v5427 = vand.u32 %v5070, 4294901760
        %v5428 = vsub.f32 %v5070, %v5427
        %5429 = vmatmul.mubr.f32.gmra.mxu0 %v5428
        %v5430 = vpop.f32.mrf.mxu0
        %v5431 = vadd.f32 %v5315, %v5430
        %v5432 = vpop.f32.mrf.mxu0
        %5433 = vmatprep.mubr.f32.mxu0 0.0
        %v5434 = vand.u32 %v5073, 4294901760
        %v5435 = vsub.f32 %v5073, %v5434
        %5436 = vmatmul.mubr.f32.gmra.mxu0 %v5435
        %v5437 = vpop.f32.mrf.mxu0
        %v5438 = vadd.f32 %v5321, %v5437
        %v5439 = vpop.f32.mrf.mxu0
        %5440 = vmatprep.mubr.f32.mxu0 0.0
        %v5441 = vand.u32 %v5076, 4294901760
        %v5442 = vsub.f32 %v5076, %v5441
        %5443 = vmatmul.mubr.f32.gmra.mxu0 %v5442
        %v5444 = vpop.f32.mrf.mxu0
        %v5445 = vadd.f32 %v5327, %v5444
        %v5446 = vpop.f32.mrf.mxu0
        %5447 = vmatprep.mubr.f32.mxu0 0.0
        %v5448 = vand.u32 %v5079, 4294901760
        %v5449 = vsub.f32 %v5079, %v5448
        %5450 = vmatmul.mubr.f32.gmra.mxu0 %v5449
        %v5451 = vpop.f32.mrf.mxu0
        %v5452 = vadd.f32 %v5333, %v5451
        %v5453 = vpop.f32.mrf.mxu0
        %5454 = vmatprep.mubr.f32.mxu0 0.0
        %v5455 = vand.u32 %v5082, 4294901760
        %v5456 = vsub.f32 %v5082, %v5455
        %5457 = vmatmul.mubr.f32.gmra.mxu0 %v5456
        %v5458 = vpop.f32.mrf.mxu0
        %v5459 = vadd.f32 %v5339, %v5458
        %v5460 = vpop.f32.mrf.mxu0
        %5461 = vmatprep.mubr.f32.mxu0 0.0
        %v5462 = vand.u32 %v5085, 4294901760
        %v5463 = vsub.f32 %v5085, %v5462
        %5464 = vmatmul.mubr.f32.gmra.mxu0 %v5463
        %v5465 = vpop.f32.mrf.mxu0
        %v5466 = vadd.f32 %v5345, %v5465
        %v5467 = vpop.f32.mrf.mxu0
        %5468 = vmatprep.mubr.f32.mxu0 0.0
        %v5469 = vand.u32 %v5088, 4294901760
        %v5470 = vsub.f32 %v5088, %v5469
        %5471 = vmatmul.mubr.f32.gmra.mxu0 %v5470
        %v5472 = vpop.f32.mrf.mxu0
        %v5473 = vadd.f32 %v5351, %v5472
        %v5474 = vpop.f32.mrf.mxu0
        %5475 = vmatprep.mubr.f32.mxu0 0.0
        %v5476 = vand.u32 %v5091, 4294901760
        %v5477 = vsub.f32 %v5091, %v5476
        %5478 = vmatmul.mubr.f32.gmra.mxu0 %v5477
        %v5479 = vpop.f32.mrf.mxu0
        %v5480 = vadd.f32 %v5357, %v5479
        %v5481 = vpop.f32.mrf.mxu0
        %5482 = vdwg.mxu0
        %5483 = vmatprep.subr.mxu0 0.0
        %5484 = vmatpush1.msra.mxu0 0.0
        %5485 = vmatprep.subr.mxu0 0.0
        %5486 = vmatpush1.msra.mxu0 0.0
        %5487 = vmatprep.subr.mxu0 0.0
        %5488 = vmatpush1.msra.mxu0 0.0
        %5489 = vmatprep.subr.mxu0 0.0
        %5490 = vmatpush1.msra.mxu0 0.0
        %5491 = vmatprep.subr.mxu0 0.0
        %5492 = vmatpush1.msra.mxu0 0.0
        %5493 = vmatprep.subr.mxu0 0.0
        %5494 = vmatpush1.msra.mxu0 0.0
        %5495 = vmatprep.subr.mxu0 0.0
        %5496 = vmatpush1.msra.mxu0 0.0
        %5497 = vmatprep.subr.mxu0 0.0
        %5498 = vmatpush1.msra.mxu0 0.0
        %5499 = vmatprep.subr.mxu0 0.0
        %5500 = vmatpush1.msra.mxu0 0.0
        %5501 = vmatprep.subr.mxu0 0.0
        %5502 = vmatpush1.msra.mxu0 0.0
        %5503 = vmatprep.subr.mxu0 0.0
        %5504 = vmatpush1.msra.mxu0 0.0
        %5505 = vmatprep.subr.mxu0 0.0
        %5506 = vmatpush1.msra.mxu0 0.0
        %5507 = vmatprep.subr.mxu0 0.0
        %5508 = vmatpush1.msra.mxu0 0.0
        %5509 = vmatprep.subr.mxu0 0.0
        %5510 = vmatpush1.msra.mxu0 0.0
        %5511 = vmatprep.subr.mxu0 0.0
        %5512 = vmatpush1.msra.mxu0 0.0
        %5513 = vmatprep.subr.mxu0 0.0
        %v5514 = vand.u32 %v5094, 4294901760
        %5515 = vmatpush1.msra.mxu0 %v5514
        %5516 = vmatprep.subr.mxu0 0.0
        %5517 = vmatpush2.msra.mxu0 0.0
        %5518 = vmatprep.subr.mxu0 0.0
        %5519 = vmatpush2.msra.mxu0 0.0
        %5520 = vmatprep.subr.mxu0 0.0
        %5521 = vmatpush2.msra.mxu0 0.0
        %5522 = vmatprep.subr.mxu0 0.0
        %5523 = vmatpush2.msra.mxu0 0.0
        %5524 = vmatprep.subr.mxu0 0.0
        %5525 = vmatpush2.msra.mxu0 0.0
        %5526 = vmatprep.subr.mxu0 0.0
        %5527 = vmatpush2.msra.mxu0 0.0
        %5528 = vmatprep.subr.mxu0 0.0
        %5529 = vmatpush2.msra.mxu0 0.0
        %5530 = vmatprep.subr.mxu0 0.0
        %5531 = vmatpush2.msra.mxu0 0.0
        %5532 = vmatprep.subr.mxu0 0.0
        %5533 = vmatpush2.msra.mxu0 0.0
        %5534 = vmatprep.subr.mxu0 0.0
        %5535 = vmatpush2.msra.mxu0 0.0
        %5536 = vmatprep.subr.mxu0 0.0
        %5537 = vmatpush2.msra.mxu0 0.0
        %5538 = vmatprep.subr.mxu0 0.0
        %5539 = vmatpush2.msra.mxu0 0.0
        %5540 = vmatprep.subr.mxu0 0.0
        %5541 = vmatpush2.msra.mxu0 0.0
        %5542 = vmatprep.subr.mxu0 0.0
        %5543 = vmatpush2.msra.mxu0 0.0
        %5544 = vmatprep.subr.mxu0 0.0
        %5545 = vmatpush2.msra.mxu0 0.0
        %5546 = vmatprep.subr.mxu0 0.0
        %5547 = vmatpush2.msra.mxu0 0.0
        %5548 = vmatprep.mubr.f32.mxu0 0.0
        %v5549 = vand.u32 %v5070, 4294901760
        %v5550 = vsub.f32 %v5070, %v5549
        %v5551 = vand.u32 %v5550, 4294901760
        %5552 = vmatmul.mubr.f32.gmra.mxu0 %v5551
        %v5553 = vpop.f32.mrf.mxu0
        %v5554 = vadd.f32 %v5431, %v5553
        %v5555 = vpop.f32.mrf.mxu0
        %5556 = vmatprep.mubr.f32.mxu0 0.0
        %v5557 = vand.u32 %v5073, 4294901760
        %v5558 = vsub.f32 %v5073, %v5557
        %v5559 = vand.u32 %v5558, 4294901760
        %5560 = vmatmul.mubr.f32.gmra.mxu0 %v5559
        %v5561 = vpop.f32.mrf.mxu0
        %v5562 = vadd.f32 %v5438, %v5561
        %v5563 = vpop.f32.mrf.mxu0
        %5564 = vmatprep.mubr.f32.mxu0 0.0
        %v5565 = vand.u32 %v5076, 4294901760
        %v5566 = vsub.f32 %v5076, %v5565
        %v5567 = vand.u32 %v5566, 4294901760
        %5568 = vmatmul.mubr.f32.gmra.mxu0 %v5567
        %v5569 = vpop.f32.mrf.mxu0
        %v5570 = vadd.f32 %v5445, %v5569
        %v5571 = vpop.f32.mrf.mxu0
        %5572 = vmatprep.mubr.f32.mxu0 0.0
        %v5573 = vand.u32 %v5079, 4294901760
        %v5574 = vsub.f32 %v5079, %v5573
        %v5575 = vand.u32 %v5574, 4294901760
        %5576 = vmatmul.mubr.f32.gmra.mxu0 %v5575
        %v5577 = vpop.f32.mrf.mxu0
        %v5578 = vadd.f32 %v5452, %v5577
        %v5579 = vpop.f32.mrf.mxu0
        %5580 = vmatprep.mubr.f32.mxu0 0.0
        %v5581 = vand.u32 %v5082, 4294901760
        %v5582 = vsub.f32 %v5082, %v5581
        %v5583 = vand.u32 %v5582, 4294901760
        %5584 = vmatmul.mubr.f32.gmra.mxu0 %v5583
        %v5585 = vpop.f32.mrf.mxu0
        %v5586 = vadd.f32 %v5459, %v5585
        %v5587 = vpop.f32.mrf.mxu0
        %5588 = vmatprep.mubr.f32.mxu0 0.0
        %v5589 = vand.u32 %v5085, 4294901760
        %v5590 = vsub.f32 %v5085, %v5589
        %v5591 = vand.u32 %v5590, 4294901760
        %5592 = vmatmul.mubr.f32.gmra.mxu0 %v5591
        %v5593 = vpop.f32.mrf.mxu0
        %v5594 = vadd.f32 %v5466, %v5593
        %v5595 = vpop.f32.mrf.mxu0
        %5596 = vmatprep.mubr.f32.mxu0 0.0
        %v5597 = vand.u32 %v5088, 4294901760
        %v5598 = vsub.f32 %v5088, %v5597
        %v5599 = vand.u32 %v5598, 4294901760
        %5600 = vmatmul.mubr.f32.gmra.mxu0 %v5599
        %v5601 = vpop.f32.mrf.mxu0
        %v5602 = vadd.f32 %v5473, %v5601
        %v5603 = vpop.f32.mrf.mxu0
        %5604 = vmatprep.mubr.f32.mxu0 0.0
        %v5605 = vand.u32 %v5091, 4294901760
        %v5606 = vsub.f32 %v5091, %v5605
        %v5607 = vand.u32 %v5606, 4294901760
        %5608 = vmatmul.mubr.f32.gmra.mxu0 %v5607
        %v5609 = vpop.f32.mrf.mxu0
        %v5610 = vadd.f32 %v5480, %v5609
        %v5611 = vpop.f32.mrf.mxu0
        %5612 = vdwg.mxu0
        %5613 = vmatprep.subr.mxu0 0.0
        %5614 = vmatpush1.msra.mxu0 0.0
        %5615 = vmatprep.subr.mxu0 0.0
        %5616 = vmatpush1.msra.mxu0 0.0
        %5617 = vmatprep.subr.mxu0 0.0
        %5618 = vmatpush1.msra.mxu0 0.0
        %5619 = vmatprep.subr.mxu0 0.0
        %5620 = vmatpush1.msra.mxu0 0.0
        %5621 = vmatprep.subr.mxu0 0.0
        %5622 = vmatpush1.msra.mxu0 0.0
        %5623 = vmatprep.subr.mxu0 0.0
        %5624 = vmatpush1.msra.mxu0 0.0
        %5625 = vmatprep.subr.mxu0 0.0
        %5626 = vmatpush1.msra.mxu0 0.0
        %5627 = vmatprep.subr.mxu0 0.0
        %5628 = vmatpush1.msra.mxu0 0.0
        %5629 = vmatprep.subr.mxu0 0.0
        %5630 = vmatpush1.msra.mxu0 0.0
        %5631 = vmatprep.subr.mxu0 0.0
        %5632 = vmatpush1.msra.mxu0 0.0
        %5633 = vmatprep.subr.mxu0 0.0
        %5634 = vmatpush1.msra.mxu0 0.0
        %5635 = vmatprep.subr.mxu0 0.0
        %5636 = vmatpush1.msra.mxu0 0.0
        %5637 = vmatprep.subr.mxu0 0.0
        %5638 = vmatpush1.msra.mxu0 0.0
        %5639 = vmatprep.subr.mxu0 0.0
        %5640 = vmatpush1.msra.mxu0 0.0
        %5641 = vmatprep.subr.mxu0 0.0
        %5642 = vmatpush1.msra.mxu0 0.0
        %5643 = vmatprep.subr.mxu0 0.0
        %v5644 = vand.u32 %v5094, 4294901760
        %v5645 = vsub.f32 %v5094, %v5644
        %v5646 = vand.u32 %v5645, 4294901760
        %5647 = vmatpush1.msra.mxu0 %v5646
        %5648 = vmatprep.subr.mxu0 0.0
        %5649 = vmatpush2.msra.mxu0 0.0
        %5650 = vmatprep.subr.mxu0 0.0
        %5651 = vmatpush2.msra.mxu0 0.0
        %5652 = vmatprep.subr.mxu0 0.0
        %5653 = vmatpush2.msra.mxu0 0.0
        %5654 = vmatprep.subr.mxu0 0.0
        %5655 = vmatpush2.msra.mxu0 0.0
        %5656 = vmatprep.subr.mxu0 0.0
        %5657 = vmatpush2.msra.mxu0 0.0
        %5658 = vmatprep.subr.mxu0 0.0
        %5659 = vmatpush2.msra.mxu0 0.0
        %5660 = vmatprep.subr.mxu0 0.0
        %5661 = vmatpush2.msra.mxu0 0.0
        %5662 = vmatprep.subr.mxu0 0.0
        %5663 = vmatpush2.msra.mxu0 0.0
        %5664 = vmatprep.subr.mxu0 0.0
        %5665 = vmatpush2.msra.mxu0 0.0
        %5666 = vmatprep.subr.mxu0 0.0
        %5667 = vmatpush2.msra.mxu0 0.0
        %5668 = vmatprep.subr.mxu0 0.0
        %5669 = vmatpush2.msra.mxu0 0.0
        %5670 = vmatprep.subr.mxu0 0.0
        %5671 = vmatpush2.msra.mxu0 0.0
        %5672 = vmatprep.subr.mxu0 0.0
        %5673 = vmatpush2.msra.mxu0 0.0
        %5674 = vmatprep.subr.mxu0 0.0
        %5675 = vmatpush2.msra.mxu0 0.0
        %5676 = vmatprep.subr.mxu0 0.0
        %5677 = vmatpush2.msra.mxu0 0.0
        %5678 = vmatprep.subr.mxu0 0.0
        %5679 = vmatpush2.msra.mxu0 0.0
        %5680 = vmatprep.mubr.f32.mxu0 0.0
        %v5681 = vand.u32 %v5070, 4294901760
        %5682 = vmatmul.mubr.f32.gmra.mxu0 %v5681
        %v5683 = vpop.f32.mrf.mxu0
        %v5684 = vadd.f32 %v5554, %v5683
        %v5685 = vpop.f32.mrf.mxu0
        %5686 = vmatprep.mubr.f32.mxu0 0.0
        %v5687 = vand.u32 %v5073, 4294901760
        %5688 = vmatmul.mubr.f32.gmra.mxu0 %v5687
        %v5689 = vpop.f32.mrf.mxu0
        %v5690 = vadd.f32 %v5562, %v5689
        %v5691 = vpop.f32.mrf.mxu0
        %5692 = vmatprep.mubr.f32.mxu0 0.0
        %v5693 = vand.u32 %v5076, 4294901760
        %5694 = vmatmul.mubr.f32.gmra.mxu0 %v5693
        %v5695 = vpop.f32.mrf.mxu0
        %v5696 = vadd.f32 %v5570, %v5695
        %v5697 = vpop.f32.mrf.mxu0
        %5698 = vmatprep.mubr.f32.mxu0 0.0
        %v5699 = vand.u32 %v5079, 4294901760
        %5700 = vmatmul.mubr.f32.gmra.mxu0 %v5699
        %v5701 = vpop.f32.mrf.mxu0
        %v5702 = vadd.f32 %v5578, %v5701
        %v5703 = vpop.f32.mrf.mxu0
        %5704 = vmatprep.mubr.f32.mxu0 0.0
        %v5705 = vand.u32 %v5082, 4294901760
        %5706 = vmatmul.mubr.f32.gmra.mxu0 %v5705
        %v5707 = vpop.f32.mrf.mxu0
        %v5708 = vadd.f32 %v5586, %v5707
        %v5709 = vpop.f32.mrf.mxu0
        %5710 = vmatprep.mubr.f32.mxu0 0.0
        %v5711 = vand.u32 %v5085, 4294901760
        %5712 = vmatmul.mubr.f32.gmra.mxu0 %v5711
        %v5713 = vpop.f32.mrf.mxu0
        %v5714 = vadd.f32 %v5594, %v5713
        %v5715 = vpop.f32.mrf.mxu0
        %5716 = vmatprep.mubr.f32.mxu0 0.0
        %v5717 = vand.u32 %v5088, 4294901760
        %5718 = vmatmul.mubr.f32.gmra.mxu0 %v5717
        %v5719 = vpop.f32.mrf.mxu0
        %v5720 = vadd.f32 %v5602, %v5719
        %v5721 = vpop.f32.mrf.mxu0
        %5722 = vmatprep.mubr.f32.mxu0 0.0
        %v5723 = vand.u32 %v5091, 4294901760
        %5724 = vmatmul.mubr.f32.gmra.mxu0 %v5723
        %v5725 = vpop.f32.mrf.mxu0
        %v5726 = vadd.f32 %v5610, %v5725
        %v5727 = vpop.f32.mrf.mxu0
        %5728 = vdwg.mxu0
        %5729 = vmatprep.subr.mxu0 0.0
        %5730 = vmatpush1.msra.mxu0 0.0
        %5731 = vmatprep.subr.mxu0 0.0
        %5732 = vmatpush1.msra.mxu0 0.0
        %5733 = vmatprep.subr.mxu0 0.0
        %5734 = vmatpush1.msra.mxu0 0.0
        %5735 = vmatprep.subr.mxu0 0.0
        %5736 = vmatpush1.msra.mxu0 0.0
        %5737 = vmatprep.subr.mxu0 0.0
        %5738 = vmatpush1.msra.mxu0 0.0
        %5739 = vmatprep.subr.mxu0 0.0
        %5740 = vmatpush1.msra.mxu0 0.0
        %5741 = vmatprep.subr.mxu0 0.0
        %5742 = vmatpush1.msra.mxu0 0.0
        %5743 = vmatprep.subr.mxu0 0.0
        %5744 = vmatpush1.msra.mxu0 0.0
        %5745 = vmatprep.subr.mxu0 0.0
        %5746 = vmatpush1.msra.mxu0 0.0
        %5747 = vmatprep.subr.mxu0 0.0
        %5748 = vmatpush1.msra.mxu0 0.0
        %5749 = vmatprep.subr.mxu0 0.0
        %5750 = vmatpush1.msra.mxu0 0.0
        %5751 = vmatprep.subr.mxu0 0.0
        %5752 = vmatpush1.msra.mxu0 0.0
        %5753 = vmatprep.subr.mxu0 0.0
        %5754 = vmatpush1.msra.mxu0 0.0
        %5755 = vmatprep.subr.mxu0 0.0
        %5756 = vmatpush1.msra.mxu0 0.0
        %5757 = vmatprep.subr.mxu0 0.0
        %5758 = vmatpush1.msra.mxu0 0.0
        %5759 = vmatprep.subr.mxu0 0.0
        %v5760 = vand.u32 %v5094, 4294901760
        %5761 = vmatpush1.msra.mxu0 %v5760
        %5762 = vmatprep.subr.mxu0 0.0
        %5763 = vmatpush2.msra.mxu0 0.0
        %5764 = vmatprep.subr.mxu0 0.0
        %5765 = vmatpush2.msra.mxu0 0.0
        %5766 = vmatprep.subr.mxu0 0.0
        %5767 = vmatpush2.msra.mxu0 0.0
        %5768 = vmatprep.subr.mxu0 0.0
        %5769 = vmatpush2.msra.mxu0 0.0
        %5770 = vmatprep.subr.mxu0 0.0
        %5771 = vmatpush2.msra.mxu0 0.0
        %5772 = vmatprep.subr.mxu0 0.0
        %5773 = vmatpush2.msra.mxu0 0.0
        %5774 = vmatprep.subr.mxu0 0.0
        %5775 = vmatpush2.msra.mxu0 0.0
        %5776 = vmatprep.subr.mxu0 0.0
        %5777 = vmatpush2.msra.mxu0 0.0
        %5778 = vmatprep.subr.mxu0 0.0
        %5779 = vmatpush2.msra.mxu0 0.0
        %5780 = vmatprep.subr.mxu0 0.0
        %5781 = vmatpush2.msra.mxu0 0.0
        %5782 = vmatprep.subr.mxu0 0.0
        %5783 = vmatpush2.msra.mxu0 0.0
        %5784 = vmatprep.subr.mxu0 0.0
        %5785 = vmatpush2.msra.mxu0 0.0
        %5786 = vmatprep.subr.mxu0 0.0
        %5787 = vmatpush2.msra.mxu0 0.0
        %5788 = vmatprep.subr.mxu0 0.0
        %5789 = vmatpush2.msra.mxu0 0.0
        %5790 = vmatprep.subr.mxu0 0.0
        %5791 = vmatpush2.msra.mxu0 0.0
        %5792 = vmatprep.subr.mxu0 0.0
        %5793 = vmatpush2.msra.mxu0 0.0
        %5794 = vmatprep.mubr.f32.mxu0 0.0
        %v5795 = vand.u32 %v5070, 4294901760
        %5796 = vmatmul.mubr.f32.gmra.mxu0 %v5795
        %v5797 = vpop.f32.mrf.mxu0
        %v5798 = vadd.f32 %v5684, %v5797
        %v5799 = vpop.f32.mrf.mxu0
        %5800 = vmatprep.mubr.f32.mxu0 0.0
        %v5801 = vand.u32 %v5073, 4294901760
        %5802 = vmatmul.mubr.f32.gmra.mxu0 %v5801
        %v5803 = vpop.f32.mrf.mxu0
        %v5804 = vadd.f32 %v5690, %v5803
        %v5805 = vpop.f32.mrf.mxu0
        %5806 = vmatprep.mubr.f32.mxu0 0.0
        %v5807 = vand.u32 %v5076, 4294901760
        %5808 = vmatmul.mubr.f32.gmra.mxu0 %v5807
        %v5809 = vpop.f32.mrf.mxu0
        %v5810 = vadd.f32 %v5696, %v5809
        %v5811 = vpop.f32.mrf.mxu0
        %5812 = vmatprep.mubr.f32.mxu0 0.0
        %v5813 = vand.u32 %v5079, 4294901760
        %5814 = vmatmul.mubr.f32.gmra.mxu0 %v5813
        %v5815 = vpop.f32.mrf.mxu0
        %v5816 = vadd.f32 %v5702, %v5815
        %v5817 = vpop.f32.mrf.mxu0
        %5818 = vmatprep.mubr.f32.mxu0 0.0
        %v5819 = vand.u32 %v5082, 4294901760
        %5820 = vmatmul.mubr.f32.gmra.mxu0 %v5819
        %v5821 = vpop.f32.mrf.mxu0
        %v5822 = vadd.f32 %v5708, %v5821
        %v5823 = vpop.f32.mrf.mxu0
        %5824 = vmatprep.mubr.f32.mxu0 0.0
        %v5825 = vand.u32 %v5085, 4294901760
        %5826 = vmatmul.mubr.f32.gmra.mxu0 %v5825
        %v5827 = vpop.f32.mrf.mxu0
        %v5828 = vadd.f32 %v5714, %v5827
        %v5829 = vpop.f32.mrf.mxu0
        %5830 = vmatprep.mubr.f32.mxu0 0.0
        %v5831 = vand.u32 %v5088, 4294901760
        %5832 = vmatmul.mubr.f32.gmra.mxu0 %v5831
        %v5833 = vpop.f32.mrf.mxu0
        %v5834 = vadd.f32 %v5720, %v5833
        %v5835 = vpop.f32.mrf.mxu0
        %5836 = vmatprep.mubr.f32.mxu0 0.0
        %v5837 = vand.u32 %v5091, 4294901760
        %5838 = vmatmul.mubr.f32.gmra.mxu0 %v5837
        %v5839 = vpop.f32.mrf.mxu0
        %v5840 = vadd.f32 %v5726, %v5839
        %v5841 = vpop.f32.mrf.mxu0
        %5842 = vdwg.mxu0
        %v5843 = vadd.f32 %v5050, %v5798
        %v5844 = vadd.f32 %v5051, %v5804
        %v5845 = vadd.f32 %v5052, %v5810
        %v5846 = vadd.f32 %v5053, %v5816
        %v5847 = vadd.f32 %v5054, %v5822
        %v5848 = vadd.f32 %v5055, %v5828
        %v5849 = vadd.f32 %v5056, %v5834
        %v5850 = vadd.f32 %v5057, %v5840
        %s5851 = scalar_lea.vmem %s310, 16
        %v5852 = vld [vmem:[%s5851] sm:$0xff]
        %v5853 = vld [vmem:[%s5851 + $0x10] sm:$0xff]
        %v5854 = vld [vmem:[%s5851 + $0x20] sm:$0xff]
        %v5855 = vld [vmem:[%s5851 + $0x30] sm:$0xff]
        %v5856 = vld [vmem:[%s5851 + $0x40] sm:$0xff]
        %v5857 = vld [vmem:[%s5851 + $0x50] sm:$0xff]
        %v5858 = vld [vmem:[%s5851 + $0x60] sm:$0xff]
        %v5859 = vld [vmem:[%s5851 + $0x70] sm:$0xff]
        %s5860 = scalar_lea.vmem %s4, 28
        %v5861 = vld [vmem:[%s5860] sm:$0xf]
        %v5863 = vsel %vm340, %v5852, 0
        %v5866 = vsel %vm340, %v5853, 0
        %v5869 = vsel %vm340, %v5854, 0
        %v5872 = vsel %vm340, %v5855, 0
        %v5875 = vsel %vm340, %v5856, 0
        %v5878 = vsel %vm340, %v5857, 0
        %v5881 = vsel %vm340, %v5858, 0
        %v5884 = vsel %vm340, %v5859, 0
        %v5887 = vsel %vm365, %v5861, 0
        %5889 = vmatprep.subr.mxu0 0.0
        %5890 = vmatpush1.msra.mxu0 0.0
        %5891 = vmatprep.subr.mxu0 0.0
        %5892 = vmatpush1.msra.mxu0 0.0
        %5893 = vmatprep.subr.mxu0 0.0
        %5894 = vmatpush1.msra.mxu0 0.0
        %5895 = vmatprep.subr.mxu0 0.0
        %5896 = vmatpush1.msra.mxu0 0.0
        %5897 = vmatprep.subr.mxu0 0.0
        %5898 = vmatpush1.msra.mxu0 0.0
        %5899 = vmatprep.subr.mxu0 0.0
        %5900 = vmatpush1.msra.mxu0 0.0
        %5901 = vmatprep.subr.mxu0 0.0
        %5902 = vmatpush1.msra.mxu0 0.0
        %5903 = vmatprep.subr.mxu0 0.0
        %5904 = vmatpush1.msra.mxu0 0.0
        %5905 = vmatprep.subr.mxu0 0.0
        %5906 = vmatpush1.msra.mxu0 0.0
        %5907 = vmatprep.subr.mxu0 0.0
        %5908 = vmatpush1.msra.mxu0 0.0
        %5909 = vmatprep.subr.mxu0 0.0
        %5910 = vmatpush1.msra.mxu0 0.0
        %5911 = vmatprep.subr.mxu0 0.0
        %5912 = vmatpush1.msra.mxu0 0.0
        %5913 = vmatprep.subr.mxu0 0.0
        %5914 = vmatpush1.msra.mxu0 0.0
        %5915 = vmatprep.subr.mxu0 0.0
        %5916 = vmatpush1.msra.mxu0 0.0
        %5917 = vmatprep.subr.mxu0 0.0
        %5918 = vmatpush1.msra.mxu0 0.0
        %5919 = vmatprep.subr.mxu0 0.0
        %v5920 = vand.u32 %v5887, 4294901760
        %5921 = vmatpush1.msra.mxu0 %v5920
        %5922 = vmatprep.subr.mxu0 0.0
        %5923 = vmatpush2.msra.mxu0 0.0
        %5924 = vmatprep.subr.mxu0 0.0
        %5925 = vmatpush2.msra.mxu0 0.0
        %5926 = vmatprep.subr.mxu0 0.0
        %5927 = vmatpush2.msra.mxu0 0.0
        %5928 = vmatprep.subr.mxu0 0.0
        %5929 = vmatpush2.msra.mxu0 0.0
        %5930 = vmatprep.subr.mxu0 0.0
        %5931 = vmatpush2.msra.mxu0 0.0
        %5932 = vmatprep.subr.mxu0 0.0
        %5933 = vmatpush2.msra.mxu0 0.0
        %5934 = vmatprep.subr.mxu0 0.0
        %5935 = vmatpush2.msra.mxu0 0.0
        %5936 = vmatprep.subr.mxu0 0.0
        %5937 = vmatpush2.msra.mxu0 0.0
        %5938 = vmatprep.subr.mxu0 0.0
        %5939 = vmatpush2.msra.mxu0 0.0
        %5940 = vmatprep.subr.mxu0 0.0
        %5941 = vmatpush2.msra.mxu0 0.0
        %5942 = vmatprep.subr.mxu0 0.0
        %5943 = vmatpush2.msra.mxu0 0.0
        %5944 = vmatprep.subr.mxu0 0.0
        %5945 = vmatpush2.msra.mxu0 0.0
        %5946 = vmatprep.subr.mxu0 0.0
        %5947 = vmatpush2.msra.mxu0 0.0
        %5948 = vmatprep.subr.mxu0 0.0
        %5949 = vmatpush2.msra.mxu0 0.0
        %5950 = vmatprep.subr.mxu0 0.0
        %5951 = vmatpush2.msra.mxu0 0.0
        %5952 = vmatprep.subr.mxu0 0.0
        %5953 = vmatpush2.msra.mxu0 0.0
        %5954 = vmatprep.mubr.f32.mxu0 0.0
        %v5955 = vand.u32 %v5863, 4294901760
        %v5956 = vsub.f32 %v5863, %v5955
        %v5957 = vand.u32 %v5956, 4294901760
        %v5958 = vsub.f32 %v5956, %v5957
        %v5959 = vand.u32 %v5958, 4294901760
        %5960 = vmatmul.mubr.f32.gmra.mxu0 %v5959
        %v5961 = vpop.f32.mrf.mxu0
        %v5962 = vadd.f32 0.0, %v5961
        %v5963 = vpop.f32.mrf.mxu0
        %5964 = vmatprep.mubr.f32.mxu0 0.0
        %v5965 = vand.u32 %v5866, 4294901760
        %v5966 = vsub.f32 %v5866, %v5965
        %v5967 = vand.u32 %v5966, 4294901760
        %v5968 = vsub.f32 %v5966, %v5967
        %v5969 = vand.u32 %v5968, 4294901760
        %5970 = vmatmul.mubr.f32.gmra.mxu0 %v5969
        %v5971 = vpop.f32.mrf.mxu0
        %v5972 = vadd.f32 0.0, %v5971
        %v5973 = vpop.f32.mrf.mxu0
        %5974 = vmatprep.mubr.f32.mxu0 0.0
        %v5975 = vand.u32 %v5869, 4294901760
        %v5976 = vsub.f32 %v5869, %v5975
        %v5977 = vand.u32 %v5976, 4294901760
        %v5978 = vsub.f32 %v5976, %v5977
        %v5979 = vand.u32 %v5978, 4294901760
        %5980 = vmatmul.mubr.f32.gmra.mxu0 %v5979
        %v5981 = vpop.f32.mrf.mxu0
        %v5982 = vadd.f32 0.0, %v5981
        %v5983 = vpop.f32.mrf.mxu0
        %5984 = vmatprep.mubr.f32.mxu0 0.0
        %v5985 = vand.u32 %v5872, 4294901760
        %v5986 = vsub.f32 %v5872, %v5985
        %v5987 = vand.u32 %v5986, 4294901760
        %v5988 = vsub.f32 %v5986, %v5987
        %v5989 = vand.u32 %v5988, 4294901760
        %5990 = vmatmul.mubr.f32.gmra.mxu0 %v5989
        %v5991 = vpop.f32.mrf.mxu0
        %v5992 = vadd.f32 0.0, %v5991
        %v5993 = vpop.f32.mrf.mxu0
        %5994 = vmatprep.mubr.f32.mxu0 0.0
        %v5995 = vand.u32 %v5875, 4294901760
        %v5996 = vsub.f32 %v5875, %v5995
        %v5997 = vand.u32 %v5996, 4294901760
        %v5998 = vsub.f32 %v5996, %v5997
        %v5999 = vand.u32 %v5998, 4294901760
        %6000 = vmatmul.mubr.f32.gmra.mxu0 %v5999
        %v6001 = vpop.f32.mrf.mxu0
        %v6002 = vadd.f32 0.0, %v6001
        %v6003 = vpop.f32.mrf.mxu0
        %6004 = vmatprep.mubr.f32.mxu0 0.0
        %v6005 = vand.u32 %v5878, 4294901760
        %v6006 = vsub.f32 %v5878, %v6005
        %v6007 = vand.u32 %v6006, 4294901760
        %v6008 = vsub.f32 %v6006, %v6007
        %v6009 = vand.u32 %v6008, 4294901760
        %6010 = vmatmul.mubr.f32.gmra.mxu0 %v6009
        %v6011 = vpop.f32.mrf.mxu0
        %v6012 = vadd.f32 0.0, %v6011
        %v6013 = vpop.f32.mrf.mxu0
        %6014 = vmatprep.mubr.f32.mxu0 0.0
        %v6015 = vand.u32 %v5881, 4294901760
        %v6016 = vsub.f32 %v5881, %v6015
        %v6017 = vand.u32 %v6016, 4294901760
        %v6018 = vsub.f32 %v6016, %v6017
        %v6019 = vand.u32 %v6018, 4294901760
        %6020 = vmatmul.mubr.f32.gmra.mxu0 %v6019
        %v6021 = vpop.f32.mrf.mxu0
        %v6022 = vadd.f32 0.0, %v6021
        %v6023 = vpop.f32.mrf.mxu0
        %6024 = vmatprep.mubr.f32.mxu0 0.0
        %v6025 = vand.u32 %v5884, 4294901760
        %v6026 = vsub.f32 %v5884, %v6025
        %v6027 = vand.u32 %v6026, 4294901760
        %v6028 = vsub.f32 %v6026, %v6027
        %v6029 = vand.u32 %v6028, 4294901760
        %6030 = vmatmul.mubr.f32.gmra.mxu0 %v6029
        %v6031 = vpop.f32.mrf.mxu0
        %v6032 = vadd.f32 0.0, %v6031
        %v6033 = vpop.f32.mrf.mxu0
        %6034 = vdwg.mxu0
        %6035 = vmatprep.subr.mxu0 0.0
        %6036 = vmatpush1.msra.mxu0 0.0
        %6037 = vmatprep.subr.mxu0 0.0
        %6038 = vmatpush1.msra.mxu0 0.0
        %6039 = vmatprep.subr.mxu0 0.0
        %6040 = vmatpush1.msra.mxu0 0.0
        %6041 = vmatprep.subr.mxu0 0.0
        %6042 = vmatpush1.msra.mxu0 0.0
        %6043 = vmatprep.subr.mxu0 0.0
        %6044 = vmatpush1.msra.mxu0 0.0
        %6045 = vmatprep.subr.mxu0 0.0
        %6046 = vmatpush1.msra.mxu0 0.0
        %6047 = vmatprep.subr.mxu0 0.0
        %6048 = vmatpush1.msra.mxu0 0.0
        %6049 = vmatprep.subr.mxu0 0.0
        %6050 = vmatpush1.msra.mxu0 0.0
        %6051 = vmatprep.subr.mxu0 0.0
        %6052 = vmatpush1.msra.mxu0 0.0
        %6053 = vmatprep.subr.mxu0 0.0
        %6054 = vmatpush1.msra.mxu0 0.0
        %6055 = vmatprep.subr.mxu0 0.0
        %6056 = vmatpush1.msra.mxu0 0.0
        %6057 = vmatprep.subr.mxu0 0.0
        %6058 = vmatpush1.msra.mxu0 0.0
        %6059 = vmatprep.subr.mxu0 0.0
        %6060 = vmatpush1.msra.mxu0 0.0
        %6061 = vmatprep.subr.mxu0 0.0
        %6062 = vmatpush1.msra.mxu0 0.0
        %6063 = vmatprep.subr.mxu0 0.0
        %6064 = vmatpush1.msra.mxu0 0.0
        %6065 = vmatprep.subr.mxu0 0.0
        %v6066 = vand.u32 %v5887, 4294901760
        %v6067 = vsub.f32 %v5887, %v6066
        %v6068 = vand.u32 %v6067, 4294901760
        %v6069 = vsub.f32 %v6067, %v6068
        %v6070 = vand.u32 %v6069, 4294901760
        %6071 = vmatpush1.msra.mxu0 %v6070
        %6072 = vmatprep.subr.mxu0 0.0
        %6073 = vmatpush2.msra.mxu0 0.0
        %6074 = vmatprep.subr.mxu0 0.0
        %6075 = vmatpush2.msra.mxu0 0.0
        %6076 = vmatprep.subr.mxu0 0.0
        %6077 = vmatpush2.msra.mxu0 0.0
        %6078 = vmatprep.subr.mxu0 0.0
        %6079 = vmatpush2.msra.mxu0 0.0
        %6080 = vmatprep.subr.mxu0 0.0
        %6081 = vmatpush2.msra.mxu0 0.0
        %6082 = vmatprep.subr.mxu0 0.0
        %6083 = vmatpush2.msra.mxu0 0.0
        %6084 = vmatprep.subr.mxu0 0.0
        %6085 = vmatpush2.msra.mxu0 0.0
        %6086 = vmatprep.subr.mxu0 0.0
        %6087 = vmatpush2.msra.mxu0 0.0
        %6088 = vmatprep.subr.mxu0 0.0
        %6089 = vmatpush2.msra.mxu0 0.0
        %6090 = vmatprep.subr.mxu0 0.0
        %6091 = vmatpush2.msra.mxu0 0.0
        %6092 = vmatprep.subr.mxu0 0.0
        %6093 = vmatpush2.msra.mxu0 0.0
        %6094 = vmatprep.subr.mxu0 0.0
        %6095 = vmatpush2.msra.mxu0 0.0
        %6096 = vmatprep.subr.mxu0 0.0
        %6097 = vmatpush2.msra.mxu0 0.0
        %6098 = vmatprep.subr.mxu0 0.0
        %6099 = vmatpush2.msra.mxu0 0.0
        %6100 = vmatprep.subr.mxu0 0.0
        %6101 = vmatpush2.msra.mxu0 0.0
        %6102 = vmatprep.subr.mxu0 0.0
        %6103 = vmatpush2.msra.mxu0 0.0
        %6104 = vmatprep.mubr.f32.mxu0 0.0
        %v6105 = vand.u32 %v5863, 4294901760
        %6106 = vmatmul.mubr.f32.gmra.mxu0 %v6105
        %v6107 = vpop.f32.mrf.mxu0
        %v6108 = vadd.f32 %v5962, %v6107
        %v6109 = vpop.f32.mrf.mxu0
        %6110 = vmatprep.mubr.f32.mxu0 0.0
        %v6111 = vand.u32 %v5866, 4294901760
        %6112 = vmatmul.mubr.f32.gmra.mxu0 %v6111
        %v6113 = vpop.f32.mrf.mxu0
        %v6114 = vadd.f32 %v5972, %v6113
        %v6115 = vpop.f32.mrf.mxu0
        %6116 = vmatprep.mubr.f32.mxu0 0.0
        %v6117 = vand.u32 %v5869, 4294901760
        %6118 = vmatmul.mubr.f32.gmra.mxu0 %v6117
        %v6119 = vpop.f32.mrf.mxu0
        %v6120 = vadd.f32 %v5982, %v6119
        %v6121 = vpop.f32.mrf.mxu0
        %6122 = vmatprep.mubr.f32.mxu0 0.0
        %v6123 = vand.u32 %v5872, 4294901760
        %6124 = vmatmul.mubr.f32.gmra.mxu0 %v6123
        %v6125 = vpop.f32.mrf.mxu0
        %v6126 = vadd.f32 %v5992, %v6125
        %v6127 = vpop.f32.mrf.mxu0
        %6128 = vmatprep.mubr.f32.mxu0 0.0
        %v6129 = vand.u32 %v5875, 4294901760
        %6130 = vmatmul.mubr.f32.gmra.mxu0 %v6129
        %v6131 = vpop.f32.mrf.mxu0
        %v6132 = vadd.f32 %v6002, %v6131
        %v6133 = vpop.f32.mrf.mxu0
        %6134 = vmatprep.mubr.f32.mxu0 0.0
        %v6135 = vand.u32 %v5878, 4294901760
        %6136 = vmatmul.mubr.f32.gmra.mxu0 %v6135
        %v6137 = vpop.f32.mrf.mxu0
        %v6138 = vadd.f32 %v6012, %v6137
        %v6139 = vpop.f32.mrf.mxu0
        %6140 = vmatprep.mubr.f32.mxu0 0.0
        %v6141 = vand.u32 %v5881, 4294901760
        %6142 = vmatmul.mubr.f32.gmra.mxu0 %v6141
        %v6143 = vpop.f32.mrf.mxu0
        %v6144 = vadd.f32 %v6022, %v6143
        %v6145 = vpop.f32.mrf.mxu0
        %6146 = vmatprep.mubr.f32.mxu0 0.0
        %v6147 = vand.u32 %v5884, 4294901760
        %6148 = vmatmul.mubr.f32.gmra.mxu0 %v6147
        %v6149 = vpop.f32.mrf.mxu0
        %v6150 = vadd.f32 %v6032, %v6149
        %v6151 = vpop.f32.mrf.mxu0
        %6152 = vdwg.mxu0
        %6153 = vmatprep.subr.mxu0 0.0
        %6154 = vmatpush1.msra.mxu0 0.0
        %6155 = vmatprep.subr.mxu0 0.0
        %6156 = vmatpush1.msra.mxu0 0.0
        %6157 = vmatprep.subr.mxu0 0.0
        %6158 = vmatpush1.msra.mxu0 0.0
        %6159 = vmatprep.subr.mxu0 0.0
        %6160 = vmatpush1.msra.mxu0 0.0
        %6161 = vmatprep.subr.mxu0 0.0
        %6162 = vmatpush1.msra.mxu0 0.0
        %6163 = vmatprep.subr.mxu0 0.0
        %6164 = vmatpush1.msra.mxu0 0.0
        %6165 = vmatprep.subr.mxu0 0.0
        %6166 = vmatpush1.msra.mxu0 0.0
        %6167 = vmatprep.subr.mxu0 0.0
        %6168 = vmatpush1.msra.mxu0 0.0
        %6169 = vmatprep.subr.mxu0 0.0
        %6170 = vmatpush1.msra.mxu0 0.0
        %6171 = vmatprep.subr.mxu0 0.0
        %6172 = vmatpush1.msra.mxu0 0.0
        %6173 = vmatprep.subr.mxu0 0.0
        %6174 = vmatpush1.msra.mxu0 0.0
        %6175 = vmatprep.subr.mxu0 0.0
        %6176 = vmatpush1.msra.mxu0 0.0
        %6177 = vmatprep.subr.mxu0 0.0
        %6178 = vmatpush1.msra.mxu0 0.0
        %6179 = vmatprep.subr.mxu0 0.0
        %6180 = vmatpush1.msra.mxu0 0.0
        %6181 = vmatprep.subr.mxu0 0.0
        %6182 = vmatpush1.msra.mxu0 0.0
        %6183 = vmatprep.subr.mxu0 0.0
        %v6184 = vand.u32 %v5887, 4294901760
        %v6185 = vsub.f32 %v5887, %v6184
        %6186 = vmatpush1.msra.mxu0 %v6185
        %6187 = vmatprep.subr.mxu0 0.0
        %6188 = vmatpush2.msra.mxu0 0.0
        %6189 = vmatprep.subr.mxu0 0.0
        %6190 = vmatpush2.msra.mxu0 0.0
        %6191 = vmatprep.subr.mxu0 0.0
        %6192 = vmatpush2.msra.mxu0 0.0
        %6193 = vmatprep.subr.mxu0 0.0
        %6194 = vmatpush2.msra.mxu0 0.0
        %6195 = vmatprep.subr.mxu0 0.0
        %6196 = vmatpush2.msra.mxu0 0.0
        %6197 = vmatprep.subr.mxu0 0.0
        %6198 = vmatpush2.msra.mxu0 0.0
        %6199 = vmatprep.subr.mxu0 0.0
        %6200 = vmatpush2.msra.mxu0 0.0
        %6201 = vmatprep.subr.mxu0 0.0
        %6202 = vmatpush2.msra.mxu0 0.0
        %6203 = vmatprep.subr.mxu0 0.0
        %6204 = vmatpush2.msra.mxu0 0.0
        %6205 = vmatprep.subr.mxu0 0.0
        %6206 = vmatpush2.msra.mxu0 0.0
        %6207 = vmatprep.subr.mxu0 0.0
        %6208 = vmatpush2.msra.mxu0 0.0
        %6209 = vmatprep.subr.mxu0 0.0
        %6210 = vmatpush2.msra.mxu0 0.0
        %6211 = vmatprep.subr.mxu0 0.0
        %6212 = vmatpush2.msra.mxu0 0.0
        %6213 = vmatprep.subr.mxu0 0.0
        %6214 = vmatpush2.msra.mxu0 0.0
        %6215 = vmatprep.subr.mxu0 0.0
        %6216 = vmatpush2.msra.mxu0 0.0
        %6217 = vmatprep.subr.mxu0 0.0
        %6218 = vmatpush2.msra.mxu0 0.0
        %6219 = vmatprep.mubr.f32.mxu0 0.0
        %v6220 = vand.u32 %v5863, 4294901760
        %v6221 = vsub.f32 %v5863, %v6220
        %6222 = vmatmul.mubr.f32.gmra.mxu0 %v6221
        %v6223 = vpop.f32.mrf.mxu0
        %v6224 = vadd.f32 %v6108, %v6223
        %v6225 = vpop.f32.mrf.mxu0
        %6226 = vmatprep.mubr.f32.mxu0 0.0
        %v6227 = vand.u32 %v5866, 4294901760
        %v6228 = vsub.f32 %v5866, %v6227
        %6229 = vmatmul.mubr.f32.gmra.mxu0 %v6228
        %v6230 = vpop.f32.mrf.mxu0
        %v6231 = vadd.f32 %v6114, %v6230
        %v6232 = vpop.f32.mrf.mxu0
        %6233 = vmatprep.mubr.f32.mxu0 0.0
        %v6234 = vand.u32 %v5869, 4294901760
        %v6235 = vsub.f32 %v5869, %v6234
        %6236 = vmatmul.mubr.f32.gmra.mxu0 %v6235
        %v6237 = vpop.f32.mrf.mxu0
        %v6238 = vadd.f32 %v6120, %v6237
        %v6239 = vpop.f32.mrf.mxu0
        %6240 = vmatprep.mubr.f32.mxu0 0.0
        %v6241 = vand.u32 %v5872, 4294901760
        %v6242 = vsub.f32 %v5872, %v6241
        %6243 = vmatmul.mubr.f32.gmra.mxu0 %v6242
        %v6244 = vpop.f32.mrf.mxu0
        %v6245 = vadd.f32 %v6126, %v6244
        %v6246 = vpop.f32.mrf.mxu0
        %6247 = vmatprep.mubr.f32.mxu0 0.0
        %v6248 = vand.u32 %v5875, 4294901760
        %v6249 = vsub.f32 %v5875, %v6248
        %6250 = vmatmul.mubr.f32.gmra.mxu0 %v6249
        %v6251 = vpop.f32.mrf.mxu0
        %v6252 = vadd.f32 %v6132, %v6251
        %v6253 = vpop.f32.mrf.mxu0
        %6254 = vmatprep.mubr.f32.mxu0 0.0
        %v6255 = vand.u32 %v5878, 4294901760
        %v6256 = vsub.f32 %v5878, %v6255
        %6257 = vmatmul.mubr.f32.gmra.mxu0 %v6256
        %v6258 = vpop.f32.mrf.mxu0
        %v6259 = vadd.f32 %v6138, %v6258
        %v6260 = vpop.f32.mrf.mxu0
        %6261 = vmatprep.mubr.f32.mxu0 0.0
        %v6262 = vand.u32 %v5881, 4294901760
        %v6263 = vsub.f32 %v5881, %v6262
        %6264 = vmatmul.mubr.f32.gmra.mxu0 %v6263
        %v6265 = vpop.f32.mrf.mxu0
        %v6266 = vadd.f32 %v6144, %v6265
        %v6267 = vpop.f32.mrf.mxu0
        %6268 = vmatprep.mubr.f32.mxu0 0.0
        %v6269 = vand.u32 %v5884, 4294901760
        %v6270 = vsub.f32 %v5884, %v6269
        %6271 = vmatmul.mubr.f32.gmra.mxu0 %v6270
        %v6272 = vpop.f32.mrf.mxu0
        %v6273 = vadd.f32 %v6150, %v6272
        %v6274 = vpop.f32.mrf.mxu0
        %6275 = vdwg.mxu0
        %6276 = vmatprep.subr.mxu0 0.0
        %6277 = vmatpush1.msra.mxu0 0.0
        %6278 = vmatprep.subr.mxu0 0.0
        %6279 = vmatpush1.msra.mxu0 0.0
        %6280 = vmatprep.subr.mxu0 0.0
        %6281 = vmatpush1.msra.mxu0 0.0
        %6282 = vmatprep.subr.mxu0 0.0
        %6283 = vmatpush1.msra.mxu0 0.0
        %6284 = vmatprep.subr.mxu0 0.0
        %6285 = vmatpush1.msra.mxu0 0.0
        %6286 = vmatprep.subr.mxu0 0.0
        %6287 = vmatpush1.msra.mxu0 0.0
        %6288 = vmatprep.subr.mxu0 0.0
        %6289 = vmatpush1.msra.mxu0 0.0
        %6290 = vmatprep.subr.mxu0 0.0
        %6291 = vmatpush1.msra.mxu0 0.0
        %6292 = vmatprep.subr.mxu0 0.0
        %6293 = vmatpush1.msra.mxu0 0.0
        %6294 = vmatprep.subr.mxu0 0.0
        %6295 = vmatpush1.msra.mxu0 0.0
        %6296 = vmatprep.subr.mxu0 0.0
        %6297 = vmatpush1.msra.mxu0 0.0
        %6298 = vmatprep.subr.mxu0 0.0
        %6299 = vmatpush1.msra.mxu0 0.0
        %6300 = vmatprep.subr.mxu0 0.0
        %6301 = vmatpush1.msra.mxu0 0.0
        %6302 = vmatprep.subr.mxu0 0.0
        %6303 = vmatpush1.msra.mxu0 0.0
        %6304 = vmatprep.subr.mxu0 0.0
        %6305 = vmatpush1.msra.mxu0 0.0
        %6306 = vmatprep.subr.mxu0 0.0
        %v6307 = vand.u32 %v5887, 4294901760
        %6308 = vmatpush1.msra.mxu0 %v6307
        %6309 = vmatprep.subr.mxu0 0.0
        %6310 = vmatpush2.msra.mxu0 0.0
        %6311 = vmatprep.subr.mxu0 0.0
        %6312 = vmatpush2.msra.mxu0 0.0
        %6313 = vmatprep.subr.mxu0 0.0
        %6314 = vmatpush2.msra.mxu0 0.0
        %6315 = vmatprep.subr.mxu0 0.0
        %6316 = vmatpush2.msra.mxu0 0.0
        %6317 = vmatprep.subr.mxu0 0.0
        %6318 = vmatpush2.msra.mxu0 0.0
        %6319 = vmatprep.subr.mxu0 0.0
        %6320 = vmatpush2.msra.mxu0 0.0
        %6321 = vmatprep.subr.mxu0 0.0
        %6322 = vmatpush2.msra.mxu0 0.0
        %6323 = vmatprep.subr.mxu0 0.0
        %6324 = vmatpush2.msra.mxu0 0.0
        %6325 = vmatprep.subr.mxu0 0.0
        %6326 = vmatpush2.msra.mxu0 0.0
        %6327 = vmatprep.subr.mxu0 0.0
        %6328 = vmatpush2.msra.mxu0 0.0
        %6329 = vmatprep.subr.mxu0 0.0
        %6330 = vmatpush2.msra.mxu0 0.0
        %6331 = vmatprep.subr.mxu0 0.0
        %6332 = vmatpush2.msra.mxu0 0.0
        %6333 = vmatprep.subr.mxu0 0.0
        %6334 = vmatpush2.msra.mxu0 0.0
        %6335 = vmatprep.subr.mxu0 0.0
        %6336 = vmatpush2.msra.mxu0 0.0
        %6337 = vmatprep.subr.mxu0 0.0
        %6338 = vmatpush2.msra.mxu0 0.0
        %6339 = vmatprep.subr.mxu0 0.0
        %6340 = vmatpush2.msra.mxu0 0.0
        %6341 = vmatprep.mubr.f32.mxu0 0.0
        %v6342 = vand.u32 %v5863, 4294901760
        %v6343 = vsub.f32 %v5863, %v6342
        %v6344 = vand.u32 %v6343, 4294901760
        %6345 = vmatmul.mubr.f32.gmra.mxu0 %v6344
        %v6346 = vpop.f32.mrf.mxu0
        %v6347 = vadd.f32 %v6224, %v6346
        %v6348 = vpop.f32.mrf.mxu0
        %6349 = vmatprep.mubr.f32.mxu0 0.0
        %v6350 = vand.u32 %v5866, 4294901760
        %v6351 = vsub.f32 %v5866, %v6350
        %v6352 = vand.u32 %v6351, 4294901760
        %6353 = vmatmul.mubr.f32.gmra.mxu0 %v6352
        %v6354 = vpop.f32.mrf.mxu0
        %v6355 = vadd.f32 %v6231, %v6354
        %v6356 = vpop.f32.mrf.mxu0
        %6357 = vmatprep.mubr.f32.mxu0 0.0
        %v6358 = vand.u32 %v5869, 4294901760
        %v6359 = vsub.f32 %v5869, %v6358
        %v6360 = vand.u32 %v6359, 4294901760
        %6361 = vmatmul.mubr.f32.gmra.mxu0 %v6360
        %v6362 = vpop.f32.mrf.mxu0
        %v6363 = vadd.f32 %v6238, %v6362
        %v6364 = vpop.f32.mrf.mxu0
        %6365 = vmatprep.mubr.f32.mxu0 0.0
        %v6366 = vand.u32 %v5872, 4294901760
        %v6367 = vsub.f32 %v5872, %v6366
        %v6368 = vand.u32 %v6367, 4294901760
        %6369 = vmatmul.mubr.f32.gmra.mxu0 %v6368
        %v6370 = vpop.f32.mrf.mxu0
        %v6371 = vadd.f32 %v6245, %v6370
        %v6372 = vpop.f32.mrf.mxu0
        %6373 = vmatprep.mubr.f32.mxu0 0.0
        %v6374 = vand.u32 %v5875, 4294901760
        %v6375 = vsub.f32 %v5875, %v6374
        %v6376 = vand.u32 %v6375, 4294901760
        %6377 = vmatmul.mubr.f32.gmra.mxu0 %v6376
        %v6378 = vpop.f32.mrf.mxu0
        %v6379 = vadd.f32 %v6252, %v6378
        %v6380 = vpop.f32.mrf.mxu0
        %6381 = vmatprep.mubr.f32.mxu0 0.0
        %v6382 = vand.u32 %v5878, 4294901760
        %v6383 = vsub.f32 %v5878, %v6382
        %v6384 = vand.u32 %v6383, 4294901760
        %6385 = vmatmul.mubr.f32.gmra.mxu0 %v6384
        %v6386 = vpop.f32.mrf.mxu0
        %v6387 = vadd.f32 %v6259, %v6386
        %v6388 = vpop.f32.mrf.mxu0
        %6389 = vmatprep.mubr.f32.mxu0 0.0
        %v6390 = vand.u32 %v5881, 4294901760
        %v6391 = vsub.f32 %v5881, %v6390
        %v6392 = vand.u32 %v6391, 4294901760
        %6393 = vmatmul.mubr.f32.gmra.mxu0 %v6392
        %v6394 = vpop.f32.mrf.mxu0
        %v6395 = vadd.f32 %v6266, %v6394
        %v6396 = vpop.f32.mrf.mxu0
        %6397 = vmatprep.mubr.f32.mxu0 0.0
        %v6398 = vand.u32 %v5884, 4294901760
        %v6399 = vsub.f32 %v5884, %v6398
        %v6400 = vand.u32 %v6399, 4294901760
        %6401 = vmatmul.mubr.f32.gmra.mxu0 %v6400
        %v6402 = vpop.f32.mrf.mxu0
        %v6403 = vadd.f32 %v6273, %v6402
        %v6404 = vpop.f32.mrf.mxu0
        %6405 = vdwg.mxu0
        %6406 = vmatprep.subr.mxu0 0.0
        %6407 = vmatpush1.msra.mxu0 0.0
        %6408 = vmatprep.subr.mxu0 0.0
        %6409 = vmatpush1.msra.mxu0 0.0
        %6410 = vmatprep.subr.mxu0 0.0
        %6411 = vmatpush1.msra.mxu0 0.0
        %6412 = vmatprep.subr.mxu0 0.0
        %6413 = vmatpush1.msra.mxu0 0.0
        %6414 = vmatprep.subr.mxu0 0.0
        %6415 = vmatpush1.msra.mxu0 0.0
        %6416 = vmatprep.subr.mxu0 0.0
        %6417 = vmatpush1.msra.mxu0 0.0
        %6418 = vmatprep.subr.mxu0 0.0
        %6419 = vmatpush1.msra.mxu0 0.0
        %6420 = vmatprep.subr.mxu0 0.0
        %6421 = vmatpush1.msra.mxu0 0.0
        %6422 = vmatprep.subr.mxu0 0.0
        %6423 = vmatpush1.msra.mxu0 0.0
        %6424 = vmatprep.subr.mxu0 0.0
        %6425 = vmatpush1.msra.mxu0 0.0
        %6426 = vmatprep.subr.mxu0 0.0
        %6427 = vmatpush1.msra.mxu0 0.0
        %6428 = vmatprep.subr.mxu0 0.0
        %6429 = vmatpush1.msra.mxu0 0.0
        %6430 = vmatprep.subr.mxu0 0.0
        %6431 = vmatpush1.msra.mxu0 0.0
        %6432 = vmatprep.subr.mxu0 0.0
        %6433 = vmatpush1.msra.mxu0 0.0
        %6434 = vmatprep.subr.mxu0 0.0
        %6435 = vmatpush1.msra.mxu0 0.0
        %6436 = vmatprep.subr.mxu0 0.0
        %v6437 = vand.u32 %v5887, 4294901760
        %v6438 = vsub.f32 %v5887, %v6437
        %v6439 = vand.u32 %v6438, 4294901760
        %6440 = vmatpush1.msra.mxu0 %v6439
        %6441 = vmatprep.subr.mxu0 0.0
        %6442 = vmatpush2.msra.mxu0 0.0
        %6443 = vmatprep.subr.mxu0 0.0
        %6444 = vmatpush2.msra.mxu0 0.0
        %6445 = vmatprep.subr.mxu0 0.0
        %6446 = vmatpush2.msra.mxu0 0.0
        %6447 = vmatprep.subr.mxu0 0.0
        %6448 = vmatpush2.msra.mxu0 0.0
        %6449 = vmatprep.subr.mxu0 0.0
        %6450 = vmatpush2.msra.mxu0 0.0
        %6451 = vmatprep.subr.mxu0 0.0
        %6452 = vmatpush2.msra.mxu0 0.0
        %6453 = vmatprep.subr.mxu0 0.0
        %6454 = vmatpush2.msra.mxu0 0.0
        %6455 = vmatprep.subr.mxu0 0.0
        %6456 = vmatpush2.msra.mxu0 0.0
        %6457 = vmatprep.subr.mxu0 0.0
        %6458 = vmatpush2.msra.mxu0 0.0
        %6459 = vmatprep.subr.mxu0 0.0
        %6460 = vmatpush2.msra.mxu0 0.0
        %6461 = vmatprep.subr.mxu0 0.0
        %6462 = vmatpush2.msra.mxu0 0.0
        %6463 = vmatprep.subr.mxu0 0.0
        %6464 = vmatpush2.msra.mxu0 0.0
        %6465 = vmatprep.subr.mxu0 0.0
        %6466 = vmatpush2.msra.mxu0 0.0
        %6467 = vmatprep.subr.mxu0 0.0
        %6468 = vmatpush2.msra.mxu0 0.0
        %6469 = vmatprep.subr.mxu0 0.0
        %6470 = vmatpush2.msra.mxu0 0.0
        %6471 = vmatprep.subr.mxu0 0.0
        %6472 = vmatpush2.msra.mxu0 0.0
        %6473 = vmatprep.mubr.f32.mxu0 0.0
        %v6474 = vand.u32 %v5863, 4294901760
        %6475 = vmatmul.mubr.f32.gmra.mxu0 %v6474
        %v6476 = vpop.f32.mrf.mxu0
        %v6477 = vadd.f32 %v6347, %v6476
        %v6478 = vpop.f32.mrf.mxu0
        %6479 = vmatprep.mubr.f32.mxu0 0.0
        %v6480 = vand.u32 %v5866, 4294901760
        %6481 = vmatmul.mubr.f32.gmra.mxu0 %v6480
        %v6482 = vpop.f32.mrf.mxu0
        %v6483 = vadd.f32 %v6355, %v6482
        %v6484 = vpop.f32.mrf.mxu0
        %6485 = vmatprep.mubr.f32.mxu0 0.0
        %v6486 = vand.u32 %v5869, 4294901760
        %6487 = vmatmul.mubr.f32.gmra.mxu0 %v6486
        %v6488 = vpop.f32.mrf.mxu0
        %v6489 = vadd.f32 %v6363, %v6488
        %v6490 = vpop.f32.mrf.mxu0
        %6491 = vmatprep.mubr.f32.mxu0 0.0
        %v6492 = vand.u32 %v5872, 4294901760
        %6493 = vmatmul.mubr.f32.gmra.mxu0 %v6492
        %v6494 = vpop.f32.mrf.mxu0
        %v6495 = vadd.f32 %v6371, %v6494
        %v6496 = vpop.f32.mrf.mxu0
        %6497 = vmatprep.mubr.f32.mxu0 0.0
        %v6498 = vand.u32 %v5875, 4294901760
        %6499 = vmatmul.mubr.f32.gmra.mxu0 %v6498
        %v6500 = vpop.f32.mrf.mxu0
        %v6501 = vadd.f32 %v6379, %v6500
        %v6502 = vpop.f32.mrf.mxu0
        %6503 = vmatprep.mubr.f32.mxu0 0.0
        %v6504 = vand.u32 %v5878, 4294901760
        %6505 = vmatmul.mubr.f32.gmra.mxu0 %v6504
        %v6506 = vpop.f32.mrf.mxu0
        %v6507 = vadd.f32 %v6387, %v6506
        %v6508 = vpop.f32.mrf.mxu0
        %6509 = vmatprep.mubr.f32.mxu0 0.0
        %v6510 = vand.u32 %v5881, 4294901760
        %6511 = vmatmul.mubr.f32.gmra.mxu0 %v6510
        %v6512 = vpop.f32.mrf.mxu0
        %v6513 = vadd.f32 %v6395, %v6512
        %v6514 = vpop.f32.mrf.mxu0
        %6515 = vmatprep.mubr.f32.mxu0 0.0
        %v6516 = vand.u32 %v5884, 4294901760
        %6517 = vmatmul.mubr.f32.gmra.mxu0 %v6516
        %v6518 = vpop.f32.mrf.mxu0
        %v6519 = vadd.f32 %v6403, %v6518
        %v6520 = vpop.f32.mrf.mxu0
        %6521 = vdwg.mxu0
        %6522 = vmatprep.subr.mxu0 0.0
        %6523 = vmatpush1.msra.mxu0 0.0
        %6524 = vmatprep.subr.mxu0 0.0
        %6525 = vmatpush1.msra.mxu0 0.0
        %6526 = vmatprep.subr.mxu0 0.0
        %6527 = vmatpush1.msra.mxu0 0.0
        %6528 = vmatprep.subr.mxu0 0.0
        %6529 = vmatpush1.msra.mxu0 0.0
        %6530 = vmatprep.subr.mxu0 0.0
        %6531 = vmatpush1.msra.mxu0 0.0
        %6532 = vmatprep.subr.mxu0 0.0
        %6533 = vmatpush1.msra.mxu0 0.0
        %6534 = vmatprep.subr.mxu0 0.0
        %6535 = vmatpush1.msra.mxu0 0.0
        %6536 = vmatprep.subr.mxu0 0.0
        %6537 = vmatpush1.msra.mxu0 0.0
        %6538 = vmatprep.subr.mxu0 0.0
        %6539 = vmatpush1.msra.mxu0 0.0
        %6540 = vmatprep.subr.mxu0 0.0
        %6541 = vmatpush1.msra.mxu0 0.0
        %6542 = vmatprep.subr.mxu0 0.0
        %6543 = vmatpush1.msra.mxu0 0.0
        %6544 = vmatprep.subr.mxu0 0.0
        %6545 = vmatpush1.msra.mxu0 0.0
        %6546 = vmatprep.subr.mxu0 0.0
        %6547 = vmatpush1.msra.mxu0 0.0
        %6548 = vmatprep.subr.mxu0 0.0
        %6549 = vmatpush1.msra.mxu0 0.0
        %6550 = vmatprep.subr.mxu0 0.0
        %6551 = vmatpush1.msra.mxu0 0.0
        %6552 = vmatprep.subr.mxu0 0.0
        %v6553 = vand.u32 %v5887, 4294901760
        %6554 = vmatpush1.msra.mxu0 %v6553
        %6555 = vmatprep.subr.mxu0 0.0
        %6556 = vmatpush2.msra.mxu0 0.0
        %6557 = vmatprep.subr.mxu0 0.0
        %6558 = vmatpush2.msra.mxu0 0.0
        %6559 = vmatprep.subr.mxu0 0.0
        %6560 = vmatpush2.msra.mxu0 0.0
        %6561 = vmatprep.subr.mxu0 0.0
        %6562 = vmatpush2.msra.mxu0 0.0
        %6563 = vmatprep.subr.mxu0 0.0
        %6564 = vmatpush2.msra.mxu0 0.0
        %6565 = vmatprep.subr.mxu0 0.0
        %6566 = vmatpush2.msra.mxu0 0.0
        %6567 = vmatprep.subr.mxu0 0.0
        %6568 = vmatpush2.msra.mxu0 0.0
        %6569 = vmatprep.subr.mxu0 0.0
        %6570 = vmatpush2.msra.mxu0 0.0
        %6571 = vmatprep.subr.mxu0 0.0
        %6572 = vmatpush2.msra.mxu0 0.0
        %6573 = vmatprep.subr.mxu0 0.0
        %6574 = vmatpush2.msra.mxu0 0.0
        %6575 = vmatprep.subr.mxu0 0.0
        %6576 = vmatpush2.msra.mxu0 0.0
        %6577 = vmatprep.subr.mxu0 0.0
        %6578 = vmatpush2.msra.mxu0 0.0
        %6579 = vmatprep.subr.mxu0 0.0
        %6580 = vmatpush2.msra.mxu0 0.0
        %6581 = vmatprep.subr.mxu0 0.0
        %6582 = vmatpush2.msra.mxu0 0.0
        %6583 = vmatprep.subr.mxu0 0.0
        %6584 = vmatpush2.msra.mxu0 0.0
        %6585 = vmatprep.subr.mxu0 0.0
        %6586 = vmatpush2.msra.mxu0 0.0
        %6587 = vmatprep.mubr.f32.mxu0 0.0
        %v6588 = vand.u32 %v5863, 4294901760
        %6589 = vmatmul.mubr.f32.gmra.mxu0 %v6588
        %v6590 = vpop.f32.mrf.mxu0
        %v6591 = vadd.f32 %v6477, %v6590
        %v6592 = vpop.f32.mrf.mxu0
        %6593 = vmatprep.mubr.f32.mxu0 0.0
        %v6594 = vand.u32 %v5866, 4294901760
        %6595 = vmatmul.mubr.f32.gmra.mxu0 %v6594
        %v6596 = vpop.f32.mrf.mxu0
        %v6597 = vadd.f32 %v6483, %v6596
        %v6598 = vpop.f32.mrf.mxu0
        %6599 = vmatprep.mubr.f32.mxu0 0.0
        %v6600 = vand.u32 %v5869, 4294901760
        %6601 = vmatmul.mubr.f32.gmra.mxu0 %v6600
        %v6602 = vpop.f32.mrf.mxu0
        %v6603 = vadd.f32 %v6489, %v6602
        %v6604 = vpop.f32.mrf.mxu0
        %6605 = vmatprep.mubr.f32.mxu0 0.0
        %v6606 = vand.u32 %v5872, 4294901760
        %6607 = vmatmul.mubr.f32.gmra.mxu0 %v6606
        %v6608 = vpop.f32.mrf.mxu0
        %v6609 = vadd.f32 %v6495, %v6608
        %v6610 = vpop.f32.mrf.mxu0
        %6611 = vmatprep.mubr.f32.mxu0 0.0
        %v6612 = vand.u32 %v5875, 4294901760
        %6613 = vmatmul.mubr.f32.gmra.mxu0 %v6612
        %v6614 = vpop.f32.mrf.mxu0
        %v6615 = vadd.f32 %v6501, %v6614
        %v6616 = vpop.f32.mrf.mxu0
        %6617 = vmatprep.mubr.f32.mxu0 0.0
        %v6618 = vand.u32 %v5878, 4294901760
        %6619 = vmatmul.mubr.f32.gmra.mxu0 %v6618
        %v6620 = vpop.f32.mrf.mxu0
        %v6621 = vadd.f32 %v6507, %v6620
        %v6622 = vpop.f32.mrf.mxu0
        %6623 = vmatprep.mubr.f32.mxu0 0.0
        %v6624 = vand.u32 %v5881, 4294901760
        %6625 = vmatmul.mubr.f32.gmra.mxu0 %v6624
        %v6626 = vpop.f32.mrf.mxu0
        %v6627 = vadd.f32 %v6513, %v6626
        %v6628 = vpop.f32.mrf.mxu0
        %6629 = vmatprep.mubr.f32.mxu0 0.0
        %v6630 = vand.u32 %v5884, 4294901760
        %6631 = vmatmul.mubr.f32.gmra.mxu0 %v6630
        %v6632 = vpop.f32.mrf.mxu0
        %v6633 = vadd.f32 %v6519, %v6632
        %v6634 = vpop.f32.mrf.mxu0
        %6635 = vdwg.mxu0
        %v6636 = vadd.f32 %v5843, %v6591
        %v6637 = vadd.f32 %v5844, %v6597
        %v6638 = vadd.f32 %v5845, %v6603
        %v6639 = vadd.f32 %v5846, %v6609
        %v6640 = vadd.f32 %v5847, %v6615
        %v6641 = vadd.f32 %v5848, %v6621
        %v6642 = vadd.f32 %v5849, %v6627
        %v6643 = vadd.f32 %v5850, %v6633
        %v6644 = vld [vmem:[%s5058 + $0x1] sm:$0xff]
        %v6645 = vld [vmem:[%s5058 + $0x11] sm:$0xff]
        %v6646 = vld [vmem:[%s5058 + $0x21] sm:$0xff]
        %v6647 = vld [vmem:[%s5058 + $0x31] sm:$0xff]
        %v6648 = vld [vmem:[%s5058 + $0x41] sm:$0xff]
        %v6649 = vld [vmem:[%s5058 + $0x51] sm:$0xff]
        %v6650 = vld [vmem:[%s5058 + $0x61] sm:$0xff]
        %v6651 = vld [vmem:[%s5058 + $0x71] sm:$0xff]
        %s6652 = scalar_lea.vmem %s4, 32
        %v6653 = vld [vmem:[%s6652] sm:$0xf]
        %v6655 = vsel %vm340, %v6644, 0
        %v6658 = vsel %vm340, %v6645, 0
        %v6661 = vsel %vm340, %v6646, 0
        %v6664 = vsel %vm340, %v6647, 0
        %v6667 = vsel %vm340, %v6648, 0
        %v6670 = vsel %vm340, %v6649, 0
        %v6673 = vsel %vm340, %v6650, 0
        %v6676 = vsel %vm340, %v6651, 0
        %v6679 = vsel %vm365, %v6653, 0
        %6681 = vmatprep.subr.mxu0 0.0
        %6682 = vmatpush1.msra.mxu0 0.0
        %6683 = vmatprep.subr.mxu0 0.0
        %6684 = vmatpush1.msra.mxu0 0.0
        %6685 = vmatprep.subr.mxu0 0.0
        %6686 = vmatpush1.msra.mxu0 0.0
        %6687 = vmatprep.subr.mxu0 0.0
        %6688 = vmatpush1.msra.mxu0 0.0
        %6689 = vmatprep.subr.mxu0 0.0
        %6690 = vmatpush1.msra.mxu0 0.0
        %6691 = vmatprep.subr.mxu0 0.0
        %6692 = vmatpush1.msra.mxu0 0.0
        %6693 = vmatprep.subr.mxu0 0.0
        %6694 = vmatpush1.msra.mxu0 0.0
        %6695 = vmatprep.subr.mxu0 0.0
        %6696 = vmatpush1.msra.mxu0 0.0
        %6697 = vmatprep.subr.mxu0 0.0
        %6698 = vmatpush1.msra.mxu0 0.0
        %6699 = vmatprep.subr.mxu0 0.0
        %6700 = vmatpush1.msra.mxu0 0.0
        %6701 = vmatprep.subr.mxu0 0.0
        %6702 = vmatpush1.msra.mxu0 0.0
        %6703 = vmatprep.subr.mxu0 0.0
        %6704 = vmatpush1.msra.mxu0 0.0
        %6705 = vmatprep.subr.mxu0 0.0
        %6706 = vmatpush1.msra.mxu0 0.0
        %6707 = vmatprep.subr.mxu0 0.0
        %6708 = vmatpush1.msra.mxu0 0.0
        %6709 = vmatprep.subr.mxu0 0.0
        %6710 = vmatpush1.msra.mxu0 0.0
        %6711 = vmatprep.subr.mxu0 0.0
        %v6712 = vand.u32 %v6679, 4294901760
        %6713 = vmatpush1.msra.mxu0 %v6712
        %6714 = vmatprep.subr.mxu0 0.0
        %6715 = vmatpush2.msra.mxu0 0.0
        %6716 = vmatprep.subr.mxu0 0.0
        %6717 = vmatpush2.msra.mxu0 0.0
        %6718 = vmatprep.subr.mxu0 0.0
        %6719 = vmatpush2.msra.mxu0 0.0
        %6720 = vmatprep.subr.mxu0 0.0
        %6721 = vmatpush2.msra.mxu0 0.0
        %6722 = vmatprep.subr.mxu0 0.0
        %6723 = vmatpush2.msra.mxu0 0.0
        %6724 = vmatprep.subr.mxu0 0.0
        %6725 = vmatpush2.msra.mxu0 0.0
        %6726 = vmatprep.subr.mxu0 0.0
        %6727 = vmatpush2.msra.mxu0 0.0
        %6728 = vmatprep.subr.mxu0 0.0
        %6729 = vmatpush2.msra.mxu0 0.0
        %6730 = vmatprep.subr.mxu0 0.0
        %6731 = vmatpush2.msra.mxu0 0.0
        %6732 = vmatprep.subr.mxu0 0.0
        %6733 = vmatpush2.msra.mxu0 0.0
        %6734 = vmatprep.subr.mxu0 0.0
        %6735 = vmatpush2.msra.mxu0 0.0
        %6736 = vmatprep.subr.mxu0 0.0
        %6737 = vmatpush2.msra.mxu0 0.0
        %6738 = vmatprep.subr.mxu0 0.0
        %6739 = vmatpush2.msra.mxu0 0.0
        %6740 = vmatprep.subr.mxu0 0.0
        %6741 = vmatpush2.msra.mxu0 0.0
        %6742 = vmatprep.subr.mxu0 0.0
        %6743 = vmatpush2.msra.mxu0 0.0
        %6744 = vmatprep.subr.mxu0 0.0
        %6745 = vmatpush2.msra.mxu0 0.0
        %6746 = vmatprep.mubr.f32.mxu0 0.0
        %v6747 = vand.u32 %v6655, 4294901760
        %v6748 = vsub.f32 %v6655, %v6747
        %v6749 = vand.u32 %v6748, 4294901760
        %v6750 = vsub.f32 %v6748, %v6749
        %v6751 = vand.u32 %v6750, 4294901760
        %6752 = vmatmul.mubr.f32.gmra.mxu0 %v6751
        %v6753 = vpop.f32.mrf.mxu0
        %v6754 = vadd.f32 0.0, %v6753
        %v6755 = vpop.f32.mrf.mxu0
        %6756 = vmatprep.mubr.f32.mxu0 0.0
        %v6757 = vand.u32 %v6658, 4294901760
        %v6758 = vsub.f32 %v6658, %v6757
        %v6759 = vand.u32 %v6758, 4294901760
        %v6760 = vsub.f32 %v6758, %v6759
        %v6761 = vand.u32 %v6760, 4294901760
        %6762 = vmatmul.mubr.f32.gmra.mxu0 %v6761
        %v6763 = vpop.f32.mrf.mxu0
        %v6764 = vadd.f32 0.0, %v6763
        %v6765 = vpop.f32.mrf.mxu0
        %6766 = vmatprep.mubr.f32.mxu0 0.0
        %v6767 = vand.u32 %v6661, 4294901760
        %v6768 = vsub.f32 %v6661, %v6767
        %v6769 = vand.u32 %v6768, 4294901760
        %v6770 = vsub.f32 %v6768, %v6769
        %v6771 = vand.u32 %v6770, 4294901760
        %6772 = vmatmul.mubr.f32.gmra.mxu0 %v6771
        %v6773 = vpop.f32.mrf.mxu0
        %v6774 = vadd.f32 0.0, %v6773
        %v6775 = vpop.f32.mrf.mxu0
        %6776 = vmatprep.mubr.f32.mxu0 0.0
        %v6777 = vand.u32 %v6664, 4294901760
        %v6778 = vsub.f32 %v6664, %v6777
        %v6779 = vand.u32 %v6778, 4294901760
        %v6780 = vsub.f32 %v6778, %v6779
        %v6781 = vand.u32 %v6780, 4294901760
        %6782 = vmatmul.mubr.f32.gmra.mxu0 %v6781
        %v6783 = vpop.f32.mrf.mxu0
        %v6784 = vadd.f32 0.0, %v6783
        %v6785 = vpop.f32.mrf.mxu0
        %6786 = vmatprep.mubr.f32.mxu0 0.0
        %v6787 = vand.u32 %v6667, 4294901760
        %v6788 = vsub.f32 %v6667, %v6787
        %v6789 = vand.u32 %v6788, 4294901760
        %v6790 = vsub.f32 %v6788, %v6789
        %v6791 = vand.u32 %v6790, 4294901760
        %6792 = vmatmul.mubr.f32.gmra.mxu0 %v6791
        %v6793 = vpop.f32.mrf.mxu0
        %v6794 = vadd.f32 0.0, %v6793
        %v6795 = vpop.f32.mrf.mxu0
        %6796 = vmatprep.mubr.f32.mxu0 0.0
        %v6797 = vand.u32 %v6670, 4294901760
        %v6798 = vsub.f32 %v6670, %v6797
        %v6799 = vand.u32 %v6798, 4294901760
        %v6800 = vsub.f32 %v6798, %v6799
        %v6801 = vand.u32 %v6800, 4294901760
        %6802 = vmatmul.mubr.f32.gmra.mxu0 %v6801
        %v6803 = vpop.f32.mrf.mxu0
        %v6804 = vadd.f32 0.0, %v6803
        %v6805 = vpop.f32.mrf.mxu0
        %6806 = vmatprep.mubr.f32.mxu0 0.0
        %v6807 = vand.u32 %v6673, 4294901760
        %v6808 = vsub.f32 %v6673, %v6807
        %v6809 = vand.u32 %v6808, 4294901760
        %v6810 = vsub.f32 %v6808, %v6809
        %v6811 = vand.u32 %v6810, 4294901760
        %6812 = vmatmul.mubr.f32.gmra.mxu0 %v6811
        %v6813 = vpop.f32.mrf.mxu0
        %v6814 = vadd.f32 0.0, %v6813
        %v6815 = vpop.f32.mrf.mxu0
        %6816 = vmatprep.mubr.f32.mxu0 0.0
        %v6817 = vand.u32 %v6676, 4294901760
        %v6818 = vsub.f32 %v6676, %v6817
        %v6819 = vand.u32 %v6818, 4294901760
        %v6820 = vsub.f32 %v6818, %v6819
        %v6821 = vand.u32 %v6820, 4294901760
        %6822 = vmatmul.mubr.f32.gmra.mxu0 %v6821
        %v6823 = vpop.f32.mrf.mxu0
        %v6824 = vadd.f32 0.0, %v6823
        %v6825 = vpop.f32.mrf.mxu0
        %6826 = vdwg.mxu0
        %6827 = vmatprep.subr.mxu0 0.0
        %6828 = vmatpush1.msra.mxu0 0.0
        %6829 = vmatprep.subr.mxu0 0.0
        %6830 = vmatpush1.msra.mxu0 0.0
        %6831 = vmatprep.subr.mxu0 0.0
        %6832 = vmatpush1.msra.mxu0 0.0
        %6833 = vmatprep.subr.mxu0 0.0
        %6834 = vmatpush1.msra.mxu0 0.0
        %6835 = vmatprep.subr.mxu0 0.0
        %6836 = vmatpush1.msra.mxu0 0.0
        %6837 = vmatprep.subr.mxu0 0.0
        %6838 = vmatpush1.msra.mxu0 0.0
        %6839 = vmatprep.subr.mxu0 0.0
        %6840 = vmatpush1.msra.mxu0 0.0
        %6841 = vmatprep.subr.mxu0 0.0
        %6842 = vmatpush1.msra.mxu0 0.0
        %6843 = vmatprep.subr.mxu0 0.0
        %6844 = vmatpush1.msra.mxu0 0.0
        %6845 = vmatprep.subr.mxu0 0.0
        %6846 = vmatpush1.msra.mxu0 0.0
        %6847 = vmatprep.subr.mxu0 0.0
        %6848 = vmatpush1.msra.mxu0 0.0
        %6849 = vmatprep.subr.mxu0 0.0
        %6850 = vmatpush1.msra.mxu0 0.0
        %6851 = vmatprep.subr.mxu0 0.0
        %6852 = vmatpush1.msra.mxu0 0.0
        %6853 = vmatprep.subr.mxu0 0.0
        %6854 = vmatpush1.msra.mxu0 0.0
        %6855 = vmatprep.subr.mxu0 0.0
        %6856 = vmatpush1.msra.mxu0 0.0
        %6857 = vmatprep.subr.mxu0 0.0
        %v6858 = vand.u32 %v6679, 4294901760
        %v6859 = vsub.f32 %v6679, %v6858
        %v6860 = vand.u32 %v6859, 4294901760
        %v6861 = vsub.f32 %v6859, %v6860
        %v6862 = vand.u32 %v6861, 4294901760
        %6863 = vmatpush1.msra.mxu0 %v6862
        %6864 = vmatprep.subr.mxu0 0.0
        %6865 = vmatpush2.msra.mxu0 0.0
        %6866 = vmatprep.subr.mxu0 0.0
        %6867 = vmatpush2.msra.mxu0 0.0
        %6868 = vmatprep.subr.mxu0 0.0
        %6869 = vmatpush2.msra.mxu0 0.0
        %6870 = vmatprep.subr.mxu0 0.0
        %6871 = vmatpush2.msra.mxu0 0.0
        %6872 = vmatprep.subr.mxu0 0.0
        %6873 = vmatpush2.msra.mxu0 0.0
        %6874 = vmatprep.subr.mxu0 0.0
        %6875 = vmatpush2.msra.mxu0 0.0
        %6876 = vmatprep.subr.mxu0 0.0
        %6877 = vmatpush2.msra.mxu0 0.0
        %6878 = vmatprep.subr.mxu0 0.0
        %6879 = vmatpush2.msra.mxu0 0.0
        %6880 = vmatprep.subr.mxu0 0.0
        %6881 = vmatpush2.msra.mxu0 0.0
        %6882 = vmatprep.subr.mxu0 0.0
        %6883 = vmatpush2.msra.mxu0 0.0
        %6884 = vmatprep.subr.mxu0 0.0
        %6885 = vmatpush2.msra.mxu0 0.0
        %6886 = vmatprep.subr.mxu0 0.0
        %6887 = vmatpush2.msra.mxu0 0.0
        %6888 = vmatprep.subr.mxu0 0.0
        %6889 = vmatpush2.msra.mxu0 0.0
        %6890 = vmatprep.subr.mxu0 0.0
        %6891 = vmatpush2.msra.mxu0 0.0
        %6892 = vmatprep.subr.mxu0 0.0
        %6893 = vmatpush2.msra.mxu0 0.0
        %6894 = vmatprep.subr.mxu0 0.0
        %6895 = vmatpush2.msra.mxu0 0.0
        %6896 = vmatprep.mubr.f32.mxu0 0.0
        %v6897 = vand.u32 %v6655, 4294901760
        %6898 = vmatmul.mubr.f32.gmra.mxu0 %v6897
        %v6899 = vpop.f32.mrf.mxu0
        %v6900 = vadd.f32 %v6754, %v6899
        %v6901 = vpop.f32.mrf.mxu0
        %6902 = vmatprep.mubr.f32.mxu0 0.0
        %v6903 = vand.u32 %v6658, 4294901760
        %6904 = vmatmul.mubr.f32.gmra.mxu0 %v6903
        %v6905 = vpop.f32.mrf.mxu0
        %v6906 = vadd.f32 %v6764, %v6905
        %v6907 = vpop.f32.mrf.mxu0
        %6908 = vmatprep.mubr.f32.mxu0 0.0
        %v6909 = vand.u32 %v6661, 4294901760
        %6910 = vmatmul.mubr.f32.gmra.mxu0 %v6909
        %v6911 = vpop.f32.mrf.mxu0
        %v6912 = vadd.f32 %v6774, %v6911
        %v6913 = vpop.f32.mrf.mxu0
        %6914 = vmatprep.mubr.f32.mxu0 0.0
        %v6915 = vand.u32 %v6664, 4294901760
        %6916 = vmatmul.mubr.f32.gmra.mxu0 %v6915
        %v6917 = vpop.f32.mrf.mxu0
        %v6918 = vadd.f32 %v6784, %v6917
        %v6919 = vpop.f32.mrf.mxu0
        %6920 = vmatprep.mubr.f32.mxu0 0.0
        %v6921 = vand.u32 %v6667, 4294901760
        %6922 = vmatmul.mubr.f32.gmra.mxu0 %v6921
        %v6923 = vpop.f32.mrf.mxu0
        %v6924 = vadd.f32 %v6794, %v6923
        %v6925 = vpop.f32.mrf.mxu0
        %6926 = vmatprep.mubr.f32.mxu0 0.0
        %v6927 = vand.u32 %v6670, 4294901760
        %6928 = vmatmul.mubr.f32.gmra.mxu0 %v6927
        %v6929 = vpop.f32.mrf.mxu0
        %v6930 = vadd.f32 %v6804, %v6929
        %v6931 = vpop.f32.mrf.mxu0
        %6932 = vmatprep.mubr.f32.mxu0 0.0
        %v6933 = vand.u32 %v6673, 4294901760
        %6934 = vmatmul.mubr.f32.gmra.mxu0 %v6933
        %v6935 = vpop.f32.mrf.mxu0
        %v6936 = vadd.f32 %v6814, %v6935
        %v6937 = vpop.f32.mrf.mxu0
        %6938 = vmatprep.mubr.f32.mxu0 0.0
        %v6939 = vand.u32 %v6676, 4294901760
        %6940 = vmatmul.mubr.f32.gmra.mxu0 %v6939
        %v6941 = vpop.f32.mrf.mxu0
        %v6942 = vadd.f32 %v6824, %v6941
        %v6943 = vpop.f32.mrf.mxu0
        %6944 = vdwg.mxu0
        %6945 = vmatprep.subr.mxu0 0.0
        %6946 = vmatpush1.msra.mxu0 0.0
        %6947 = vmatprep.subr.mxu0 0.0
        %6948 = vmatpush1.msra.mxu0 0.0
        %6949 = vmatprep.subr.mxu0 0.0
        %6950 = vmatpush1.msra.mxu0 0.0
        %6951 = vmatprep.subr.mxu0 0.0
        %6952 = vmatpush1.msra.mxu0 0.0
        %6953 = vmatprep.subr.mxu0 0.0
        %6954 = vmatpush1.msra.mxu0 0.0
        %6955 = vmatprep.subr.mxu0 0.0
        %6956 = vmatpush1.msra.mxu0 0.0
        %6957 = vmatprep.subr.mxu0 0.0
        %6958 = vmatpush1.msra.mxu0 0.0
        %6959 = vmatprep.subr.mxu0 0.0
        %6960 = vmatpush1.msra.mxu0 0.0
        %6961 = vmatprep.subr.mxu0 0.0
        %6962 = vmatpush1.msra.mxu0 0.0
        %6963 = vmatprep.subr.mxu0 0.0
        %6964 = vmatpush1.msra.mxu0 0.0
        %6965 = vmatprep.subr.mxu0 0.0
        %6966 = vmatpush1.msra.mxu0 0.0
        %6967 = vmatprep.subr.mxu0 0.0
        %6968 = vmatpush1.msra.mxu0 0.0
        %6969 = vmatprep.subr.mxu0 0.0
        %6970 = vmatpush1.msra.mxu0 0.0
        %6971 = vmatprep.subr.mxu0 0.0
        %6972 = vmatpush1.msra.mxu0 0.0
        %6973 = vmatprep.subr.mxu0 0.0
        %6974 = vmatpush1.msra.mxu0 0.0
        %6975 = vmatprep.subr.mxu0 0.0
        %v6976 = vand.u32 %v6679, 4294901760
        %v6977 = vsub.f32 %v6679, %v6976
        %6978 = vmatpush1.msra.mxu0 %v6977
        %6979 = vmatprep.subr.mxu0 0.0
        %6980 = vmatpush2.msra.mxu0 0.0
        %6981 = vmatprep.subr.mxu0 0.0
        %6982 = vmatpush2.msra.mxu0 0.0
        %6983 = vmatprep.subr.mxu0 0.0
        %6984 = vmatpush2.msra.mxu0 0.0
        %6985 = vmatprep.subr.mxu0 0.0
        %6986 = vmatpush2.msra.mxu0 0.0
        %6987 = vmatprep.subr.mxu0 0.0
        %6988 = vmatpush2.msra.mxu0 0.0
        %6989 = vmatprep.subr.mxu0 0.0
        %6990 = vmatpush2.msra.mxu0 0.0
        %6991 = vmatprep.subr.mxu0 0.0
        %6992 = vmatpush2.msra.mxu0 0.0
        %6993 = vmatprep.subr.mxu0 0.0
        %6994 = vmatpush2.msra.mxu0 0.0
        %6995 = vmatprep.subr.mxu0 0.0
        %6996 = vmatpush2.msra.mxu0 0.0
        %6997 = vmatprep.subr.mxu0 0.0
        %6998 = vmatpush2.msra.mxu0 0.0
        %6999 = vmatprep.subr.mxu0 0.0
        %7000 = vmatpush2.msra.mxu0 0.0
        %7001 = vmatprep.subr.mxu0 0.0
        %7002 = vmatpush2.msra.mxu0 0.0
        %7003 = vmatprep.subr.mxu0 0.0
        %7004 = vmatpush2.msra.mxu0 0.0
        %7005 = vmatprep.subr.mxu0 0.0
        %7006 = vmatpush2.msra.mxu0 0.0
        %7007 = vmatprep.subr.mxu0 0.0
        %7008 = vmatpush2.msra.mxu0 0.0
        %7009 = vmatprep.subr.mxu0 0.0
        %7010 = vmatpush2.msra.mxu0 0.0
        %7011 = vmatprep.mubr.f32.mxu0 0.0
        %v7012 = vand.u32 %v6655, 4294901760
        %v7013 = vsub.f32 %v6655, %v7012
        %7014 = vmatmul.mubr.f32.gmra.mxu0 %v7013
        %v7015 = vpop.f32.mrf.mxu0
        %v7016 = vadd.f32 %v6900, %v7015
        %v7017 = vpop.f32.mrf.mxu0
        %7018 = vmatprep.mubr.f32.mxu0 0.0
        %v7019 = vand.u32 %v6658, 4294901760
        %v7020 = vsub.f32 %v6658, %v7019
        %7021 = vmatmul.mubr.f32.gmra.mxu0 %v7020
        %v7022 = vpop.f32.mrf.mxu0
        %v7023 = vadd.f32 %v6906, %v7022
        %v7024 = vpop.f32.mrf.mxu0
        %7025 = vmatprep.mubr.f32.mxu0 0.0
        %v7026 = vand.u32 %v6661, 4294901760
        %v7027 = vsub.f32 %v6661, %v7026
        %7028 = vmatmul.mubr.f32.gmra.mxu0 %v7027
        %v7029 = vpop.f32.mrf.mxu0
        %v7030 = vadd.f32 %v6912, %v7029
        %v7031 = vpop.f32.mrf.mxu0
        %7032 = vmatprep.mubr.f32.mxu0 0.0
        %v7033 = vand.u32 %v6664, 4294901760
        %v7034 = vsub.f32 %v6664, %v7033
        %7035 = vmatmul.mubr.f32.gmra.mxu0 %v7034
        %v7036 = vpop.f32.mrf.mxu0
        %v7037 = vadd.f32 %v6918, %v7036
        %v7038 = vpop.f32.mrf.mxu0
        %7039 = vmatprep.mubr.f32.mxu0 0.0
        %v7040 = vand.u32 %v6667, 4294901760
        %v7041 = vsub.f32 %v6667, %v7040
        %7042 = vmatmul.mubr.f32.gmra.mxu0 %v7041
        %v7043 = vpop.f32.mrf.mxu0
        %v7044 = vadd.f32 %v6924, %v7043
        %v7045 = vpop.f32.mrf.mxu0
        %7046 = vmatprep.mubr.f32.mxu0 0.0
        %v7047 = vand.u32 %v6670, 4294901760
        %v7048 = vsub.f32 %v6670, %v7047
        %7049 = vmatmul.mubr.f32.gmra.mxu0 %v7048
        %v7050 = vpop.f32.mrf.mxu0
        %v7051 = vadd.f32 %v6930, %v7050
        %v7052 = vpop.f32.mrf.mxu0
        %7053 = vmatprep.mubr.f32.mxu0 0.0
        %v7054 = vand.u32 %v6673, 4294901760
        %v7055 = vsub.f32 %v6673, %v7054
        %7056 = vmatmul.mubr.f32.gmra.mxu0 %v7055
        %v7057 = vpop.f32.mrf.mxu0
        %v7058 = vadd.f32 %v6936, %v7057
        %v7059 = vpop.f32.mrf.mxu0
        %7060 = vmatprep.mubr.f32.mxu0 0.0
        %v7061 = vand.u32 %v6676, 4294901760
        %v7062 = vsub.f32 %v6676, %v7061
        %7063 = vmatmul.mubr.f32.gmra.mxu0 %v7062
        %v7064 = vpop.f32.mrf.mxu0
        %v7065 = vadd.f32 %v6942, %v7064
        %v7066 = vpop.f32.mrf.mxu0
        %7067 = vdwg.mxu0
        %7068 = vmatprep.subr.mxu0 0.0
        %7069 = vmatpush1.msra.mxu0 0.0
        %7070 = vmatprep.subr.mxu0 0.0
        %7071 = vmatpush1.msra.mxu0 0.0
        %7072 = vmatprep.subr.mxu0 0.0
        %7073 = vmatpush1.msra.mxu0 0.0
        %7074 = vmatprep.subr.mxu0 0.0
        %7075 = vmatpush1.msra.mxu0 0.0
        %7076 = vmatprep.subr.mxu0 0.0
        %7077 = vmatpush1.msra.mxu0 0.0
        %7078 = vmatprep.subr.mxu0 0.0
        %7079 = vmatpush1.msra.mxu0 0.0
        %7080 = vmatprep.subr.mxu0 0.0
        %7081 = vmatpush1.msra.mxu0 0.0
        %7082 = vmatprep.subr.mxu0 0.0
        %7083 = vmatpush1.msra.mxu0 0.0
        %7084 = vmatprep.subr.mxu0 0.0
        %7085 = vmatpush1.msra.mxu0 0.0
        %7086 = vmatprep.subr.mxu0 0.0
        %7087 = vmatpush1.msra.mxu0 0.0
        %7088 = vmatprep.subr.mxu0 0.0
        %7089 = vmatpush1.msra.mxu0 0.0
        %7090 = vmatprep.subr.mxu0 0.0
        %7091 = vmatpush1.msra.mxu0 0.0
        %7092 = vmatprep.subr.mxu0 0.0
        %7093 = vmatpush1.msra.mxu0 0.0
        %7094 = vmatprep.subr.mxu0 0.0
        %7095 = vmatpush1.msra.mxu0 0.0
        %7096 = vmatprep.subr.mxu0 0.0
        %7097 = vmatpush1.msra.mxu0 0.0
        %7098 = vmatprep.subr.mxu0 0.0
        %v7099 = vand.u32 %v6679, 4294901760
        %7100 = vmatpush1.msra.mxu0 %v7099
        %7101 = vmatprep.subr.mxu0 0.0
        %7102 = vmatpush2.msra.mxu0 0.0
        %7103 = vmatprep.subr.mxu0 0.0
        %7104 = vmatpush2.msra.mxu0 0.0
        %7105 = vmatprep.subr.mxu0 0.0
        %7106 = vmatpush2.msra.mxu0 0.0
        %7107 = vmatprep.subr.mxu0 0.0
        %7108 = vmatpush2.msra.mxu0 0.0
        %7109 = vmatprep.subr.mxu0 0.0
        %7110 = vmatpush2.msra.mxu0 0.0
        %7111 = vmatprep.subr.mxu0 0.0
        %7112 = vmatpush2.msra.mxu0 0.0
        %7113 = vmatprep.subr.mxu0 0.0
        %7114 = vmatpush2.msra.mxu0 0.0
        %7115 = vmatprep.subr.mxu0 0.0
        %7116 = vmatpush2.msra.mxu0 0.0
        %7117 = vmatprep.subr.mxu0 0.0
        %7118 = vmatpush2.msra.mxu0 0.0
        %7119 = vmatprep.subr.mxu0 0.0
        %7120 = vmatpush2.msra.mxu0 0.0
        %7121 = vmatprep.subr.mxu0 0.0
        %7122 = vmatpush2.msra.mxu0 0.0
        %7123 = vmatprep.subr.mxu0 0.0
        %7124 = vmatpush2.msra.mxu0 0.0
        %7125 = vmatprep.subr.mxu0 0.0
        %7126 = vmatpush2.msra.mxu0 0.0
        %7127 = vmatprep.subr.mxu0 0.0
        %7128 = vmatpush2.msra.mxu0 0.0
        %7129 = vmatprep.subr.mxu0 0.0
        %7130 = vmatpush2.msra.mxu0 0.0
        %7131 = vmatprep.subr.mxu0 0.0
        %7132 = vmatpush2.msra.mxu0 0.0
        %7133 = vmatprep.mubr.f32.mxu0 0.0
        %v7134 = vand.u32 %v6655, 4294901760
        %v7135 = vsub.f32 %v6655, %v7134
        %v7136 = vand.u32 %v7135, 4294901760
        %7137 = vmatmul.mubr.f32.gmra.mxu0 %v7136
        %v7138 = vpop.f32.mrf.mxu0
        %v7139 = vadd.f32 %v7016, %v7138
        %v7140 = vpop.f32.mrf.mxu0
        %7141 = vmatprep.mubr.f32.mxu0 0.0
        %v7142 = vand.u32 %v6658, 4294901760
        %v7143 = vsub.f32 %v6658, %v7142
        %v7144 = vand.u32 %v7143, 4294901760
        %7145 = vmatmul.mubr.f32.gmra.mxu0 %v7144
        %v7146 = vpop.f32.mrf.mxu0
        %v7147 = vadd.f32 %v7023, %v7146
        %v7148 = vpop.f32.mrf.mxu0
        %7149 = vmatprep.mubr.f32.mxu0 0.0
        %v7150 = vand.u32 %v6661, 4294901760
        %v7151 = vsub.f32 %v6661, %v7150
        %v7152 = vand.u32 %v7151, 4294901760
        %7153 = vmatmul.mubr.f32.gmra.mxu0 %v7152
        %v7154 = vpop.f32.mrf.mxu0
        %v7155 = vadd.f32 %v7030, %v7154
        %v7156 = vpop.f32.mrf.mxu0
        %7157 = vmatprep.mubr.f32.mxu0 0.0
        %v7158 = vand.u32 %v6664, 4294901760
        %v7159 = vsub.f32 %v6664, %v7158
        %v7160 = vand.u32 %v7159, 4294901760
        %7161 = vmatmul.mubr.f32.gmra.mxu0 %v7160
        %v7162 = vpop.f32.mrf.mxu0
        %v7163 = vadd.f32 %v7037, %v7162
        %v7164 = vpop.f32.mrf.mxu0
        %7165 = vmatprep.mubr.f32.mxu0 0.0
        %v7166 = vand.u32 %v6667, 4294901760
        %v7167 = vsub.f32 %v6667, %v7166
        %v7168 = vand.u32 %v7167, 4294901760
        %7169 = vmatmul.mubr.f32.gmra.mxu0 %v7168
        %v7170 = vpop.f32.mrf.mxu0
        %v7171 = vadd.f32 %v7044, %v7170
        %v7172 = vpop.f32.mrf.mxu0
        %7173 = vmatprep.mubr.f32.mxu0 0.0
        %v7174 = vand.u32 %v6670, 4294901760
        %v7175 = vsub.f32 %v6670, %v7174
        %v7176 = vand.u32 %v7175, 4294901760
        %7177 = vmatmul.mubr.f32.gmra.mxu0 %v7176
        %v7178 = vpop.f32.mrf.mxu0
        %v7179 = vadd.f32 %v7051, %v7178
        %v7180 = vpop.f32.mrf.mxu0
        %7181 = vmatprep.mubr.f32.mxu0 0.0
        %v7182 = vand.u32 %v6673, 4294901760
        %v7183 = vsub.f32 %v6673, %v7182
        %v7184 = vand.u32 %v7183, 4294901760
        %7185 = vmatmul.mubr.f32.gmra.mxu0 %v7184
        %v7186 = vpop.f32.mrf.mxu0
        %v7187 = vadd.f32 %v7058, %v7186
        %v7188 = vpop.f32.mrf.mxu0
        %7189 = vmatprep.mubr.f32.mxu0 0.0
        %v7190 = vand.u32 %v6676, 4294901760
        %v7191 = vsub.f32 %v6676, %v7190
        %v7192 = vand.u32 %v7191, 4294901760
        %7193 = vmatmul.mubr.f32.gmra.mxu0 %v7192
        %v7194 = vpop.f32.mrf.mxu0
        %v7195 = vadd.f32 %v7065, %v7194
        %v7196 = vpop.f32.mrf.mxu0
        %7197 = vdwg.mxu0
        %7198 = vmatprep.subr.mxu0 0.0
        %7199 = vmatpush1.msra.mxu0 0.0
        %7200 = vmatprep.subr.mxu0 0.0
        %7201 = vmatpush1.msra.mxu0 0.0
        %7202 = vmatprep.subr.mxu0 0.0
        %7203 = vmatpush1.msra.mxu0 0.0
        %7204 = vmatprep.subr.mxu0 0.0
        %7205 = vmatpush1.msra.mxu0 0.0
        %7206 = vmatprep.subr.mxu0 0.0
        %7207 = vmatpush1.msra.mxu0 0.0
        %7208 = vmatprep.subr.mxu0 0.0
        %7209 = vmatpush1.msra.mxu0 0.0
        %7210 = vmatprep.subr.mxu0 0.0
        %7211 = vmatpush1.msra.mxu0 0.0
        %7212 = vmatprep.subr.mxu0 0.0
        %7213 = vmatpush1.msra.mxu0 0.0
        %7214 = vmatprep.subr.mxu0 0.0
        %7215 = vmatpush1.msra.mxu0 0.0
        %7216 = vmatprep.subr.mxu0 0.0
        %7217 = vmatpush1.msra.mxu0 0.0
        %7218 = vmatprep.subr.mxu0 0.0
        %7219 = vmatpush1.msra.mxu0 0.0
        %7220 = vmatprep.subr.mxu0 0.0
        %7221 = vmatpush1.msra.mxu0 0.0
        %7222 = vmatprep.subr.mxu0 0.0
        %7223 = vmatpush1.msra.mxu0 0.0
        %7224 = vmatprep.subr.mxu0 0.0
        %7225 = vmatpush1.msra.mxu0 0.0
        %7226 = vmatprep.subr.mxu0 0.0
        %7227 = vmatpush1.msra.mxu0 0.0
        %7228 = vmatprep.subr.mxu0 0.0
        %v7229 = vand.u32 %v6679, 4294901760
        %v7230 = vsub.f32 %v6679, %v7229
        %v7231 = vand.u32 %v7230, 4294901760
        %7232 = vmatpush1.msra.mxu0 %v7231
        %7233 = vmatprep.subr.mxu0 0.0
        %7234 = vmatpush2.msra.mxu0 0.0
        %7235 = vmatprep.subr.mxu0 0.0
        %7236 = vmatpush2.msra.mxu0 0.0
        %7237 = vmatprep.subr.mxu0 0.0
        %7238 = vmatpush2.msra.mxu0 0.0
        %7239 = vmatprep.subr.mxu0 0.0
        %7240 = vmatpush2.msra.mxu0 0.0
        %7241 = vmatprep.subr.mxu0 0.0
        %7242 = vmatpush2.msra.mxu0 0.0
        %7243 = vmatprep.subr.mxu0 0.0
        %7244 = vmatpush2.msra.mxu0 0.0
        %7245 = vmatprep.subr.mxu0 0.0
        %7246 = vmatpush2.msra.mxu0 0.0
        %7247 = vmatprep.subr.mxu0 0.0
        %7248 = vmatpush2.msra.mxu0 0.0
        %7249 = vmatprep.subr.mxu0 0.0
        %7250 = vmatpush2.msra.mxu0 0.0
        %7251 = vmatprep.subr.mxu0 0.0
        %7252 = vmatpush2.msra.mxu0 0.0
        %7253 = vmatprep.subr.mxu0 0.0
        %7254 = vmatpush2.msra.mxu0 0.0
        %7255 = vmatprep.subr.mxu0 0.0
        %7256 = vmatpush2.msra.mxu0 0.0
        %7257 = vmatprep.subr.mxu0 0.0
        %7258 = vmatpush2.msra.mxu0 0.0
        %7259 = vmatprep.subr.mxu0 0.0
        %7260 = vmatpush2.msra.mxu0 0.0
        %7261 = vmatprep.subr.mxu0 0.0
        %7262 = vmatpush2.msra.mxu0 0.0
        %7263 = vmatprep.subr.mxu0 0.0
        %7264 = vmatpush2.msra.mxu0 0.0
        %7265 = vmatprep.mubr.f32.mxu0 0.0
        %v7266 = vand.u32 %v6655, 4294901760
        %7267 = vmatmul.mubr.f32.gmra.mxu0 %v7266
        %v7268 = vpop.f32.mrf.mxu0
        %v7269 = vadd.f32 %v7139, %v7268
        %v7270 = vpop.f32.mrf.mxu0
        %7271 = vmatprep.mubr.f32.mxu0 0.0
        %v7272 = vand.u32 %v6658, 4294901760
        %7273 = vmatmul.mubr.f32.gmra.mxu0 %v7272
        %v7274 = vpop.f32.mrf.mxu0
        %v7275 = vadd.f32 %v7147, %v7274
        %v7276 = vpop.f32.mrf.mxu0
        %7277 = vmatprep.mubr.f32.mxu0 0.0
        %v7278 = vand.u32 %v6661, 4294901760
        %7279 = vmatmul.mubr.f32.gmra.mxu0 %v7278
        %v7280 = vpop.f32.mrf.mxu0
        %v7281 = vadd.f32 %v7155, %v7280
        %v7282 = vpop.f32.mrf.mxu0
        %7283 = vmatprep.mubr.f32.mxu0 0.0
        %v7284 = vand.u32 %v6664, 4294901760
        %7285 = vmatmul.mubr.f32.gmra.mxu0 %v7284
        %v7286 = vpop.f32.mrf.mxu0
        %v7287 = vadd.f32 %v7163, %v7286
        %v7288 = vpop.f32.mrf.mxu0
        %7289 = vmatprep.mubr.f32.mxu0 0.0
        %v7290 = vand.u32 %v6667, 4294901760
        %7291 = vmatmul.mubr.f32.gmra.mxu0 %v7290
        %v7292 = vpop.f32.mrf.mxu0
        %v7293 = vadd.f32 %v7171, %v7292
        %v7294 = vpop.f32.mrf.mxu0
        %7295 = vmatprep.mubr.f32.mxu0 0.0
        %v7296 = vand.u32 %v6670, 4294901760
        %7297 = vmatmul.mubr.f32.gmra.mxu0 %v7296
        %v7298 = vpop.f32.mrf.mxu0
        %v7299 = vadd.f32 %v7179, %v7298
        %v7300 = vpop.f32.mrf.mxu0
        %7301 = vmatprep.mubr.f32.mxu0 0.0
        %v7302 = vand.u32 %v6673, 4294901760
        %7303 = vmatmul.mubr.f32.gmra.mxu0 %v7302
        %v7304 = vpop.f32.mrf.mxu0
        %v7305 = vadd.f32 %v7187, %v7304
        %v7306 = vpop.f32.mrf.mxu0
        %7307 = vmatprep.mubr.f32.mxu0 0.0
        %v7308 = vand.u32 %v6676, 4294901760
        %7309 = vmatmul.mubr.f32.gmra.mxu0 %v7308
        %v7310 = vpop.f32.mrf.mxu0
        %v7311 = vadd.f32 %v7195, %v7310
        %v7312 = vpop.f32.mrf.mxu0
        %7313 = vdwg.mxu0
        %7314 = vmatprep.subr.mxu0 0.0
        %7315 = vmatpush1.msra.mxu0 0.0
        %7316 = vmatprep.subr.mxu0 0.0
        %7317 = vmatpush1.msra.mxu0 0.0
        %7318 = vmatprep.subr.mxu0 0.0
        %7319 = vmatpush1.msra.mxu0 0.0
        %7320 = vmatprep.subr.mxu0 0.0
        %7321 = vmatpush1.msra.mxu0 0.0
        %7322 = vmatprep.subr.mxu0 0.0
        %7323 = vmatpush1.msra.mxu0 0.0
        %7324 = vmatprep.subr.mxu0 0.0
        %7325 = vmatpush1.msra.mxu0 0.0
        %7326 = vmatprep.subr.mxu0 0.0
        %7327 = vmatpush1.msra.mxu0 0.0
        %7328 = vmatprep.subr.mxu0 0.0
        %7329 = vmatpush1.msra.mxu0 0.0
        %7330 = vmatprep.subr.mxu0 0.0
        %7331 = vmatpush1.msra.mxu0 0.0
        %7332 = vmatprep.subr.mxu0 0.0
        %7333 = vmatpush1.msra.mxu0 0.0
        %7334 = vmatprep.subr.mxu0 0.0
        %7335 = vmatpush1.msra.mxu0 0.0
        %7336 = vmatprep.subr.mxu0 0.0
        %7337 = vmatpush1.msra.mxu0 0.0
        %7338 = vmatprep.subr.mxu0 0.0
        %7339 = vmatpush1.msra.mxu0 0.0
        %7340 = vmatprep.subr.mxu0 0.0
        %7341 = vmatpush1.msra.mxu0 0.0
        %7342 = vmatprep.subr.mxu0 0.0
        %7343 = vmatpush1.msra.mxu0 0.0
        %7344 = vmatprep.subr.mxu0 0.0
        %v7345 = vand.u32 %v6679, 4294901760
        %7346 = vmatpush1.msra.mxu0 %v7345
        %7347 = vmatprep.subr.mxu0 0.0
        %7348 = vmatpush2.msra.mxu0 0.0
        %7349 = vmatprep.subr.mxu0 0.0
        %7350 = vmatpush2.msra.mxu0 0.0
        %7351 = vmatprep.subr.mxu0 0.0
        %7352 = vmatpush2.msra.mxu0 0.0
        %7353 = vmatprep.subr.mxu0 0.0
        %7354 = vmatpush2.msra.mxu0 0.0
        %7355 = vmatprep.subr.mxu0 0.0
        %7356 = vmatpush2.msra.mxu0 0.0
        %7357 = vmatprep.subr.mxu0 0.0
        %7358 = vmatpush2.msra.mxu0 0.0
        %7359 = vmatprep.subr.mxu0 0.0
        %7360 = vmatpush2.msra.mxu0 0.0
        %7361 = vmatprep.subr.mxu0 0.0
        %7362 = vmatpush2.msra.mxu0 0.0
        %7363 = vmatprep.subr.mxu0 0.0
        %7364 = vmatpush2.msra.mxu0 0.0
        %7365 = vmatprep.subr.mxu0 0.0
        %7366 = vmatpush2.msra.mxu0 0.0
        %7367 = vmatprep.subr.mxu0 0.0
        %7368 = vmatpush2.msra.mxu0 0.0
        %7369 = vmatprep.subr.mxu0 0.0
        %7370 = vmatpush2.msra.mxu0 0.0
        %7371 = vmatprep.subr.mxu0 0.0
        %7372 = vmatpush2.msra.mxu0 0.0
        %7373 = vmatprep.subr.mxu0 0.0
        %7374 = vmatpush2.msra.mxu0 0.0
        %7375 = vmatprep.subr.mxu0 0.0
        %7376 = vmatpush2.msra.mxu0 0.0
        %7377 = vmatprep.subr.mxu0 0.0
        %7378 = vmatpush2.msra.mxu0 0.0
        %7379 = vmatprep.mubr.f32.mxu0 0.0
        %v7380 = vand.u32 %v6655, 4294901760
        %7381 = vmatmul.mubr.f32.gmra.mxu0 %v7380
        %v7382 = vpop.f32.mrf.mxu0
        %v7383 = vadd.f32 %v7269, %v7382
        %v7384 = vpop.f32.mrf.mxu0
        %7385 = vmatprep.mubr.f32.mxu0 0.0
        %v7386 = vand.u32 %v6658, 4294901760
        %7387 = vmatmul.mubr.f32.gmra.mxu0 %v7386
        %v7388 = vpop.f32.mrf.mxu0
        %v7389 = vadd.f32 %v7275, %v7388
        %v7390 = vpop.f32.mrf.mxu0
        %7391 = vmatprep.mubr.f32.mxu0 0.0
        %v7392 = vand.u32 %v6661, 4294901760
        %7393 = vmatmul.mubr.f32.gmra.mxu0 %v7392
        %v7394 = vpop.f32.mrf.mxu0
        %v7395 = vadd.f32 %v7281, %v7394
        %v7396 = vpop.f32.mrf.mxu0
        %7397 = vmatprep.mubr.f32.mxu0 0.0
        %v7398 = vand.u32 %v6664, 4294901760
        %7399 = vmatmul.mubr.f32.gmra.mxu0 %v7398
        %v7400 = vpop.f32.mrf.mxu0
        %v7401 = vadd.f32 %v7287, %v7400
        %v7402 = vpop.f32.mrf.mxu0
        %7403 = vmatprep.mubr.f32.mxu0 0.0
        %v7404 = vand.u32 %v6667, 4294901760
        %7405 = vmatmul.mubr.f32.gmra.mxu0 %v7404
        %v7406 = vpop.f32.mrf.mxu0
        %v7407 = vadd.f32 %v7293, %v7406
        %v7408 = vpop.f32.mrf.mxu0
        %7409 = vmatprep.mubr.f32.mxu0 0.0
        %v7410 = vand.u32 %v6670, 4294901760
        %7411 = vmatmul.mubr.f32.gmra.mxu0 %v7410
        %v7412 = vpop.f32.mrf.mxu0
        %v7413 = vadd.f32 %v7299, %v7412
        %v7414 = vpop.f32.mrf.mxu0
        %7415 = vmatprep.mubr.f32.mxu0 0.0
        %v7416 = vand.u32 %v6673, 4294901760
        %7417 = vmatmul.mubr.f32.gmra.mxu0 %v7416
        %v7418 = vpop.f32.mrf.mxu0
        %v7419 = vadd.f32 %v7305, %v7418
        %v7420 = vpop.f32.mrf.mxu0
        %7421 = vmatprep.mubr.f32.mxu0 0.0
        %v7422 = vand.u32 %v6676, 4294901760
        %7423 = vmatmul.mubr.f32.gmra.mxu0 %v7422
        %v7424 = vpop.f32.mrf.mxu0
        %v7425 = vadd.f32 %v7311, %v7424
        %v7426 = vpop.f32.mrf.mxu0
        %7427 = vdwg.mxu0
        %v7428 = vadd.f32 %v6636, %v7383
        %v7429 = vadd.f32 %v6637, %v7389
        %v7430 = vadd.f32 %v6638, %v7395
        %v7431 = vadd.f32 %v6639, %v7401
        %v7432 = vadd.f32 %v6640, %v7407
        %v7433 = vadd.f32 %v6641, %v7413
        %v7434 = vadd.f32 %v6642, %v7419
        %v7435 = vadd.f32 %v6643, %v7425
        %7436 = vst [vmem:[%s293] sm:$0xff] %v7428
        %7437 = vst [vmem:[%s293 + $0x8] sm:$0xff] %v7429
        %7438 = vst [vmem:[%s293 + $0x10] sm:$0xff] %v7430
        %7439 = vst [vmem:[%s293 + $0x18] sm:$0xff] %v7431
        %7440 = vst [vmem:[%s293 + $0x20] sm:$0xff] %v7432
        %7441 = vst [vmem:[%s293 + $0x28] sm:$0xff] %v7433
        %7442 = vst [vmem:[%s293 + $0x30] sm:$0xff] %v7434
        %7443 = vst [vmem:[%s293 + $0x38] sm:$0xff] %v7435
        %v7444 = vadd.f32 %v7428, %v7429
        %v7445 = vadd.f32 %v7444, %v7430
        %v7446 = vadd.f32 %v7445, %v7431
        %v7447 = vadd.f32 %v7446, %v7432
        %v7448 = vadd.f32 %v7447, %v7433
        %v7449 = vadd.f32 %v7448, %v7434
        %v7450 = vadd.f32 %v7449, %v7435
        %v7451 = vrot.slane %v7450, 4
        %v7452 = vadd.f32 %v7450, %v7451
        %v7453 = vrot.slane %v7452, 2
        %v7454 = vadd.f32 %v7452, %v7453
        %v7455 = vrot.slane %v7454, 1
        %v7456 = vadd.f32 %v7454, %v7455
        %7457 = vst [vmem:[%s300] sm:$0x1] %v7456
        %v7458 = vmul.f32 %v7428, %v7428
        %v7459 = vmul.f32 %v7429, %v7429
        %v7460 = vmul.f32 %v7430, %v7430
        %v7461 = vmul.f32 %v7431, %v7431
        %v7462 = vmul.f32 %v7432, %v7432
        %v7463 = vmul.f32 %v7433, %v7433
        %v7464 = vmul.f32 %v7434, %v7434
        %v7465 = vmul.f32 %v7435, %v7435
        %v7466 = vadd.f32 %v7458, %v7459
        %v7467 = vadd.f32 %v7466, %v7460
        %v7468 = vadd.f32 %v7467, %v7461
        %v7469 = vadd.f32 %v7468, %v7462
        %v7470 = vadd.f32 %v7469, %v7463
        %v7471 = vadd.f32 %v7470, %v7464
        %v7472 = vadd.f32 %v7471, %v7465
        %v7473 = vrot.slane %v7472, 4
        %v7474 = vadd.f32 %v7472, %v7473
        %v7475 = vrot.slane %v7474, 2
        %v7476 = vadd.f32 %v7474, %v7475
        %v7477 = vrot.slane %v7476, 1
        %v7478 = vadd.f32 %v7476, %v7477
        %7479 = vst [vmem:[%s300 + $0x1] sm:$0x1] %v7478
        %s7480 = sand.u32 %s157, 1
        %s7481 = scalar_lea.sflag [#allocation3], %s7480
        %s7482 = sand.u32 %s157, 1
        %s7483 = smul.addr %s7482, 64
        %s7484 = scalar_lea.vmem [#allocation2], %s7483
        %s7485 = sand.u32 %s183, 1
        %s7486 = scalar_lea.sflag [#allocation5], %s7485
        %s7487 = sand.u32 %s183, 1
        %s7488 = smul.addr %s7487, 2
        %s7489 = scalar_lea.vmem [#allocation4], %s7488
        // Predicated region
        $region41: #{tpu_custom_call.1} parent=39 // pred_check
          %p7490 = pneg %p167
        $region42: #{tpu_custom_call.1} parent=39 // pred_check_branch
          %7492 = sbr.rel (%p7490) target = $region44
        $region43: #{tpu_custom_call.1} parent=39 // pred_region
          %s7494 = ssub.s32 1024, 1024
          %7495 = vsyncadd %s7481, %s7494
          %s7496 = smul.addr %s24, 8
          %s7497 = smul.addr %s7496, 128
          %s7498 = scalar_lea.hbm %s5, %s7497
          %s7499 = sshll.u32 %s7484, 4
          %s7500 = int_to_ptr.vmem [resolvable:$true] %s7499
          %7505 = dma.vmem_to_hbm [thread:$0]  %s7500, 1024, %s7498, %s7481, 128, 128, 8
        $region44: #{tpu_custom_call.1} parent=39 // pred_fallthru
          _
        // Predicated region
        $region45: #{tpu_custom_call.1} parent=39 // pred_check
          %p7506 = pneg %p193
        $region46: #{tpu_custom_call.1} parent=39 // pred_check_branch
          %7508 = sbr.rel (%p7506) target = $region48
        $region47: #{tpu_custom_call.1} parent=39 // pred_region
          %s7510 = ssub.s32 32, 32
          %7511 = vsyncadd %s7486, %s7510
          %s7512 = smul.addr %s24, 32
          %s7513 = scalar_lea.hbm %s6, %s7512
          %s7515 = sshll.u32 %s7489, 4
          %s7516 = int_to_ptr.vmem [resolvable:$true] %s7515
          %7518 = dma.vmem_to_hbm [thread:$0]  %s7516, 32, %s7513, %s7486
        $region48: #{tpu_custom_call.1} parent=39 // pred_fallthru
          _
      $region40: #{tpu_custom_call.1} parent=5 // pred_fallthru
        _
      %p7519 = scmp.le.s32.totalorder 2, %s19
      // Predicated region
      $region49: #{tpu_custom_call.1} parent=5 // pred_check
        %p7520 = pneg %p7519
      $region50: #{tpu_custom_call.1} parent=5 // pred_check_branch
        %7522 = sbr.rel (%p7520) target = $region52
      $region51: #{tpu_custom_call.1} parent=5 // pred_region
        %s7523 = ssub.s32 %s19, 2
        // Predicated region
        $region53: #{tpu_custom_call.1} parent=51 // pred_check
          %p7524 = pneg %p173
        $region54: #{tpu_custom_call.1} parent=51 // pred_check_branch
          %7526 = sbr.rel (%p7524) target = $region56
        $region55: #{tpu_custom_call.1} parent=51 // pred_region
          %s7527 = sand.u32 %s158, 1
          %s7528 = scalar_lea.sflag [#allocation3], %s7527
          %s7529 = sand.u32 %s158, 1
          %s7530 = smul.addr %s7529, 64
          %s7531 = scalar_lea.vmem [#allocation2], %s7530
          %7532 = dma.done %s7528, 1024
        $region56: #{tpu_custom_call.1} parent=51 // pred_fallthru
          _
        // Predicated region
        $region57: #{tpu_custom_call.1} parent=51 // pred_check
          %p7533 = pneg %p199
        $region58: #{tpu_custom_call.1} parent=51 // pred_check_branch
          %7535 = sbr.rel (%p7533) target = $region60
        $region59: #{tpu_custom_call.1} parent=51 // pred_region
          %s7536 = sand.u32 %s184, 1
          %s7537 = scalar_lea.sflag [#allocation5], %s7536
          %s7538 = sand.u32 %s184, 1
          %s7539 = smul.addr %s7538, 2
          %s7540 = scalar_lea.vmem [#allocation4], %s7539
          %7541 = dma.done %s7537, 32
        $region60: #{tpu_custom_call.1} parent=51 // pred_fallthru
          _
      $region52: #{tpu_custom_call.1} parent=5 // pred_fallthru
        _
    $region6: #{tpu_custom_call.1} parent=1 // loop_footer
      %s23 = sadd.s32 1, %s19
    $region7: #{tpu_custom_call.1} parent=1 // loop_footer_branch
      %18 = sbr.rel target = $region3
    $region8: #{tpu_custom_call.1} parent=1 // loop_exit
      _
    %7542 = vsyncpa [#allocation3], 1
    %s7543 = scalar_lea.sflag [#allocation3], 1
    %7544 = vsyncpa %s7543, 1
    %7545 = vsyncpa [#allocation5], 1
    %s7546 = scalar_lea.sflag [#allocation5], 1
    %7547 = vsyncpa %s7546, 1

</llo_original>
